<compile_context>
chip_gen: v7x
topology: tpu7x:2x2x1
jax: 0.10.0
libtpu: 0.0.40
codegen_flags: <defaults>
</compile_context>

<pallas_src>
import jax
import jax.numpy as jnp
from jax import lax
from jax.experimental import pallas as pl
from jax.experimental.pallas import tpu as pltpu

# ---------------------------------------------------------------------------
# problem sizes (small, TPU-friendly)
# ---------------------------------------------------------------------------
T = 8       # decode steps folded into a single kernel launch
B = 8       # batch (fills the 8-sublane axis of every vreg)
L = 16      # number of encoder regions (e.g. 4x4 feature map)
D_ENC = 32  # encoder feature dim
E = 32      # token embedding dim
H = 32      # LSTM hidden dim
A = 32      # attention dim
V = 64      # vocab size
VP = 128    # vocab padded to a full 128-lane group (dense MXU N, dense store)
LA = L * A  # lane-dense attention width (= 512)


# ---------------------------------------------------------------------------
# Pallas kernel: T full decoder steps (attention + LSTM cell + output proj)
# ---------------------------------------------------------------------------
def decode_kernel(
    att_x_ref,      # [B, L*A]        precomputed x@W_enc + b_att, lane-dense
    x2d_ref,        # [B*L, D_ENC]    encoder features, flattened
    gates_pre_ref,  # [T, B, 4H]      (emb@W_e + b) with g-cols pre-scaled by 2
    h0_ref,         # [B, H]
    c0_ref,         # [B, H]
    w_h_all_ref,    # [H, L*A + 4H]   [tile(w_h, L) | w_hh(g-cols x2)]
    v_bd_ref,       # [L*A, L]        block-diag(v_att): score reduction on MXU
    spread_ref,     # [L, B*L]        spread[l, j] = (j % L == l)
    bd_mask_ref,    # [B, B*L]        bd_mask[b, j] = (j // L == b)
    w_c_ref,        # [D_ENC, 4H]     w_ih_c (g-cols x2)
    w_out_ref,      # [H, VP]         output projection (zero-padded V->VP)
    b_out_ref,      # [1, VP]
    logits_ref,     # [T, B, VP]  out
    alpha_ref,      # [T, B, L]   out
    h_out_ref,      # [T, B, H]   out
    c_out_ref,      # [T, B, H]   out
):
    def step(t, carry):
        h, c = carry

        # ---- fused h-projection: attention att_h (tiled over L) and the LSTM
        #      h-contribution in a single MXU push --------------------------
        h_proj = jnp.dot(h, w_h_all_ref[...],
                         preferred_element_type=jnp.float32)       # [B, LA+4H]
        att_h = h_proj[:, :LA]                                      # [B, LA]
        gates_h = h_proj[:, LA:]                                    # [B, 4H]

        # ---- lane-dense additive attention ---------------------------------
        tt = jnp.tanh(att_x_ref[...] + att_h)                       # [B, 512]
        scores = jnp.dot(tt, v_bd_ref[...],
                         preferred_element_type=jnp.float32)        # [B, L]
        m = jnp.max(scores, axis=-1, keepdims=True)
        e = jnp.exp(scores - m)
        alpha = e / jnp.sum(e, axis=-1, keepdims=True)              # exact softmax

        # ---- context: block-diag(alpha) @ x, built and applied on the MXU --
        alpha_rep = jnp.dot(alpha, spread_ref[...],
                            preferred_element_type=jnp.float32)     # [B, B*L]
        alpha_bd = alpha_rep * bd_mask_ref[...]
        ctx = jnp.dot(alpha_bd, x2d_ref[...],
                      preferred_element_type=jnp.float32)           # [B, D_ENC]

        # ---- LSTM gates (PyTorch order i, f, g, o); single sigmoid pass ----
        gates = gates_pre_ref[t] + gates_h + jnp.dot(
            ctx, w_c_ref[...], preferred_element_type=jnp.float32)  # [B, 4H]
        sig = jax.nn.sigmoid(gates)
        i_g = sig[:, 0 * H:1 * H]
        f_g = sig[:, 1 * H:2 * H]
        g_g = 2.0 * sig[:, 2 * H:3 * H] - 1.0   # == tanh(pre-act), cols pre-scaled x2
        o_g = sig[:, 3 * H:4 * H]
        c_new = f_g * c + i_g * g_g
        h_new = o_g * jnp.tanh(c_new)

        # ---- output projection (N padded to 128 => dense MXU tile) ---------
        logits = jnp.dot(h_new, w_out_ref[...],
                         preferred_element_type=jnp.float32) + b_out_ref[...]

        # ---- direct stores from the producing vregs (no lane re-assembly) --
        logits_ref[t] = logits
        alpha_ref[t] = alpha
        h_out_ref[t] = h_new
        c_out_ref[t] = c_new
        return h_new, c_new

    lax.fori_loop(0, T, step, (h0_ref[...], c0_ref[...]), unroll=True)


# ---------------------------------------------------------------------------
# wrapper: hoist loop-invariant work, pack weights, run one pallas_call
# ---------------------------------------------------------------------------
def captioning_decoder_decode(x, h0, c0, predicted_indices, params):
    """Runs T teacher-forced decoder steps (the module's forward applied per
    step) inside a single pallas_call with all weights VMEM-resident.

    Returns per-step (logits [T,B,V], h [T,B,H], c [T,B,H], alpha [T,B,L]).
    """
    f32 = jnp.float32

    # g-gate columns pre-scaled by 2 so the kernel needs only one sigmoid pass
    gate_scale = jnp.concatenate(
        [jnp.ones((1, 2 * H), f32), jnp.full((1, H), 2.0, f32),
         jnp.ones((1, H), f32)], axis=1)                             # [1, 4H]

    # hoisted: token embedding gather + its carry-independent gate term + bias
    emb_all = params["emb_table"][predicted_indices.astype(jnp.int32)]   # [T, B, E]
    gates_pre = ((emb_all.reshape(T * B, E) @ params["w_ih_e"]
                  + params["b_gates"]) * gate_scale).reshape(T, B, 4 * H)

    # hoisted, loop-invariant encoder projection (+ attention bias), lane-dense
    x2d = x.reshape(B * L, D_ENC)
    att_x = (x2d @ params["w_enc"] + params["b_att"]).reshape(B, LA)

    # fused h-projection weight: [tile(w_h, L) | w_hh(scaled)] -> one push/step
    w_h_all = jnp.concatenate(
        [jnp.tile(params["w_h"], (1, L)), params["w_hh"] * gate_scale], axis=1)

    # block-diag(v_att) so the score reduction runs on the MXU
    v_bd = jnp.kron(jnp.eye(L, dtype=f32), params["v_att"].reshape(A, 1))  # [LA, L]

    # helpers to build block-diag(alpha) on the MXU for the context matmul
    spread = (jnp.arange(B * L)[None, :] % L
              == jnp.arange(L)[:, None]).astype(f32)                 # [L, B*L]
    bd_mask = (jnp.arange(B * L)[None, :] // L
               == jnp.arange(B)[:, None]).astype(f32)                # [B, B*L]

    w_c = params["w_ih_c"] * gate_scale                              # [D_ENC, 4H]
    w_out_p = jnp.pad(params["w_out"], ((0, 0), (0, VP - V)))        # [H, VP]
    b_out_p = jnp.pad(params["b_out"], ((0, 0), (0, VP - V)))        # [1, VP]

    inputs = (att_x, x2d, gates_pre, h0, c0, w_h_all, v_bd, spread, bd_mask,
              w_c, w_out_p, b_out_p)

    vmem = pl.BlockSpec(memory_space=pltpu.MemorySpace.VMEM)
    out_shape = (
        jax.ShapeDtypeStruct((T, B, VP), f32),   # logits (padded)
        jax.ShapeDtypeStruct((T, B, L), f32),    # alpha
        jax.ShapeDtypeStruct((T, B, H), f32),    # h
        jax.ShapeDtypeStruct((T, B, H), f32),    # c
    )
    # TODO(synk): for real workloads with many sequences, add a leading batch
    # grid axis with dimension_semantics=("parallel",...) so v7x's 2nd TC works.
    logits_p, alpha, h_all, c_all = pl.pallas_call(
        decode_kernel,
        out_shape=out_shape,
        in_specs=[vmem] * len(inputs),
        out_specs=(vmem, vmem, vmem, vmem),
    )(*inputs)

    return logits_p[:, :, :V], h_all, c_all, alpha


# ---------------------------------------------------------------------------
# pure-JAX reference for correctness checking
# ---------------------------------------------------------------------------
def reference_step(x, h, c, tok, params):
    emb = params["emb_table"][tok]
    att_x = jnp.einsum('bld,da->bla', x, params["w_enc"])
    att_h = h @ params["w_h"]
    t = jnp.tanh(att_x + att_h[:, None, :] + params["b_att"][None, :, :])
    scores = jnp.sum(t * params["v_att"], axis=-1)
    alpha = jax.nn.softmax(scores, axis=-1)
    ctx = jnp.einsum('bl,bld->bd', alpha, x)
    gates = (emb @ params["w_ih_e"] + ctx @ params["w_ih_c"]
             + h @ params["w_hh"] + params["b_gates"])
    i_g = jax.nn.sigmoid(gates[:, 0 * H:1 * H])
    f_g = jax.nn.sigmoid(gates[:, 1 * H:2 * H])
    g_g = jnp.tanh(gates[:, 2 * H:3 * H])
    o_g = jax.nn.sigmoid(gates[:, 3 * H:4 * H])
    c_new = f_g * c + i_g * g_g
    h_new = o_g * jnp.tanh(c_new)
    logits = h_new @ params["w_out"] + params["b_out"]
    return logits, h_new, c_new, alpha


def reference_decode(x, h, c, tokens, params):
    ls, hs, cs, als = [], [], [], []
    for step_t in range(T):
        logits, h, c, alpha = reference_step(x, h, c, tokens[step_t], params)
        ls.append(logits); hs.append(h); cs.append(c); als.append(alpha)
    return jnp.stack(ls), jnp.stack(hs), jnp.stack(cs), jnp.stack(als)


# ---------------------------------------------------------------------------
# main
# ---------------------------------------------------------------------------
if __name__ == "__main__":
    key = jax.random.PRNGKey(0)
    keys = jax.random.split(key, 16)

    # deterministic "weights" (synthetic; no checkpoint load)
    params = {
        "emb_table": 0.1 * jax.random.normal(keys[0], (V, E), jnp.float32),
        "w_enc":     0.1 * jax.random.normal(keys[1], (D_ENC, A), jnp.float32),
        "w_h":       0.1 * jax.random.normal(keys[2], (H, A), jnp.float32),
        "b_att":     0.1 * jax.random.normal(keys[3], (1, A), jnp.float32),
        "v_att":     0.1 * jax.random.normal(keys[4], (1, A), jnp.float32),
        "w_ih_e":    0.1 * jax.random.normal(keys[5], (E, 4 * H), jnp.float32),
        "w_ih_c":    0.1 * jax.random.normal(keys[6], (D_ENC, 4 * H), jnp.float32),
        "w_hh":      0.1 * jax.random.normal(keys[7], (H, 4 * H), jnp.float32),
        "b_gates":   0.1 * jax.random.normal(keys[8], (1, 4 * H), jnp.float32),
        "w_out":     0.1 * jax.random.normal(keys[9], (H, V), jnp.float32),
        "b_out":     0.1 * jax.random.normal(keys[10], (1, V), jnp.float32),
    }

    # deterministic example inputs
    x = jax.random.normal(keys[11], (B, L, D_ENC), jnp.float32)
    h0 = jax.random.normal(keys[12], (B, H), jnp.float32)
    c0 = jax.random.normal(keys[13], (B, H), jnp.float32)
    predicted_indices = jax.random.randint(keys[14], (T, B), 0, V, jnp.int32)

    outs = captioning_decoder_decode(x, h0, c0, predicted_indices, params)
    outs = jax.block_until_ready(outs)

    refs = reference_decode(x, h0, c0, predicted_indices, params)
    # exact softmax normalization + mathematically exact tanh-via-sigmoid =>
    # tight tolerance restored (previous revision needed 2e-2).
    for o, r in zip(outs, refs):
        assert o.shape == r.shape and o.dtype == r.dtype
        assert jnp.allclose(o, r, atol=1e-3, rtol=1e-3), "mismatch vs reference"

    print("KERNEL_OK")
</pallas_src>

<mosaic_0001>
module attributes {stable_mosaic.version = 11 : i64} {
  func.func @decode_kernel(%arg0: memref<8x512xf32, #tpu.memory_space<vmem>>, %arg1: memref<128x32xf32, #tpu.memory_space<vmem>>, %arg2: memref<8x8x128xf32, #tpu.memory_space<vmem>>, %arg3: memref<8x32xf32, #tpu.memory_space<vmem>>, %arg4: memref<8x32xf32, #tpu.memory_space<vmem>>, %arg5: memref<32x640xf32, #tpu.memory_space<vmem>>, %arg6: memref<512x16xf32, #tpu.memory_space<vmem>>, %arg7: memref<16x128xf32, #tpu.memory_space<vmem>>, %arg8: memref<8x128xf32, #tpu.memory_space<vmem>>, %arg9: memref<32x128xf32, #tpu.memory_space<vmem>>, %arg10: memref<32x128xf32, #tpu.memory_space<vmem>>, %arg11: memref<1x128xf32, #tpu.memory_space<vmem>>, %arg12: memref<8x8x128xf32, #tpu.memory_space<vmem>>, %arg13: memref<8x8x16xf32, #tpu.memory_space<vmem>>, %arg14: memref<8x8x32xf32, #tpu.memory_space<vmem>>, %arg15: memref<8x8x32xf32, #tpu.memory_space<vmem>>) attributes {dimension_semantics = [], scalar_prefetch = 0 : i64, scratch_operands = 0 : i64, tpu.core_type = #tpu.core_type<tc>} {
    %c0 = arith.constant 0 : index
    %c0_0 = arith.constant 0 : index
    %0 = vector.load %arg3[%c0, %c0_0] : memref<8x32xf32, #tpu.memory_space<vmem>>, vector<8x32xf32>
    %c0_1 = arith.constant 0 : index
    %c0_2 = arith.constant 0 : index
    %1 = vector.load %arg4[%c0_1, %c0_2] : memref<8x32xf32, #tpu.memory_space<vmem>>, vector<8x32xf32>
    %c0_i32 = arith.constant 0 : i32
    %c0_3 = arith.constant 0 : index
    %c0_4 = arith.constant 0 : index
    %2 = vector.load %arg5[%c0_3, %c0_4] : memref<32x640xf32, #tpu.memory_space<vmem>>, vector<32x640xf32>
    %cst = arith.constant dense<0.000000e+00> : vector<8x640xf32>
    %3 = tpu.matmul %0, %2, %cst {dimension_numbers = #tpu.dot_dimension_numbers<[1], [0], [0], [1], [0, 0, 1, 1], [], []>} : vector<8x32xf32>, vector<32x640xf32>, vector<8x640xf32> -> vector<8x640xf32>
    %4 = vector.extract_strided_slice %3 {offsets = [0, 0], sizes = [8, 512], strides = [1, 1]} : vector<8x640xf32> to vector<8x512xf32>
    %5 = vector.extract_strided_slice %3 {offsets = [0, 512], sizes = [8, 128], strides = [1, 1]} : vector<8x640xf32> to vector<8x128xf32>
    %c0_5 = arith.constant 0 : index
    %c0_6 = arith.constant 0 : index
    %6 = vector.load %arg0[%c0_5, %c0_6] : memref<8x512xf32, #tpu.memory_space<vmem>>, vector<8x512xf32>
    %7 = arith.addf %6, %4 : vector<8x512xf32>
    %8 = math.tanh %7 : vector<8x512xf32>
    %c0_7 = arith.constant 0 : index
    %c0_8 = arith.constant 0 : index
    %9 = vector.load %arg6[%c0_7, %c0_8] : memref<512x16xf32, #tpu.memory_space<vmem>>, vector<512x16xf32>
    %cst_9 = arith.constant dense<0.000000e+00> : vector<8x16xf32>
    %10 = tpu.matmul %8, %9, %cst_9 {dimension_numbers = #tpu.dot_dimension_numbers<[1], [0], [0], [1], [0, 0, 1, 1], [], []>} : vector<8x512xf32>, vector<512x16xf32>, vector<8x16xf32> -> vector<8x16xf32>
    %cst_10 = arith.constant dense<0xFF800000> : vector<8xf32>
    %11 = vector.multi_reduction <maximumf>, %10, %cst_10 [1] : vector<8x16xf32> to vector<8xf32>
    %12 = vector.shape_cast %11 : vector<8xf32> to vector<8x1xf32>
    %13 = vector.broadcast %12 : vector<8x1xf32> to vector<8x16xf32>
    %14 = arith.subf %10, %13 : vector<8x16xf32>
    %15 = math.exp %14 : vector<8x16xf32>
    %cst_11 = arith.constant dense<0.000000e+00> : vector<8xf32>
    %16 = vector.multi_reduction <add>, %15, %cst_11 [1] : vector<8x16xf32> to vector<8xf32>
    %17 = vector.shape_cast %16 : vector<8xf32> to vector<8x1xf32>
    %18 = vector.broadcast %17 : vector<8x1xf32> to vector<8x16xf32>
    %19 = arith.divf %15, %18 : vector<8x16xf32>
    %c0_12 = arith.constant 0 : index
    %c0_13 = arith.constant 0 : index
    %20 = vector.load %arg7[%c0_12, %c0_13] : memref<16x128xf32, #tpu.memory_space<vmem>>, vector<16x128xf32>
    %cst_14 = arith.constant dense<0.000000e+00> : vector<8x128xf32>
    %21 = tpu.matmul %19, %20, %cst_14 {dimension_numbers = #tpu.dot_dimension_numbers<[1], [0], [0], [1], [0, 0, 1, 1], [], []>} : vector<8x16xf32>, vector<16x128xf32>, vector<8x128xf32> -> vector<8x128xf32>
    %c0_15 = arith.constant 0 : index
    %c0_16 = arith.constant 0 : index
    %22 = vector.load %arg8[%c0_15, %c0_16] : memref<8x128xf32, #tpu.memory_space<vmem>>, vector<8x128xf32>
    %23 = arith.mulf %21, %22 : vector<8x128xf32>
    %c0_17 = arith.constant 0 : index
    %c0_18 = arith.constant 0 : index
    %24 = vector.load %arg1[%c0_17, %c0_18] : memref<128x32xf32, #tpu.memory_space<vmem>>, vector<128x32xf32>
    %cst_19 = arith.constant dense<0.000000e+00> : vector<8x32xf32>
    %25 = tpu.matmul %23, %24, %cst_19 {dimension_numbers = #tpu.dot_dimension_numbers<[1], [0], [0], [1], [0, 0, 1, 1], [], []>} : vector<8x128xf32>, vector<128x32xf32>, vector<8x32xf32> -> vector<8x32xf32>
    %26 = arith.index_cast %c0_i32 : i32 to index
    %c0_20 = arith.constant 0 : index
    %c0_21 = arith.constant 0 : index
    %27 = vector.load %arg2[%26, %c0_20, %c0_21] : memref<8x8x128xf32, #tpu.memory_space<vmem>>, vector<1x8x128xf32>
    %28 = vector.shape_cast %27 : vector<1x8x128xf32> to vector<8x128xf32>
    %29 = arith.addf %28, %5 : vector<8x128xf32>
    %c0_22 = arith.constant 0 : index
    %c0_23 = arith.constant 0 : index
    %30 = vector.load %arg9[%c0_22, %c0_23] : memref<32x128xf32, #tpu.memory_space<vmem>>, vector<32x128xf32>
    %cst_24 = arith.constant dense<0.000000e+00> : vector<8x128xf32>
    %31 = tpu.matmul %25, %30, %cst_24 {dimension_numbers = #tpu.dot_dimension_numbers<[1], [0], [0], [1], [0, 0, 1, 1], [], []>} : vector<8x32xf32>, vector<32x128xf32>, vector<8x128xf32> -> vector<8x128xf32>
    %32 = arith.addf %29, %31 : vector<8x128xf32>
    %33 = arith.negf %32 : vector<8x128xf32>
    %34 = math.exp %33 : vector<8x128xf32>
    %cst_25 = arith.constant 1.000000e+00 : f32
    %35 = vector.broadcast %cst_25 : f32 to vector<8x128xf32>
    %36 = arith.addf %35, %34 : vector<8x128xf32>
    %37 = arith.divf %35, %36 : vector<8x128xf32>
    %38 = vector.extract_strided_slice %37 {offsets = [0, 0], sizes = [8, 32], strides = [1, 1]} : vector<8x128xf32> to vector<8x32xf32>
    %39 = vector.extract_strided_slice %37 {offsets = [0, 32], sizes = [8, 32], strides = [1, 1]} : vector<8x128xf32> to vector<8x32xf32>
    %40 = vector.extract_strided_slice %37 {offsets = [0, 64], sizes = [8, 32], strides = [1, 1]} : vector<8x128xf32> to vector<8x32xf32>
    %cst_26 = arith.constant 2.000000e+00 : f32
    %41 = vector.broadcast %cst_26 : f32 to vector<8x32xf32>
    %42 = arith.mulf %41, %40 : vector<8x32xf32>
    %cst_27 = arith.constant 1.000000e+00 : f32
    %43 = vector.broadcast %cst_27 : f32 to vector<8x32xf32>
    %44 = arith.subf %42, %43 : vector<8x32xf32>
    %45 = vector.extract_strided_slice %37 {offsets = [0, 96], sizes = [8, 32], strides = [1, 1]} : vector<8x128xf32> to vector<8x32xf32>
    %46 = arith.mulf %39, %1 : vector<8x32xf32>
    %47 = arith.mulf %38, %44 : vector<8x32xf32>
    %48 = arith.addf %46, %47 : vector<8x32xf32>
    %49 = math.tanh %48 : vector<8x32xf32>
    %50 = arith.mulf %45, %49 : vector<8x32xf32>
    %c0_28 = arith.constant 0 : index
    %c0_29 = arith.constant 0 : index
    %51 = vector.load %arg10[%c0_28, %c0_29] : memref<32x128xf32, #tpu.memory_space<vmem>>, vector<32x128xf32>
    %cst_30 = arith.constant dense<0.000000e+00> : vector<8x128xf32>
    %52 = tpu.matmul %50, %51, %cst_30 {dimension_numbers = #tpu.dot_dimension_numbers<[1], [0], [0], [1], [0, 0, 1, 1], [], []>} : vector<8x32xf32>, vector<32x128xf32>, vector<8x128xf32> -> vector<8x128xf32>
    %c0_31 = arith.constant 0 : index
    %c0_32 = arith.constant 0 : index
    %53 = vector.load %arg11[%c0_31, %c0_32] : memref<1x128xf32, #tpu.memory_space<vmem>>, vector<1x128xf32>
    %54 = vector.broadcast %53 : vector<1x128xf32> to vector<8x128xf32>
    %55 = arith.addf %52, %54 : vector<8x128xf32>
    %56 = arith.index_cast %c0_i32 : i32 to index
    %c0_33 = arith.constant 0 : index
    %c0_34 = arith.constant 0 : index
    %57 = vector.load %arg12[%56, %c0_33, %c0_34] : memref<8x8x128xf32, #tpu.memory_space<vmem>>, vector<1x8x128xf32>
    %58 = vector.shape_cast %57 : vector<1x8x128xf32> to vector<8x128xf32>
    %59 = vector.shape_cast %55 : vector<8x128xf32> to vector<1x8x128xf32>
    tpu.vector_store %arg12[%56, %c0_33, %c0_34], %59 {strides = array<i32>} : memref<8x8x128xf32, #tpu.memory_space<vmem>>, vector<1x8x128xf32>,
    %60 = arith.index_cast %c0_i32 : i32 to index
    %c0_35 = arith.constant 0 : index
    %c0_36 = arith.constant 0 : index
    %61 = vector.load %arg13[%60, %c0_35, %c0_36] : memref<8x8x16xf32, #tpu.memory_space<vmem>>, vector<1x8x16xf32>
    %62 = vector.shape_cast %61 : vector<1x8x16xf32> to vector<8x16xf32>
    %63 = vector.shape_cast %19 : vector<8x16xf32> to vector<1x8x16xf32>
    tpu.vector_store %arg13[%60, %c0_35, %c0_36], %63 {strides = array<i32>} : memref<8x8x16xf32, #tpu.memory_space<vmem>>, vector<1x8x16xf32>,
    %64 = arith.index_cast %c0_i32 : i32 to index
    %c0_37 = arith.constant 0 : index
    %c0_38 = arith.constant 0 : index
    %65 = vector.load %arg14[%64, %c0_37, %c0_38] : memref<8x8x32xf32, #tpu.memory_space<vmem>>, vector<1x8x32xf32>
    %66 = vector.shape_cast %65 : vector<1x8x32xf32> to vector<8x32xf32>
    %67 = vector.shape_cast %50 : vector<8x32xf32> to vector<1x8x32xf32>
    tpu.vector_store %arg14[%64, %c0_37, %c0_38], %67 {strides = array<i32>} : memref<8x8x32xf32, #tpu.memory_space<vmem>>, vector<1x8x32xf32>,
    %68 = arith.index_cast %c0_i32 : i32 to index
    %c0_39 = arith.constant 0 : index
    %c0_40 = arith.constant 0 : index
    %69 = vector.load %arg15[%68, %c0_39, %c0_40] : memref<8x8x32xf32, #tpu.memory_space<vmem>>, vector<1x8x32xf32>
    %70 = vector.shape_cast %69 : vector<1x8x32xf32> to vector<8x32xf32>
    %71 = vector.shape_cast %48 : vector<8x32xf32> to vector<1x8x32xf32>
    tpu.vector_store %arg15[%68, %c0_39, %c0_40], %71 {strides = array<i32>} : memref<8x8x32xf32, #tpu.memory_space<vmem>>, vector<1x8x32xf32>,
    %c1_i32 = arith.constant 1 : i32
    %c0_41 = arith.constant 0 : index
    %c0_42 = arith.constant 0 : index
    %72 = vector.load %arg5[%c0_41, %c0_42] : memref<32x640xf32, #tpu.memory_space<vmem>>, vector<32x640xf32>
    %cst_43 = arith.constant dense<0.000000e+00> : vector<8x640xf32>
    %73 = tpu.matmul %50, %72, %cst_43 {dimension_numbers = #tpu.dot_dimension_numbers<[1], [0], [0], [1], [0, 0, 1, 1], [], []>} : vector<8x32xf32>, vector<32x640xf32>, vector<8x640xf32> -> vector<8x640xf32>
    %74 = vector.extract_strided_slice %73 {offsets = [0, 0], sizes = [8, 512], strides = [1, 1]} : vector<8x640xf32> to vector<8x512xf32>
    %75 = vector.extract_strided_slice %73 {offsets = [0, 512], sizes = [8, 128], strides = [1, 1]} : vector<8x640xf32> to vector<8x128xf32>
    %c0_44 = arith.constant 0 : index
    %c0_45 = arith.constant 0 : index
    %76 = vector.load %arg0[%c0_44, %c0_45] : memref<8x512xf32, #tpu.memory_space<vmem>>, vector<8x512xf32>
    %77 = arith.addf %76, %74 : vector<8x512xf32>
    %78 = math.tanh %77 : vector<8x512xf32>
    %c0_46 = arith.constant 0 : index
    %c0_47 = arith.constant 0 : index
    %79 = vector.load %arg6[%c0_46, %c0_47] : memref<512x16xf32, #tpu.memory_space<vmem>>, vector<512x16xf32>
    %cst_48 = arith.constant dense<0.000000e+00> : vector<8x16xf32>
    %80 = tpu.matmul %78, %79, %cst_48 {dimension_numbers = #tpu.dot_dimension_numbers<[1], [0], [0], [1], [0, 0, 1, 1], [], []>} : vector<8x512xf32>, vector<512x16xf32>, vector<8x16xf32> -> vector<8x16xf32>
    %cst_49 = arith.constant dense<0xFF800000> : vector<8xf32>
    %81 = vector.multi_reduction <maximumf>, %80, %cst_49 [1] : vector<8x16xf32> to vector<8xf32>
    %82 = vector.shape_cast %81 : vector<8xf32> to vector<8x1xf32>
    %83 = vector.broadcast %82 : vector<8x1xf32> to vector<8x16xf32>
    %84 = arith.subf %80, %83 : vector<8x16xf32>
    %85 = math.exp %84 : vector<8x16xf32>
    %cst_50 = arith.constant dense<0.000000e+00> : vector<8xf32>
    %86 = vector.multi_reduction <add>, %85, %cst_50 [1] : vector<8x16xf32> to vector<8xf32>
    %87 = vector.shape_cast %86 : vector<8xf32> to vector<8x1xf32>
    %88 = vector.broadcast %87 : vector<8x1xf32> to vector<8x16xf32>
    %89 = arith.divf %85, %88 : vector<8x16xf32>
    %c0_51 = arith.constant 0 : index
    %c0_52 = arith.constant 0 : index
    %90 = vector.load %arg7[%c0_51, %c0_52] : memref<16x128xf32, #tpu.memory_space<vmem>>, vector<16x128xf32>
    %cst_53 = arith.constant dense<0.000000e+00> : vector<8x128xf32>
    %91 = tpu.matmul %89, %90, %cst_53 {dimension_numbers = #tpu.dot_dimension_numbers<[1], [0], [0], [1], [0, 0, 1, 1], [], []>} : vector<8x16xf32>, vector<16x128xf32>, vector<8x128xf32> -> vector<8x128xf32>
    %c0_54 = arith.constant 0 : index
    %c0_55 = arith.constant 0 : index
    %92 = vector.load %arg8[%c0_54, %c0_55] : memref<8x128xf32, #tpu.memory_space<vmem>>, vector<8x128xf32>
    %93 = arith.mulf %91, %92 : vector<8x128xf32>
    %c0_56 = arith.constant 0 : index
    %c0_57 = arith.constant 0 : index
    %94 = vector.load %arg1[%c0_56, %c0_57] : memref<128x32xf32, #tpu.memory_space<vmem>>, vector<128x32xf32>
    %cst_58 = arith.constant dense<0.000000e+00> : vector<8x32xf32>
    %95 = tpu.matmul %93, %94, %cst_58 {dimension_numbers = #tpu.dot_dimension_numbers<[1], [0], [0], [1], [0, 0, 1, 1], [], []>} : vector<8x128xf32>, vector<128x32xf32>, vector<8x32xf32> -> vector<8x32xf32>
    %96 = arith.index_cast %c1_i32 : i32 to index
    %c0_59 = arith.constant 0 : index
    %c0_60 = arith.constant 0 : index
    %97 = vector.load %arg2[%96, %c0_59, %c0_60] : memref<8x8x128xf32, #tpu.memory_space<vmem>>, vector<1x8x128xf32>
    %98 = vector.shape_cast %97 : vector<1x8x128xf32> to vector<8x128xf32>
    %99 = arith.addf %98, %75 : vector<8x128xf32>
    %c0_61 = arith.constant 0 : index
    %c0_62 = arith.constant 0 : index
    %100 = vector.load %arg9[%c0_61, %c0_62] : memref<32x128xf32, #tpu.memory_space<vmem>>, vector<32x128xf32>
    %cst_63 = arith.constant dense<0.000000e+00> : vector<8x128xf32>
    %101 = tpu.matmul %95, %100, %cst_63 {dimension_numbers = #tpu.dot_dimension_numbers<[1], [0], [0], [1], [0, 0, 1, 1], [], []>} : vector<8x32xf32>, vector<32x128xf32>, vector<8x128xf32> -> vector<8x128xf32>
    %102 = arith.addf %99, %101 : vector<8x128xf32>
    %103 = arith.negf %102 : vector<8x128xf32>
    %104 = math.exp %103 : vector<8x128xf32>
    %cst_64 = arith.constant 1.000000e+00 : f32
    %105 = vector.broadcast %cst_64 : f32 to vector<8x128xf32>
    %106 = arith.addf %105, %104 : vector<8x128xf32>
    %107 = arith.divf %105, %106 : vector<8x128xf32>
    %108 = vector.extract_strided_slice %107 {offsets = [0, 0], sizes = [8, 32], strides = [1, 1]} : vector<8x128xf32> to vector<8x32xf32>
    %109 = vector.extract_strided_slice %107 {offsets = [0, 32], sizes = [8, 32], strides = [1, 1]} : vector<8x128xf32> to vector<8x32xf32>
    %110 = vector.extract_strided_slice %107 {offsets = [0, 64], sizes = [8, 32], strides = [1, 1]} : vector<8x128xf32> to vector<8x32xf32>
    %cst_65 = arith.constant 2.000000e+00 : f32
    %111 = vector.broadcast %cst_65 : f32 to vector<8x32xf32>
    %112 = arith.mulf %111, %110 : vector<8x32xf32>
    %cst_66 = arith.constant 1.000000e+00 : f32
    %113 = vector.broadcast %cst_66 : f32 to vector<8x32xf32>
    %114 = arith.subf %112, %113 : vector<8x32xf32>
    %115 = vector.extract_strided_slice %107 {offsets = [0, 96], sizes = [8, 32], strides = [1, 1]} : vector<8x128xf32> to vector<8x32xf32>
    %116 = arith.mulf %109, %48 : vector<8x32xf32>
    %117 = arith.mulf %108, %114 : vector<8x32xf32>
    %118 = arith.addf %116, %117 : vector<8x32xf32>
    %119 = math.tanh %118 : vector<8x32xf32>
    %120 = arith.mulf %115, %119 : vector<8x32xf32>
    %c0_67 = arith.constant 0 : index
    %c0_68 = arith.constant 0 : index
    %121 = vector.load %arg10[%c0_67, %c0_68] : memref<32x128xf32, #tpu.memory_space<vmem>>, vector<32x128xf32>
    %cst_69 = arith.constant dense<0.000000e+00> : vector<8x128xf32>
    %122 = tpu.matmul %120, %121, %cst_69 {dimension_numbers = #tpu.dot_dimension_numbers<[1], [0], [0], [1], [0, 0, 1, 1], [], []>} : vector<8x32xf32>, vector<32x128xf32>, vector<8x128xf32> -> vector<8x128xf32>
    %c0_70 = arith.constant 0 : index
    %c0_71 = arith.constant 0 : index
    %123 = vector.load %arg11[%c0_70, %c0_71] : memref<1x128xf32, #tpu.memory_space<vmem>>, vector<1x128xf32>
    %124 = vector.broadcast %123 : vector<1x128xf32> to vector<8x128xf32>
    %125 = arith.addf %122, %124 : vector<8x128xf32>
    %126 = arith.index_cast %c1_i32 : i32 to index
    %c0_72 = arith.constant 0 : index
    %c0_73 = arith.constant 0 : index
    %127 = vector.load %arg12[%126, %c0_72, %c0_73] : memref<8x8x128xf32, #tpu.memory_space<vmem>>, vector<1x8x128xf32>
    %128 = vector.shape_cast %127 : vector<1x8x128xf32> to vector<8x128xf32>
    %129 = vector.shape_cast %125 : vector<8x128xf32> to vector<1x8x128xf32>
    tpu.vector_store %arg12[%126, %c0_72, %c0_73], %129 {strides = array<i32>} : memref<8x8x128xf32, #tpu.memory_space<vmem>>, vector<1x8x128xf32>,
    %130 = arith.index_cast %c1_i32 : i32 to index
    %c0_74 = arith.constant 0 : index
    %c0_75 = arith.constant 0 : index
    %131 = vector.load %arg13[%130, %c0_74, %c0_75] : memref<8x8x16xf32, #tpu.memory_space<vmem>>, vector<1x8x16xf32>
    %132 = vector.shape_cast %131 : vector<1x8x16xf32> to vector<8x16xf32>
    %133 = vector.shape_cast %89 : vector<8x16xf32> to vector<1x8x16xf32>
    tpu.vector_store %arg13[%130, %c0_74, %c0_75], %133 {strides = array<i32>} : memref<8x8x16xf32, #tpu.memory_space<vmem>>, vector<1x8x16xf32>,
    %134 = arith.index_cast %c1_i32 : i32 to index
    %c0_76 = arith.constant 0 : index
    %c0_77 = arith.constant 0 : index
    %135 = vector.load %arg14[%134, %c0_76, %c0_77] : memref<8x8x32xf32, #tpu.memory_space<vmem>>, vector<1x8x32xf32>
    %136 = vector.shape_cast %135 : vector<1x8x32xf32> to vector<8x32xf32>
    %137 = vector.shape_cast %120 : vector<8x32xf32> to vector<1x8x32xf32>
    tpu.vector_store %arg14[%134, %c0_76, %c0_77], %137 {strides = array<i32>} : memref<8x8x32xf32, #tpu.memory_space<vmem>>, vector<1x8x32xf32>,
    %138 = arith.index_cast %c1_i32 : i32 to index
    %c0_78 = arith.constant 0 : index
    %c0_79 = arith.constant 0 : index
    %139 = vector.load %arg15[%138, %c0_78, %c0_79] : memref<8x8x32xf32, #tpu.memory_space<vmem>>, vector<1x8x32xf32>
    %140 = vector.shape_cast %139 : vector<1x8x32xf32> to vector<8x32xf32>
    %141 = vector.shape_cast %118 : vector<8x32xf32> to vector<1x8x32xf32>
    tpu.vector_store %arg15[%138, %c0_78, %c0_79], %141 {strides = array<i32>} : memref<8x8x32xf32, #tpu.memory_space<vmem>>, vector<1x8x32xf32>,
    %c2_i32 = arith.constant 2 : i32
    %c0_80 = arith.constant 0 : index
    %c0_81 = arith.constant 0 : index
    %142 = vector.load %arg5[%c0_80, %c0_81] : memref<32x640xf32, #tpu.memory_space<vmem>>, vector<32x640xf32>
    %cst_82 = arith.constant dense<0.000000e+00> : vector<8x640xf32>
    %143 = tpu.matmul %120, %142, %cst_82 {dimension_numbers = #tpu.dot_dimension_numbers<[1], [0], [0], [1], [0, 0, 1, 1], [], []>} : vector<8x32xf32>, vector<32x640xf32>, vector<8x640xf32> -> vector<8x640xf32>
    %144 = vector.extract_strided_slice %143 {offsets = [0, 0], sizes = [8, 512], strides = [1, 1]} : vector<8x640xf32> to vector<8x512xf32>
    %145 = vector.extract_strided_slice %143 {offsets = [0, 512], sizes = [8, 128], strides = [1, 1]} : vector<8x640xf32> to vector<8x128xf32>
    %c0_83 = arith.constant 0 : index
    %c0_84 = arith.constant 0 : index
    %146 = vector.load %arg0[%c0_83, %c0_84] : memref<8x512xf32, #tpu.memory_space<vmem>>, vector<8x512xf32>
    %147 = arith.addf %146, %144 : vector<8x512xf32>
    %148 = math.tanh %147 : vector<8x512xf32>
    %c0_85 = arith.constant 0 : index
    %c0_86 = arith.constant 0 : index
    %149 = vector.load %arg6[%c0_85, %c0_86] : memref<512x16xf32, #tpu.memory_space<vmem>>, vector<512x16xf32>
    %cst_87 = arith.constant dense<0.000000e+00> : vector<8x16xf32>
    %150 = tpu.matmul %148, %149, %cst_87 {dimension_numbers = #tpu.dot_dimension_numbers<[1], [0], [0], [1], [0, 0, 1, 1], [], []>} : vector<8x512xf32>, vector<512x16xf32>, vector<8x16xf32> -> vector<8x16xf32>
    %cst_88 = arith.constant dense<0xFF800000> : vector<8xf32>
    %151 = vector.multi_reduction <maximumf>, %150, %cst_88 [1] : vector<8x16xf32> to vector<8xf32>
    %152 = vector.shape_cast %151 : vector<8xf32> to vector<8x1xf32>
    %153 = vector.broadcast %152 : vector<8x1xf32> to vector<8x16xf32>
    %154 = arith.subf %150, %153 : vector<8x16xf32>
    %155 = math.exp %154 : vector<8x16xf32>
    %cst_89 = arith.constant dense<0.000000e+00> : vector<8xf32>
    %156 = vector.multi_reduction <add>, %155, %cst_89 [1] : vector<8x16xf32> to vector<8xf32>
    %157 = vector.shape_cast %156 : vector<8xf32> to vector<8x1xf32>
    %158 = vector.broadcast %157 : vector<8x1xf32> to vector<8x16xf32>
    %159 = arith.divf %155, %158 : vector<8x16xf32>
    %c0_90 = arith.constant 0 : index
    %c0_91 = arith.constant 0 : index
    %160 = vector.load %arg7[%c0_90, %c0_91] : memref<16x128xf32, #tpu.memory_space<vmem>>, vector<16x128xf32>
    %cst_92 = arith.constant dense<0.000000e+00> : vector<8x128xf32>
    %161 = tpu.matmul %159, %160, %cst_92 {dimension_numbers = #tpu.dot_dimension_numbers<[1], [0], [0], [1], [0, 0, 1, 1], [], []>} : vector<8x16xf32>, vector<16x128xf32>, vector<8x128xf32> -> vector<8x128xf32>
    %c0_93 = arith.constant 0 : index
    %c0_94 = arith.constant 0 : index
    %162 = vector.load %arg8[%c0_93, %c0_94] : memref<8x128xf32, #tpu.memory_space<vmem>>, vector<8x128xf32>
    %163 = arith.mulf %161, %162 : vector<8x128xf32>
    %c0_95 = arith.constant 0 : index
    %c0_96 = arith.constant 0 : index
    %164 = vector.load %arg1[%c0_95, %c0_96] : memref<128x32xf32, #tpu.memory_space<vmem>>, vector<128x32xf32>
    %cst_97 = arith.constant dense<0.000000e+00> : vector<8x32xf32>
    %165 = tpu.matmul %163, %164, %cst_97 {dimension_numbers = #tpu.dot_dimension_numbers<[1], [0], [0], [1], [0, 0, 1, 1], [], []>} : vector<8x128xf32>, vector<128x32xf32>, vector<8x32xf32> -> vector<8x32xf32>
    %166 = arith.index_cast %c2_i32 : i32 to index
    %c0_98 = arith.constant 0 : index
    %c0_99 = arith.constant 0 : index
    %167 = vector.load %arg2[%166, %c0_98, %c0_99] : memref<8x8x128xf32, #tpu.memory_space<vmem>>, vector<1x8x128xf32>
    %168 = vector.shape_cast %167 : vector<1x8x128xf32> to vector<8x128xf32>
    %169 = arith.addf %168, %145 : vector<8x128xf32>
    %c0_100 = arith.constant 0 : index
    %c0_101 = arith.constant 0 : index
    %170 = vector.load %arg9[%c0_100, %c0_101] : memref<32x128xf32, #tpu.memory_space<vmem>>, vector<32x128xf32>
    %cst_102 = arith.constant dense<0.000000e+00> : vector<8x128xf32>
    %171 = tpu.matmul %165, %170, %cst_102 {dimension_numbers = #tpu.dot_dimension_numbers<[1], [0], [0], [1], [0, 0, 1, 1], [], []>} : vector<8x32xf32>, vector<32x128xf32>, vector<8x128xf32> -> vector<8x128xf32>
    %172 = arith.addf %169, %171 : vector<8x128xf32>
    %173 = arith.negf %172 : vector<8x128xf32>
    %174 = math.exp %173 : vector<8x128xf32>
    %cst_103 = arith.constant 1.000000e+00 : f32
    %175 = vector.broadcast %cst_103 : f32 to vector<8x128xf32>
    %176 = arith.addf %175, %174 : vector<8x128xf32>
    %177 = arith.divf %175, %176 : vector<8x128xf32>
    %178 = vector.extract_strided_slice %177 {offsets = [0, 0], sizes = [8, 32], strides = [1, 1]} : vector<8x128xf32> to vector<8x32xf32>
    %179 = vector.extract_strided_slice %177 {offsets = [0, 32], sizes = [8, 32], strides = [1, 1]} : vector<8x128xf32> to vector<8x32xf32>
    %180 = vector.extract_strided_slice %177 {offsets = [0, 64], sizes = [8, 32], strides = [1, 1]} : vector<8x128xf32> to vector<8x32xf32>
    %cst_104 = arith.constant 2.000000e+00 : f32
    %181 = vector.broadcast %cst_104 : f32 to vector<8x32xf32>
    %182 = arith.mulf %181, %180 : vector<8x32xf32>
    %cst_105 = arith.constant 1.000000e+00 : f32
    %183 = vector.broadcast %cst_105 : f32 to vector<8x32xf32>
    %184 = arith.subf %182, %183 : vector<8x32xf32>
    %185 = vector.extract_strided_slice %177 {offsets = [0, 96], sizes = [8, 32], strides = [1, 1]} : vector<8x128xf32> to vector<8x32xf32>
    %186 = arith.mulf %179, %118 : vector<8x32xf32>
    %187 = arith.mulf %178, %184 : vector<8x32xf32>
    %188 = arith.addf %186, %187 : vector<8x32xf32>
    %189 = math.tanh %188 : vector<8x32xf32>
    %190 = arith.mulf %185, %189 : vector<8x32xf32>
    %c0_106 = arith.constant 0 : index
    %c0_107 = arith.constant 0 : index
    %191 = vector.load %arg10[%c0_106, %c0_107] : memref<32x128xf32, #tpu.memory_space<vmem>>, vector<32x128xf32>
    %cst_108 = arith.constant dense<0.000000e+00> : vector<8x128xf32>
    %192 = tpu.matmul %190, %191, %cst_108 {dimension_numbers = #tpu.dot_dimension_numbers<[1], [0], [0], [1], [0, 0, 1, 1], [], []>} : vector<8x32xf32>, vector<32x128xf32>, vector<8x128xf32> -> vector<8x128xf32>
    %c0_109 = arith.constant 0 : index
    %c0_110 = arith.constant 0 : index
    %193 = vector.load %arg11[%c0_109, %c0_110] : memref<1x128xf32, #tpu.memory_space<vmem>>, vector<1x128xf32>
    %194 = vector.broadcast %193 : vector<1x128xf32> to vector<8x128xf32>
    %195 = arith.addf %192, %194 : vector<8x128xf32>
    %196 = arith.index_cast %c2_i32 : i32 to index
    %c0_111 = arith.constant 0 : index
    %c0_112 = arith.constant 0 : index
    %197 = vector.load %arg12[%196, %c0_111, %c0_112] : memref<8x8x128xf32, #tpu.memory_space<vmem>>, vector<1x8x128xf32>
    %198 = vector.shape_cast %197 : vector<1x8x128xf32> to vector<8x128xf32>
    %199 = vector.shape_cast %195 : vector<8x128xf32> to vector<1x8x128xf32>
    tpu.vector_store %arg12[%196, %c0_111, %c0_112], %199 {strides = array<i32>} : memref<8x8x128xf32, #tpu.memory_space<vmem>>, vector<1x8x128xf32>,
    %200 = arith.index_cast %c2_i32 : i32 to index
    %c0_113 = arith.constant 0 : index
    %c0_114 = arith.constant 0 : index
    %201 = vector.load %arg13[%200, %c0_113, %c0_114] : memref<8x8x16xf32, #tpu.memory_space<vmem>>, vector<1x8x16xf32>
    %202 = vector.shape_cast %201 : vector<1x8x16xf32> to vector<8x16xf32>
    %203 = vector.shape_cast %159 : vector<8x16xf32> to vector<1x8x16xf32>
    tpu.vector_store %arg13[%200, %c0_113, %c0_114], %203 {strides = array<i32>} : memref<8x8x16xf32, #tpu.memory_space<vmem>>, vector<1x8x16xf32>,
    %204 = arith.index_cast %c2_i32 : i32 to index
    %c0_115 = arith.constant 0 : index
    %c0_116 = arith.constant 0 : index
    %205 = vector.load %arg14[%204, %c0_115, %c0_116] : memref<8x8x32xf32, #tpu.memory_space<vmem>>, vector<1x8x32xf32>
    %206 = vector.shape_cast %205 : vector<1x8x32xf32> to vector<8x32xf32>
    %207 = vector.shape_cast %190 : vector<8x32xf32> to vector<1x8x32xf32>
    tpu.vector_store %arg14[%204, %c0_115, %c0_116], %207 {strides = array<i32>} : memref<8x8x32xf32, #tpu.memory_space<vmem>>, vector<1x8x32xf32>,
    %208 = arith.index_cast %c2_i32 : i32 to index
    %c0_117 = arith.constant 0 : index
    %c0_118 = arith.constant 0 : index
    %209 = vector.load %arg15[%208, %c0_117, %c0_118] : memref<8x8x32xf32, #tpu.memory_space<vmem>>, vector<1x8x32xf32>
    %210 = vector.shape_cast %209 : vector<1x8x32xf32> to vector<8x32xf32>
    %211 = vector.shape_cast %188 : vector<8x32xf32> to vector<1x8x32xf32>
    tpu.vector_store %arg15[%208, %c0_117, %c0_118], %211 {strides = array<i32>} : memref<8x8x32xf32, #tpu.memory_space<vmem>>, vector<1x8x32xf32>,
    %c3_i32 = arith.constant 3 : i32
    %c0_119 = arith.constant 0 : index
    %c0_120 = arith.constant 0 : index
    %212 = vector.load %arg5[%c0_119, %c0_120] : memref<32x640xf32, #tpu.memory_space<vmem>>, vector<32x640xf32>
    %cst_121 = arith.constant dense<0.000000e+00> : vector<8x640xf32>
    %213 = tpu.matmul %190, %212, %cst_121 {dimension_numbers = #tpu.dot_dimension_numbers<[1], [0], [0], [1], [0, 0, 1, 1], [], []>} : vector<8x32xf32>, vector<32x640xf32>, vector<8x640xf32> -> vector<8x640xf32>
    %214 = vector.extract_strided_slice %213 {offsets = [0, 0], sizes = [8, 512], strides = [1, 1]} : vector<8x640xf32> to vector<8x512xf32>
    %215 = vector.extract_strided_slice %213 {offsets = [0, 512], sizes = [8, 128], strides = [1, 1]} : vector<8x640xf32> to vector<8x128xf32>
    %c0_122 = arith.constant 0 : index
    %c0_123 = arith.constant 0 : index
    %216 = vector.load %arg0[%c0_122, %c0_123] : memref<8x512xf32, #tpu.memory_space<vmem>>, vector<8x512xf32>
    %217 = arith.addf %216, %214 : vector<8x512xf32>
    %218 = math.tanh %217 : vector<8x512xf32>
    %c0_124 = arith.constant 0 : index
    %c0_125 = arith.constant 0 : index
    %219 = vector.load %arg6[%c0_124, %c0_125] : memref<512x16xf32, #tpu.memory_space<vmem>>, vector<512x16xf32>
    %cst_126 = arith.constant dense<0.000000e+00> : vector<8x16xf32>
    %220 = tpu.matmul %218, %219, %cst_126 {dimension_numbers = #tpu.dot_dimension_numbers<[1], [0], [0], [1], [0, 0, 1, 1], [], []>} : vector<8x512xf32>, vector<512x16xf32>, vector<8x16xf32> -> vector<8x16xf32>
    %cst_127 = arith.constant dense<0xFF800000> : vector<8xf32>
    %221 = vector.multi_reduction <maximumf>, %220, %cst_127 [1] : vector<8x16xf32> to vector<8xf32>
    %222 = vector.shape_cast %221 : vector<8xf32> to vector<8x1xf32>
    %223 = vector.broadcast %222 : vector<8x1xf32> to vector<8x16xf32>
    %224 = arith.subf %220, %223 : vector<8x16xf32>
    %225 = math.exp %224 : vector<8x16xf32>
    %cst_128 = arith.constant dense<0.000000e+00> : vector<8xf32>
    %226 = vector.multi_reduction <add>, %225, %cst_128 [1] : vector<8x16xf32> to vector<8xf32>
    %227 = vector.shape_cast %226 : vector<8xf32> to vector<8x1xf32>
    %228 = vector.broadcast %227 : vector<8x1xf32> to vector<8x16xf32>
    %229 = arith.divf %225, %228 : vector<8x16xf32>
    %c0_129 = arith.constant 0 : index
    %c0_130 = arith.constant 0 : index
    %230 = vector.load %arg7[%c0_129, %c0_130] : memref<16x128xf32, #tpu.memory_space<vmem>>, vector<16x128xf32>
    %cst_131 = arith.constant dense<0.000000e+00> : vector<8x128xf32>
    %231 = tpu.matmul %229, %230, %cst_131 {dimension_numbers = #tpu.dot_dimension_numbers<[1], [0], [0], [1], [0, 0, 1, 1], [], []>} : vector<8x16xf32>, vector<16x128xf32>, vector<8x128xf32> -> vector<8x128xf32>
    %c0_132 = arith.constant 0 : index
    %c0_133 = arith.constant 0 : index
    %232 = vector.load %arg8[%c0_132, %c0_133] : memref<8x128xf32, #tpu.memory_space<vmem>>, vector<8x128xf32>
    %233 = arith.mulf %231, %232 : vector<8x128xf32>
    %c0_134 = arith.constant 0 : index
    %c0_135 = arith.constant 0 : index
    %234 = vector.load %arg1[%c0_134, %c0_135] : memref<128x32xf32, #tpu.memory_space<vmem>>, vector<128x32xf32>
    %cst_136 = arith.constant dense<0.000000e+00> : vector<8x32xf32>
    %235 = tpu.matmul %233, %234, %cst_136 {dimension_numbers = #tpu.dot_dimension_numbers<[1], [0], [0], [1], [0, 0, 1, 1], [], []>} : vector<8x128xf32>, vector<128x32xf32>, vector<8x32xf32> -> vector<8x32xf32>
    %236 = arith.index_cast %c3_i32 : i32 to index
    %c0_137 = arith.constant 0 : index
    %c0_138 = arith.constant 0 : index
    %237 = vector.load %arg2[%236, %c0_137, %c0_138] : memref<8x8x128xf32, #tpu.memory_space<vmem>>, vector<1x8x128xf32>
    %238 = vector.shape_cast %237 : vector<1x8x128xf32> to vector<8x128xf32>
    %239 = arith.addf %238, %215 : vector<8x128xf32>
    %c0_139 = arith.constant 0 : index
    %c0_140 = arith.constant 0 : index
    %240 = vector.load %arg9[%c0_139, %c0_140] : memref<32x128xf32, #tpu.memory_space<vmem>>, vector<32x128xf32>
    %cst_141 = arith.constant dense<0.000000e+00> : vector<8x128xf32>
    %241 = tpu.matmul %235, %240, %cst_141 {dimension_numbers = #tpu.dot_dimension_numbers<[1], [0], [0], [1], [0, 0, 1, 1], [], []>} : vector<8x32xf32>, vector<32x128xf32>, vector<8x128xf32> -> vector<8x128xf32>
    %242 = arith.addf %239, %241 : vector<8x128xf32>
    %243 = arith.negf %242 : vector<8x128xf32>
    %244 = math.exp %243 : vector<8x128xf32>
    %cst_142 = arith.constant 1.000000e+00 : f32
    %245 = vector.broadcast %cst_142 : f32 to vector<8x128xf32>
    %246 = arith.addf %245, %244 : vector<8x128xf32>
    %247 = arith.divf %245, %246 : vector<8x128xf32>
    %248 = vector.extract_strided_slice %247 {offsets = [0, 0], sizes = [8, 32], strides = [1, 1]} : vector<8x128xf32> to vector<8x32xf32>
    %249 = vector.extract_strided_slice %247 {offsets = [0, 32], sizes = [8, 32], strides = [1, 1]} : vector<8x128xf32> to vector<8x32xf32>
    %250 = vector.extract_strided_slice %247 {offsets = [0, 64], sizes = [8, 32], strides = [1, 1]} : vector<8x128xf32> to vector<8x32xf32>
    %cst_143 = arith.constant 2.000000e+00 : f32
    %251 = vector.broadcast %cst_143 : f32 to vector<8x32xf32>
    %252 = arith.mulf %251, %250 : vector<8x32xf32>
    %cst_144 = arith.constant 1.000000e+00 : f32
    %253 = vector.broadcast %cst_144 : f32 to vector<8x32xf32>
    %254 = arith.subf %252, %253 : vector<8x32xf32>
    %255 = vector.extract_strided_slice %247 {offsets = [0, 96], sizes = [8, 32], strides = [1, 1]} : vector<8x128xf32> to vector<8x32xf32>
    %256 = arith.mulf %249, %188 : vector<8x32xf32>
    %257 = arith.mulf %248, %254 : vector<8x32xf32>
    %258 = arith.addf %256, %257 : vector<8x32xf32>
    %259 = math.tanh %258 : vector<8x32xf32>
    %260 = arith.mulf %255, %259 : vector<8x32xf32>
    %c0_145 = arith.constant 0 : index
    %c0_146 = arith.constant 0 : index
    %261 = vector.load %arg10[%c0_145, %c0_146] : memref<32x128xf32, #tpu.memory_space<vmem>>, vector<32x128xf32>
    %cst_147 = arith.constant dense<0.000000e+00> : vector<8x128xf32>
    %262 = tpu.matmul %260, %261, %cst_147 {dimension_numbers = #tpu.dot_dimension_numbers<[1], [0], [0], [1], [0, 0, 1, 1], [], []>} : vector<8x32xf32>, vector<32x128xf32>, vector<8x128xf32> -> vector<8x128xf32>
    %c0_148 = arith.constant 0 : index
    %c0_149 = arith.constant 0 : index
    %263 = vector.load %arg11[%c0_148, %c0_149] : memref<1x128xf32, #tpu.memory_space<vmem>>, vector<1x128xf32>
    %264 = vector.broadcast %263 : vector<1x128xf32> to vector<8x128xf32>
    %265 = arith.addf %262, %264 : vector<8x128xf32>
    %266 = arith.index_cast %c3_i32 : i32 to index
    %c0_150 = arith.constant 0 : index
    %c0_151 = arith.constant 0 : index
    %267 = vector.load %arg12[%266, %c0_150, %c0_151] : memref<8x8x128xf32, #tpu.memory_space<vmem>>, vector<1x8x128xf32>
    %268 = vector.shape_cast %267 : vector<1x8x128xf32> to vector<8x128xf32>
    %269 = vector.shape_cast %265 : vector<8x128xf32> to vector<1x8x128xf32>
    tpu.vector_store %arg12[%266, %c0_150, %c0_151], %269 {strides = array<i32>} : memref<8x8x128xf32, #tpu.memory_space<vmem>>, vector<1x8x128xf32>,
    %270 = arith.index_cast %c3_i32 : i32 to index
    %c0_152 = arith.constant 0 : index
    %c0_153 = arith.constant 0 : index
    %271 = vector.load %arg13[%270, %c0_152, %c0_153] : memref<8x8x16xf32, #tpu.memory_space<vmem>>, vector<1x8x16xf32>
    %272 = vector.shape_cast %271 : vector<1x8x16xf32> to vector<8x16xf32>
    %273 = vector.shape_cast %229 : vector<8x16xf32> to vector<1x8x16xf32>
    tpu.vector_store %arg13[%270, %c0_152, %c0_153], %273 {strides = array<i32>} : memref<8x8x16xf32, #tpu.memory_space<vmem>>, vector<1x8x16xf32>,
    %274 = arith.index_cast %c3_i32 : i32 to index
    %c0_154 = arith.constant 0 : index
    %c0_155 = arith.constant 0 : index
    %275 = vector.load %arg14[%274, %c0_154, %c0_155] : memref<8x8x32xf32, #tpu.memory_space<vmem>>, vector<1x8x32xf32>
    %276 = vector.shape_cast %275 : vector<1x8x32xf32> to vector<8x32xf32>
    %277 = vector.shape_cast %260 : vector<8x32xf32> to vector<1x8x32xf32>
    tpu.vector_store %arg14[%274, %c0_154, %c0_155], %277 {strides = array<i32>} : memref<8x8x32xf32, #tpu.memory_space<vmem>>, vector<1x8x32xf32>,
    %278 = arith.index_cast %c3_i32 : i32 to index
    %c0_156 = arith.constant 0 : index
    %c0_157 = arith.constant 0 : index
    %279 = vector.load %arg15[%278, %c0_156, %c0_157] : memref<8x8x32xf32, #tpu.memory_space<vmem>>, vector<1x8x32xf32>
    %280 = vector.shape_cast %279 : vector<1x8x32xf32> to vector<8x32xf32>
    %281 = vector.shape_cast %258 : vector<8x32xf32> to vector<1x8x32xf32>
    tpu.vector_store %arg15[%278, %c0_156, %c0_157], %281 {strides = array<i32>} : memref<8x8x32xf32, #tpu.memory_space<vmem>>, vector<1x8x32xf32>,
    %c4_i32 = arith.constant 4 : i32
    %c0_158 = arith.constant 0 : index
    %c0_159 = arith.constant 0 : index
    %282 = vector.load %arg5[%c0_158, %c0_159] : memref<32x640xf32, #tpu.memory_space<vmem>>, vector<32x640xf32>
    %cst_160 = arith.constant dense<0.000000e+00> : vector<8x640xf32>
    %283 = tpu.matmul %260, %282, %cst_160 {dimension_numbers = #tpu.dot_dimension_numbers<[1], [0], [0], [1], [0, 0, 1, 1], [], []>} : vector<8x32xf32>, vector<32x640xf32>, vector<8x640xf32> -> vector<8x640xf32>
    %284 = vector.extract_strided_slice %283 {offsets = [0, 0], sizes = [8, 512], strides = [1, 1]} : vector<8x640xf32> to vector<8x512xf32>
    %285 = vector.extract_strided_slice %283 {offsets = [0, 512], sizes = [8, 128], strides = [1, 1]} : vector<8x640xf32> to vector<8x128xf32>
    %c0_161 = arith.constant 0 : index
    %c0_162 = arith.constant 0 : index
    %286 = vector.load %arg0[%c0_161, %c0_162] : memref<8x512xf32, #tpu.memory_space<vmem>>, vector<8x512xf32>
    %287 = arith.addf %286, %284 : vector<8x512xf32>
    %288 = math.tanh %287 : vector<8x512xf32>
    %c0_163 = arith.constant 0 : index
    %c0_164 = arith.constant 0 : index
    %289 = vector.load %arg6[%c0_163, %c0_164] : memref<512x16xf32, #tpu.memory_space<vmem>>, vector<512x16xf32>
    %cst_165 = arith.constant dense<0.000000e+00> : vector<8x16xf32>
    %290 = tpu.matmul %288, %289, %cst_165 {dimension_numbers = #tpu.dot_dimension_numbers<[1], [0], [0], [1], [0, 0, 1, 1], [], []>} : vector<8x512xf32>, vector<512x16xf32>, vector<8x16xf32> -> vector<8x16xf32>
    %cst_166 = arith.constant dense<0xFF800000> : vector<8xf32>
    %291 = vector.multi_reduction <maximumf>, %290, %cst_166 [1] : vector<8x16xf32> to vector<8xf32>
    %292 = vector.shape_cast %291 : vector<8xf32> to vector<8x1xf32>
    %293 = vector.broadcast %292 : vector<8x1xf32> to vector<8x16xf32>
    %294 = arith.subf %290, %293 : vector<8x16xf32>
    %295 = math.exp %294 : vector<8x16xf32>
    %cst_167 = arith.constant dense<0.000000e+00> : vector<8xf32>
    %296 = vector.multi_reduction <add>, %295, %cst_167 [1] : vector<8x16xf32> to vector<8xf32>
    %297 = vector.shape_cast %296 : vector<8xf32> to vector<8x1xf32>
    %298 = vector.broadcast %297 : vector<8x1xf32> to vector<8x16xf32>
    %299 = arith.divf %295, %298 : vector<8x16xf32>
    %c0_168 = arith.constant 0 : index
    %c0_169 = arith.constant 0 : index
    %300 = vector.load %arg7[%c0_168, %c0_169] : memref<16x128xf32, #tpu.memory_space<vmem>>, vector<16x128xf32>
    %cst_170 = arith.constant dense<0.000000e+00> : vector<8x128xf32>
    %301 = tpu.matmul %299, %300, %cst_170 {dimension_numbers = #tpu.dot_dimension_numbers<[1], [0], [0], [1], [0, 0, 1, 1], [], []>} : vector<8x16xf32>, vector<16x128xf32>, vector<8x128xf32> -> vector<8x128xf32>
    %c0_171 = arith.constant 0 : index
    %c0_172 = arith.constant 0 : index
    %302 = vector.load %arg8[%c0_171, %c0_172] : memref<8x128xf32, #tpu.memory_space<vmem>>, vector<8x128xf32>
    %303 = arith.mulf %301, %302 : vector<8x128xf32>
    %c0_173 = arith.constant 0 : index
    %c0_174 = arith.constant 0 : index
    %304 = vector.load %arg1[%c0_173, %c0_174] : memref<128x32xf32, #tpu.memory_space<vmem>>, vector<128x32xf32>
    %cst_175 = arith.constant dense<0.000000e+00> : vector<8x32xf32>
    %305 = tpu.matmul %303, %304, %cst_175 {dimension_numbers = #tpu.dot_dimension_numbers<[1], [0], [0], [1], [0, 0, 1, 1], [], []>} : vector<8x128xf32>, vector<128x32xf32>, vector<8x32xf32> -> vector<8x32xf32>
    %306 = arith.index_cast %c4_i32 : i32 to index
    %c0_176 = arith.constant 0 : index
    %c0_177 = arith.constant 0 : index
    %307 = vector.load %arg2[%306, %c0_176, %c0_177] : memref<8x8x128xf32, #tpu.memory_space<vmem>>, vector<1x8x128xf32>
    %308 = vector.shape_cast %307 : vector<1x8x128xf32> to vector<8x128xf32>
    %309 = arith.addf %308, %285 : vector<8x128xf32>
    %c0_178 = arith.constant 0 : index
    %c0_179 = arith.constant 0 : index
    %310 = vector.load %arg9[%c0_178, %c0_179] : memref<32x128xf32, #tpu.memory_space<vmem>>, vector<32x128xf32>
    %cst_180 = arith.constant dense<0.000000e+00> : vector<8x128xf32>
    %311 = tpu.matmul %305, %310, %cst_180 {dimension_numbers = #tpu.dot_dimension_numbers<[1], [0], [0], [1], [0, 0, 1, 1], [], []>} : vector<8x32xf32>, vector<32x128xf32>, vector<8x128xf32> -> vector<8x128xf32>
    %312 = arith.addf %309, %311 : vector<8x128xf32>
    %313 = arith.negf %312 : vector<8x128xf32>
    %314 = math.exp %313 : vector<8x128xf32>
    %cst_181 = arith.constant 1.000000e+00 : f32
    %315 = vector.broadcast %cst_181 : f32 to vector<8x128xf32>
    %316 = arith.addf %315, %314 : vector<8x128xf32>
    %317 = arith.divf %315, %316 : vector<8x128xf32>
    %318 = vector.extract_strided_slice %317 {offsets = [0, 0], sizes = [8, 32], strides = [1, 1]} : vector<8x128xf32> to vector<8x32xf32>
    %319 = vector.extract_strided_slice %317 {offsets = [0, 32], sizes = [8, 32], strides = [1, 1]} : vector<8x128xf32> to vector<8x32xf32>
    %320 = vector.extract_strided_slice %317 {offsets = [0, 64], sizes = [8, 32], strides = [1, 1]} : vector<8x128xf32> to vector<8x32xf32>
    %cst_182 = arith.constant 2.000000e+00 : f32
    %321 = vector.broadcast %cst_182 : f32 to vector<8x32xf32>
    %322 = arith.mulf %321, %320 : vector<8x32xf32>
    %cst_183 = arith.constant 1.000000e+00 : f32
    %323 = vector.broadcast %cst_183 : f32 to vector<8x32xf32>
    %324 = arith.subf %322, %323 : vector<8x32xf32>
    %325 = vector.extract_strided_slice %317 {offsets = [0, 96], sizes = [8, 32], strides = [1, 1]} : vector<8x128xf32> to vector<8x32xf32>
    %326 = arith.mulf %319, %258 : vector<8x32xf32>
    %327 = arith.mulf %318, %324 : vector<8x32xf32>
    %328 = arith.addf %326, %327 : vector<8x32xf32>
    %329 = math.tanh %328 : vector<8x32xf32>
    %330 = arith.mulf %325, %329 : vector<8x32xf32>
    %c0_184 = arith.constant 0 : index
    %c0_185 = arith.constant 0 : index
    %331 = vector.load %arg10[%c0_184, %c0_185] : memref<32x128xf32, #tpu.memory_space<vmem>>, vector<32x128xf32>
    %cst_186 = arith.constant dense<0.000000e+00> : vector<8x128xf32>
    %332 = tpu.matmul %330, %331, %cst_186 {dimension_numbers = #tpu.dot_dimension_numbers<[1], [0], [0], [1], [0, 0, 1, 1], [], []>} : vector<8x32xf32>, vector<32x128xf32>, vector<8x128xf32> -> vector<8x128xf32>
    %c0_187 = arith.constant 0 : index
    %c0_188 = arith.constant 0 : index
    %333 = vector.load %arg11[%c0_187, %c0_188] : memref<1x128xf32, #tpu.memory_space<vmem>>, vector<1x128xf32>
    %334 = vector.broadcast %333 : vector<1x128xf32> to vector<8x128xf32>
    %335 = arith.addf %332, %334 : vector<8x128xf32>
    %336 = arith.index_cast %c4_i32 : i32 to index
    %c0_189 = arith.constant 0 : index
    %c0_190 = arith.constant 0 : index
    %337 = vector.load %arg12[%336, %c0_189, %c0_190] : memref<8x8x128xf32, #tpu.memory_space<vmem>>, vector<1x8x128xf32>
    %338 = vector.shape_cast %337 : vector<1x8x128xf32> to vector<8x128xf32>
    %339 = vector.shape_cast %335 : vector<8x128xf32> to vector<1x8x128xf32>
    tpu.vector_store %arg12[%336, %c0_189, %c0_190], %339 {strides = array<i32>} : memref<8x8x128xf32, #tpu.memory_space<vmem>>, vector<1x8x128xf32>,
    %340 = arith.index_cast %c4_i32 : i32 to index
    %c0_191 = arith.constant 0 : index
    %c0_192 = arith.constant 0 : index
    %341 = vector.load %arg13[%340, %c0_191, %c0_192] : memref<8x8x16xf32, #tpu.memory_space<vmem>>, vector<1x8x16xf32>
    %342 = vector.shape_cast %341 : vector<1x8x16xf32> to vector<8x16xf32>
    %343 = vector.shape_cast %299 : vector<8x16xf32> to vector<1x8x16xf32>
    tpu.vector_store %arg13[%340, %c0_191, %c0_192], %343 {strides = array<i32>} : memref<8x8x16xf32, #tpu.memory_space<vmem>>, vector<1x8x16xf32>,
    %344 = arith.index_cast %c4_i32 : i32 to index
    %c0_193 = arith.constant 0 : index
    %c0_194 = arith.constant 0 : index
    %345 = vector.load %arg14[%344, %c0_193, %c0_194] : memref<8x8x32xf32, #tpu.memory_space<vmem>>, vector<1x8x32xf32>
    %346 = vector.shape_cast %345 : vector<1x8x32xf32> to vector<8x32xf32>
    %347 = vector.shape_cast %330 : vector<8x32xf32> to vector<1x8x32xf32>
    tpu.vector_store %arg14[%344, %c0_193, %c0_194], %347 {strides = array<i32>} : memref<8x8x32xf32, #tpu.memory_space<vmem>>, vector<1x8x32xf32>,
    %348 = arith.index_cast %c4_i32 : i32 to index
    %c0_195 = arith.constant 0 : index
    %c0_196 = arith.constant 0 : index
    %349 = vector.load %arg15[%348, %c0_195, %c0_196] : memref<8x8x32xf32, #tpu.memory_space<vmem>>, vector<1x8x32xf32>
    %350 = vector.shape_cast %349 : vector<1x8x32xf32> to vector<8x32xf32>
    %351 = vector.shape_cast %328 : vector<8x32xf32> to vector<1x8x32xf32>
    tpu.vector_store %arg15[%348, %c0_195, %c0_196], %351 {strides = array<i32>} : memref<8x8x32xf32, #tpu.memory_space<vmem>>, vector<1x8x32xf32>,
    %c5_i32 = arith.constant 5 : i32
    %c0_197 = arith.constant 0 : index
    %c0_198 = arith.constant 0 : index
    %352 = vector.load %arg5[%c0_197, %c0_198] : memref<32x640xf32, #tpu.memory_space<vmem>>, vector<32x640xf32>
    %cst_199 = arith.constant dense<0.000000e+00> : vector<8x640xf32>
    %353 = tpu.matmul %330, %352, %cst_199 {dimension_numbers = #tpu.dot_dimension_numbers<[1], [0], [0], [1], [0, 0, 1, 1], [], []>} : vector<8x32xf32>, vector<32x640xf32>, vector<8x640xf32> -> vector<8x640xf32>
    %354 = vector.extract_strided_slice %353 {offsets = [0, 0], sizes = [8, 512], strides = [1, 1]} : vector<8x640xf32> to vector<8x512xf32>
    %355 = vector.extract_strided_slice %353 {offsets = [0, 512], sizes = [8, 128], strides = [1, 1]} : vector<8x640xf32> to vector<8x128xf32>
    %c0_200 = arith.constant 0 : index
    %c0_201 = arith.constant 0 : index
    %356 = vector.load %arg0[%c0_200, %c0_201] : memref<8x512xf32, #tpu.memory_space<vmem>>, vector<8x512xf32>
    %357 = arith.addf %356, %354 : vector<8x512xf32>
    %358 = math.tanh %357 : vector<8x512xf32>
    %c0_202 = arith.constant 0 : index
    %c0_203 = arith.constant 0 : index
    %359 = vector.load %arg6[%c0_202, %c0_203] : memref<512x16xf32, #tpu.memory_space<vmem>>, vector<512x16xf32>
    %cst_204 = arith.constant dense<0.000000e+00> : vector<8x16xf32>
    %360 = tpu.matmul %358, %359, %cst_204 {dimension_numbers = #tpu.dot_dimension_numbers<[1], [0], [0], [1], [0, 0, 1, 1], [], []>} : vector<8x512xf32>, vector<512x16xf32>, vector<8x16xf32> -> vector<8x16xf32>
    %cst_205 = arith.constant dense<0xFF800000> : vector<8xf32>
    %361 = vector.multi_reduction <maximumf>, %360, %cst_205 [1] : vector<8x16xf32> to vector<8xf32>
    %362 = vector.shape_cast %361 : vector<8xf32> to vector<8x1xf32>
    %363 = vector.broadcast %362 : vector<8x1xf32> to vector<8x16xf32>
    %364 = arith.subf %360, %363 : vector<8x16xf32>
    %365 = math.exp %364 : vector<8x16xf32>
    %cst_206 = arith.constant dense<0.000000e+00> : vector<8xf32>
    %366 = vector.multi_reduction <add>, %365, %cst_206 [1] : vector<8x16xf32> to vector<8xf32>
    %367 = vector.shape_cast %366 : vector<8xf32> to vector<8x1xf32>
    %368 = vector.broadcast %367 : vector<8x1xf32> to vector<8x16xf32>
    %369 = arith.divf %365, %368 : vector<8x16xf32>
    %c0_207 = arith.constant 0 : index
    %c0_208 = arith.constant 0 : index
    %370 = vector.load %arg7[%c0_207, %c0_208] : memref<16x128xf32, #tpu.memory_space<vmem>>, vector<16x128xf32>
    %cst_209 = arith.constant dense<0.000000e+00> : vector<8x128xf32>
    %371 = tpu.matmul %369, %370, %cst_209 {dimension_numbers = #tpu.dot_dimension_numbers<[1], [0], [0], [1], [0, 0, 1, 1], [], []>} : vector<8x16xf32>, vector<16x128xf32>, vector<8x128xf32> -> vector<8x128xf32>
    %c0_210 = arith.constant 0 : index
    %c0_211 = arith.constant 0 : index
    %372 = vector.load %arg8[%c0_210, %c0_211] : memref<8x128xf32, #tpu.memory_space<vmem>>, vector<8x128xf32>
    %373 = arith.mulf %371, %372 : vector<8x128xf32>
    %c0_212 = arith.constant 0 : index
    %c0_213 = arith.constant 0 : index
    %374 = vector.load %arg1[%c0_212, %c0_213] : memref<128x32xf32, #tpu.memory_space<vmem>>, vector<128x32xf32>
    %cst_214 = arith.constant dense<0.000000e+00> : vector<8x32xf32>
    %375 = tpu.matmul %373, %374, %cst_214 {dimension_numbers = #tpu.dot_dimension_numbers<[1], [0], [0], [1], [0, 0, 1, 1], [], []>} : vector<8x128xf32>, vector<128x32xf32>, vector<8x32xf32> -> vector<8x32xf32>
    %376 = arith.index_cast %c5_i32 : i32 to index
    %c0_215 = arith.constant 0 : index
    %c0_216 = arith.constant 0 : index
    %377 = vector.load %arg2[%376, %c0_215, %c0_216] : memref<8x8x128xf32, #tpu.memory_space<vmem>>, vector<1x8x128xf32>
    %378 = vector.shape_cast %377 : vector<1x8x128xf32> to vector<8x128xf32>
    %379 = arith.addf %378, %355 : vector<8x128xf32>
    %c0_217 = arith.constant 0 : index
    %c0_218 = arith.constant 0 : index
    %380 = vector.load %arg9[%c0_217, %c0_218] : memref<32x128xf32, #tpu.memory_space<vmem>>, vector<32x128xf32>
    %cst_219 = arith.constant dense<0.000000e+00> : vector<8x128xf32>
    %381 = tpu.matmul %375, %380, %cst_219 {dimension_numbers = #tpu.dot_dimension_numbers<[1], [0], [0], [1], [0, 0, 1, 1], [], []>} : vector<8x32xf32>, vector<32x128xf32>, vector<8x128xf32> -> vector<8x128xf32>
    %382 = arith.addf %379, %381 : vector<8x128xf32>
    %383 = arith.negf %382 : vector<8x128xf32>
    %384 = math.exp %383 : vector<8x128xf32>
    %cst_220 = arith.constant 1.000000e+00 : f32
    %385 = vector.broadcast %cst_220 : f32 to vector<8x128xf32>
    %386 = arith.addf %385, %384 : vector<8x128xf32>
    %387 = arith.divf %385, %386 : vector<8x128xf32>
    %388 = vector.extract_strided_slice %387 {offsets = [0, 0], sizes = [8, 32], strides = [1, 1]} : vector<8x128xf32> to vector<8x32xf32>
    %389 = vector.extract_strided_slice %387 {offsets = [0, 32], sizes = [8, 32], strides = [1, 1]} : vector<8x128xf32> to vector<8x32xf32>
    %390 = vector.extract_strided_slice %387 {offsets = [0, 64], sizes = [8, 32], strides = [1, 1]} : vector<8x128xf32> to vector<8x32xf32>
    %cst_221 = arith.constant 2.000000e+00 : f32
    %391 = vector.broadcast %cst_221 : f32 to vector<8x32xf32>
    %392 = arith.mulf %391, %390 : vector<8x32xf32>
    %cst_222 = arith.constant 1.000000e+00 : f32
    %393 = vector.broadcast %cst_222 : f32 to vector<8x32xf32>
    %394 = arith.subf %392, %393 : vector<8x32xf32>
    %395 = vector.extract_strided_slice %387 {offsets = [0, 96], sizes = [8, 32], strides = [1, 1]} : vector<8x128xf32> to vector<8x32xf32>
    %396 = arith.mulf %389, %328 : vector<8x32xf32>
    %397 = arith.mulf %388, %394 : vector<8x32xf32>
    %398 = arith.addf %396, %397 : vector<8x32xf32>
    %399 = math.tanh %398 : vector<8x32xf32>
    %400 = arith.mulf %395, %399 : vector<8x32xf32>
    %c0_223 = arith.constant 0 : index
    %c0_224 = arith.constant 0 : index
    %401 = vector.load %arg10[%c0_223, %c0_224] : memref<32x128xf32, #tpu.memory_space<vmem>>, vector<32x128xf32>
    %cst_225 = arith.constant dense<0.000000e+00> : vector<8x128xf32>
    %402 = tpu.matmul %400, %401, %cst_225 {dimension_numbers = #tpu.dot_dimension_numbers<[1], [0], [0], [1], [0, 0, 1, 1], [], []>} : vector<8x32xf32>, vector<32x128xf32>, vector<8x128xf32> -> vector<8x128xf32>
    %c0_226 = arith.constant 0 : index
    %c0_227 = arith.constant 0 : index
    %403 = vector.load %arg11[%c0_226, %c0_227] : memref<1x128xf32, #tpu.memory_space<vmem>>, vector<1x128xf32>
    %404 = vector.broadcast %403 : vector<1x128xf32> to vector<8x128xf32>
    %405 = arith.addf %402, %404 : vector<8x128xf32>
    %406 = arith.index_cast %c5_i32 : i32 to index
    %c0_228 = arith.constant 0 : index
    %c0_229 = arith.constant 0 : index
    %407 = vector.load %arg12[%406, %c0_228, %c0_229] : memref<8x8x128xf32, #tpu.memory_space<vmem>>, vector<1x8x128xf32>
    %408 = vector.shape_cast %407 : vector<1x8x128xf32> to vector<8x128xf32>
    %409 = vector.shape_cast %405 : vector<8x128xf32> to vector<1x8x128xf32>
    tpu.vector_store %arg12[%406, %c0_228, %c0_229], %409 {strides = array<i32>} : memref<8x8x128xf32, #tpu.memory_space<vmem>>, vector<1x8x128xf32>,
    %410 = arith.index_cast %c5_i32 : i32 to index
    %c0_230 = arith.constant 0 : index
    %c0_231 = arith.constant 0 : index
    %411 = vector.load %arg13[%410, %c0_230, %c0_231] : memref<8x8x16xf32, #tpu.memory_space<vmem>>, vector<1x8x16xf32>
    %412 = vector.shape_cast %411 : vector<1x8x16xf32> to vector<8x16xf32>
    %413 = vector.shape_cast %369 : vector<8x16xf32> to vector<1x8x16xf32>
    tpu.vector_store %arg13[%410, %c0_230, %c0_231], %413 {strides = array<i32>} : memref<8x8x16xf32, #tpu.memory_space<vmem>>, vector<1x8x16xf32>,
    %414 = arith.index_cast %c5_i32 : i32 to index
    %c0_232 = arith.constant 0 : index
    %c0_233 = arith.constant 0 : index
    %415 = vector.load %arg14[%414, %c0_232, %c0_233] : memref<8x8x32xf32, #tpu.memory_space<vmem>>, vector<1x8x32xf32>
    %416 = vector.shape_cast %415 : vector<1x8x32xf32> to vector<8x32xf32>
    %417 = vector.shape_cast %400 : vector<8x32xf32> to vector<1x8x32xf32>
    tpu.vector_store %arg14[%414, %c0_232, %c0_233], %417 {strides = array<i32>} : memref<8x8x32xf32, #tpu.memory_space<vmem>>, vector<1x8x32xf32>,
    %418 = arith.index_cast %c5_i32 : i32 to index
    %c0_234 = arith.constant 0 : index
    %c0_235 = arith.constant 0 : index
    %419 = vector.load %arg15[%418, %c0_234, %c0_235] : memref<8x8x32xf32, #tpu.memory_space<vmem>>, vector<1x8x32xf32>
    %420 = vector.shape_cast %419 : vector<1x8x32xf32> to vector<8x32xf32>
    %421 = vector.shape_cast %398 : vector<8x32xf32> to vector<1x8x32xf32>
    tpu.vector_store %arg15[%418, %c0_234, %c0_235], %421 {strides = array<i32>} : memref<8x8x32xf32, #tpu.memory_space<vmem>>, vector<1x8x32xf32>,
    %c6_i32 = arith.constant 6 : i32
    %c0_236 = arith.constant 0 : index
    %c0_237 = arith.constant 0 : index
    %422 = vector.load %arg5[%c0_236, %c0_237] : memref<32x640xf32, #tpu.memory_space<vmem>>, vector<32x640xf32>
    %cst_238 = arith.constant dense<0.000000e+00> : vector<8x640xf32>
    %423 = tpu.matmul %400, %422, %cst_238 {dimension_numbers = #tpu.dot_dimension_numbers<[1], [0], [0], [1], [0, 0, 1, 1], [], []>} : vector<8x32xf32>, vector<32x640xf32>, vector<8x640xf32> -> vector<8x640xf32>
    %424 = vector.extract_strided_slice %423 {offsets = [0, 0], sizes = [8, 512], strides = [1, 1]} : vector<8x640xf32> to vector<8x512xf32>
    %425 = vector.extract_strided_slice %423 {offsets = [0, 512], sizes = [8, 128], strides = [1, 1]} : vector<8x640xf32> to vector<8x128xf32>
    %c0_239 = arith.constant 0 : index
    %c0_240 = arith.constant 0 : index
    %426 = vector.load %arg0[%c0_239, %c0_240] : memref<8x512xf32, #tpu.memory_space<vmem>>, vector<8x512xf32>
    %427 = arith.addf %426, %424 : vector<8x512xf32>
    %428 = math.tanh %427 : vector<8x512xf32>
    %c0_241 = arith.constant 0 : index
    %c0_242 = arith.constant 0 : index
    %429 = vector.load %arg6[%c0_241, %c0_242] : memref<512x16xf32, #tpu.memory_space<vmem>>, vector<512x16xf32>
    %cst_243 = arith.constant dense<0.000000e+00> : vector<8x16xf32>
    %430 = tpu.matmul %428, %429, %cst_243 {dimension_numbers = #tpu.dot_dimension_numbers<[1], [0], [0], [1], [0, 0, 1, 1], [], []>} : vector<8x512xf32>, vector<512x16xf32>, vector<8x16xf32> -> vector<8x16xf32>
    %cst_244 = arith.constant dense<0xFF800000> : vector<8xf32>
    %431 = vector.multi_reduction <maximumf>, %430, %cst_244 [1] : vector<8x16xf32> to vector<8xf32>
    %432 = vector.shape_cast %431 : vector<8xf32> to vector<8x1xf32>
    %433 = vector.broadcast %432 : vector<8x1xf32> to vector<8x16xf32>
    %434 = arith.subf %430, %433 : vector<8x16xf32>
    %435 = math.exp %434 : vector<8x16xf32>
    %cst_245 = arith.constant dense<0.000000e+00> : vector<8xf32>
    %436 = vector.multi_reduction <add>, %435, %cst_245 [1] : vector<8x16xf32> to vector<8xf32>
    %437 = vector.shape_cast %436 : vector<8xf32> to vector<8x1xf32>
    %438 = vector.broadcast %437 : vector<8x1xf32> to vector<8x16xf32>
    %439 = arith.divf %435, %438 : vector<8x16xf32>
    %c0_246 = arith.constant 0 : index
    %c0_247 = arith.constant 0 : index
    %440 = vector.load %arg7[%c0_246, %c0_247] : memref<16x128xf32, #tpu.memory_space<vmem>>, vector<16x128xf32>
    %cst_248 = arith.constant dense<0.000000e+00> : vector<8x128xf32>
    %441 = tpu.matmul %439, %440, %cst_248 {dimension_numbers = #tpu.dot_dimension_numbers<[1], [0], [0], [1], [0, 0, 1, 1], [], []>} : vector<8x16xf32>, vector<16x128xf32>, vector<8x128xf32> -> vector<8x128xf32>
    %c0_249 = arith.constant 0 : index
    %c0_250 = arith.constant 0 : index
    %442 = vector.load %arg8[%c0_249, %c0_250] : memref<8x128xf32, #tpu.memory_space<vmem>>, vector<8x128xf32>
    %443 = arith.mulf %441, %442 : vector<8x128xf32>
    %c0_251 = arith.constant 0 : index
    %c0_252 = arith.constant 0 : index
    %444 = vector.load %arg1[%c0_251, %c0_252] : memref<128x32xf32, #tpu.memory_space<vmem>>, vector<128x32xf32>
    %cst_253 = arith.constant dense<0.000000e+00> : vector<8x32xf32>
    %445 = tpu.matmul %443, %444, %cst_253 {dimension_numbers = #tpu.dot_dimension_numbers<[1], [0], [0], [1], [0, 0, 1, 1], [], []>} : vector<8x128xf32>, vector<128x32xf32>, vector<8x32xf32> -> vector<8x32xf32>
    %446 = arith.index_cast %c6_i32 : i32 to index
    %c0_254 = arith.constant 0 : index
    %c0_255 = arith.constant 0 : index
    %447 = vector.load %arg2[%446, %c0_254, %c0_255] : memref<8x8x128xf32, #tpu.memory_space<vmem>>, vector<1x8x128xf32>
    %448 = vector.shape_cast %447 : vector<1x8x128xf32> to vector<8x128xf32>
    %449 = arith.addf %448, %425 : vector<8x128xf32>
    %c0_256 = arith.constant 0 : index
    %c0_257 = arith.constant 0 : index
    %450 = vector.load %arg9[%c0_256, %c0_257] : memref<32x128xf32, #tpu.memory_space<vmem>>, vector<32x128xf32>
    %cst_258 = arith.constant dense<0.000000e+00> : vector<8x128xf32>
    %451 = tpu.matmul %445, %450, %cst_258 {dimension_numbers = #tpu.dot_dimension_numbers<[1], [0], [0], [1], [0, 0, 1, 1], [], []>} : vector<8x32xf32>, vector<32x128xf32>, vector<8x128xf32> -> vector<8x128xf32>
    %452 = arith.addf %449, %451 : vector<8x128xf32>
    %453 = arith.negf %452 : vector<8x128xf32>
    %454 = math.exp %453 : vector<8x128xf32>
    %cst_259 = arith.constant 1.000000e+00 : f32
    %455 = vector.broadcast %cst_259 : f32 to vector<8x128xf32>
    %456 = arith.addf %455, %454 : vector<8x128xf32>
    %457 = arith.divf %455, %456 : vector<8x128xf32>
    %458 = vector.extract_strided_slice %457 {offsets = [0, 0], sizes = [8, 32], strides = [1, 1]} : vector<8x128xf32> to vector<8x32xf32>
    %459 = vector.extract_strided_slice %457 {offsets = [0, 32], sizes = [8, 32], strides = [1, 1]} : vector<8x128xf32> to vector<8x32xf32>
    %460 = vector.extract_strided_slice %457 {offsets = [0, 64], sizes = [8, 32], strides = [1, 1]} : vector<8x128xf32> to vector<8x32xf32>
    %cst_260 = arith.constant 2.000000e+00 : f32
    %461 = vector.broadcast %cst_260 : f32 to vector<8x32xf32>
    %462 = arith.mulf %461, %460 : vector<8x32xf32>
    %cst_261 = arith.constant 1.000000e+00 : f32
    %463 = vector.broadcast %cst_261 : f32 to vector<8x32xf32>
    %464 = arith.subf %462, %463 : vector<8x32xf32>
    %465 = vector.extract_strided_slice %457 {offsets = [0, 96], sizes = [8, 32], strides = [1, 1]} : vector<8x128xf32> to vector<8x32xf32>
    %466 = arith.mulf %459, %398 : vector<8x32xf32>
    %467 = arith.mulf %458, %464 : vector<8x32xf32>
    %468 = arith.addf %466, %467 : vector<8x32xf32>
    %469 = math.tanh %468 : vector<8x32xf32>
    %470 = arith.mulf %465, %469 : vector<8x32xf32>
    %c0_262 = arith.constant 0 : index
    %c0_263 = arith.constant 0 : index
    %471 = vector.load %arg10[%c0_262, %c0_263] : memref<32x128xf32, #tpu.memory_space<vmem>>, vector<32x128xf32>
    %cst_264 = arith.constant dense<0.000000e+00> : vector<8x128xf32>
    %472 = tpu.matmul %470, %471, %cst_264 {dimension_numbers = #tpu.dot_dimension_numbers<[1], [0], [0], [1], [0, 0, 1, 1], [], []>} : vector<8x32xf32>, vector<32x128xf32>, vector<8x128xf32> -> vector<8x128xf32>
    %c0_265 = arith.constant 0 : index
    %c0_266 = arith.constant 0 : index
    %473 = vector.load %arg11[%c0_265, %c0_266] : memref<1x128xf32, #tpu.memory_space<vmem>>, vector<1x128xf32>
    %474 = vector.broadcast %473 : vector<1x128xf32> to vector<8x128xf32>
    %475 = arith.addf %472, %474 : vector<8x128xf32>
    %476 = arith.index_cast %c6_i32 : i32 to index
    %c0_267 = arith.constant 0 : index
    %c0_268 = arith.constant 0 : index
    %477 = vector.load %arg12[%476, %c0_267, %c0_268] : memref<8x8x128xf32, #tpu.memory_space<vmem>>, vector<1x8x128xf32>
    %478 = vector.shape_cast %477 : vector<1x8x128xf32> to vector<8x128xf32>
    %479 = vector.shape_cast %475 : vector<8x128xf32> to vector<1x8x128xf32>
    tpu.vector_store %arg12[%476, %c0_267, %c0_268], %479 {strides = array<i32>} : memref<8x8x128xf32, #tpu.memory_space<vmem>>, vector<1x8x128xf32>,
    %480 = arith.index_cast %c6_i32 : i32 to index
    %c0_269 = arith.constant 0 : index
    %c0_270 = arith.constant 0 : index
    %481 = vector.load %arg13[%480, %c0_269, %c0_270] : memref<8x8x16xf32, #tpu.memory_space<vmem>>, vector<1x8x16xf32>
    %482 = vector.shape_cast %481 : vector<1x8x16xf32> to vector<8x16xf32>
    %483 = vector.shape_cast %439 : vector<8x16xf32> to vector<1x8x16xf32>
    tpu.vector_store %arg13[%480, %c0_269, %c0_270], %483 {strides = array<i32>} : memref<8x8x16xf32, #tpu.memory_space<vmem>>, vector<1x8x16xf32>,
    %484 = arith.index_cast %c6_i32 : i32 to index
    %c0_271 = arith.constant 0 : index
    %c0_272 = arith.constant 0 : index
    %485 = vector.load %arg14[%484, %c0_271, %c0_272] : memref<8x8x32xf32, #tpu.memory_space<vmem>>, vector<1x8x32xf32>
    %486 = vector.shape_cast %485 : vector<1x8x32xf32> to vector<8x32xf32>
    %487 = vector.shape_cast %470 : vector<8x32xf32> to vector<1x8x32xf32>
    tpu.vector_store %arg14[%484, %c0_271, %c0_272], %487 {strides = array<i32>} : memref<8x8x32xf32, #tpu.memory_space<vmem>>, vector<1x8x32xf32>,
    %488 = arith.index_cast %c6_i32 : i32 to index
    %c0_273 = arith.constant 0 : index
    %c0_274 = arith.constant 0 : index
    %489 = vector.load %arg15[%488, %c0_273, %c0_274] : memref<8x8x32xf32, #tpu.memory_space<vmem>>, vector<1x8x32xf32>
    %490 = vector.shape_cast %489 : vector<1x8x32xf32> to vector<8x32xf32>
    %491 = vector.shape_cast %468 : vector<8x32xf32> to vector<1x8x32xf32>
    tpu.vector_store %arg15[%488, %c0_273, %c0_274], %491 {strides = array<i32>} : memref<8x8x32xf32, #tpu.memory_space<vmem>>, vector<1x8x32xf32>,
    %c7_i32 = arith.constant 7 : i32
    %c0_275 = arith.constant 0 : index
    %c0_276 = arith.constant 0 : index
    %492 = vector.load %arg5[%c0_275, %c0_276] : memref<32x640xf32, #tpu.memory_space<vmem>>, vector<32x640xf32>
    %cst_277 = arith.constant dense<0.000000e+00> : vector<8x640xf32>
    %493 = tpu.matmul %470, %492, %cst_277 {dimension_numbers = #tpu.dot_dimension_numbers<[1], [0], [0], [1], [0, 0, 1, 1], [], []>} : vector<8x32xf32>, vector<32x640xf32>, vector<8x640xf32> -> vector<8x640xf32>
    %494 = vector.extract_strided_slice %493 {offsets = [0, 0], sizes = [8, 512], strides = [1, 1]} : vector<8x640xf32> to vector<8x512xf32>
    %495 = vector.extract_strided_slice %493 {offsets = [0, 512], sizes = [8, 128], strides = [1, 1]} : vector<8x640xf32> to vector<8x128xf32>
    %c0_278 = arith.constant 0 : index
    %c0_279 = arith.constant 0 : index
    %496 = vector.load %arg0[%c0_278, %c0_279] : memref<8x512xf32, #tpu.memory_space<vmem>>, vector<8x512xf32>
    %497 = arith.addf %496, %494 : vector<8x512xf32>
    %498 = math.tanh %497 : vector<8x512xf32>
    %c0_280 = arith.constant 0 : index
    %c0_281 = arith.constant 0 : index
    %499 = vector.load %arg6[%c0_280, %c0_281] : memref<512x16xf32, #tpu.memory_space<vmem>>, vector<512x16xf32>
    %cst_282 = arith.constant dense<0.000000e+00> : vector<8x16xf32>
    %500 = tpu.matmul %498, %499, %cst_282 {dimension_numbers = #tpu.dot_dimension_numbers<[1], [0], [0], [1], [0, 0, 1, 1], [], []>} : vector<8x512xf32>, vector<512x16xf32>, vector<8x16xf32> -> vector<8x16xf32>
    %cst_283 = arith.constant dense<0xFF800000> : vector<8xf32>
    %501 = vector.multi_reduction <maximumf>, %500, %cst_283 [1] : vector<8x16xf32> to vector<8xf32>
    %502 = vector.shape_cast %501 : vector<8xf32> to vector<8x1xf32>
    %503 = vector.broadcast %502 : vector<8x1xf32> to vector<8x16xf32>
    %504 = arith.subf %500, %503 : vector<8x16xf32>
    %505 = math.exp %504 : vector<8x16xf32>
    %cst_284 = arith.constant dense<0.000000e+00> : vector<8xf32>
    %506 = vector.multi_reduction <add>, %505, %cst_284 [1] : vector<8x16xf32> to vector<8xf32>
    %507 = vector.shape_cast %506 : vector<8xf32> to vector<8x1xf32>
    %508 = vector.broadcast %507 : vector<8x1xf32> to vector<8x16xf32>
    %509 = arith.divf %505, %508 : vector<8x16xf32>
    %c0_285 = arith.constant 0 : index
    %c0_286 = arith.constant 0 : index
    %510 = vector.load %arg7[%c0_285, %c0_286] : memref<16x128xf32, #tpu.memory_space<vmem>>, vector<16x128xf32>
    %cst_287 = arith.constant dense<0.000000e+00> : vector<8x128xf32>
    %511 = tpu.matmul %509, %510, %cst_287 {dimension_numbers = #tpu.dot_dimension_numbers<[1], [0], [0], [1], [0, 0, 1, 1], [], []>} : vector<8x16xf32>, vector<16x128xf32>, vector<8x128xf32> -> vector<8x128xf32>
    %c0_288 = arith.constant 0 : index
    %c0_289 = arith.constant 0 : index
    %512 = vector.load %arg8[%c0_288, %c0_289] : memref<8x128xf32, #tpu.memory_space<vmem>>, vector<8x128xf32>
    %513 = arith.mulf %511, %512 : vector<8x128xf32>
    %c0_290 = arith.constant 0 : index
    %c0_291 = arith.constant 0 : index
    %514 = vector.load %arg1[%c0_290, %c0_291] : memref<128x32xf32, #tpu.memory_space<vmem>>, vector<128x32xf32>
    %cst_292 = arith.constant dense<0.000000e+00> : vector<8x32xf32>
    %515 = tpu.matmul %513, %514, %cst_292 {dimension_numbers = #tpu.dot_dimension_numbers<[1], [0], [0], [1], [0, 0, 1, 1], [], []>} : vector<8x128xf32>, vector<128x32xf32>, vector<8x32xf32> -> vector<8x32xf32>
    %516 = arith.index_cast %c7_i32 : i32 to index
    %c0_293 = arith.constant 0 : index
    %c0_294 = arith.constant 0 : index
    %517 = vector.load %arg2[%516, %c0_293, %c0_294] : memref<8x8x128xf32, #tpu.memory_space<vmem>>, vector<1x8x128xf32>
    %518 = vector.shape_cast %517 : vector<1x8x128xf32> to vector<8x128xf32>
    %519 = arith.addf %518, %495 : vector<8x128xf32>
    %c0_295 = arith.constant 0 : index
    %c0_296 = arith.constant 0 : index
    %520 = vector.load %arg9[%c0_295, %c0_296] : memref<32x128xf32, #tpu.memory_space<vmem>>, vector<32x128xf32>
    %cst_297 = arith.constant dense<0.000000e+00> : vector<8x128xf32>
    %521 = tpu.matmul %515, %520, %cst_297 {dimension_numbers = #tpu.dot_dimension_numbers<[1], [0], [0], [1], [0, 0, 1, 1], [], []>} : vector<8x32xf32>, vector<32x128xf32>, vector<8x128xf32> -> vector<8x128xf32>
    %522 = arith.addf %519, %521 : vector<8x128xf32>
    %523 = arith.negf %522 : vector<8x128xf32>
    %524 = math.exp %523 : vector<8x128xf32>
    %cst_298 = arith.constant 1.000000e+00 : f32
    %525 = vector.broadcast %cst_298 : f32 to vector<8x128xf32>
    %526 = arith.addf %525, %524 : vector<8x128xf32>
    %527 = arith.divf %525, %526 : vector<8x128xf32>
    %528 = vector.extract_strided_slice %527 {offsets = [0, 0], sizes = [8, 32], strides = [1, 1]} : vector<8x128xf32> to vector<8x32xf32>
    %529 = vector.extract_strided_slice %527 {offsets = [0, 32], sizes = [8, 32], strides = [1, 1]} : vector<8x128xf32> to vector<8x32xf32>
    %530 = vector.extract_strided_slice %527 {offsets = [0, 64], sizes = [8, 32], strides = [1, 1]} : vector<8x128xf32> to vector<8x32xf32>
    %cst_299 = arith.constant 2.000000e+00 : f32
    %531 = vector.broadcast %cst_299 : f32 to vector<8x32xf32>
    %532 = arith.mulf %531, %530 : vector<8x32xf32>
    %cst_300 = arith.constant 1.000000e+00 : f32
    %533 = vector.broadcast %cst_300 : f32 to vector<8x32xf32>
    %534 = arith.subf %532, %533 : vector<8x32xf32>
    %535 = vector.extract_strided_slice %527 {offsets = [0, 96], sizes = [8, 32], strides = [1, 1]} : vector<8x128xf32> to vector<8x32xf32>
    %536 = arith.mulf %529, %468 : vector<8x32xf32>
    %537 = arith.mulf %528, %534 : vector<8x32xf32>
    %538 = arith.addf %536, %537 : vector<8x32xf32>
    %539 = math.tanh %538 : vector<8x32xf32>
    %540 = arith.mulf %535, %539 : vector<8x32xf32>
    %c0_301 = arith.constant 0 : index
    %c0_302 = arith.constant 0 : index
    %541 = vector.load %arg10[%c0_301, %c0_302] : memref<32x128xf32, #tpu.memory_space<vmem>>, vector<32x128xf32>
    %cst_303 = arith.constant dense<0.000000e+00> : vector<8x128xf32>
    %542 = tpu.matmul %540, %541, %cst_303 {dimension_numbers = #tpu.dot_dimension_numbers<[1], [0], [0], [1], [0, 0, 1, 1], [], []>} : vector<8x32xf32>, vector<32x128xf32>, vector<8x128xf32> -> vector<8x128xf32>
    %c0_304 = arith.constant 0 : index
    %c0_305 = arith.constant 0 : index
    %543 = vector.load %arg11[%c0_304, %c0_305] : memref<1x128xf32, #tpu.memory_space<vmem>>, vector<1x128xf32>
    %544 = vector.broadcast %543 : vector<1x128xf32> to vector<8x128xf32>
    %545 = arith.addf %542, %544 : vector<8x128xf32>
    %546 = arith.index_cast %c7_i32 : i32 to index
    %c0_306 = arith.constant 0 : index
    %c0_307 = arith.constant 0 : index
    %547 = vector.load %arg12[%546, %c0_306, %c0_307] : memref<8x8x128xf32, #tpu.memory_space<vmem>>, vector<1x8x128xf32>
    %548 = vector.shape_cast %547 : vector<1x8x128xf32> to vector<8x128xf32>
    %549 = vector.shape_cast %545 : vector<8x128xf32> to vector<1x8x128xf32>
    tpu.vector_store %arg12[%546, %c0_306, %c0_307], %549 {strides = array<i32>} : memref<8x8x128xf32, #tpu.memory_space<vmem>>, vector<1x8x128xf32>,
    %550 = arith.index_cast %c7_i32 : i32 to index
    %c0_308 = arith.constant 0 : index
    %c0_309 = arith.constant 0 : index
    %551 = vector.load %arg13[%550, %c0_308, %c0_309] : memref<8x8x16xf32, #tpu.memory_space<vmem>>, vector<1x8x16xf32>
    %552 = vector.shape_cast %551 : vector<1x8x16xf32> to vector<8x16xf32>
    %553 = vector.shape_cast %509 : vector<8x16xf32> to vector<1x8x16xf32>
    tpu.vector_store %arg13[%550, %c0_308, %c0_309], %553 {strides = array<i32>} : memref<8x8x16xf32, #tpu.memory_space<vmem>>, vector<1x8x16xf32>,
    %554 = arith.index_cast %c7_i32 : i32 to index
    %c0_310 = arith.constant 0 : index
    %c0_311 = arith.constant 0 : index
    %555 = vector.load %arg14[%554, %c0_310, %c0_311] : memref<8x8x32xf32, #tpu.memory_space<vmem>>, vector<1x8x32xf32>
    %556 = vector.shape_cast %555 : vector<1x8x32xf32> to vector<8x32xf32>
    %557 = vector.shape_cast %540 : vector<8x32xf32> to vector<1x8x32xf32>
    tpu.vector_store %arg14[%554, %c0_310, %c0_311], %557 {strides = array<i32>} : memref<8x8x32xf32, #tpu.memory_space<vmem>>, vector<1x8x32xf32>,
    %558 = arith.index_cast %c7_i32 : i32 to index
    %c0_312 = arith.constant 0 : index
    %c0_313 = arith.constant 0 : index
    %559 = vector.load %arg15[%558, %c0_312, %c0_313] : memref<8x8x32xf32, #tpu.memory_space<vmem>>, vector<1x8x32xf32>
    %560 = vector.shape_cast %559 : vector<1x8x32xf32> to vector<8x32xf32>
    %561 = vector.shape_cast %538 : vector<8x32xf32> to vector<1x8x32xf32>
    tpu.vector_store %arg15[%558, %c0_312, %c0_313], %561 {strides = array<i32>} : memref<8x8x32xf32, #tpu.memory_space<vmem>>, vector<1x8x32xf32>,
    %c8_i32 = arith.constant 8 : i32
    return
  }
}

</mosaic_0001>

<llo_original>
// kernel: tpu_custom_call.1
$region0: #{tpu_custom_call.1}
  #allocation0 [shape = 'u32[]', space=smem, size = 0x4, offset = 0x4, fixed_abs, tag = 'smem constant byte address 0x4 - core index']
  #allocation1 [shape = 'u32[144,128]{1,0:T(1,128)}', space=vmem, size = 0x12000, scoped, tag = 'internal scratch']
  %s0 = inlined_call_operand.vmem [shape: f32[8,512], index: 0, kind: input, shape index: {}]
  %s1 = inlined_call_operand.vmem [shape: f32[128,32], index: 1, kind: input, shape index: {}]
  %s2 = inlined_call_operand.vmem [shape: f32[8,8,128], index: 2, kind: input, shape index: {}]
  %s3 = inlined_call_operand.vmem [shape: f32[8,32], index: 3, kind: input, shape index: {}]
  %s4 = inlined_call_operand.vmem [shape: f32[8,32], index: 4, kind: input, shape index: {}]
  %s5 = inlined_call_operand.vmem [shape: f32[32,640], index: 5, kind: input, shape index: {}]
  %s6 = inlined_call_operand.vmem [shape: f32[512,16], index: 6, kind: input, shape index: {}]
  %s7 = inlined_call_operand.vmem [shape: f32[16,128], index: 7, kind: input, shape index: {}]
  %s8 = inlined_call_operand.vmem [shape: f32[8,128], index: 8, kind: input, shape index: {}]
  %s9 = inlined_call_operand.vmem [shape: f32[32,128], index: 9, kind: input, shape index: {}]
  %s10 = inlined_call_operand.vmem [shape: f32[32,128], index: 10, kind: input, shape index: {}]
  %s11 = inlined_call_operand.vmem [shape: f32[1,128], index: 11, kind: input, shape index: {}]
  %s12 = inlined_call_operand.hbm [shape: f32[8,8,128], index: 12, kind: output, shape index: {0}]
  %s13 = inlined_call_operand.hbm [shape: f32[8,8,16], index: 13, kind: output, shape index: {1}]
  %s14 = inlined_call_operand.hbm [shape: f32[8,8,32], index: 14, kind: output, shape index: {2}]
  %s15 = inlined_call_operand.hbm [shape: f32[8,8,32], index: 15, kind: output, shape index: {3}]
  %16 = xla_tuple %s12, %s13, %s14, %s15
  %s17 = sld [smem:[#allocation0]]
  $region82: #{tpu_custom_call.1} parent=0
    _
  %s19 = ssub.s32 1, %s17
  %s20 = scalar_select 0, %s19, %s17
  $region1: #{tpu_custom_call.1} parent=0
    #allocation2 [shape = 'u8[32768]{0}', space=vmem, size = 0x8000, scoped, tag = 'output window, operand 0, single buffered']
    #allocation3 [shape = 's32[1]{0}', space=sflag, size = 0x4, scoped, tag = 'scoped memory for tpu_custom_call.1']
    #allocation4 [shape = 'u8[32768]{0}', space=vmem, size = 0x8000, scoped, tag = 'output window, operand 1, single buffered']
    #allocation5 [shape = 's32[1]{0}', space=sflag, size = 0x4, scoped, tag = 'scoped memory for tpu_custom_call.1']
    #allocation6 [shape = 'u8[32768]{0}', space=vmem, size = 0x8000, scoped, tag = 'output window, operand 2, single buffered']
    #allocation7 [shape = 'u8[32768]{0}', space=vmem, size = 0x8000, scoped, tag = 'output window, operand 3, single buffered']
    #allocation8 [shape = 's32[1]{0}', space=sflag, size = 0x4, scoped, tag = 'scoped memory for tpu_custom_call.1']
    %21 = vsyncpa [#allocation3], 0
    %22 = vsyncpa [#allocation5], 0
    %23 = vsyncpa [#allocation8], 0
    // Predicated region
    $region2: #{tpu_custom_call.1} parent=1 // pred_check
      _
    $region3: #{tpu_custom_call.1} parent=1 // pred_check_branch
      %25 = sbr.rel (0) target = $region5
    $region4: #{tpu_custom_call.1} parent=1 // pred_region
      _
    $region5: #{tpu_custom_call.1} parent=1 // pred_fallthru
      _
    // Predicated region
    $region6: #{tpu_custom_call.1} parent=1 // pred_check
      _
    $region7: #{tpu_custom_call.1} parent=1 // pred_check_branch
      %27 = sbr.rel (0) target = $region9
    $region8: #{tpu_custom_call.1} parent=1 // pred_region
      _
    $region9: #{tpu_custom_call.1} parent=1 // pred_fallthru
      _
    // Predicated region
    $region10: #{tpu_custom_call.1} parent=1 // pred_check
      _
    $region11: #{tpu_custom_call.1} parent=1 // pred_check_branch
      %29 = sbr.rel (0) target = $region13
    $region12: #{tpu_custom_call.1} parent=1 // pred_region
      _
    $region13: #{tpu_custom_call.1} parent=1 // pred_fallthru
      _
    // Predicated region
    $region14: #{tpu_custom_call.1} parent=1 // pred_check
      _
    $region15: #{tpu_custom_call.1} parent=1 // pred_check_branch
      %31 = sbr.rel (0) target = $region17
    $region16: #{tpu_custom_call.1} parent=1 // pred_region
      _
    $region17: #{tpu_custom_call.1} parent=1 // pred_fallthru
      _
    // Predicated region
    $region18: #{tpu_custom_call.1} parent=1 // pred_check
      _
    $region19: #{tpu_custom_call.1} parent=1 // pred_check_branch
      %33 = sbr.rel (0) target = $region21
    $region20: #{tpu_custom_call.1} parent=1 // pred_region
      _
    $region21: #{tpu_custom_call.1} parent=1 // pred_fallthru
      _
    // Predicated region
    $region22: #{tpu_custom_call.1} parent=1 // pred_check
      _
    $region23: #{tpu_custom_call.1} parent=1 // pred_check_branch
      %35 = sbr.rel (0) target = $region25
    $region24: #{tpu_custom_call.1} parent=1 // pred_region
      _
    $region25: #{tpu_custom_call.1} parent=1 // pred_fallthru
      _
    // Predicated region
    $region26: #{tpu_custom_call.1} parent=1 // pred_check
      _
    $region27: #{tpu_custom_call.1} parent=1 // pred_check_branch
      %37 = sbr.rel (0) target = $region29
    $region28: #{tpu_custom_call.1} parent=1 // pred_region
      _
    $region29: #{tpu_custom_call.1} parent=1 // pred_fallthru
      _
    // Predicated region
    $region30: #{tpu_custom_call.1} parent=1 // pred_check
      _
    $region31: #{tpu_custom_call.1} parent=1 // pred_check_branch
      %39 = sbr.rel (0) target = $region33
    $region32: #{tpu_custom_call.1} parent=1 // pred_region
      _
    $region33: #{tpu_custom_call.1} parent=1 // pred_fallthru
      _
    // Predicated region
    $region34: #{tpu_custom_call.1} parent=1 // pred_check
      _
    $region35: #{tpu_custom_call.1} parent=1 // pred_check_branch
      %41 = sbr.rel (0) target = $region37
    $region36: #{tpu_custom_call.1} parent=1 // pred_region
      _
    $region37: #{tpu_custom_call.1} parent=1 // pred_fallthru
      _
    // Predicated region
    $region38: #{tpu_custom_call.1} parent=1 // pred_check
      _
    $region39: #{tpu_custom_call.1} parent=1 // pred_check_branch
      %43 = sbr.rel (0) target = $region41
    $region40: #{tpu_custom_call.1} parent=1 // pred_region
      _
    $region41: #{tpu_custom_call.1} parent=1 // pred_fallthru
      _
    // Predicated region
    $region42: #{tpu_custom_call.1} parent=1 // pred_check
      _
    $region43: #{tpu_custom_call.1} parent=1 // pred_check_branch
      %45 = sbr.rel (0) target = $region45
    $region44: #{tpu_custom_call.1} parent=1 // pred_region
      _
    $region45: #{tpu_custom_call.1} parent=1 // pred_fallthru
      _
    // Predicated region
    $region46: #{tpu_custom_call.1} parent=1 // pred_check
      _
    $region47: #{tpu_custom_call.1} parent=1 // pred_check_branch
      %47 = sbr.rel (0) target = $region49
    $region48: #{tpu_custom_call.1} parent=1 // pred_region
      _
    $region49: #{tpu_custom_call.1} parent=1 // pred_fallthru
      _
    %v48 = vld [vmem:[%s3] sm:$0xff]
    %v49 = vld [vmem:[%s4] sm:$0xff]
    %v50 = vld [vmem:[%s5] sm:$0xff]
    %v51 = vld [vmem:[%s5 + $0x8] sm:$0xff]
    %v52 = vld [vmem:[%s5 + $0x10] sm:$0xff]
    %v53 = vld [vmem:[%s5 + $0x18] sm:$0xff]
    %v54 = vld [vmem:[%s5 + $0x20] sm:$0xff]
    %v55 = vld [vmem:[%s5 + $0x28] sm:$0xff]
    %v56 = vld [vmem:[%s5 + $0x30] sm:$0xff]
    %v57 = vld [vmem:[%s5 + $0x38] sm:$0xff]
    %v58 = vld [vmem:[%s5 + $0x40] sm:$0xff]
    %v59 = vld [vmem:[%s5 + $0x48] sm:$0xff]
    %v60 = vld [vmem:[%s5 + $0x50] sm:$0xff]
    %v61 = vld [vmem:[%s5 + $0x58] sm:$0xff]
    %v62 = vld [vmem:[%s5 + $0x60] sm:$0xff]
    %v63 = vld [vmem:[%s5 + $0x68] sm:$0xff]
    %v64 = vld [vmem:[%s5 + $0x70] sm:$0xff]
    %v65 = vld [vmem:[%s5 + $0x78] sm:$0xff]
    %v66 = vld [vmem:[%s5 + $0x80] sm:$0xff]
    %v67 = vld [vmem:[%s5 + $0x88] sm:$0xff]
    %v68 = vld [vmem:[%s5 + $0x90] sm:$0xff]
    %v69 = vld [vmem:[%s5 + $0x98] sm:$0xff]
    %vm70 = vcmask 261120
    %v72 = vsel %vm70, %v48, 0
    %74 = vmatprep.subr.mxu0 %v51
    %75 = vmatpush1.msra.mxu0 %v50
    %76 = vmatprep.subr.mxu0 %v56
    %77 = vmatpush1.msra.mxu0 %v55
    %78 = vmatprep.subr.mxu0 %v61
    %79 = vmatpush1.msra.mxu0 %v60
    %80 = vmatprep.subr.mxu0 %v66
    %81 = vmatpush1.msra.mxu0 %v65
    %82 = vmatprep.subr.mxu0 0.0
    %83 = vmatpush1.msra.mxu0 0.0
    %84 = vmatprep.subr.mxu0 0.0
    %85 = vmatpush1.msra.mxu0 0.0
    %86 = vmatprep.subr.mxu0 0.0
    %87 = vmatpush1.msra.mxu0 0.0
    %88 = vmatprep.subr.mxu0 0.0
    %89 = vmatpush1.msra.mxu0 0.0
    %90 = vmatprep.subr.mxu0 0.0
    %91 = vmatpush1.msra.mxu0 0.0
    %92 = vmatprep.subr.mxu0 0.0
    %93 = vmatpush1.msra.mxu0 0.0
    %94 = vmatprep.subr.mxu0 0.0
    %95 = vmatpush1.msra.mxu0 0.0
    %96 = vmatprep.subr.mxu0 0.0
    %97 = vmatpush1.msra.mxu0 0.0
    %98 = vmatprep.subr.mxu0 0.0
    %99 = vmatpush1.msra.mxu0 0.0
    %100 = vmatprep.subr.mxu0 0.0
    %101 = vmatpush1.msra.mxu0 0.0
    %102 = vmatprep.subr.mxu0 0.0
    %103 = vmatpush1.msra.mxu0 0.0
    %104 = vmatprep.subr.mxu0 0.0
    %105 = vmatpush1.msra.mxu0 0.0
    %106 = vmatprep.subr.mxu0 0.0
    %107 = vmatpush1.msra.mxu0 0.0
    %108 = vmatprep.subr.mxu0 0.0
    %109 = vmatpush1.msra.mxu0 0.0
    %110 = vmatprep.subr.mxu0 0.0
    %111 = vmatpush1.msra.mxu0 0.0
    %112 = vmatprep.subr.mxu0 0.0
    %113 = vmatpush1.msra.mxu0 0.0
    %114 = vmatprep.subr.mxu0 0.0
    %115 = vmatpush1.msra.mxu0 0.0
    %116 = vmatprep.subr.mxu0 0.0
    %117 = vmatpush1.msra.mxu0 0.0
    %118 = vmatprep.subr.mxu0 0.0
    %119 = vmatpush1.msra.mxu0 0.0
    %120 = vmatprep.subr.mxu0 0.0
    %121 = vmatpush1.msra.mxu0 0.0
    %122 = vmatprep.subr.mxu0 0.0
    %123 = vmatpush1.msra.mxu0 0.0
    %124 = vmatprep.subr.mxu0 0.0
    %125 = vmatpush1.msra.mxu0 0.0
    %126 = vmatprep.subr.mxu0 0.0
    %127 = vmatpush1.msra.mxu0 0.0
    %128 = vmatprep.subr.mxu0 0.0
    %129 = vmatpush1.msra.mxu0 0.0
    %130 = vmatprep.subr.mxu0 0.0
    %131 = vmatpush1.msra.mxu0 0.0
    %132 = vmatprep.subr.mxu0 0.0
    %133 = vmatpush1.msra.mxu0 0.0
    %134 = vmatprep.subr.mxu0 0.0
    %135 = vmatpush1.msra.mxu0 0.0
    %136 = vmatprep.subr.mxu0 0.0
    %137 = vmatpush1.msra.mxu0 0.0
    %138 = vmatprep.mubr.f32.mxu0 0.0
    %139 = vmatmul.mubr.f32.gmra.mrb[0].mxu0 %v72
    %v140 = vpop.f32.mrb[0].mxu0
    %v141 = vadd.f32 0.0, %v140
    %v142 = vpop.f32.mrb[0].mxu0
    %v143 = vadd.f32 0.0, %v142
    %144 = vdwg.mxu0
    %145 = vmatprep.subr.mxu0 %v53
    %146 = vmatpush1.msra.mxu0 %v52
    %147 = vmatprep.subr.mxu0 %v58
    %148 = vmatpush1.msra.mxu0 %v57
    %149 = vmatprep.subr.mxu0 %v63
    %150 = vmatpush1.msra.mxu0 %v62
    %151 = vmatprep.subr.mxu0 %v68
    %152 = vmatpush1.msra.mxu0 %v67
    %153 = vmatprep.subr.mxu0 0.0
    %154 = vmatpush1.msra.mxu0 0.0
    %155 = vmatprep.subr.mxu0 0.0
    %156 = vmatpush1.msra.mxu0 0.0
    %157 = vmatprep.subr.mxu0 0.0
    %158 = vmatpush1.msra.mxu0 0.0
    %159 = vmatprep.subr.mxu0 0.0
    %160 = vmatpush1.msra.mxu0 0.0
    %161 = vmatprep.subr.mxu0 0.0
    %162 = vmatpush1.msra.mxu0 0.0
    %163 = vmatprep.subr.mxu0 0.0
    %164 = vmatpush1.msra.mxu0 0.0
    %165 = vmatprep.subr.mxu0 0.0
    %166 = vmatpush1.msra.mxu0 0.0
    %167 = vmatprep.subr.mxu0 0.0
    %168 = vmatpush1.msra.mxu0 0.0
    %169 = vmatprep.subr.mxu0 0.0
    %170 = vmatpush1.msra.mxu0 0.0
    %171 = vmatprep.subr.mxu0 0.0
    %172 = vmatpush1.msra.mxu0 0.0
    %173 = vmatprep.subr.mxu0 0.0
    %174 = vmatpush1.msra.mxu0 0.0
    %175 = vmatprep.subr.mxu0 0.0
    %176 = vmatpush1.msra.mxu0 0.0
    %177 = vmatprep.subr.mxu0 0.0
    %178 = vmatpush1.msra.mxu0 0.0
    %179 = vmatprep.subr.mxu0 0.0
    %180 = vmatpush1.msra.mxu0 0.0
    %181 = vmatprep.subr.mxu0 0.0
    %182 = vmatpush1.msra.mxu0 0.0
    %183 = vmatprep.subr.mxu0 0.0
    %184 = vmatpush1.msra.mxu0 0.0
    %185 = vmatprep.subr.mxu0 0.0
    %186 = vmatpush1.msra.mxu0 0.0
    %187 = vmatprep.subr.mxu0 0.0
    %188 = vmatpush1.msra.mxu0 0.0
    %189 = vmatprep.subr.mxu0 0.0
    %190 = vmatpush1.msra.mxu0 0.0
    %191 = vmatprep.subr.mxu0 0.0
    %192 = vmatpush1.msra.mxu0 0.0
    %193 = vmatprep.subr.mxu0 0.0
    %194 = vmatpush1.msra.mxu0 0.0
    %195 = vmatprep.subr.mxu0 0.0
    %196 = vmatpush1.msra.mxu0 0.0
    %197 = vmatprep.subr.mxu0 0.0
    %198 = vmatpush1.msra.mxu0 0.0
    %199 = vmatprep.subr.mxu0 0.0
    %200 = vmatpush1.msra.mxu0 0.0
    %201 = vmatprep.subr.mxu0 0.0
    %202 = vmatpush1.msra.mxu0 0.0
    %203 = vmatprep.subr.mxu0 0.0
    %204 = vmatpush1.msra.mxu0 0.0
    %205 = vmatprep.subr.mxu0 0.0
    %206 = vmatpush1.msra.mxu0 0.0
    %207 = vmatprep.subr.mxu0 0.0
    %208 = vmatpush1.msra.mxu0 0.0
    %209 = vmatprep.mubr.f32.mxu0 0.0
    %210 = vmatmul.mubr.f32.gmra.mrb[0].mxu0 %v72
    %v211 = vpop.f32.mrb[0].mxu0
    %v212 = vadd.f32 0.0, %v211
    %v213 = vpop.f32.mrb[0].mxu0
    %v214 = vadd.f32 0.0, %v213
    %215 = vdwg.mxu0
    %216 = vmatprep.subr.mxu0 0.0
    %217 = vmatpush1.msra.mxu0 %v54
    %218 = vmatprep.subr.mxu0 0.0
    %219 = vmatpush1.msra.mxu0 %v59
    %220 = vmatprep.subr.mxu0 0.0
    %221 = vmatpush1.msra.mxu0 %v64
    %222 = vmatprep.subr.mxu0 0.0
    %223 = vmatpush1.msra.mxu0 %v69
    %224 = vmatprep.subr.mxu0 0.0
    %225 = vmatpush1.msra.mxu0 0.0
    %226 = vmatprep.subr.mxu0 0.0
    %227 = vmatpush1.msra.mxu0 0.0
    %228 = vmatprep.subr.mxu0 0.0
    %229 = vmatpush1.msra.mxu0 0.0
    %230 = vmatprep.subr.mxu0 0.0
    %231 = vmatpush1.msra.mxu0 0.0
    %232 = vmatprep.subr.mxu0 0.0
    %233 = vmatpush1.msra.mxu0 0.0
    %234 = vmatprep.subr.mxu0 0.0
    %235 = vmatpush1.msra.mxu0 0.0
    %236 = vmatprep.subr.mxu0 0.0
    %237 = vmatpush1.msra.mxu0 0.0
    %238 = vmatprep.subr.mxu0 0.0
    %239 = vmatpush1.msra.mxu0 0.0
    %240 = vmatprep.subr.mxu0 0.0
    %241 = vmatpush1.msra.mxu0 0.0
    %242 = vmatprep.subr.mxu0 0.0
    %243 = vmatpush1.msra.mxu0 0.0
    %244 = vmatprep.subr.mxu0 0.0
    %245 = vmatpush1.msra.mxu0 0.0
    %246 = vmatprep.subr.mxu0 0.0
    %247 = vmatpush1.msra.mxu0 0.0
    %248 = vmatprep.subr.mxu0 0.0
    %249 = vmatpush1.msra.mxu0 0.0
    %250 = vmatprep.subr.mxu0 0.0
    %251 = vmatpush1.msra.mxu0 0.0
    %252 = vmatprep.subr.mxu0 0.0
    %253 = vmatpush1.msra.mxu0 0.0
    %254 = vmatprep.subr.mxu0 0.0
    %255 = vmatpush1.msra.mxu0 0.0
    %256 = vmatprep.subr.mxu0 0.0
    %257 = vmatpush1.msra.mxu0 0.0
    %258 = vmatprep.subr.mxu0 0.0
    %259 = vmatpush1.msra.mxu0 0.0
    %260 = vmatprep.subr.mxu0 0.0
    %261 = vmatpush1.msra.mxu0 0.0
    %262 = vmatprep.subr.mxu0 0.0
    %263 = vmatpush1.msra.mxu0 0.0
    %264 = vmatprep.subr.mxu0 0.0
    %265 = vmatpush1.msra.mxu0 0.0
    %266 = vmatprep.subr.mxu0 0.0
    %267 = vmatpush1.msra.mxu0 0.0
    %268 = vmatprep.subr.mxu0 0.0
    %269 = vmatpush1.msra.mxu0 0.0
    %270 = vmatprep.subr.mxu0 0.0
    %271 = vmatpush1.msra.mxu0 0.0
    %272 = vmatprep.subr.mxu0 0.0
    %273 = vmatpush1.msra.mxu0 0.0
    %274 = vmatprep.subr.mxu0 0.0
    %275 = vmatpush1.msra.mxu0 0.0
    %276 = vmatprep.subr.mxu0 0.0
    %277 = vmatpush1.msra.mxu0 0.0
    %278 = vmatprep.subr.mxu0 0.0
    %279 = vmatpush1.msra.mxu0 0.0
    %280 = vmatprep.mubr.f32.mxu0 0.0
    %281 = vmatmul.mubr.f32.gmra.mrb[0].mxu0 %v72
    %v282 = vpop.f32.mrb[0].mxu0
    %v283 = vadd.f32 0.0, %v282
    %v284 = vpop.f32.mrb[0].mxu0
    %285 = vdwg.mxu0
    %v286 = vld [vmem:[%s0] sm:$0xff]
    %v287 = vld [vmem:[%s0 + $0x8] sm:$0xff]
    %v288 = vld [vmem:[%s0 + $0x10] sm:$0xff]
    %v289 = vld [vmem:[%s0 + $0x18] sm:$0xff]
    %v290 = vadd.f32 %v286, %v141
    %v291 = vadd.f32 %v287, %v143
    %v292 = vadd.f32 %v288, %v212
    %v293 = vadd.f32 %v289, %v214
    %v294 = vtanh.pop %v290
    %v295 = vtanh.pop %v291
    %v296 = vtanh.pop %v292
    %v297 = vtanh.pop %v293
    %v298 = vld [vmem:[%s6] sm:$0xff]
    %v299 = vld [vmem:[%s6 + $0x8] sm:$0xff]
    %v300 = vld [vmem:[%s6 + $0x10] sm:$0xff]
    %v301 = vld [vmem:[%s6 + $0x18] sm:$0xff]
    %v302 = vld [vmem:[%s6 + $0x20] sm:$0xff]
    %v303 = vld [vmem:[%s6 + $0x28] sm:$0xff]
    %v304 = vld [vmem:[%s6 + $0x30] sm:$0xff]
    %v305 = vld [vmem:[%s6 + $0x38] sm:$0xff]
    %v306 = vld [vmem:[%s6 + $0x40] sm:$0xff]
    %v307 = vld [vmem:[%s6 + $0x48] sm:$0xff]
    %v308 = vld [vmem:[%s6 + $0x50] sm:$0xff]
    %v309 = vld [vmem:[%s6 + $0x58] sm:$0xff]
    %v310 = vld [vmem:[%s6 + $0x60] sm:$0xff]
    %v311 = vld [vmem:[%s6 + $0x68] sm:$0xff]
    %v312 = vld [vmem:[%s6 + $0x70] sm:$0xff]
    %v313 = vld [vmem:[%s6 + $0x78] sm:$0xff]
    %v314 = vld [vmem:[%s6 + $0x80] sm:$0xff]
    %v315 = vld [vmem:[%s6 + $0x88] sm:$0xff]
    %v316 = vld [vmem:[%s6 + $0x90] sm:$0xff]
    %v317 = vld [vmem:[%s6 + $0x98] sm:$0xff]
    %v318 = vld [vmem:[%s6 + $0xa0] sm:$0xff]
    %v319 = vld [vmem:[%s6 + $0xa8] sm:$0xff]
    %v320 = vld [vmem:[%s6 + $0xb0] sm:$0xff]
    %v321 = vld [vmem:[%s6 + $0xb8] sm:$0xff]
    %v322 = vld [vmem:[%s6 + $0xc0] sm:$0xff]
    %v323 = vld [vmem:[%s6 + $0xc8] sm:$0xff]
    %v324 = vld [vmem:[%s6 + $0xd0] sm:$0xff]
    %v325 = vld [vmem:[%s6 + $0xd8] sm:$0xff]
    %v326 = vld [vmem:[%s6 + $0xe0] sm:$0xff]
    %v327 = vld [vmem:[%s6 + $0xe8] sm:$0xff]
    %v328 = vld [vmem:[%s6 + $0xf0] sm:$0xff]
    %v329 = vld [vmem:[%s6 + $0xf8] sm:$0xff]
    %v330 = vld [vmem:[%s6 + $0x100] sm:$0xff]
    %v331 = vld [vmem:[%s6 + $0x108] sm:$0xff]
    %v332 = vld [vmem:[%s6 + $0x110] sm:$0xff]
    %v333 = vld [vmem:[%s6 + $0x118] sm:$0xff]
    %v334 = vld [vmem:[%s6 + $0x120] sm:$0xff]
    %v335 = vld [vmem:[%s6 + $0x128] sm:$0xff]
    %v336 = vld [vmem:[%s6 + $0x130] sm:$0xff]
    %v337 = vld [vmem:[%s6 + $0x138] sm:$0xff]
    %v338 = vld [vmem:[%s6 + $0x140] sm:$0xff]
    %v339 = vld [vmem:[%s6 + $0x148] sm:$0xff]
    %v340 = vld [vmem:[%s6 + $0x150] sm:$0xff]
    %v341 = vld [vmem:[%s6 + $0x158] sm:$0xff]
    %v342 = vld [vmem:[%s6 + $0x160] sm:$0xff]
    %v343 = vld [vmem:[%s6 + $0x168] sm:$0xff]
    %v344 = vld [vmem:[%s6 + $0x170] sm:$0xff]
    %v345 = vld [vmem:[%s6 + $0x178] sm:$0xff]
    %v346 = vld [vmem:[%s6 + $0x180] sm:$0xff]
    %v347 = vld [vmem:[%s6 + $0x188] sm:$0xff]
    %v348 = vld [vmem:[%s6 + $0x190] sm:$0xff]
    %v349 = vld [vmem:[%s6 + $0x198] sm:$0xff]
    %v350 = vld [vmem:[%s6 + $0x1a0] sm:$0xff]
    %v351 = vld [vmem:[%s6 + $0x1a8] sm:$0xff]
    %v352 = vld [vmem:[%s6 + $0x1b0] sm:$0xff]
    %v353 = vld [vmem:[%s6 + $0x1b8] sm:$0xff]
    %v354 = vld [vmem:[%s6 + $0x1c0] sm:$0xff]
    %v355 = vld [vmem:[%s6 + $0x1c8] sm:$0xff]
    %v356 = vld [vmem:[%s6 + $0x1d0] sm:$0xff]
    %v357 = vld [vmem:[%s6 + $0x1d8] sm:$0xff]
    %v358 = vld [vmem:[%s6 + $0x1e0] sm:$0xff]
    %v359 = vld [vmem:[%s6 + $0x1e8] sm:$0xff]
    %v360 = vld [vmem:[%s6 + $0x1f0] sm:$0xff]
    %v361 = vld [vmem:[%s6 + $0x1f8] sm:$0xff]
    %362 = vmatprep.subr.mxu0 0.0
    %363 = vmatpush1.msra.mxu0 %v298
    %364 = vmatprep.subr.mxu0 0.0
    %365 = vmatpush1.msra.mxu0 %v299
    %366 = vmatprep.subr.mxu0 0.0
    %367 = vmatpush1.msra.mxu0 %v300
    %368 = vmatprep.subr.mxu0 0.0
    %369 = vmatpush1.msra.mxu0 %v301
    %370 = vmatprep.subr.mxu0 0.0
    %371 = vmatpush1.msra.mxu0 %v302
    %372 = vmatprep.subr.mxu0 0.0
    %373 = vmatpush1.msra.mxu0 %v303
    %374 = vmatprep.subr.mxu0 0.0
    %375 = vmatpush1.msra.mxu0 %v304
    %376 = vmatprep.subr.mxu0 0.0
    %377 = vmatpush1.msra.mxu0 %v305
    %378 = vmatprep.subr.mxu0 0.0
    %379 = vmatpush1.msra.mxu0 %v306
    %380 = vmatprep.subr.mxu0 0.0
    %381 = vmatpush1.msra.mxu0 %v307
    %382 = vmatprep.subr.mxu0 0.0
    %383 = vmatpush1.msra.mxu0 %v308
    %384 = vmatprep.subr.mxu0 0.0
    %385 = vmatpush1.msra.mxu0 %v309
    %386 = vmatprep.subr.mxu0 0.0
    %387 = vmatpush1.msra.mxu0 %v310
    %388 = vmatprep.subr.mxu0 0.0
    %389 = vmatpush1.msra.mxu0 %v311
    %390 = vmatprep.subr.mxu0 0.0
    %391 = vmatpush1.msra.mxu0 %v312
    %392 = vmatprep.subr.mxu0 0.0
    %393 = vmatpush1.msra.mxu0 %v313
    %394 = vmatprep.subr.mxu0 0.0
    %395 = vmatpush1.msra.mxu0 %v314
    %396 = vmatprep.subr.mxu0 0.0
    %397 = vmatpush1.msra.mxu0 %v315
    %398 = vmatprep.subr.mxu0 0.0
    %399 = vmatpush1.msra.mxu0 %v316
    %400 = vmatprep.subr.mxu0 0.0
    %401 = vmatpush1.msra.mxu0 %v317
    %402 = vmatprep.subr.mxu0 0.0
    %403 = vmatpush1.msra.mxu0 %v318
    %404 = vmatprep.subr.mxu0 0.0
    %405 = vmatpush1.msra.mxu0 %v319
    %406 = vmatprep.subr.mxu0 0.0
    %407 = vmatpush1.msra.mxu0 %v320
    %408 = vmatprep.subr.mxu0 0.0
    %409 = vmatpush1.msra.mxu0 %v321
    %410 = vmatprep.subr.mxu0 0.0
    %411 = vmatpush1.msra.mxu0 %v322
    %412 = vmatprep.subr.mxu0 0.0
    %413 = vmatpush1.msra.mxu0 %v323
    %414 = vmatprep.subr.mxu0 0.0
    %415 = vmatpush1.msra.mxu0 %v324
    %416 = vmatprep.subr.mxu0 0.0
    %417 = vmatpush1.msra.mxu0 %v325
    %418 = vmatprep.subr.mxu0 0.0
    %419 = vmatpush1.msra.mxu0 %v326
    %420 = vmatprep.subr.mxu0 0.0
    %421 = vmatpush1.msra.mxu0 %v327
    %422 = vmatprep.subr.mxu0 0.0
    %423 = vmatpush1.msra.mxu0 %v328
    %424 = vmatprep.subr.mxu0 0.0
    %425 = vmatpush1.msra.mxu0 %v329
    %426 = vmatprep.mubr.f32.mxu0 %v295
    %427 = vmatmul.mubr.f32.gmra.mrb[0].mxu0 %v294
    %v428 = vpop.f32.mrb[0].mxu0
    %v429 = vadd.f32 0.0, %v428
    %v430 = vpop.f32.mrb[0].mxu0
    %431 = vdwg.mxu0
    %432 = vmatprep.subr.mxu0 0.0
    %433 = vmatpush1.msra.mxu0 %v330
    %434 = vmatprep.subr.mxu0 0.0
    %435 = vmatpush1.msra.mxu0 %v331
    %436 = vmatprep.subr.mxu0 0.0
    %437 = vmatpush1.msra.mxu0 %v332
    %438 = vmatprep.subr.mxu0 0.0
    %439 = vmatpush1.msra.mxu0 %v333
    %440 = vmatprep.subr.mxu0 0.0
    %441 = vmatpush1.msra.mxu0 %v334
    %442 = vmatprep.subr.mxu0 0.0
    %443 = vmatpush1.msra.mxu0 %v335
    %444 = vmatprep.subr.mxu0 0.0
    %445 = vmatpush1.msra.mxu0 %v336
    %446 = vmatprep.subr.mxu0 0.0
    %447 = vmatpush1.msra.mxu0 %v337
    %448 = vmatprep.subr.mxu0 0.0
    %449 = vmatpush1.msra.mxu0 %v338
    %450 = vmatprep.subr.mxu0 0.0
    %451 = vmatpush1.msra.mxu0 %v339
    %452 = vmatprep.subr.mxu0 0.0
    %453 = vmatpush1.msra.mxu0 %v340
    %454 = vmatprep.subr.mxu0 0.0
    %455 = vmatpush1.msra.mxu0 %v341
    %456 = vmatprep.subr.mxu0 0.0
    %457 = vmatpush1.msra.mxu0 %v342
    %458 = vmatprep.subr.mxu0 0.0
    %459 = vmatpush1.msra.mxu0 %v343
    %460 = vmatprep.subr.mxu0 0.0
    %461 = vmatpush1.msra.mxu0 %v344
    %462 = vmatprep.subr.mxu0 0.0
    %463 = vmatpush1.msra.mxu0 %v345
    %464 = vmatprep.subr.mxu0 0.0
    %465 = vmatpush1.msra.mxu0 %v346
    %466 = vmatprep.subr.mxu0 0.0
    %467 = vmatpush1.msra.mxu0 %v347
    %468 = vmatprep.subr.mxu0 0.0
    %469 = vmatpush1.msra.mxu0 %v348
    %470 = vmatprep.subr.mxu0 0.0
    %471 = vmatpush1.msra.mxu0 %v349
    %472 = vmatprep.subr.mxu0 0.0
    %473 = vmatpush1.msra.mxu0 %v350
    %474 = vmatprep.subr.mxu0 0.0
    %475 = vmatpush1.msra.mxu0 %v351
    %476 = vmatprep.subr.mxu0 0.0
    %477 = vmatpush1.msra.mxu0 %v352
    %478 = vmatprep.subr.mxu0 0.0
    %479 = vmatpush1.msra.mxu0 %v353
    %480 = vmatprep.subr.mxu0 0.0
    %481 = vmatpush1.msra.mxu0 %v354
    %482 = vmatprep.subr.mxu0 0.0
    %483 = vmatpush1.msra.mxu0 %v355
    %484 = vmatprep.subr.mxu0 0.0
    %485 = vmatpush1.msra.mxu0 %v356
    %486 = vmatprep.subr.mxu0 0.0
    %487 = vmatpush1.msra.mxu0 %v357
    %488 = vmatprep.subr.mxu0 0.0
    %489 = vmatpush1.msra.mxu0 %v358
    %490 = vmatprep.subr.mxu0 0.0
    %491 = vmatpush1.msra.mxu0 %v359
    %492 = vmatprep.subr.mxu0 0.0
    %493 = vmatpush1.msra.mxu0 %v360
    %494 = vmatprep.subr.mxu0 0.0
    %495 = vmatpush1.msra.mxu0 %v361
    %496 = vmatprep.mubr.f32.mxu0 %v297
    %497 = vmatmul.mubr.f32.gmra.mrb[0].mxu0 %v296
    %v498 = vpop.f32.mrb[0].mxu0
    %v499 = vadd.f32 %v429, %v498
    %v500 = vpop.f32.mrb[0].mxu0
    %501 = vdwg.mxu0
    %vm502 = vcmask 130048
    %v503 = vsel %vm502, %v499, -inf
    %504 = vmax.xlane.f32.xlu0 %v503
    %v505 = vpop.xlane.xlu0 %504
    %v506 = vsub.f32 %v499, %v505
    %v507 = vmul.f32 %v506, 1.442695
    %v508 = vpow.pop %v507
    %v509 = vsel %vm502, %v508, 0.0
    %510 = vadd.xlane.f32.xlu0 %v509
    %v511 = vpop.xlane.xlu0 %510
    %v512 = vrcp.pop %v511
    %v513 = vmul.f32 %v508, %v512
    %v514 = vld [vmem:[%s7] sm:$0xff]
    %v515 = vld [vmem:[%s7 + $0x8] sm:$0xff]
    %v517 = vsel %vm502, %v513, 0
    %519 = vmatprep.subr.mxu0 0.0
    %520 = vmatpush1.msra.mxu0 %v514
    %521 = vmatprep.subr.mxu0 0.0
    %522 = vmatpush1.msra.mxu0 %v515
    %523 = vmatprep.subr.mxu0 0.0
    %524 = vmatpush1.msra.mxu0 0.0
    %525 = vmatprep.subr.mxu0 0.0
    %526 = vmatpush1.msra.mxu0 0.0
    %527 = vmatprep.subr.mxu0 0.0
    %528 = vmatpush1.msra.mxu0 0.0
    %529 = vmatprep.subr.mxu0 0.0
    %530 = vmatpush1.msra.mxu0 0.0
    %531 = vmatprep.subr.mxu0 0.0
    %532 = vmatpush1.msra.mxu0 0.0
    %533 = vmatprep.subr.mxu0 0.0
    %534 = vmatpush1.msra.mxu0 0.0
    %535 = vmatprep.subr.mxu0 0.0
    %536 = vmatpush1.msra.mxu0 0.0
    %537 = vmatprep.subr.mxu0 0.0
    %538 = vmatpush1.msra.mxu0 0.0
    %539 = vmatprep.subr.mxu0 0.0
    %540 = vmatpush1.msra.mxu0 0.0
    %541 = vmatprep.subr.mxu0 0.0
    %542 = vmatpush1.msra.mxu0 0.0
    %543 = vmatprep.subr.mxu0 0.0
    %544 = vmatpush1.msra.mxu0 0.0
    %545 = vmatprep.subr.mxu0 0.0
    %546 = vmatpush1.msra.mxu0 0.0
    %547 = vmatprep.subr.mxu0 0.0
    %548 = vmatpush1.msra.mxu0 0.0
    %549 = vmatprep.subr.mxu0 0.0
    %550 = vmatpush1.msra.mxu0 0.0
    %551 = vmatprep.subr.mxu0 0.0
    %552 = vmatpush1.msra.mxu0 0.0
    %553 = vmatprep.subr.mxu0 0.0
    %554 = vmatpush1.msra.mxu0 0.0
    %555 = vmatprep.subr.mxu0 0.0
    %556 = vmatpush1.msra.mxu0 0.0
    %557 = vmatprep.subr.mxu0 0.0
    %558 = vmatpush1.msra.mxu0 0.0
    %559 = vmatprep.subr.mxu0 0.0
    %560 = vmatpush1.msra.mxu0 0.0
    %561 = vmatprep.subr.mxu0 0.0
    %562 = vmatpush1.msra.mxu0 0.0
    %563 = vmatprep.subr.mxu0 0.0
    %564 = vmatpush1.msra.mxu0 0.0
    %565 = vmatprep.subr.mxu0 0.0
    %566 = vmatpush1.msra.mxu0 0.0
    %567 = vmatprep.subr.mxu0 0.0
    %568 = vmatpush1.msra.mxu0 0.0
    %569 = vmatprep.subr.mxu0 0.0
    %570 = vmatpush1.msra.mxu0 0.0
    %571 = vmatprep.subr.mxu0 0.0
    %572 = vmatpush1.msra.mxu0 0.0
    %573 = vmatprep.subr.mxu0 0.0
    %574 = vmatpush1.msra.mxu0 0.0
    %575 = vmatprep.subr.mxu0 0.0
    %576 = vmatpush1.msra.mxu0 0.0
    %577 = vmatprep.subr.mxu0 0.0
    %578 = vmatpush1.msra.mxu0 0.0
    %579 = vmatprep.subr.mxu0 0.0
    %580 = vmatpush1.msra.mxu0 0.0
    %581 = vmatprep.subr.mxu0 0.0
    %582 = vmatpush1.msra.mxu0 0.0
    %583 = vmatprep.mubr.f32.mxu0 0.0
    %584 = vmatmul.mubr.f32.gmra.mrb[0].mxu0 %v517
    %v585 = vpop.f32.mrb[0].mxu0
    %v586 = vadd.f32 0.0, %v585
    %v587 = vpop.f32.mrb[0].mxu0
    %588 = vdwg.mxu0
    %v589 = vld [vmem:[%s8] sm:$0xff]
    %v590 = vmul.f32 %v586, %v589
    %v591 = vld [vmem:[%s1] sm:$0xff]
    %v592 = vld [vmem:[%s1 + $0x8] sm:$0xff]
    %v593 = vld [vmem:[%s1 + $0x10] sm:$0xff]
    %v594 = vld [vmem:[%s1 + $0x18] sm:$0xff]
    %v595 = vld [vmem:[%s1 + $0x20] sm:$0xff]
    %v596 = vld [vmem:[%s1 + $0x28] sm:$0xff]
    %v597 = vld [vmem:[%s1 + $0x30] sm:$0xff]
    %v598 = vld [vmem:[%s1 + $0x38] sm:$0xff]
    %v599 = vld [vmem:[%s1 + $0x40] sm:$0xff]
    %v600 = vld [vmem:[%s1 + $0x48] sm:$0xff]
    %v601 = vld [vmem:[%s1 + $0x50] sm:$0xff]
    %v602 = vld [vmem:[%s1 + $0x58] sm:$0xff]
    %v603 = vld [vmem:[%s1 + $0x60] sm:$0xff]
    %v604 = vld [vmem:[%s1 + $0x68] sm:$0xff]
    %v605 = vld [vmem:[%s1 + $0x70] sm:$0xff]
    %v606 = vld [vmem:[%s1 + $0x78] sm:$0xff]
    %607 = vmatprep.subr.mxu0 0.0
    %608 = vmatpush1.msra.mxu0 %v591
    %609 = vmatprep.subr.mxu0 0.0
    %610 = vmatpush1.msra.mxu0 %v592
    %611 = vmatprep.subr.mxu0 0.0
    %612 = vmatpush1.msra.mxu0 %v593
    %613 = vmatprep.subr.mxu0 0.0
    %614 = vmatpush1.msra.mxu0 %v594
    %615 = vmatprep.subr.mxu0 0.0
    %616 = vmatpush1.msra.mxu0 %v595
    %617 = vmatprep.subr.mxu0 0.0
    %618 = vmatpush1.msra.mxu0 %v596
    %619 = vmatprep.subr.mxu0 0.0
    %620 = vmatpush1.msra.mxu0 %v597
    %621 = vmatprep.subr.mxu0 0.0
    %622 = vmatpush1.msra.mxu0 %v598
    %623 = vmatprep.subr.mxu0 0.0
    %624 = vmatpush1.msra.mxu0 %v599
    %625 = vmatprep.subr.mxu0 0.0
    %626 = vmatpush1.msra.mxu0 %v600
    %627 = vmatprep.subr.mxu0 0.0
    %628 = vmatpush1.msra.mxu0 %v601
    %629 = vmatprep.subr.mxu0 0.0
    %630 = vmatpush1.msra.mxu0 %v602
    %631 = vmatprep.subr.mxu0 0.0
    %632 = vmatpush1.msra.mxu0 %v603
    %633 = vmatprep.subr.mxu0 0.0
    %634 = vmatpush1.msra.mxu0 %v604
    %635 = vmatprep.subr.mxu0 0.0
    %636 = vmatpush1.msra.mxu0 %v605
    %637 = vmatprep.subr.mxu0 0.0
    %638 = vmatpush1.msra.mxu0 %v606
    %639 = vmatprep.subr.mxu0 0.0
    %640 = vmatpush1.msra.mxu0 0.0
    %641 = vmatprep.subr.mxu0 0.0
    %642 = vmatpush1.msra.mxu0 0.0
    %643 = vmatprep.subr.mxu0 0.0
    %644 = vmatpush1.msra.mxu0 0.0
    %645 = vmatprep.subr.mxu0 0.0
    %646 = vmatpush1.msra.mxu0 0.0
    %647 = vmatprep.subr.mxu0 0.0
    %648 = vmatpush1.msra.mxu0 0.0
    %649 = vmatprep.subr.mxu0 0.0
    %650 = vmatpush1.msra.mxu0 0.0
    %651 = vmatprep.subr.mxu0 0.0
    %652 = vmatpush1.msra.mxu0 0.0
    %653 = vmatprep.subr.mxu0 0.0
    %654 = vmatpush1.msra.mxu0 0.0
    %655 = vmatprep.subr.mxu0 0.0
    %656 = vmatpush1.msra.mxu0 0.0
    %657 = vmatprep.subr.mxu0 0.0
    %658 = vmatpush1.msra.mxu0 0.0
    %659 = vmatprep.subr.mxu0 0.0
    %660 = vmatpush1.msra.mxu0 0.0
    %661 = vmatprep.subr.mxu0 0.0
    %662 = vmatpush1.msra.mxu0 0.0
    %663 = vmatprep.subr.mxu0 0.0
    %664 = vmatpush1.msra.mxu0 0.0
    %665 = vmatprep.subr.mxu0 0.0
    %666 = vmatpush1.msra.mxu0 0.0
    %667 = vmatprep.subr.mxu0 0.0
    %668 = vmatpush1.msra.mxu0 0.0
    %669 = vmatprep.subr.mxu0 0.0
    %670 = vmatpush1.msra.mxu0 0.0
    %671 = vmatprep.mubr.f32.mxu0 0.0
    %672 = vmatmul.mubr.f32.gmra.mrb[0].mxu0 %v590
    %v673 = vpop.f32.mrb[0].mxu0
    %v674 = vadd.f32 0.0, %v673
    %v675 = vpop.f32.mrb[0].mxu0
    %676 = vdwg.mxu0
    %v677 = vld [vmem:[%s2] sm:$0xff]
    %v678 = vadd.f32 %v677, %v283
    %v679 = vld [vmem:[%s9] sm:$0xff]
    %v680 = vld [vmem:[%s9 + $0x8] sm:$0xff]
    %v681 = vld [vmem:[%s9 + $0x10] sm:$0xff]
    %v682 = vld [vmem:[%s9 + $0x18] sm:$0xff]
    %v684 = vsel %vm70, %v674, 0
    %686 = vmatprep.subr.mxu0 0.0
    %687 = vmatpush1.msra.mxu0 %v679
    %688 = vmatprep.subr.mxu0 0.0
    %689 = vmatpush1.msra.mxu0 %v680
    %690 = vmatprep.subr.mxu0 0.0
    %691 = vmatpush1.msra.mxu0 %v681
    %692 = vmatprep.subr.mxu0 0.0
    %693 = vmatpush1.msra.mxu0 %v682
    %694 = vmatprep.subr.mxu0 0.0
    %695 = vmatpush1.msra.mxu0 0.0
    %696 = vmatprep.subr.mxu0 0.0
    %697 = vmatpush1.msra.mxu0 0.0
    %698 = vmatprep.subr.mxu0 0.0
    %699 = vmatpush1.msra.mxu0 0.0
    %700 = vmatprep.subr.mxu0 0.0
    %701 = vmatpush1.msra.mxu0 0.0
    %702 = vmatprep.subr.mxu0 0.0
    %703 = vmatpush1.msra.mxu0 0.0
    %704 = vmatprep.subr.mxu0 0.0
    %705 = vmatpush1.msra.mxu0 0.0
    %706 = vmatprep.subr.mxu0 0.0
    %707 = vmatpush1.msra.mxu0 0.0
    %708 = vmatprep.subr.mxu0 0.0
    %709 = vmatpush1.msra.mxu0 0.0
    %710 = vmatprep.subr.mxu0 0.0
    %711 = vmatpush1.msra.mxu0 0.0
    %712 = vmatprep.subr.mxu0 0.0
    %713 = vmatpush1.msra.mxu0 0.0
    %714 = vmatprep.subr.mxu0 0.0
    %715 = vmatpush1.msra.mxu0 0.0
    %716 = vmatprep.subr.mxu0 0.0
    %717 = vmatpush1.msra.mxu0 0.0
    %718 = vmatprep.subr.mxu0 0.0
    %719 = vmatpush1.msra.mxu0 0.0
    %720 = vmatprep.subr.mxu0 0.0
    %721 = vmatpush1.msra.mxu0 0.0
    %722 = vmatprep.subr.mxu0 0.0
    %723 = vmatpush1.msra.mxu0 0.0
    %724 = vmatprep.subr.mxu0 0.0
    %725 = vmatpush1.msra.mxu0 0.0
    %726 = vmatprep.subr.mxu0 0.0
    %727 = vmatpush1.msra.mxu0 0.0
    %728 = vmatprep.subr.mxu0 0.0
    %729 = vmatpush1.msra.mxu0 0.0
    %730 = vmatprep.subr.mxu0 0.0
    %731 = vmatpush1.msra.mxu0 0.0
    %732 = vmatprep.subr.mxu0 0.0
    %733 = vmatpush1.msra.mxu0 0.0
    %734 = vmatprep.subr.mxu0 0.0
    %735 = vmatpush1.msra.mxu0 0.0
    %736 = vmatprep.subr.mxu0 0.0
    %737 = vmatpush1.msra.mxu0 0.0
    %738 = vmatprep.subr.mxu0 0.0
    %739 = vmatpush1.msra.mxu0 0.0
    %740 = vmatprep.subr.mxu0 0.0
    %741 = vmatpush1.msra.mxu0 0.0
    %742 = vmatprep.subr.mxu0 0.0
    %743 = vmatpush1.msra.mxu0 0.0
    %744 = vmatprep.subr.mxu0 0.0
    %745 = vmatpush1.msra.mxu0 0.0
    %746 = vmatprep.subr.mxu0 0.0
    %747 = vmatpush1.msra.mxu0 0.0
    %748 = vmatprep.subr.mxu0 0.0
    %749 = vmatpush1.msra.mxu0 0.0
    %750 = vmatprep.mubr.f32.mxu0 0.0
    %751 = vmatmul.mubr.f32.gmra.mrb[0].mxu0 %v684
    %v752 = vpop.f32.mrb[0].mxu0
    %v753 = vadd.f32 0.0, %v752
    %v754 = vpop.f32.mrb[0].mxu0
    %755 = vdwg.mxu0
    %v756 = vadd.f32 %v678, %v753
    %v757 = vxor.u32 %v756, 2147483648
    %v758 = vmul.f32 %v757, 1.442695
    %v759 = vpow.pop %v758
    %v760 = vadd.f32 %v759, 1.0
    %v761 = vrcp.pop %v760
    %v762 = vmul.f32 1.0, %v761
    %v763 = vmul.f32 %v762, 2.0
    %v764 = vsub.f32 %v763, 1.0
    %766 = vrot.lane.b32.xlu0 %v49, 32
    %v767 = vpop.permute.xlu0 %766
    %v769 = vmul.f32 %v762, %v767
    %771 = vrot.lane.b32.xlu0 %v764, 64
    %v772 = vpop.permute.xlu0 %771
    %v774 = vmul.f32 %v762, %v772
    %776 = vrot.lane.b32.xlu0 %v774, 32
    %v777 = vpop.permute.xlu0 %776
    %v779 = vadd.f32 %v769, %v777
    %v780 = vtanh.pop %v779
    %782 = vrot.lane.b32.xlu0 %v780, 64
    %v783 = vpop.permute.xlu0 %782
    %v785 = vmul.f32 %v762, %v783
    %v786 = vld [vmem:[%s10] sm:$0xff]
    %v787 = vld [vmem:[%s10 + $0x8] sm:$0xff]
    %v788 = vld [vmem:[%s10 + $0x10] sm:$0xff]
    %v789 = vld [vmem:[%s10 + $0x18] sm:$0xff]
    %v790 = vld [vmem:[%s11] sm:$0x1]
    %v792 = vlaneseq
    %v793 = vshrl.u32 %v792, 7
    %v794 = vsub.s32 0, %v793
    %v795 = vrot.slane %v790, %v794
    %798 = vrot.lane.b32.xlu0 %v785, 32
    %v799 = vpop.permute.xlu0 %798
    %v800 = vsel %vm70, %v799, 0
    %802 = vmatprep.subr.mxu0 0.0
    %803 = vmatpush1.msra.mxu0 %v786
    %804 = vmatprep.subr.mxu0 0.0
    %805 = vmatpush1.msra.mxu0 %v787
    %806 = vmatprep.subr.mxu0 0.0
    %807 = vmatpush1.msra.mxu0 %v788
    %808 = vmatprep.subr.mxu0 0.0
    %809 = vmatpush1.msra.mxu0 %v789
    %810 = vmatprep.subr.mxu0 0.0
    %811 = vmatpush1.msra.mxu0 0.0
    %812 = vmatprep.subr.mxu0 0.0
    %813 = vmatpush1.msra.mxu0 0.0
    %814 = vmatprep.subr.mxu0 0.0
    %815 = vmatpush1.msra.mxu0 0.0
    %816 = vmatprep.subr.mxu0 0.0
    %817 = vmatpush1.msra.mxu0 0.0
    %818 = vmatprep.subr.mxu0 0.0
    %819 = vmatpush1.msra.mxu0 0.0
    %820 = vmatprep.subr.mxu0 0.0
    %821 = vmatpush1.msra.mxu0 0.0
    %822 = vmatprep.subr.mxu0 0.0
    %823 = vmatpush1.msra.mxu0 0.0
    %824 = vmatprep.subr.mxu0 0.0
    %825 = vmatpush1.msra.mxu0 0.0
    %826 = vmatprep.subr.mxu0 0.0
    %827 = vmatpush1.msra.mxu0 0.0
    %828 = vmatprep.subr.mxu0 0.0
    %829 = vmatpush1.msra.mxu0 0.0
    %830 = vmatprep.subr.mxu0 0.0
    %831 = vmatpush1.msra.mxu0 0.0
    %832 = vmatprep.subr.mxu0 0.0
    %833 = vmatpush1.msra.mxu0 0.0
    %834 = vmatprep.subr.mxu0 0.0
    %835 = vmatpush1.msra.mxu0 0.0
    %836 = vmatprep.subr.mxu0 0.0
    %837 = vmatpush1.msra.mxu0 0.0
    %838 = vmatprep.subr.mxu0 0.0
    %839 = vmatpush1.msra.mxu0 0.0
    %840 = vmatprep.subr.mxu0 0.0
    %841 = vmatpush1.msra.mxu0 0.0
    %842 = vmatprep.subr.mxu0 0.0
    %843 = vmatpush1.msra.mxu0 0.0
    %844 = vmatprep.subr.mxu0 0.0
    %845 = vmatpush1.msra.mxu0 0.0
    %846 = vmatprep.subr.mxu0 0.0
    %847 = vmatpush1.msra.mxu0 0.0
    %848 = vmatprep.subr.mxu0 0.0
    %849 = vmatpush1.msra.mxu0 0.0
    %850 = vmatprep.subr.mxu0 0.0
    %851 = vmatpush1.msra.mxu0 0.0
    %852 = vmatprep.subr.mxu0 0.0
    %853 = vmatpush1.msra.mxu0 0.0
    %854 = vmatprep.subr.mxu0 0.0
    %855 = vmatpush1.msra.mxu0 0.0
    %856 = vmatprep.subr.mxu0 0.0
    %857 = vmatpush1.msra.mxu0 0.0
    %858 = vmatprep.subr.mxu0 0.0
    %859 = vmatpush1.msra.mxu0 0.0
    %860 = vmatprep.subr.mxu0 0.0
    %861 = vmatpush1.msra.mxu0 0.0
    %862 = vmatprep.subr.mxu0 0.0
    %863 = vmatpush1.msra.mxu0 0.0
    %864 = vmatprep.subr.mxu0 0.0
    %865 = vmatpush1.msra.mxu0 0.0
    %866 = vmatprep.mubr.f32.mxu0 0.0
    %867 = vmatmul.mubr.f32.gmra.mrb[0].mxu0 %v800
    %v868 = vpop.f32.mrb[0].mxu0
    %v869 = vadd.f32 %v795, %v868
    %v870 = vpop.f32.mrb[0].mxu0
    %871 = vdwg.mxu0
    %872 = vst [vmem:[#allocation2] sm:$0xff] %v869
    %873 = vst.msk [vmem:[#allocation4] sm:$0xff] %vm502, %v513
    %875 = vst.msk [vmem:[#allocation6] sm:$0xff] %vm70, %v799
    %877 = vrot.lane.b32.xlu0 %v779, 96
    %v878 = vpop.permute.xlu0 %877
    %880 = vst.msk [vmem:[#allocation7] sm:$0xff] %vm70, %v878
    %v881 = vld [vmem:[%s5] sm:$0xff]
    %v882 = vld [vmem:[%s5 + $0x8] sm:$0xff]
    %v883 = vld [vmem:[%s5 + $0x10] sm:$0xff]
    %v884 = vld [vmem:[%s5 + $0x18] sm:$0xff]
    %v885 = vld [vmem:[%s5 + $0x20] sm:$0xff]
    %v886 = vld [vmem:[%s5 + $0x28] sm:$0xff]
    %v887 = vld [vmem:[%s5 + $0x30] sm:$0xff]
    %v888 = vld [vmem:[%s5 + $0x38] sm:$0xff]
    %v889 = vld [vmem:[%s5 + $0x40] sm:$0xff]
    %v890 = vld [vmem:[%s5 + $0x48] sm:$0xff]
    %v891 = vld [vmem:[%s5 + $0x50] sm:$0xff]
    %v892 = vld [vmem:[%s5 + $0x58] sm:$0xff]
    %v893 = vld [vmem:[%s5 + $0x60] sm:$0xff]
    %v894 = vld [vmem:[%s5 + $0x68] sm:$0xff]
    %v895 = vld [vmem:[%s5 + $0x70] sm:$0xff]
    %v896 = vld [vmem:[%s5 + $0x78] sm:$0xff]
    %v897 = vld [vmem:[%s5 + $0x80] sm:$0xff]
    %v898 = vld [vmem:[%s5 + $0x88] sm:$0xff]
    %v899 = vld [vmem:[%s5 + $0x90] sm:$0xff]
    %v900 = vld [vmem:[%s5 + $0x98] sm:$0xff]
    %901 = vmatprep.subr.mxu0 %v882
    %902 = vmatpush1.msra.mxu0 %v881
    %903 = vmatprep.subr.mxu0 %v887
    %904 = vmatpush1.msra.mxu0 %v886
    %905 = vmatprep.subr.mxu0 %v892
    %906 = vmatpush1.msra.mxu0 %v891
    %907 = vmatprep.subr.mxu0 %v897
    %908 = vmatpush1.msra.mxu0 %v896
    %909 = vmatprep.subr.mxu0 0.0
    %910 = vmatpush1.msra.mxu0 0.0
    %911 = vmatprep.subr.mxu0 0.0
    %912 = vmatpush1.msra.mxu0 0.0
    %913 = vmatprep.subr.mxu0 0.0
    %914 = vmatpush1.msra.mxu0 0.0
    %915 = vmatprep.subr.mxu0 0.0
    %916 = vmatpush1.msra.mxu0 0.0
    %917 = vmatprep.subr.mxu0 0.0
    %918 = vmatpush1.msra.mxu0 0.0
    %919 = vmatprep.subr.mxu0 0.0
    %920 = vmatpush1.msra.mxu0 0.0
    %921 = vmatprep.subr.mxu0 0.0
    %922 = vmatpush1.msra.mxu0 0.0
    %923 = vmatprep.subr.mxu0 0.0
    %924 = vmatpush1.msra.mxu0 0.0
    %925 = vmatprep.subr.mxu0 0.0
    %926 = vmatpush1.msra.mxu0 0.0
    %927 = vmatprep.subr.mxu0 0.0
    %928 = vmatpush1.msra.mxu0 0.0
    %929 = vmatprep.subr.mxu0 0.0
    %930 = vmatpush1.msra.mxu0 0.0
    %931 = vmatprep.subr.mxu0 0.0
    %932 = vmatpush1.msra.mxu0 0.0
    %933 = vmatprep.subr.mxu0 0.0
    %934 = vmatpush1.msra.mxu0 0.0
    %935 = vmatprep.subr.mxu0 0.0
    %936 = vmatpush1.msra.mxu0 0.0
    %937 = vmatprep.subr.mxu0 0.0
    %938 = vmatpush1.msra.mxu0 0.0
    %939 = vmatprep.subr.mxu0 0.0
    %940 = vmatpush1.msra.mxu0 0.0
    %941 = vmatprep.subr.mxu0 0.0
    %942 = vmatpush1.msra.mxu0 0.0
    %943 = vmatprep.subr.mxu0 0.0
    %944 = vmatpush1.msra.mxu0 0.0
    %945 = vmatprep.subr.mxu0 0.0
    %946 = vmatpush1.msra.mxu0 0.0
    %947 = vmatprep.subr.mxu0 0.0
    %948 = vmatpush1.msra.mxu0 0.0
    %949 = vmatprep.subr.mxu0 0.0
    %950 = vmatpush1.msra.mxu0 0.0
    %951 = vmatprep.subr.mxu0 0.0
    %952 = vmatpush1.msra.mxu0 0.0
    %953 = vmatprep.subr.mxu0 0.0
    %954 = vmatpush1.msra.mxu0 0.0
    %955 = vmatprep.subr.mxu0 0.0
    %956 = vmatpush1.msra.mxu0 0.0
    %957 = vmatprep.subr.mxu0 0.0
    %958 = vmatpush1.msra.mxu0 0.0
    %959 = vmatprep.subr.mxu0 0.0
    %960 = vmatpush1.msra.mxu0 0.0
    %961 = vmatprep.subr.mxu0 0.0
    %962 = vmatpush1.msra.mxu0 0.0
    %963 = vmatprep.subr.mxu0 0.0
    %964 = vmatpush1.msra.mxu0 0.0
    %965 = vmatprep.mubr.f32.mxu0 0.0
    %966 = vmatmul.mubr.f32.gmra.mrb[0].mxu0 %v800
    %v967 = vpop.f32.mrb[0].mxu0
    %v968 = vadd.f32 0.0, %v967
    %v969 = vpop.f32.mrb[0].mxu0
    %v970 = vadd.f32 0.0, %v969
    %971 = vdwg.mxu0
    %972 = vmatprep.subr.mxu0 %v884
    %973 = vmatpush1.msra.mxu0 %v883
    %974 = vmatprep.subr.mxu0 %v889
    %975 = vmatpush1.msra.mxu0 %v888
    %976 = vmatprep.subr.mxu0 %v894
    %977 = vmatpush1.msra.mxu0 %v893
    %978 = vmatprep.subr.mxu0 %v899
    %979 = vmatpush1.msra.mxu0 %v898
    %980 = vmatprep.subr.mxu0 0.0
    %981 = vmatpush1.msra.mxu0 0.0
    %982 = vmatprep.subr.mxu0 0.0
    %983 = vmatpush1.msra.mxu0 0.0
    %984 = vmatprep.subr.mxu0 0.0
    %985 = vmatpush1.msra.mxu0 0.0
    %986 = vmatprep.subr.mxu0 0.0
    %987 = vmatpush1.msra.mxu0 0.0
    %988 = vmatprep.subr.mxu0 0.0
    %989 = vmatpush1.msra.mxu0 0.0
    %990 = vmatprep.subr.mxu0 0.0
    %991 = vmatpush1.msra.mxu0 0.0
    %992 = vmatprep.subr.mxu0 0.0
    %993 = vmatpush1.msra.mxu0 0.0
    %994 = vmatprep.subr.mxu0 0.0
    %995 = vmatpush1.msra.mxu0 0.0
    %996 = vmatprep.subr.mxu0 0.0
    %997 = vmatpush1.msra.mxu0 0.0
    %998 = vmatprep.subr.mxu0 0.0
    %999 = vmatpush1.msra.mxu0 0.0
    %1000 = vmatprep.subr.mxu0 0.0
    %1001 = vmatpush1.msra.mxu0 0.0
    %1002 = vmatprep.subr.mxu0 0.0
    %1003 = vmatpush1.msra.mxu0 0.0
    %1004 = vmatprep.subr.mxu0 0.0
    %1005 = vmatpush1.msra.mxu0 0.0
    %1006 = vmatprep.subr.mxu0 0.0
    %1007 = vmatpush1.msra.mxu0 0.0
    %1008 = vmatprep.subr.mxu0 0.0
    %1009 = vmatpush1.msra.mxu0 0.0
    %1010 = vmatprep.subr.mxu0 0.0
    %1011 = vmatpush1.msra.mxu0 0.0
    %1012 = vmatprep.subr.mxu0 0.0
    %1013 = vmatpush1.msra.mxu0 0.0
    %1014 = vmatprep.subr.mxu0 0.0
    %1015 = vmatpush1.msra.mxu0 0.0
    %1016 = vmatprep.subr.mxu0 0.0
    %1017 = vmatpush1.msra.mxu0 0.0
    %1018 = vmatprep.subr.mxu0 0.0
    %1019 = vmatpush1.msra.mxu0 0.0
    %1020 = vmatprep.subr.mxu0 0.0
    %1021 = vmatpush1.msra.mxu0 0.0
    %1022 = vmatprep.subr.mxu0 0.0
    %1023 = vmatpush1.msra.mxu0 0.0
    %1024 = vmatprep.subr.mxu0 0.0
    %1025 = vmatpush1.msra.mxu0 0.0
    %1026 = vmatprep.subr.mxu0 0.0
    %1027 = vmatpush1.msra.mxu0 0.0
    %1028 = vmatprep.subr.mxu0 0.0
    %1029 = vmatpush1.msra.mxu0 0.0
    %1030 = vmatprep.subr.mxu0 0.0
    %1031 = vmatpush1.msra.mxu0 0.0
    %1032 = vmatprep.subr.mxu0 0.0
    %1033 = vmatpush1.msra.mxu0 0.0
    %1034 = vmatprep.subr.mxu0 0.0
    %1035 = vmatpush1.msra.mxu0 0.0
    %1036 = vmatprep.mubr.f32.mxu0 0.0
    %1037 = vmatmul.mubr.f32.gmra.mrb[0].mxu0 %v800
    %v1038 = vpop.f32.mrb[0].mxu0
    %v1039 = vadd.f32 0.0, %v1038
    %v1040 = vpop.f32.mrb[0].mxu0
    %v1041 = vadd.f32 0.0, %v1040
    %1042 = vdwg.mxu0
    %1043 = vmatprep.subr.mxu0 0.0
    %1044 = vmatpush1.msra.mxu0 %v885
    %1045 = vmatprep.subr.mxu0 0.0
    %1046 = vmatpush1.msra.mxu0 %v890
    %1047 = vmatprep.subr.mxu0 0.0
    %1048 = vmatpush1.msra.mxu0 %v895
    %1049 = vmatprep.subr.mxu0 0.0
    %1050 = vmatpush1.msra.mxu0 %v900
    %1051 = vmatprep.subr.mxu0 0.0
    %1052 = vmatpush1.msra.mxu0 0.0
    %1053 = vmatprep.subr.mxu0 0.0
    %1054 = vmatpush1.msra.mxu0 0.0
    %1055 = vmatprep.subr.mxu0 0.0
    %1056 = vmatpush1.msra.mxu0 0.0
    %1057 = vmatprep.subr.mxu0 0.0
    %1058 = vmatpush1.msra.mxu0 0.0
    %1059 = vmatprep.subr.mxu0 0.0
    %1060 = vmatpush1.msra.mxu0 0.0
    %1061 = vmatprep.subr.mxu0 0.0
    %1062 = vmatpush1.msra.mxu0 0.0
    %1063 = vmatprep.subr.mxu0 0.0
    %1064 = vmatpush1.msra.mxu0 0.0
    %1065 = vmatprep.subr.mxu0 0.0
    %1066 = vmatpush1.msra.mxu0 0.0
    %1067 = vmatprep.subr.mxu0 0.0
    %1068 = vmatpush1.msra.mxu0 0.0
    %1069 = vmatprep.subr.mxu0 0.0
    %1070 = vmatpush1.msra.mxu0 0.0
    %1071 = vmatprep.subr.mxu0 0.0
    %1072 = vmatpush1.msra.mxu0 0.0
    %1073 = vmatprep.subr.mxu0 0.0
    %1074 = vmatpush1.msra.mxu0 0.0
    %1075 = vmatprep.subr.mxu0 0.0
    %1076 = vmatpush1.msra.mxu0 0.0
    %1077 = vmatprep.subr.mxu0 0.0
    %1078 = vmatpush1.msra.mxu0 0.0
    %1079 = vmatprep.subr.mxu0 0.0
    %1080 = vmatpush1.msra.mxu0 0.0
    %1081 = vmatprep.subr.mxu0 0.0
    %1082 = vmatpush1.msra.mxu0 0.0
    %1083 = vmatprep.subr.mxu0 0.0
    %1084 = vmatpush1.msra.mxu0 0.0
    %1085 = vmatprep.subr.mxu0 0.0
    %1086 = vmatpush1.msra.mxu0 0.0
    %1087 = vmatprep.subr.mxu0 0.0
    %1088 = vmatpush1.msra.mxu0 0.0
    %1089 = vmatprep.subr.mxu0 0.0
    %1090 = vmatpush1.msra.mxu0 0.0
    %1091 = vmatprep.subr.mxu0 0.0
    %1092 = vmatpush1.msra.mxu0 0.0
    %1093 = vmatprep.subr.mxu0 0.0
    %1094 = vmatpush1.msra.mxu0 0.0
    %1095 = vmatprep.subr.mxu0 0.0
    %1096 = vmatpush1.msra.mxu0 0.0
    %1097 = vmatprep.subr.mxu0 0.0
    %1098 = vmatpush1.msra.mxu0 0.0
    %1099 = vmatprep.subr.mxu0 0.0
    %1100 = vmatpush1.msra.mxu0 0.0
    %1101 = vmatprep.subr.mxu0 0.0
    %1102 = vmatpush1.msra.mxu0 0.0
    %1103 = vmatprep.subr.mxu0 0.0
    %1104 = vmatpush1.msra.mxu0 0.0
    %1105 = vmatprep.subr.mxu0 0.0
    %1106 = vmatpush1.msra.mxu0 0.0
    %1107 = vmatprep.mubr.f32.mxu0 0.0
    %1108 = vmatmul.mubr.f32.gmra.mrb[0].mxu0 %v800
    %v1109 = vpop.f32.mrb[0].mxu0
    %v1110 = vadd.f32 0.0, %v1109
    %v1111 = vpop.f32.mrb[0].mxu0
    %1112 = vdwg.mxu0
    %v1113 = vld [vmem:[%s0] sm:$0xff]
    %v1114 = vld [vmem:[%s0 + $0x8] sm:$0xff]
    %v1115 = vld [vmem:[%s0 + $0x10] sm:$0xff]
    %v1116 = vld [vmem:[%s0 + $0x18] sm:$0xff]
    %v1117 = vadd.f32 %v1113, %v968
    %v1118 = vadd.f32 %v1114, %v970
    %v1119 = vadd.f32 %v1115, %v1039
    %v1120 = vadd.f32 %v1116, %v1041
    %v1121 = vtanh.pop %v1117
    %v1122 = vtanh.pop %v1118
    %v1123 = vtanh.pop %v1119
    %v1124 = vtanh.pop %v1120
    %v1125 = vld [vmem:[%s6] sm:$0xff]
    %v1126 = vld [vmem:[%s6 + $0x8] sm:$0xff]
    %v1127 = vld [vmem:[%s6 + $0x10] sm:$0xff]
    %v1128 = vld [vmem:[%s6 + $0x18] sm:$0xff]
    %v1129 = vld [vmem:[%s6 + $0x20] sm:$0xff]
    %v1130 = vld [vmem:[%s6 + $0x28] sm:$0xff]
    %v1131 = vld [vmem:[%s6 + $0x30] sm:$0xff]
    %v1132 = vld [vmem:[%s6 + $0x38] sm:$0xff]
    %v1133 = vld [vmem:[%s6 + $0x40] sm:$0xff]
    %v1134 = vld [vmem:[%s6 + $0x48] sm:$0xff]
    %v1135 = vld [vmem:[%s6 + $0x50] sm:$0xff]
    %v1136 = vld [vmem:[%s6 + $0x58] sm:$0xff]
    %v1137 = vld [vmem:[%s6 + $0x60] sm:$0xff]
    %v1138 = vld [vmem:[%s6 + $0x68] sm:$0xff]
    %v1139 = vld [vmem:[%s6 + $0x70] sm:$0xff]
    %v1140 = vld [vmem:[%s6 + $0x78] sm:$0xff]
    %v1141 = vld [vmem:[%s6 + $0x80] sm:$0xff]
    %v1142 = vld [vmem:[%s6 + $0x88] sm:$0xff]
    %v1143 = vld [vmem:[%s6 + $0x90] sm:$0xff]
    %v1144 = vld [vmem:[%s6 + $0x98] sm:$0xff]
    %v1145 = vld [vmem:[%s6 + $0xa0] sm:$0xff]
    %v1146 = vld [vmem:[%s6 + $0xa8] sm:$0xff]
    %v1147 = vld [vmem:[%s6 + $0xb0] sm:$0xff]
    %v1148 = vld [vmem:[%s6 + $0xb8] sm:$0xff]
    %v1149 = vld [vmem:[%s6 + $0xc0] sm:$0xff]
    %v1150 = vld [vmem:[%s6 + $0xc8] sm:$0xff]
    %v1151 = vld [vmem:[%s6 + $0xd0] sm:$0xff]
    %v1152 = vld [vmem:[%s6 + $0xd8] sm:$0xff]
    %v1153 = vld [vmem:[%s6 + $0xe0] sm:$0xff]
    %v1154 = vld [vmem:[%s6 + $0xe8] sm:$0xff]
    %v1155 = vld [vmem:[%s6 + $0xf0] sm:$0xff]
    %v1156 = vld [vmem:[%s6 + $0xf8] sm:$0xff]
    %v1157 = vld [vmem:[%s6 + $0x100] sm:$0xff]
    %v1158 = vld [vmem:[%s6 + $0x108] sm:$0xff]
    %v1159 = vld [vmem:[%s6 + $0x110] sm:$0xff]
    %v1160 = vld [vmem:[%s6 + $0x118] sm:$0xff]
    %v1161 = vld [vmem:[%s6 + $0x120] sm:$0xff]
    %v1162 = vld [vmem:[%s6 + $0x128] sm:$0xff]
    %v1163 = vld [vmem:[%s6 + $0x130] sm:$0xff]
    %v1164 = vld [vmem:[%s6 + $0x138] sm:$0xff]
    %v1165 = vld [vmem:[%s6 + $0x140] sm:$0xff]
    %v1166 = vld [vmem:[%s6 + $0x148] sm:$0xff]
    %v1167 = vld [vmem:[%s6 + $0x150] sm:$0xff]
    %v1168 = vld [vmem:[%s6 + $0x158] sm:$0xff]
    %v1169 = vld [vmem:[%s6 + $0x160] sm:$0xff]
    %v1170 = vld [vmem:[%s6 + $0x168] sm:$0xff]
    %v1171 = vld [vmem:[%s6 + $0x170] sm:$0xff]
    %v1172 = vld [vmem:[%s6 + $0x178] sm:$0xff]
    %v1173 = vld [vmem:[%s6 + $0x180] sm:$0xff]
    %v1174 = vld [vmem:[%s6 + $0x188] sm:$0xff]
    %v1175 = vld [vmem:[%s6 + $0x190] sm:$0xff]
    %v1176 = vld [vmem:[%s6 + $0x198] sm:$0xff]
    %v1177 = vld [vmem:[%s6 + $0x1a0] sm:$0xff]
    %v1178 = vld [vmem:[%s6 + $0x1a8] sm:$0xff]
    %v1179 = vld [vmem:[%s6 + $0x1b0] sm:$0xff]
    %v1180 = vld [vmem:[%s6 + $0x1b8] sm:$0xff]
    %v1181 = vld [vmem:[%s6 + $0x1c0] sm:$0xff]
    %v1182 = vld [vmem:[%s6 + $0x1c8] sm:$0xff]
    %v1183 = vld [vmem:[%s6 + $0x1d0] sm:$0xff]
    %v1184 = vld [vmem:[%s6 + $0x1d8] sm:$0xff]
    %v1185 = vld [vmem:[%s6 + $0x1e0] sm:$0xff]
    %v1186 = vld [vmem:[%s6 + $0x1e8] sm:$0xff]
    %v1187 = vld [vmem:[%s6 + $0x1f0] sm:$0xff]
    %v1188 = vld [vmem:[%s6 + $0x1f8] sm:$0xff]
    %1189 = vmatprep.subr.mxu0 0.0
    %1190 = vmatpush1.msra.mxu0 %v1125
    %1191 = vmatprep.subr.mxu0 0.0
    %1192 = vmatpush1.msra.mxu0 %v1126
    %1193 = vmatprep.subr.mxu0 0.0
    %1194 = vmatpush1.msra.mxu0 %v1127
    %1195 = vmatprep.subr.mxu0 0.0
    %1196 = vmatpush1.msra.mxu0 %v1128
    %1197 = vmatprep.subr.mxu0 0.0
    %1198 = vmatpush1.msra.mxu0 %v1129
    %1199 = vmatprep.subr.mxu0 0.0
    %1200 = vmatpush1.msra.mxu0 %v1130
    %1201 = vmatprep.subr.mxu0 0.0
    %1202 = vmatpush1.msra.mxu0 %v1131
    %1203 = vmatprep.subr.mxu0 0.0
    %1204 = vmatpush1.msra.mxu0 %v1132
    %1205 = vmatprep.subr.mxu0 0.0
    %1206 = vmatpush1.msra.mxu0 %v1133
    %1207 = vmatprep.subr.mxu0 0.0
    %1208 = vmatpush1.msra.mxu0 %v1134
    %1209 = vmatprep.subr.mxu0 0.0
    %1210 = vmatpush1.msra.mxu0 %v1135
    %1211 = vmatprep.subr.mxu0 0.0
    %1212 = vmatpush1.msra.mxu0 %v1136
    %1213 = vmatprep.subr.mxu0 0.0
    %1214 = vmatpush1.msra.mxu0 %v1137
    %1215 = vmatprep.subr.mxu0 0.0
    %1216 = vmatpush1.msra.mxu0 %v1138
    %1217 = vmatprep.subr.mxu0 0.0
    %1218 = vmatpush1.msra.mxu0 %v1139
    %1219 = vmatprep.subr.mxu0 0.0
    %1220 = vmatpush1.msra.mxu0 %v1140
    %1221 = vmatprep.subr.mxu0 0.0
    %1222 = vmatpush1.msra.mxu0 %v1141
    %1223 = vmatprep.subr.mxu0 0.0
    %1224 = vmatpush1.msra.mxu0 %v1142
    %1225 = vmatprep.subr.mxu0 0.0
    %1226 = vmatpush1.msra.mxu0 %v1143
    %1227 = vmatprep.subr.mxu0 0.0
    %1228 = vmatpush1.msra.mxu0 %v1144
    %1229 = vmatprep.subr.mxu0 0.0
    %1230 = vmatpush1.msra.mxu0 %v1145
    %1231 = vmatprep.subr.mxu0 0.0
    %1232 = vmatpush1.msra.mxu0 %v1146
    %1233 = vmatprep.subr.mxu0 0.0
    %1234 = vmatpush1.msra.mxu0 %v1147
    %1235 = vmatprep.subr.mxu0 0.0
    %1236 = vmatpush1.msra.mxu0 %v1148
    %1237 = vmatprep.subr.mxu0 0.0
    %1238 = vmatpush1.msra.mxu0 %v1149
    %1239 = vmatprep.subr.mxu0 0.0
    %1240 = vmatpush1.msra.mxu0 %v1150
    %1241 = vmatprep.subr.mxu0 0.0
    %1242 = vmatpush1.msra.mxu0 %v1151
    %1243 = vmatprep.subr.mxu0 0.0
    %1244 = vmatpush1.msra.mxu0 %v1152
    %1245 = vmatprep.subr.mxu0 0.0
    %1246 = vmatpush1.msra.mxu0 %v1153
    %1247 = vmatprep.subr.mxu0 0.0
    %1248 = vmatpush1.msra.mxu0 %v1154
    %1249 = vmatprep.subr.mxu0 0.0
    %1250 = vmatpush1.msra.mxu0 %v1155
    %1251 = vmatprep.subr.mxu0 0.0
    %1252 = vmatpush1.msra.mxu0 %v1156
    %1253 = vmatprep.mubr.f32.mxu0 %v1122
    %1254 = vmatmul.mubr.f32.gmra.mrb[0].mxu0 %v1121
    %v1255 = vpop.f32.mrb[0].mxu0
    %v1256 = vadd.f32 0.0, %v1255
    %v1257 = vpop.f32.mrb[0].mxu0
    %1258 = vdwg.mxu0
    %1259 = vmatprep.subr.mxu0 0.0
    %1260 = vmatpush1.msra.mxu0 %v1157
    %1261 = vmatprep.subr.mxu0 0.0
    %1262 = vmatpush1.msra.mxu0 %v1158
    %1263 = vmatprep.subr.mxu0 0.0
    %1264 = vmatpush1.msra.mxu0 %v1159
    %1265 = vmatprep.subr.mxu0 0.0
    %1266 = vmatpush1.msra.mxu0 %v1160
    %1267 = vmatprep.subr.mxu0 0.0
    %1268 = vmatpush1.msra.mxu0 %v1161
    %1269 = vmatprep.subr.mxu0 0.0
    %1270 = vmatpush1.msra.mxu0 %v1162
    %1271 = vmatprep.subr.mxu0 0.0
    %1272 = vmatpush1.msra.mxu0 %v1163
    %1273 = vmatprep.subr.mxu0 0.0
    %1274 = vmatpush1.msra.mxu0 %v1164
    %1275 = vmatprep.subr.mxu0 0.0
    %1276 = vmatpush1.msra.mxu0 %v1165
    %1277 = vmatprep.subr.mxu0 0.0
    %1278 = vmatpush1.msra.mxu0 %v1166
    %1279 = vmatprep.subr.mxu0 0.0
    %1280 = vmatpush1.msra.mxu0 %v1167
    %1281 = vmatprep.subr.mxu0 0.0
    %1282 = vmatpush1.msra.mxu0 %v1168
    %1283 = vmatprep.subr.mxu0 0.0
    %1284 = vmatpush1.msra.mxu0 %v1169
    %1285 = vmatprep.subr.mxu0 0.0
    %1286 = vmatpush1.msra.mxu0 %v1170
    %1287 = vmatprep.subr.mxu0 0.0
    %1288 = vmatpush1.msra.mxu0 %v1171
    %1289 = vmatprep.subr.mxu0 0.0
    %1290 = vmatpush1.msra.mxu0 %v1172
    %1291 = vmatprep.subr.mxu0 0.0
    %1292 = vmatpush1.msra.mxu0 %v1173
    %1293 = vmatprep.subr.mxu0 0.0
    %1294 = vmatpush1.msra.mxu0 %v1174
    %1295 = vmatprep.subr.mxu0 0.0
    %1296 = vmatpush1.msra.mxu0 %v1175
    %1297 = vmatprep.subr.mxu0 0.0
    %1298 = vmatpush1.msra.mxu0 %v1176
    %1299 = vmatprep.subr.mxu0 0.0
    %1300 = vmatpush1.msra.mxu0 %v1177
    %1301 = vmatprep.subr.mxu0 0.0
    %1302 = vmatpush1.msra.mxu0 %v1178
    %1303 = vmatprep.subr.mxu0 0.0
    %1304 = vmatpush1.msra.mxu0 %v1179
    %1305 = vmatprep.subr.mxu0 0.0
    %1306 = vmatpush1.msra.mxu0 %v1180
    %1307 = vmatprep.subr.mxu0 0.0
    %1308 = vmatpush1.msra.mxu0 %v1181
    %1309 = vmatprep.subr.mxu0 0.0
    %1310 = vmatpush1.msra.mxu0 %v1182
    %1311 = vmatprep.subr.mxu0 0.0
    %1312 = vmatpush1.msra.mxu0 %v1183
    %1313 = vmatprep.subr.mxu0 0.0
    %1314 = vmatpush1.msra.mxu0 %v1184
    %1315 = vmatprep.subr.mxu0 0.0
    %1316 = vmatpush1.msra.mxu0 %v1185
    %1317 = vmatprep.subr.mxu0 0.0
    %1318 = vmatpush1.msra.mxu0 %v1186
    %1319 = vmatprep.subr.mxu0 0.0
    %1320 = vmatpush1.msra.mxu0 %v1187
    %1321 = vmatprep.subr.mxu0 0.0
    %1322 = vmatpush1.msra.mxu0 %v1188
    %1323 = vmatprep.mubr.f32.mxu0 %v1124
    %1324 = vmatmul.mubr.f32.gmra.mrb[0].mxu0 %v1123
    %v1325 = vpop.f32.mrb[0].mxu0
    %v1326 = vadd.f32 %v1256, %v1325
    %v1327 = vpop.f32.mrb[0].mxu0
    %1328 = vdwg.mxu0
    %v1329 = vsel %vm502, %v1326, -inf
    %1330 = vmax.xlane.f32.xlu0 %v1329
    %v1331 = vpop.xlane.xlu0 %1330
    %v1332 = vsub.f32 %v1326, %v1331
    %v1333 = vmul.f32 %v1332, 1.442695
    %v1334 = vpow.pop %v1333
    %v1335 = vsel %vm502, %v1334, 0.0
    %1336 = vadd.xlane.f32.xlu0 %v1335
    %v1337 = vpop.xlane.xlu0 %1336
    %v1338 = vrcp.pop %v1337
    %v1339 = vmul.f32 %v1334, %v1338
    %v1340 = vld [vmem:[%s7] sm:$0xff]
    %v1341 = vld [vmem:[%s7 + $0x8] sm:$0xff]
    %v1343 = vsel %vm502, %v1339, 0
    %1345 = vmatprep.subr.mxu0 0.0
    %1346 = vmatpush1.msra.mxu0 %v1340
    %1347 = vmatprep.subr.mxu0 0.0
    %1348 = vmatpush1.msra.mxu0 %v1341
    %1349 = vmatprep.subr.mxu0 0.0
    %1350 = vmatpush1.msra.mxu0 0.0
    %1351 = vmatprep.subr.mxu0 0.0
    %1352 = vmatpush1.msra.mxu0 0.0
    %1353 = vmatprep.subr.mxu0 0.0
    %1354 = vmatpush1.msra.mxu0 0.0
    %1355 = vmatprep.subr.mxu0 0.0
    %1356 = vmatpush1.msra.mxu0 0.0
    %1357 = vmatprep.subr.mxu0 0.0
    %1358 = vmatpush1.msra.mxu0 0.0
    %1359 = vmatprep.subr.mxu0 0.0
    %1360 = vmatpush1.msra.mxu0 0.0
    %1361 = vmatprep.subr.mxu0 0.0
    %1362 = vmatpush1.msra.mxu0 0.0
    %1363 = vmatprep.subr.mxu0 0.0
    %1364 = vmatpush1.msra.mxu0 0.0
    %1365 = vmatprep.subr.mxu0 0.0
    %1366 = vmatpush1.msra.mxu0 0.0
    %1367 = vmatprep.subr.mxu0 0.0
    %1368 = vmatpush1.msra.mxu0 0.0
    %1369 = vmatprep.subr.mxu0 0.0
    %1370 = vmatpush1.msra.mxu0 0.0
    %1371 = vmatprep.subr.mxu0 0.0
    %1372 = vmatpush1.msra.mxu0 0.0
    %1373 = vmatprep.subr.mxu0 0.0
    %1374 = vmatpush1.msra.mxu0 0.0
    %1375 = vmatprep.subr.mxu0 0.0
    %1376 = vmatpush1.msra.mxu0 0.0
    %1377 = vmatprep.subr.mxu0 0.0
    %1378 = vmatpush1.msra.mxu0 0.0
    %1379 = vmatprep.subr.mxu0 0.0
    %1380 = vmatpush1.msra.mxu0 0.0
    %1381 = vmatprep.subr.mxu0 0.0
    %1382 = vmatpush1.msra.mxu0 0.0
    %1383 = vmatprep.subr.mxu0 0.0
    %1384 = vmatpush1.msra.mxu0 0.0
    %1385 = vmatprep.subr.mxu0 0.0
    %1386 = vmatpush1.msra.mxu0 0.0
    %1387 = vmatprep.subr.mxu0 0.0
    %1388 = vmatpush1.msra.mxu0 0.0
    %1389 = vmatprep.subr.mxu0 0.0
    %1390 = vmatpush1.msra.mxu0 0.0
    %1391 = vmatprep.subr.mxu0 0.0
    %1392 = vmatpush1.msra.mxu0 0.0
    %1393 = vmatprep.subr.mxu0 0.0
    %1394 = vmatpush1.msra.mxu0 0.0
    %1395 = vmatprep.subr.mxu0 0.0
    %1396 = vmatpush1.msra.mxu0 0.0
    %1397 = vmatprep.subr.mxu0 0.0
    %1398 = vmatpush1.msra.mxu0 0.0
    %1399 = vmatprep.subr.mxu0 0.0
    %1400 = vmatpush1.msra.mxu0 0.0
    %1401 = vmatprep.subr.mxu0 0.0
    %1402 = vmatpush1.msra.mxu0 0.0
    %1403 = vmatprep.subr.mxu0 0.0
    %1404 = vmatpush1.msra.mxu0 0.0
    %1405 = vmatprep.subr.mxu0 0.0
    %1406 = vmatpush1.msra.mxu0 0.0
    %1407 = vmatprep.subr.mxu0 0.0
    %1408 = vmatpush1.msra.mxu0 0.0
    %1409 = vmatprep.mubr.f32.mxu0 0.0
    %1410 = vmatmul.mubr.f32.gmra.mrb[0].mxu0 %v1343
    %v1411 = vpop.f32.mrb[0].mxu0
    %v1412 = vadd.f32 0.0, %v1411
    %v1413 = vpop.f32.mrb[0].mxu0
    %1414 = vdwg.mxu0
    %v1415 = vld [vmem:[%s8] sm:$0xff]
    %v1416 = vmul.f32 %v1412, %v1415
    %v1417 = vld [vmem:[%s1] sm:$0xff]
    %v1418 = vld [vmem:[%s1 + $0x8] sm:$0xff]
    %v1419 = vld [vmem:[%s1 + $0x10] sm:$0xff]
    %v1420 = vld [vmem:[%s1 + $0x18] sm:$0xff]
    %v1421 = vld [vmem:[%s1 + $0x20] sm:$0xff]
    %v1422 = vld [vmem:[%s1 + $0x28] sm:$0xff]
    %v1423 = vld [vmem:[%s1 + $0x30] sm:$0xff]
    %v1424 = vld [vmem:[%s1 + $0x38] sm:$0xff]
    %v1425 = vld [vmem:[%s1 + $0x40] sm:$0xff]
    %v1426 = vld [vmem:[%s1 + $0x48] sm:$0xff]
    %v1427 = vld [vmem:[%s1 + $0x50] sm:$0xff]
    %v1428 = vld [vmem:[%s1 + $0x58] sm:$0xff]
    %v1429 = vld [vmem:[%s1 + $0x60] sm:$0xff]
    %v1430 = vld [vmem:[%s1 + $0x68] sm:$0xff]
    %v1431 = vld [vmem:[%s1 + $0x70] sm:$0xff]
    %v1432 = vld [vmem:[%s1 + $0x78] sm:$0xff]
    %1433 = vmatprep.subr.mxu0 0.0
    %1434 = vmatpush1.msra.mxu0 %v1417
    %1435 = vmatprep.subr.mxu0 0.0
    %1436 = vmatpush1.msra.mxu0 %v1418
    %1437 = vmatprep.subr.mxu0 0.0
    %1438 = vmatpush1.msra.mxu0 %v1419
    %1439 = vmatprep.subr.mxu0 0.0
    %1440 = vmatpush1.msra.mxu0 %v1420
    %1441 = vmatprep.subr.mxu0 0.0
    %1442 = vmatpush1.msra.mxu0 %v1421
    %1443 = vmatprep.subr.mxu0 0.0
    %1444 = vmatpush1.msra.mxu0 %v1422
    %1445 = vmatprep.subr.mxu0 0.0
    %1446 = vmatpush1.msra.mxu0 %v1423
    %1447 = vmatprep.subr.mxu0 0.0
    %1448 = vmatpush1.msra.mxu0 %v1424
    %1449 = vmatprep.subr.mxu0 0.0
    %1450 = vmatpush1.msra.mxu0 %v1425
    %1451 = vmatprep.subr.mxu0 0.0
    %1452 = vmatpush1.msra.mxu0 %v1426
    %1453 = vmatprep.subr.mxu0 0.0
    %1454 = vmatpush1.msra.mxu0 %v1427
    %1455 = vmatprep.subr.mxu0 0.0
    %1456 = vmatpush1.msra.mxu0 %v1428
    %1457 = vmatprep.subr.mxu0 0.0
    %1458 = vmatpush1.msra.mxu0 %v1429
    %1459 = vmatprep.subr.mxu0 0.0
    %1460 = vmatpush1.msra.mxu0 %v1430
    %1461 = vmatprep.subr.mxu0 0.0
    %1462 = vmatpush1.msra.mxu0 %v1431
    %1463 = vmatprep.subr.mxu0 0.0
    %1464 = vmatpush1.msra.mxu0 %v1432
    %1465 = vmatprep.subr.mxu0 0.0
    %1466 = vmatpush1.msra.mxu0 0.0
    %1467 = vmatprep.subr.mxu0 0.0
    %1468 = vmatpush1.msra.mxu0 0.0
    %1469 = vmatprep.subr.mxu0 0.0
    %1470 = vmatpush1.msra.mxu0 0.0
    %1471 = vmatprep.subr.mxu0 0.0
    %1472 = vmatpush1.msra.mxu0 0.0
    %1473 = vmatprep.subr.mxu0 0.0
    %1474 = vmatpush1.msra.mxu0 0.0
    %1475 = vmatprep.subr.mxu0 0.0
    %1476 = vmatpush1.msra.mxu0 0.0
    %1477 = vmatprep.subr.mxu0 0.0
    %1478 = vmatpush1.msra.mxu0 0.0
    %1479 = vmatprep.subr.mxu0 0.0
    %1480 = vmatpush1.msra.mxu0 0.0
    %1481 = vmatprep.subr.mxu0 0.0
    %1482 = vmatpush1.msra.mxu0 0.0
    %1483 = vmatprep.subr.mxu0 0.0
    %1484 = vmatpush1.msra.mxu0 0.0
    %1485 = vmatprep.subr.mxu0 0.0
    %1486 = vmatpush1.msra.mxu0 0.0
    %1487 = vmatprep.subr.mxu0 0.0
    %1488 = vmatpush1.msra.mxu0 0.0
    %1489 = vmatprep.subr.mxu0 0.0
    %1490 = vmatpush1.msra.mxu0 0.0
    %1491 = vmatprep.subr.mxu0 0.0
    %1492 = vmatpush1.msra.mxu0 0.0
    %1493 = vmatprep.subr.mxu0 0.0
    %1494 = vmatpush1.msra.mxu0 0.0
    %1495 = vmatprep.subr.mxu0 0.0
    %1496 = vmatpush1.msra.mxu0 0.0
    %1497 = vmatprep.mubr.f32.mxu0 0.0
    %1498 = vmatmul.mubr.f32.gmra.mrb[0].mxu0 %v1416
    %v1499 = vpop.f32.mrb[0].mxu0
    %v1500 = vadd.f32 0.0, %v1499
    %v1501 = vpop.f32.mrb[0].mxu0
    %1502 = vdwg.mxu0
    %s1503 = scalar_lea.vmem %s2, 8
    %v1504 = vld [vmem:[%s1503] sm:$0xff]
    %v1505 = vadd.f32 %v1504, %v1110
    %v1506 = vld [vmem:[%s9] sm:$0xff]
    %v1507 = vld [vmem:[%s9 + $0x8] sm:$0xff]
    %v1508 = vld [vmem:[%s9 + $0x10] sm:$0xff]
    %v1509 = vld [vmem:[%s9 + $0x18] sm:$0xff]
    %v1511 = vsel %vm70, %v1500, 0
    %1513 = vmatprep.subr.mxu0 0.0
    %1514 = vmatpush1.msra.mxu0 %v1506
    %1515 = vmatprep.subr.mxu0 0.0
    %1516 = vmatpush1.msra.mxu0 %v1507
    %1517 = vmatprep.subr.mxu0 0.0
    %1518 = vmatpush1.msra.mxu0 %v1508
    %1519 = vmatprep.subr.mxu0 0.0
    %1520 = vmatpush1.msra.mxu0 %v1509
    %1521 = vmatprep.subr.mxu0 0.0
    %1522 = vmatpush1.msra.mxu0 0.0
    %1523 = vmatprep.subr.mxu0 0.0
    %1524 = vmatpush1.msra.mxu0 0.0
    %1525 = vmatprep.subr.mxu0 0.0
    %1526 = vmatpush1.msra.mxu0 0.0
    %1527 = vmatprep.subr.mxu0 0.0
    %1528 = vmatpush1.msra.mxu0 0.0
    %1529 = vmatprep.subr.mxu0 0.0
    %1530 = vmatpush1.msra.mxu0 0.0
    %1531 = vmatprep.subr.mxu0 0.0
    %1532 = vmatpush1.msra.mxu0 0.0
    %1533 = vmatprep.subr.mxu0 0.0
    %1534 = vmatpush1.msra.mxu0 0.0
    %1535 = vmatprep.subr.mxu0 0.0
    %1536 = vmatpush1.msra.mxu0 0.0
    %1537 = vmatprep.subr.mxu0 0.0
    %1538 = vmatpush1.msra.mxu0 0.0
    %1539 = vmatprep.subr.mxu0 0.0
    %1540 = vmatpush1.msra.mxu0 0.0
    %1541 = vmatprep.subr.mxu0 0.0
    %1542 = vmatpush1.msra.mxu0 0.0
    %1543 = vmatprep.subr.mxu0 0.0
    %1544 = vmatpush1.msra.mxu0 0.0
    %1545 = vmatprep.subr.mxu0 0.0
    %1546 = vmatpush1.msra.mxu0 0.0
    %1547 = vmatprep.subr.mxu0 0.0
    %1548 = vmatpush1.msra.mxu0 0.0
    %1549 = vmatprep.subr.mxu0 0.0
    %1550 = vmatpush1.msra.mxu0 0.0
    %1551 = vmatprep.subr.mxu0 0.0
    %1552 = vmatpush1.msra.mxu0 0.0
    %1553 = vmatprep.subr.mxu0 0.0
    %1554 = vmatpush1.msra.mxu0 0.0
    %1555 = vmatprep.subr.mxu0 0.0
    %1556 = vmatpush1.msra.mxu0 0.0
    %1557 = vmatprep.subr.mxu0 0.0
    %1558 = vmatpush1.msra.mxu0 0.0
    %1559 = vmatprep.subr.mxu0 0.0
    %1560 = vmatpush1.msra.mxu0 0.0
    %1561 = vmatprep.subr.mxu0 0.0
    %1562 = vmatpush1.msra.mxu0 0.0
    %1563 = vmatprep.subr.mxu0 0.0
    %1564 = vmatpush1.msra.mxu0 0.0
    %1565 = vmatprep.subr.mxu0 0.0
    %1566 = vmatpush1.msra.mxu0 0.0
    %1567 = vmatprep.subr.mxu0 0.0
    %1568 = vmatpush1.msra.mxu0 0.0
    %1569 = vmatprep.subr.mxu0 0.0
    %1570 = vmatpush1.msra.mxu0 0.0
    %1571 = vmatprep.subr.mxu0 0.0
    %1572 = vmatpush1.msra.mxu0 0.0
    %1573 = vmatprep.subr.mxu0 0.0
    %1574 = vmatpush1.msra.mxu0 0.0
    %1575 = vmatprep.subr.mxu0 0.0
    %1576 = vmatpush1.msra.mxu0 0.0
    %1577 = vmatprep.mubr.f32.mxu0 0.0
    %1578 = vmatmul.mubr.f32.gmra.mrb[0].mxu0 %v1511
    %v1579 = vpop.f32.mrb[0].mxu0
    %v1580 = vadd.f32 0.0, %v1579
    %v1581 = vpop.f32.mrb[0].mxu0
    %1582 = vdwg.mxu0
    %v1583 = vadd.f32 %v1505, %v1580
    %v1584 = vxor.u32 %v1583, 2147483648
    %v1585 = vmul.f32 %v1584, 1.442695
    %v1586 = vpow.pop %v1585
    %v1587 = vadd.f32 %v1586, 1.0
    %v1588 = vrcp.pop %v1587
    %v1589 = vmul.f32 1.0, %v1588
    %v1590 = vmul.f32 %v1589, 2.0
    %v1591 = vsub.f32 %v1590, 1.0
    %v1592 = vmul.f32 %v1589, %v779
    %1594 = vrot.lane.b32.xlu0 %v1591, 64
    %v1595 = vpop.permute.xlu0 %1594
    %v1597 = vmul.f32 %v1589, %v1595
    %1599 = vrot.lane.b32.xlu0 %v1597, 32
    %v1600 = vpop.permute.xlu0 %1599
    %v1602 = vadd.f32 %v1592, %v1600
    %v1603 = vtanh.pop %v1602
    %1605 = vrot.lane.b32.xlu0 %v1603, 64
    %v1606 = vpop.permute.xlu0 %1605
    %v1608 = vmul.f32 %v1589, %v1606
    %v1609 = vld [vmem:[%s10] sm:$0xff]
    %v1610 = vld [vmem:[%s10 + $0x8] sm:$0xff]
    %v1611 = vld [vmem:[%s10 + $0x10] sm:$0xff]
    %v1612 = vld [vmem:[%s10 + $0x18] sm:$0xff]
    %v1613 = vld [vmem:[%s11] sm:$0x1]
    %v1615 = vlaneseq
    %v1616 = vshrl.u32 %v1615, 7
    %v1617 = vsub.s32 0, %v1616
    %v1618 = vrot.slane %v1613, %v1617
    %1621 = vrot.lane.b32.xlu0 %v1608, 32
    %v1622 = vpop.permute.xlu0 %1621
    %v1623 = vsel %vm70, %v1622, 0
    %1625 = vmatprep.subr.mxu0 0.0
    %1626 = vmatpush1.msra.mxu0 %v1609
    %1627 = vmatprep.subr.mxu0 0.0
    %1628 = vmatpush1.msra.mxu0 %v1610
    %1629 = vmatprep.subr.mxu0 0.0
    %1630 = vmatpush1.msra.mxu0 %v1611
    %1631 = vmatprep.subr.mxu0 0.0
    %1632 = vmatpush1.msra.mxu0 %v1612
    %1633 = vmatprep.subr.mxu0 0.0
    %1634 = vmatpush1.msra.mxu0 0.0
    %1635 = vmatprep.subr.mxu0 0.0
    %1636 = vmatpush1.msra.mxu0 0.0
    %1637 = vmatprep.subr.mxu0 0.0
    %1638 = vmatpush1.msra.mxu0 0.0
    %1639 = vmatprep.subr.mxu0 0.0
    %1640 = vmatpush1.msra.mxu0 0.0
    %1641 = vmatprep.subr.mxu0 0.0
    %1642 = vmatpush1.msra.mxu0 0.0
    %1643 = vmatprep.subr.mxu0 0.0
    %1644 = vmatpush1.msra.mxu0 0.0
    %1645 = vmatprep.subr.mxu0 0.0
    %1646 = vmatpush1.msra.mxu0 0.0
    %1647 = vmatprep.subr.mxu0 0.0
    %1648 = vmatpush1.msra.mxu0 0.0
    %1649 = vmatprep.subr.mxu0 0.0
    %1650 = vmatpush1.msra.mxu0 0.0
    %1651 = vmatprep.subr.mxu0 0.0
    %1652 = vmatpush1.msra.mxu0 0.0
    %1653 = vmatprep.subr.mxu0 0.0
    %1654 = vmatpush1.msra.mxu0 0.0
    %1655 = vmatprep.subr.mxu0 0.0
    %1656 = vmatpush1.msra.mxu0 0.0
    %1657 = vmatprep.subr.mxu0 0.0
    %1658 = vmatpush1.msra.mxu0 0.0
    %1659 = vmatprep.subr.mxu0 0.0
    %1660 = vmatpush1.msra.mxu0 0.0
    %1661 = vmatprep.subr.mxu0 0.0
    %1662 = vmatpush1.msra.mxu0 0.0
    %1663 = vmatprep.subr.mxu0 0.0
    %1664 = vmatpush1.msra.mxu0 0.0
    %1665 = vmatprep.subr.mxu0 0.0
    %1666 = vmatpush1.msra.mxu0 0.0
    %1667 = vmatprep.subr.mxu0 0.0
    %1668 = vmatpush1.msra.mxu0 0.0
    %1669 = vmatprep.subr.mxu0 0.0
    %1670 = vmatpush1.msra.mxu0 0.0
    %1671 = vmatprep.subr.mxu0 0.0
    %1672 = vmatpush1.msra.mxu0 0.0
    %1673 = vmatprep.subr.mxu0 0.0
    %1674 = vmatpush1.msra.mxu0 0.0
    %1675 = vmatprep.subr.mxu0 0.0
    %1676 = vmatpush1.msra.mxu0 0.0
    %1677 = vmatprep.subr.mxu0 0.0
    %1678 = vmatpush1.msra.mxu0 0.0
    %1679 = vmatprep.subr.mxu0 0.0
    %1680 = vmatpush1.msra.mxu0 0.0
    %1681 = vmatprep.subr.mxu0 0.0
    %1682 = vmatpush1.msra.mxu0 0.0
    %1683 = vmatprep.subr.mxu0 0.0
    %1684 = vmatpush1.msra.mxu0 0.0
    %1685 = vmatprep.subr.mxu0 0.0
    %1686 = vmatpush1.msra.mxu0 0.0
    %1687 = vmatprep.subr.mxu0 0.0
    %1688 = vmatpush1.msra.mxu0 0.0
    %1689 = vmatprep.mubr.f32.mxu0 0.0
    %1690 = vmatmul.mubr.f32.gmra.mrb[0].mxu0 %v1623
    %v1691 = vpop.f32.mrb[0].mxu0
    %v1692 = vadd.f32 %v1618, %v1691
    %v1693 = vpop.f32.mrb[0].mxu0
    %1694 = vdwg.mxu0
    %s1695 = scalar_lea.vmem [#allocation2], 8
    %1696 = vst [vmem:[%s1695] sm:$0xff] %v1692
    %s1697 = scalar_lea.vmem [#allocation4], 8
    %1698 = vst.msk [vmem:[%s1697] sm:$0xff] %vm502, %v1339
    %s1700 = scalar_lea.vmem [#allocation6], 8
    %1701 = vst.msk [vmem:[%s1700] sm:$0xff] %vm70, %v1622
    %1703 = vrot.lane.b32.xlu0 %v1602, 96
    %v1704 = vpop.permute.xlu0 %1703
    %s1706 = scalar_lea.vmem [#allocation7], 8
    %1707 = vst.msk [vmem:[%s1706] sm:$0xff] %vm70, %v1704
    %v1708 = vld [vmem:[%s5] sm:$0xff]
    %v1709 = vld [vmem:[%s5 + $0x8] sm:$0xff]
    %v1710 = vld [vmem:[%s5 + $0x10] sm:$0xff]
    %v1711 = vld [vmem:[%s5 + $0x18] sm:$0xff]
    %v1712 = vld [vmem:[%s5 + $0x20] sm:$0xff]
    %v1713 = vld [vmem:[%s5 + $0x28] sm:$0xff]
    %v1714 = vld [vmem:[%s5 + $0x30] sm:$0xff]
    %v1715 = vld [vmem:[%s5 + $0x38] sm:$0xff]
    %v1716 = vld [vmem:[%s5 + $0x40] sm:$0xff]
    %v1717 = vld [vmem:[%s5 + $0x48] sm:$0xff]
    %v1718 = vld [vmem:[%s5 + $0x50] sm:$0xff]
    %v1719 = vld [vmem:[%s5 + $0x58] sm:$0xff]
    %v1720 = vld [vmem:[%s5 + $0x60] sm:$0xff]
    %v1721 = vld [vmem:[%s5 + $0x68] sm:$0xff]
    %v1722 = vld [vmem:[%s5 + $0x70] sm:$0xff]
    %v1723 = vld [vmem:[%s5 + $0x78] sm:$0xff]
    %v1724 = vld [vmem:[%s5 + $0x80] sm:$0xff]
    %v1725 = vld [vmem:[%s5 + $0x88] sm:$0xff]
    %v1726 = vld [vmem:[%s5 + $0x90] sm:$0xff]
    %v1727 = vld [vmem:[%s5 + $0x98] sm:$0xff]
    %1728 = vmatprep.subr.mxu0 %v1709
    %1729 = vmatpush1.msra.mxu0 %v1708
    %1730 = vmatprep.subr.mxu0 %v1714
    %1731 = vmatpush1.msra.mxu0 %v1713
    %1732 = vmatprep.subr.mxu0 %v1719
    %1733 = vmatpush1.msra.mxu0 %v1718
    %1734 = vmatprep.subr.mxu0 %v1724
    %1735 = vmatpush1.msra.mxu0 %v1723
    %1736 = vmatprep.subr.mxu0 0.0
    %1737 = vmatpush1.msra.mxu0 0.0
    %1738 = vmatprep.subr.mxu0 0.0
    %1739 = vmatpush1.msra.mxu0 0.0
    %1740 = vmatprep.subr.mxu0 0.0
    %1741 = vmatpush1.msra.mxu0 0.0
    %1742 = vmatprep.subr.mxu0 0.0
    %1743 = vmatpush1.msra.mxu0 0.0
    %1744 = vmatprep.subr.mxu0 0.0
    %1745 = vmatpush1.msra.mxu0 0.0
    %1746 = vmatprep.subr.mxu0 0.0
    %1747 = vmatpush1.msra.mxu0 0.0
    %1748 = vmatprep.subr.mxu0 0.0
    %1749 = vmatpush1.msra.mxu0 0.0
    %1750 = vmatprep.subr.mxu0 0.0
    %1751 = vmatpush1.msra.mxu0 0.0
    %1752 = vmatprep.subr.mxu0 0.0
    %1753 = vmatpush1.msra.mxu0 0.0
    %1754 = vmatprep.subr.mxu0 0.0
    %1755 = vmatpush1.msra.mxu0 0.0
    %1756 = vmatprep.subr.mxu0 0.0
    %1757 = vmatpush1.msra.mxu0 0.0
    %1758 = vmatprep.subr.mxu0 0.0
    %1759 = vmatpush1.msra.mxu0 0.0
    %1760 = vmatprep.subr.mxu0 0.0
    %1761 = vmatpush1.msra.mxu0 0.0
    %1762 = vmatprep.subr.mxu0 0.0
    %1763 = vmatpush1.msra.mxu0 0.0
    %1764 = vmatprep.subr.mxu0 0.0
    %1765 = vmatpush1.msra.mxu0 0.0
    %1766 = vmatprep.subr.mxu0 0.0
    %1767 = vmatpush1.msra.mxu0 0.0
    %1768 = vmatprep.subr.mxu0 0.0
    %1769 = vmatpush1.msra.mxu0 0.0
    %1770 = vmatprep.subr.mxu0 0.0
    %1771 = vmatpush1.msra.mxu0 0.0
    %1772 = vmatprep.subr.mxu0 0.0
    %1773 = vmatpush1.msra.mxu0 0.0
    %1774 = vmatprep.subr.mxu0 0.0
    %1775 = vmatpush1.msra.mxu0 0.0
    %1776 = vmatprep.subr.mxu0 0.0
    %1777 = vmatpush1.msra.mxu0 0.0
    %1778 = vmatprep.subr.mxu0 0.0
    %1779 = vmatpush1.msra.mxu0 0.0
    %1780 = vmatprep.subr.mxu0 0.0
    %1781 = vmatpush1.msra.mxu0 0.0
    %1782 = vmatprep.subr.mxu0 0.0
    %1783 = vmatpush1.msra.mxu0 0.0
    %1784 = vmatprep.subr.mxu0 0.0
    %1785 = vmatpush1.msra.mxu0 0.0
    %1786 = vmatprep.subr.mxu0 0.0
    %1787 = vmatpush1.msra.mxu0 0.0
    %1788 = vmatprep.subr.mxu0 0.0
    %1789 = vmatpush1.msra.mxu0 0.0
    %1790 = vmatprep.subr.mxu0 0.0
    %1791 = vmatpush1.msra.mxu0 0.0
    %1792 = vmatprep.mubr.f32.mxu0 0.0
    %1793 = vmatmul.mubr.f32.gmra.mrb[0].mxu0 %v1623
    %v1794 = vpop.f32.mrb[0].mxu0
    %v1795 = vadd.f32 0.0, %v1794
    %v1796 = vpop.f32.mrb[0].mxu0
    %v1797 = vadd.f32 0.0, %v1796
    %1798 = vdwg.mxu0
    %1799 = vmatprep.subr.mxu0 %v1711
    %1800 = vmatpush1.msra.mxu0 %v1710
    %1801 = vmatprep.subr.mxu0 %v1716
    %1802 = vmatpush1.msra.mxu0 %v1715
    %1803 = vmatprep.subr.mxu0 %v1721
    %1804 = vmatpush1.msra.mxu0 %v1720
    %1805 = vmatprep.subr.mxu0 %v1726
    %1806 = vmatpush1.msra.mxu0 %v1725
    %1807 = vmatprep.subr.mxu0 0.0
    %1808 = vmatpush1.msra.mxu0 0.0
    %1809 = vmatprep.subr.mxu0 0.0
    %1810 = vmatpush1.msra.mxu0 0.0
    %1811 = vmatprep.subr.mxu0 0.0
    %1812 = vmatpush1.msra.mxu0 0.0
    %1813 = vmatprep.subr.mxu0 0.0
    %1814 = vmatpush1.msra.mxu0 0.0
    %1815 = vmatprep.subr.mxu0 0.0
    %1816 = vmatpush1.msra.mxu0 0.0
    %1817 = vmatprep.subr.mxu0 0.0
    %1818 = vmatpush1.msra.mxu0 0.0
    %1819 = vmatprep.subr.mxu0 0.0
    %1820 = vmatpush1.msra.mxu0 0.0
    %1821 = vmatprep.subr.mxu0 0.0
    %1822 = vmatpush1.msra.mxu0 0.0
    %1823 = vmatprep.subr.mxu0 0.0
    %1824 = vmatpush1.msra.mxu0 0.0
    %1825 = vmatprep.subr.mxu0 0.0
    %1826 = vmatpush1.msra.mxu0 0.0
    %1827 = vmatprep.subr.mxu0 0.0
    %1828 = vmatpush1.msra.mxu0 0.0
    %1829 = vmatprep.subr.mxu0 0.0
    %1830 = vmatpush1.msra.mxu0 0.0
    %1831 = vmatprep.subr.mxu0 0.0
    %1832 = vmatpush1.msra.mxu0 0.0
    %1833 = vmatprep.subr.mxu0 0.0
    %1834 = vmatpush1.msra.mxu0 0.0
    %1835 = vmatprep.subr.mxu0 0.0
    %1836 = vmatpush1.msra.mxu0 0.0
    %1837 = vmatprep.subr.mxu0 0.0
    %1838 = vmatpush1.msra.mxu0 0.0
    %1839 = vmatprep.subr.mxu0 0.0
    %1840 = vmatpush1.msra.mxu0 0.0
    %1841 = vmatprep.subr.mxu0 0.0
    %1842 = vmatpush1.msra.mxu0 0.0
    %1843 = vmatprep.subr.mxu0 0.0
    %1844 = vmatpush1.msra.mxu0 0.0
    %1845 = vmatprep.subr.mxu0 0.0
    %1846 = vmatpush1.msra.mxu0 0.0
    %1847 = vmatprep.subr.mxu0 0.0
    %1848 = vmatpush1.msra.mxu0 0.0
    %1849 = vmatprep.subr.mxu0 0.0
    %1850 = vmatpush1.msra.mxu0 0.0
    %1851 = vmatprep.subr.mxu0 0.0
    %1852 = vmatpush1.msra.mxu0 0.0
    %1853 = vmatprep.subr.mxu0 0.0
    %1854 = vmatpush1.msra.mxu0 0.0
    %1855 = vmatprep.subr.mxu0 0.0
    %1856 = vmatpush1.msra.mxu0 0.0
    %1857 = vmatprep.subr.mxu0 0.0
    %1858 = vmatpush1.msra.mxu0 0.0
    %1859 = vmatprep.subr.mxu0 0.0
    %1860 = vmatpush1.msra.mxu0 0.0
    %1861 = vmatprep.subr.mxu0 0.0
    %1862 = vmatpush1.msra.mxu0 0.0
    %1863 = vmatprep.mubr.f32.mxu0 0.0
    %1864 = vmatmul.mubr.f32.gmra.mrb[0].mxu0 %v1623
    %v1865 = vpop.f32.mrb[0].mxu0
    %v1866 = vadd.f32 0.0, %v1865
    %v1867 = vpop.f32.mrb[0].mxu0
    %v1868 = vadd.f32 0.0, %v1867
    %1869 = vdwg.mxu0
    %1870 = vmatprep.subr.mxu0 0.0
    %1871 = vmatpush1.msra.mxu0 %v1712
    %1872 = vmatprep.subr.mxu0 0.0
    %1873 = vmatpush1.msra.mxu0 %v1717
    %1874 = vmatprep.subr.mxu0 0.0
    %1875 = vmatpush1.msra.mxu0 %v1722
    %1876 = vmatprep.subr.mxu0 0.0
    %1877 = vmatpush1.msra.mxu0 %v1727
    %1878 = vmatprep.subr.mxu0 0.0
    %1879 = vmatpush1.msra.mxu0 0.0
    %1880 = vmatprep.subr.mxu0 0.0
    %1881 = vmatpush1.msra.mxu0 0.0
    %1882 = vmatprep.subr.mxu0 0.0
    %1883 = vmatpush1.msra.mxu0 0.0
    %1884 = vmatprep.subr.mxu0 0.0
    %1885 = vmatpush1.msra.mxu0 0.0
    %1886 = vmatprep.subr.mxu0 0.0
    %1887 = vmatpush1.msra.mxu0 0.0
    %1888 = vmatprep.subr.mxu0 0.0
    %1889 = vmatpush1.msra.mxu0 0.0
    %1890 = vmatprep.subr.mxu0 0.0
    %1891 = vmatpush1.msra.mxu0 0.0
    %1892 = vmatprep.subr.mxu0 0.0
    %1893 = vmatpush1.msra.mxu0 0.0
    %1894 = vmatprep.subr.mxu0 0.0
    %1895 = vmatpush1.msra.mxu0 0.0
    %1896 = vmatprep.subr.mxu0 0.0
    %1897 = vmatpush1.msra.mxu0 0.0
    %1898 = vmatprep.subr.mxu0 0.0
    %1899 = vmatpush1.msra.mxu0 0.0
    %1900 = vmatprep.subr.mxu0 0.0
    %1901 = vmatpush1.msra.mxu0 0.0
    %1902 = vmatprep.subr.mxu0 0.0
    %1903 = vmatpush1.msra.mxu0 0.0
    %1904 = vmatprep.subr.mxu0 0.0
    %1905 = vmatpush1.msra.mxu0 0.0
    %1906 = vmatprep.subr.mxu0 0.0
    %1907 = vmatpush1.msra.mxu0 0.0
    %1908 = vmatprep.subr.mxu0 0.0
    %1909 = vmatpush1.msra.mxu0 0.0
    %1910 = vmatprep.subr.mxu0 0.0
    %1911 = vmatpush1.msra.mxu0 0.0
    %1912 = vmatprep.subr.mxu0 0.0
    %1913 = vmatpush1.msra.mxu0 0.0
    %1914 = vmatprep.subr.mxu0 0.0
    %1915 = vmatpush1.msra.mxu0 0.0
    %1916 = vmatprep.subr.mxu0 0.0
    %1917 = vmatpush1.msra.mxu0 0.0
    %1918 = vmatprep.subr.mxu0 0.0
    %1919 = vmatpush1.msra.mxu0 0.0
    %1920 = vmatprep.subr.mxu0 0.0
    %1921 = vmatpush1.msra.mxu0 0.0
    %1922 = vmatprep.subr.mxu0 0.0
    %1923 = vmatpush1.msra.mxu0 0.0
    %1924 = vmatprep.subr.mxu0 0.0
    %1925 = vmatpush1.msra.mxu0 0.0
    %1926 = vmatprep.subr.mxu0 0.0
    %1927 = vmatpush1.msra.mxu0 0.0
    %1928 = vmatprep.subr.mxu0 0.0
    %1929 = vmatpush1.msra.mxu0 0.0
    %1930 = vmatprep.subr.mxu0 0.0
    %1931 = vmatpush1.msra.mxu0 0.0
    %1932 = vmatprep.subr.mxu0 0.0
    %1933 = vmatpush1.msra.mxu0 0.0
    %1934 = vmatprep.mubr.f32.mxu0 0.0
    %1935 = vmatmul.mubr.f32.gmra.mrb[0].mxu0 %v1623
    %v1936 = vpop.f32.mrb[0].mxu0
    %v1937 = vadd.f32 0.0, %v1936
    %v1938 = vpop.f32.mrb[0].mxu0
    %1939 = vdwg.mxu0
    %v1940 = vld [vmem:[%s0] sm:$0xff]
    %v1941 = vld [vmem:[%s0 + $0x8] sm:$0xff]
    %v1942 = vld [vmem:[%s0 + $0x10] sm:$0xff]
    %v1943 = vld [vmem:[%s0 + $0x18] sm:$0xff]
    %v1944 = vadd.f32 %v1940, %v1795
    %v1945 = vadd.f32 %v1941, %v1797
    %v1946 = vadd.f32 %v1942, %v1866
    %v1947 = vadd.f32 %v1943, %v1868
    %v1948 = vtanh.pop %v1944
    %v1949 = vtanh.pop %v1945
    %v1950 = vtanh.pop %v1946
    %v1951 = vtanh.pop %v1947
    %v1952 = vld [vmem:[%s6] sm:$0xff]
    %v1953 = vld [vmem:[%s6 + $0x8] sm:$0xff]
    %v1954 = vld [vmem:[%s6 + $0x10] sm:$0xff]
    %v1955 = vld [vmem:[%s6 + $0x18] sm:$0xff]
    %v1956 = vld [vmem:[%s6 + $0x20] sm:$0xff]
    %v1957 = vld [vmem:[%s6 + $0x28] sm:$0xff]
    %v1958 = vld [vmem:[%s6 + $0x30] sm:$0xff]
    %v1959 = vld [vmem:[%s6 + $0x38] sm:$0xff]
    %v1960 = vld [vmem:[%s6 + $0x40] sm:$0xff]
    %v1961 = vld [vmem:[%s6 + $0x48] sm:$0xff]
    %v1962 = vld [vmem:[%s6 + $0x50] sm:$0xff]
    %v1963 = vld [vmem:[%s6 + $0x58] sm:$0xff]
    %v1964 = vld [vmem:[%s6 + $0x60] sm:$0xff]
    %v1965 = vld [vmem:[%s6 + $0x68] sm:$0xff]
    %v1966 = vld [vmem:[%s6 + $0x70] sm:$0xff]
    %v1967 = vld [vmem:[%s6 + $0x78] sm:$0xff]
    %v1968 = vld [vmem:[%s6 + $0x80] sm:$0xff]
    %v1969 = vld [vmem:[%s6 + $0x88] sm:$0xff]
    %v1970 = vld [vmem:[%s6 + $0x90] sm:$0xff]
    %v1971 = vld [vmem:[%s6 + $0x98] sm:$0xff]
    %v1972 = vld [vmem:[%s6 + $0xa0] sm:$0xff]
    %v1973 = vld [vmem:[%s6 + $0xa8] sm:$0xff]
    %v1974 = vld [vmem:[%s6 + $0xb0] sm:$0xff]
    %v1975 = vld [vmem:[%s6 + $0xb8] sm:$0xff]
    %v1976 = vld [vmem:[%s6 + $0xc0] sm:$0xff]
    %v1977 = vld [vmem:[%s6 + $0xc8] sm:$0xff]
    %v1978 = vld [vmem:[%s6 + $0xd0] sm:$0xff]
    %v1979 = vld [vmem:[%s6 + $0xd8] sm:$0xff]
    %v1980 = vld [vmem:[%s6 + $0xe0] sm:$0xff]
    %v1981 = vld [vmem:[%s6 + $0xe8] sm:$0xff]
    %v1982 = vld [vmem:[%s6 + $0xf0] sm:$0xff]
    %v1983 = vld [vmem:[%s6 + $0xf8] sm:$0xff]
    %v1984 = vld [vmem:[%s6 + $0x100] sm:$0xff]
    %v1985 = vld [vmem:[%s6 + $0x108] sm:$0xff]
    %v1986 = vld [vmem:[%s6 + $0x110] sm:$0xff]
    %v1987 = vld [vmem:[%s6 + $0x118] sm:$0xff]
    %v1988 = vld [vmem:[%s6 + $0x120] sm:$0xff]
    %v1989 = vld [vmem:[%s6 + $0x128] sm:$0xff]
    %v1990 = vld [vmem:[%s6 + $0x130] sm:$0xff]
    %v1991 = vld [vmem:[%s6 + $0x138] sm:$0xff]
    %v1992 = vld [vmem:[%s6 + $0x140] sm:$0xff]
    %v1993 = vld [vmem:[%s6 + $0x148] sm:$0xff]
    %v1994 = vld [vmem:[%s6 + $0x150] sm:$0xff]
    %v1995 = vld [vmem:[%s6 + $0x158] sm:$0xff]
    %v1996 = vld [vmem:[%s6 + $0x160] sm:$0xff]
    %v1997 = vld [vmem:[%s6 + $0x168] sm:$0xff]
    %v1998 = vld [vmem:[%s6 + $0x170] sm:$0xff]
    %v1999 = vld [vmem:[%s6 + $0x178] sm:$0xff]
    %v2000 = vld [vmem:[%s6 + $0x180] sm:$0xff]
    %v2001 = vld [vmem:[%s6 + $0x188] sm:$0xff]
    %v2002 = vld [vmem:[%s6 + $0x190] sm:$0xff]
    %v2003 = vld [vmem:[%s6 + $0x198] sm:$0xff]
    %v2004 = vld [vmem:[%s6 + $0x1a0] sm:$0xff]
    %v2005 = vld [vmem:[%s6 + $0x1a8] sm:$0xff]
    %v2006 = vld [vmem:[%s6 + $0x1b0] sm:$0xff]
    %v2007 = vld [vmem:[%s6 + $0x1b8] sm:$0xff]
    %v2008 = vld [vmem:[%s6 + $0x1c0] sm:$0xff]
    %v2009 = vld [vmem:[%s6 + $0x1c8] sm:$0xff]
    %v2010 = vld [vmem:[%s6 + $0x1d0] sm:$0xff]
    %v2011 = vld [vmem:[%s6 + $0x1d8] sm:$0xff]
    %v2012 = vld [vmem:[%s6 + $0x1e0] sm:$0xff]
    %v2013 = vld [vmem:[%s6 + $0x1e8] sm:$0xff]
    %v2014 = vld [vmem:[%s6 + $0x1f0] sm:$0xff]
    %v2015 = vld [vmem:[%s6 + $0x1f8] sm:$0xff]
    %2016 = vmatprep.subr.mxu0 0.0
    %2017 = vmatpush1.msra.mxu0 %v1952
    %2018 = vmatprep.subr.mxu0 0.0
    %2019 = vmatpush1.msra.mxu0 %v1953
    %2020 = vmatprep.subr.mxu0 0.0
    %2021 = vmatpush1.msra.mxu0 %v1954
    %2022 = vmatprep.subr.mxu0 0.0
    %2023 = vmatpush1.msra.mxu0 %v1955
    %2024 = vmatprep.subr.mxu0 0.0
    %2025 = vmatpush1.msra.mxu0 %v1956
    %2026 = vmatprep.subr.mxu0 0.0
    %2027 = vmatpush1.msra.mxu0 %v1957
    %2028 = vmatprep.subr.mxu0 0.0
    %2029 = vmatpush1.msra.mxu0 %v1958
    %2030 = vmatprep.subr.mxu0 0.0
    %2031 = vmatpush1.msra.mxu0 %v1959
    %2032 = vmatprep.subr.mxu0 0.0
    %2033 = vmatpush1.msra.mxu0 %v1960
    %2034 = vmatprep.subr.mxu0 0.0
    %2035 = vmatpush1.msra.mxu0 %v1961
    %2036 = vmatprep.subr.mxu0 0.0
    %2037 = vmatpush1.msra.mxu0 %v1962
    %2038 = vmatprep.subr.mxu0 0.0
    %2039 = vmatpush1.msra.mxu0 %v1963
    %2040 = vmatprep.subr.mxu0 0.0
    %2041 = vmatpush1.msra.mxu0 %v1964
    %2042 = vmatprep.subr.mxu0 0.0
    %2043 = vmatpush1.msra.mxu0 %v1965
    %2044 = vmatprep.subr.mxu0 0.0
    %2045 = vmatpush1.msra.mxu0 %v1966
    %2046 = vmatprep.subr.mxu0 0.0
    %2047 = vmatpush1.msra.mxu0 %v1967
    %2048 = vmatprep.subr.mxu0 0.0
    %2049 = vmatpush1.msra.mxu0 %v1968
    %2050 = vmatprep.subr.mxu0 0.0
    %2051 = vmatpush1.msra.mxu0 %v1969
    %2052 = vmatprep.subr.mxu0 0.0
    %2053 = vmatpush1.msra.mxu0 %v1970
    %2054 = vmatprep.subr.mxu0 0.0
    %2055 = vmatpush1.msra.mxu0 %v1971
    %2056 = vmatprep.subr.mxu0 0.0
    %2057 = vmatpush1.msra.mxu0 %v1972
    %2058 = vmatprep.subr.mxu0 0.0
    %2059 = vmatpush1.msra.mxu0 %v1973
    %2060 = vmatprep.subr.mxu0 0.0
    %2061 = vmatpush1.msra.mxu0 %v1974
    %2062 = vmatprep.subr.mxu0 0.0
    %2063 = vmatpush1.msra.mxu0 %v1975
    %2064 = vmatprep.subr.mxu0 0.0
    %2065 = vmatpush1.msra.mxu0 %v1976
    %2066 = vmatprep.subr.mxu0 0.0
    %2067 = vmatpush1.msra.mxu0 %v1977
    %2068 = vmatprep.subr.mxu0 0.0
    %2069 = vmatpush1.msra.mxu0 %v1978
    %2070 = vmatprep.subr.mxu0 0.0
    %2071 = vmatpush1.msra.mxu0 %v1979
    %2072 = vmatprep.subr.mxu0 0.0
    %2073 = vmatpush1.msra.mxu0 %v1980
    %2074 = vmatprep.subr.mxu0 0.0
    %2075 = vmatpush1.msra.mxu0 %v1981
    %2076 = vmatprep.subr.mxu0 0.0
    %2077 = vmatpush1.msra.mxu0 %v1982
    %2078 = vmatprep.subr.mxu0 0.0
    %2079 = vmatpush1.msra.mxu0 %v1983
    %2080 = vmatprep.mubr.f32.mxu0 %v1949
    %2081 = vmatmul.mubr.f32.gmra.mrb[0].mxu0 %v1948
    %v2082 = vpop.f32.mrb[0].mxu0
    %v2083 = vadd.f32 0.0, %v2082
    %v2084 = vpop.f32.mrb[0].mxu0
    %2085 = vdwg.mxu0
    %2086 = vmatprep.subr.mxu0 0.0
    %2087 = vmatpush1.msra.mxu0 %v1984
    %2088 = vmatprep.subr.mxu0 0.0
    %2089 = vmatpush1.msra.mxu0 %v1985
    %2090 = vmatprep.subr.mxu0 0.0
    %2091 = vmatpush1.msra.mxu0 %v1986
    %2092 = vmatprep.subr.mxu0 0.0
    %2093 = vmatpush1.msra.mxu0 %v1987
    %2094 = vmatprep.subr.mxu0 0.0
    %2095 = vmatpush1.msra.mxu0 %v1988
    %2096 = vmatprep.subr.mxu0 0.0
    %2097 = vmatpush1.msra.mxu0 %v1989
    %2098 = vmatprep.subr.mxu0 0.0
    %2099 = vmatpush1.msra.mxu0 %v1990
    %2100 = vmatprep.subr.mxu0 0.0
    %2101 = vmatpush1.msra.mxu0 %v1991
    %2102 = vmatprep.subr.mxu0 0.0
    %2103 = vmatpush1.msra.mxu0 %v1992
    %2104 = vmatprep.subr.mxu0 0.0
    %2105 = vmatpush1.msra.mxu0 %v1993
    %2106 = vmatprep.subr.mxu0 0.0
    %2107 = vmatpush1.msra.mxu0 %v1994
    %2108 = vmatprep.subr.mxu0 0.0
    %2109 = vmatpush1.msra.mxu0 %v1995
    %2110 = vmatprep.subr.mxu0 0.0
    %2111 = vmatpush1.msra.mxu0 %v1996
    %2112 = vmatprep.subr.mxu0 0.0
    %2113 = vmatpush1.msra.mxu0 %v1997
    %2114 = vmatprep.subr.mxu0 0.0
    %2115 = vmatpush1.msra.mxu0 %v1998
    %2116 = vmatprep.subr.mxu0 0.0
    %2117 = vmatpush1.msra.mxu0 %v1999
    %2118 = vmatprep.subr.mxu0 0.0
    %2119 = vmatpush1.msra.mxu0 %v2000
    %2120 = vmatprep.subr.mxu0 0.0
    %2121 = vmatpush1.msra.mxu0 %v2001
    %2122 = vmatprep.subr.mxu0 0.0
    %2123 = vmatpush1.msra.mxu0 %v2002
    %2124 = vmatprep.subr.mxu0 0.0
    %2125 = vmatpush1.msra.mxu0 %v2003
    %2126 = vmatprep.subr.mxu0 0.0
    %2127 = vmatpush1.msra.mxu0 %v2004
    %2128 = vmatprep.subr.mxu0 0.0
    %2129 = vmatpush1.msra.mxu0 %v2005
    %2130 = vmatprep.subr.mxu0 0.0
    %2131 = vmatpush1.msra.mxu0 %v2006
    %2132 = vmatprep.subr.mxu0 0.0
    %2133 = vmatpush1.msra.mxu0 %v2007
    %2134 = vmatprep.subr.mxu0 0.0
    %2135 = vmatpush1.msra.mxu0 %v2008
    %2136 = vmatprep.subr.mxu0 0.0
    %2137 = vmatpush1.msra.mxu0 %v2009
    %2138 = vmatprep.subr.mxu0 0.0
    %2139 = vmatpush1.msra.mxu0 %v2010
    %2140 = vmatprep.subr.mxu0 0.0
    %2141 = vmatpush1.msra.mxu0 %v2011
    %2142 = vmatprep.subr.mxu0 0.0
    %2143 = vmatpush1.msra.mxu0 %v2012
    %2144 = vmatprep.subr.mxu0 0.0
    %2145 = vmatpush1.msra.mxu0 %v2013
    %2146 = vmatprep.subr.mxu0 0.0
    %2147 = vmatpush1.msra.mxu0 %v2014
    %2148 = vmatprep.subr.mxu0 0.0
    %2149 = vmatpush1.msra.mxu0 %v2015
    %2150 = vmatprep.mubr.f32.mxu0 %v1951
    %2151 = vmatmul.mubr.f32.gmra.mrb[0].mxu0 %v1950
    %v2152 = vpop.f32.mrb[0].mxu0
    %v2153 = vadd.f32 %v2083, %v2152
    %v2154 = vpop.f32.mrb[0].mxu0
    %2155 = vdwg.mxu0
    %v2156 = vsel %vm502, %v2153, -inf
    %2157 = vmax.xlane.f32.xlu0 %v2156
    %v2158 = vpop.xlane.xlu0 %2157
    %v2159 = vsub.f32 %v2153, %v2158
    %v2160 = vmul.f32 %v2159, 1.442695
    %v2161 = vpow.pop %v2160
    %v2162 = vsel %vm502, %v2161, 0.0
    %2163 = vadd.xlane.f32.xlu0 %v2162
    %v2164 = vpop.xlane.xlu0 %2163
    %v2165 = vrcp.pop %v2164
    %v2166 = vmul.f32 %v2161, %v2165
    %v2167 = vld [vmem:[%s7] sm:$0xff]
    %v2168 = vld [vmem:[%s7 + $0x8] sm:$0xff]
    %v2170 = vsel %vm502, %v2166, 0
    %2172 = vmatprep.subr.mxu0 0.0
    %2173 = vmatpush1.msra.mxu0 %v2167
    %2174 = vmatprep.subr.mxu0 0.0
    %2175 = vmatpush1.msra.mxu0 %v2168
    %2176 = vmatprep.subr.mxu0 0.0
    %2177 = vmatpush1.msra.mxu0 0.0
    %2178 = vmatprep.subr.mxu0 0.0
    %2179 = vmatpush1.msra.mxu0 0.0
    %2180 = vmatprep.subr.mxu0 0.0
    %2181 = vmatpush1.msra.mxu0 0.0
    %2182 = vmatprep.subr.mxu0 0.0
    %2183 = vmatpush1.msra.mxu0 0.0
    %2184 = vmatprep.subr.mxu0 0.0
    %2185 = vmatpush1.msra.mxu0 0.0
    %2186 = vmatprep.subr.mxu0 0.0
    %2187 = vmatpush1.msra.mxu0 0.0
    %2188 = vmatprep.subr.mxu0 0.0
    %2189 = vmatpush1.msra.mxu0 0.0
    %2190 = vmatprep.subr.mxu0 0.0
    %2191 = vmatpush1.msra.mxu0 0.0
    %2192 = vmatprep.subr.mxu0 0.0
    %2193 = vmatpush1.msra.mxu0 0.0
    %2194 = vmatprep.subr.mxu0 0.0
    %2195 = vmatpush1.msra.mxu0 0.0
    %2196 = vmatprep.subr.mxu0 0.0
    %2197 = vmatpush1.msra.mxu0 0.0
    %2198 = vmatprep.subr.mxu0 0.0
    %2199 = vmatpush1.msra.mxu0 0.0
    %2200 = vmatprep.subr.mxu0 0.0
    %2201 = vmatpush1.msra.mxu0 0.0
    %2202 = vmatprep.subr.mxu0 0.0
    %2203 = vmatpush1.msra.mxu0 0.0
    %2204 = vmatprep.subr.mxu0 0.0
    %2205 = vmatpush1.msra.mxu0 0.0
    %2206 = vmatprep.subr.mxu0 0.0
    %2207 = vmatpush1.msra.mxu0 0.0
    %2208 = vmatprep.subr.mxu0 0.0
    %2209 = vmatpush1.msra.mxu0 0.0
    %2210 = vmatprep.subr.mxu0 0.0
    %2211 = vmatpush1.msra.mxu0 0.0
    %2212 = vmatprep.subr.mxu0 0.0
    %2213 = vmatpush1.msra.mxu0 0.0
    %2214 = vmatprep.subr.mxu0 0.0
    %2215 = vmatpush1.msra.mxu0 0.0
    %2216 = vmatprep.subr.mxu0 0.0
    %2217 = vmatpush1.msra.mxu0 0.0
    %2218 = vmatprep.subr.mxu0 0.0
    %2219 = vmatpush1.msra.mxu0 0.0
    %2220 = vmatprep.subr.mxu0 0.0
    %2221 = vmatpush1.msra.mxu0 0.0
    %2222 = vmatprep.subr.mxu0 0.0
    %2223 = vmatpush1.msra.mxu0 0.0
    %2224 = vmatprep.subr.mxu0 0.0
    %2225 = vmatpush1.msra.mxu0 0.0
    %2226 = vmatprep.subr.mxu0 0.0
    %2227 = vmatpush1.msra.mxu0 0.0
    %2228 = vmatprep.subr.mxu0 0.0
    %2229 = vmatpush1.msra.mxu0 0.0
    %2230 = vmatprep.subr.mxu0 0.0
    %2231 = vmatpush1.msra.mxu0 0.0
    %2232 = vmatprep.subr.mxu0 0.0
    %2233 = vmatpush1.msra.mxu0 0.0
    %2234 = vmatprep.subr.mxu0 0.0
    %2235 = vmatpush1.msra.mxu0 0.0
    %2236 = vmatprep.mubr.f32.mxu0 0.0
    %2237 = vmatmul.mubr.f32.gmra.mrb[0].mxu0 %v2170
    %v2238 = vpop.f32.mrb[0].mxu0
    %v2239 = vadd.f32 0.0, %v2238
    %v2240 = vpop.f32.mrb[0].mxu0
    %2241 = vdwg.mxu0
    %v2242 = vld [vmem:[%s8] sm:$0xff]
    %v2243 = vmul.f32 %v2239, %v2242
    %v2244 = vld [vmem:[%s1] sm:$0xff]
    %v2245 = vld [vmem:[%s1 + $0x8] sm:$0xff]
    %v2246 = vld [vmem:[%s1 + $0x10] sm:$0xff]
    %v2247 = vld [vmem:[%s1 + $0x18] sm:$0xff]
    %v2248 = vld [vmem:[%s1 + $0x20] sm:$0xff]
    %v2249 = vld [vmem:[%s1 + $0x28] sm:$0xff]
    %v2250 = vld [vmem:[%s1 + $0x30] sm:$0xff]
    %v2251 = vld [vmem:[%s1 + $0x38] sm:$0xff]
    %v2252 = vld [vmem:[%s1 + $0x40] sm:$0xff]
    %v2253 = vld [vmem:[%s1 + $0x48] sm:$0xff]
    %v2254 = vld [vmem:[%s1 + $0x50] sm:$0xff]
    %v2255 = vld [vmem:[%s1 + $0x58] sm:$0xff]
    %v2256 = vld [vmem:[%s1 + $0x60] sm:$0xff]
    %v2257 = vld [vmem:[%s1 + $0x68] sm:$0xff]
    %v2258 = vld [vmem:[%s1 + $0x70] sm:$0xff]
    %v2259 = vld [vmem:[%s1 + $0x78] sm:$0xff]
    %2260 = vmatprep.subr.mxu0 0.0
    %2261 = vmatpush1.msra.mxu0 %v2244
    %2262 = vmatprep.subr.mxu0 0.0
    %2263 = vmatpush1.msra.mxu0 %v2245
    %2264 = vmatprep.subr.mxu0 0.0
    %2265 = vmatpush1.msra.mxu0 %v2246
    %2266 = vmatprep.subr.mxu0 0.0
    %2267 = vmatpush1.msra.mxu0 %v2247
    %2268 = vmatprep.subr.mxu0 0.0
    %2269 = vmatpush1.msra.mxu0 %v2248
    %2270 = vmatprep.subr.mxu0 0.0
    %2271 = vmatpush1.msra.mxu0 %v2249
    %2272 = vmatprep.subr.mxu0 0.0
    %2273 = vmatpush1.msra.mxu0 %v2250
    %2274 = vmatprep.subr.mxu0 0.0
    %2275 = vmatpush1.msra.mxu0 %v2251
    %2276 = vmatprep.subr.mxu0 0.0
    %2277 = vmatpush1.msra.mxu0 %v2252
    %2278 = vmatprep.subr.mxu0 0.0
    %2279 = vmatpush1.msra.mxu0 %v2253
    %2280 = vmatprep.subr.mxu0 0.0
    %2281 = vmatpush1.msra.mxu0 %v2254
    %2282 = vmatprep.subr.mxu0 0.0
    %2283 = vmatpush1.msra.mxu0 %v2255
    %2284 = vmatprep.subr.mxu0 0.0
    %2285 = vmatpush1.msra.mxu0 %v2256
    %2286 = vmatprep.subr.mxu0 0.0
    %2287 = vmatpush1.msra.mxu0 %v2257
    %2288 = vmatprep.subr.mxu0 0.0
    %2289 = vmatpush1.msra.mxu0 %v2258
    %2290 = vmatprep.subr.mxu0 0.0
    %2291 = vmatpush1.msra.mxu0 %v2259
    %2292 = vmatprep.subr.mxu0 0.0
    %2293 = vmatpush1.msra.mxu0 0.0
    %2294 = vmatprep.subr.mxu0 0.0
    %2295 = vmatpush1.msra.mxu0 0.0
    %2296 = vmatprep.subr.mxu0 0.0
    %2297 = vmatpush1.msra.mxu0 0.0
    %2298 = vmatprep.subr.mxu0 0.0
    %2299 = vmatpush1.msra.mxu0 0.0
    %2300 = vmatprep.subr.mxu0 0.0
    %2301 = vmatpush1.msra.mxu0 0.0
    %2302 = vmatprep.subr.mxu0 0.0
    %2303 = vmatpush1.msra.mxu0 0.0
    %2304 = vmatprep.subr.mxu0 0.0
    %2305 = vmatpush1.msra.mxu0 0.0
    %2306 = vmatprep.subr.mxu0 0.0
    %2307 = vmatpush1.msra.mxu0 0.0
    %2308 = vmatprep.subr.mxu0 0.0
    %2309 = vmatpush1.msra.mxu0 0.0
    %2310 = vmatprep.subr.mxu0 0.0
    %2311 = vmatpush1.msra.mxu0 0.0
    %2312 = vmatprep.subr.mxu0 0.0
    %2313 = vmatpush1.msra.mxu0 0.0
    %2314 = vmatprep.subr.mxu0 0.0
    %2315 = vmatpush1.msra.mxu0 0.0
    %2316 = vmatprep.subr.mxu0 0.0
    %2317 = vmatpush1.msra.mxu0 0.0
    %2318 = vmatprep.subr.mxu0 0.0
    %2319 = vmatpush1.msra.mxu0 0.0
    %2320 = vmatprep.subr.mxu0 0.0
    %2321 = vmatpush1.msra.mxu0 0.0
    %2322 = vmatprep.subr.mxu0 0.0
    %2323 = vmatpush1.msra.mxu0 0.0
    %2324 = vmatprep.mubr.f32.mxu0 0.0
    %2325 = vmatmul.mubr.f32.gmra.mrb[0].mxu0 %v2243
    %v2326 = vpop.f32.mrb[0].mxu0
    %v2327 = vadd.f32 0.0, %v2326
    %v2328 = vpop.f32.mrb[0].mxu0
    %2329 = vdwg.mxu0
    %s2330 = scalar_lea.vmem %s2, 16
    %v2331 = vld [vmem:[%s2330] sm:$0xff]
    %v2332 = vadd.f32 %v2331, %v1937
    %v2333 = vld [vmem:[%s9] sm:$0xff]
    %v2334 = vld [vmem:[%s9 + $0x8] sm:$0xff]
    %v2335 = vld [vmem:[%s9 + $0x10] sm:$0xff]
    %v2336 = vld [vmem:[%s9 + $0x18] sm:$0xff]
    %v2338 = vsel %vm70, %v2327, 0
    %2340 = vmatprep.subr.mxu0 0.0
    %2341 = vmatpush1.msra.mxu0 %v2333
    %2342 = vmatprep.subr.mxu0 0.0
    %2343 = vmatpush1.msra.mxu0 %v2334
    %2344 = vmatprep.subr.mxu0 0.0
    %2345 = vmatpush1.msra.mxu0 %v2335
    %2346 = vmatprep.subr.mxu0 0.0
    %2347 = vmatpush1.msra.mxu0 %v2336
    %2348 = vmatprep.subr.mxu0 0.0
    %2349 = vmatpush1.msra.mxu0 0.0
    %2350 = vmatprep.subr.mxu0 0.0
    %2351 = vmatpush1.msra.mxu0 0.0
    %2352 = vmatprep.subr.mxu0 0.0
    %2353 = vmatpush1.msra.mxu0 0.0
    %2354 = vmatprep.subr.mxu0 0.0
    %2355 = vmatpush1.msra.mxu0 0.0
    %2356 = vmatprep.subr.mxu0 0.0
    %2357 = vmatpush1.msra.mxu0 0.0
    %2358 = vmatprep.subr.mxu0 0.0
    %2359 = vmatpush1.msra.mxu0 0.0
    %2360 = vmatprep.subr.mxu0 0.0
    %2361 = vmatpush1.msra.mxu0 0.0
    %2362 = vmatprep.subr.mxu0 0.0
    %2363 = vmatpush1.msra.mxu0 0.0
    %2364 = vmatprep.subr.mxu0 0.0
    %2365 = vmatpush1.msra.mxu0 0.0
    %2366 = vmatprep.subr.mxu0 0.0
    %2367 = vmatpush1.msra.mxu0 0.0
    %2368 = vmatprep.subr.mxu0 0.0
    %2369 = vmatpush1.msra.mxu0 0.0
    %2370 = vmatprep.subr.mxu0 0.0
    %2371 = vmatpush1.msra.mxu0 0.0
    %2372 = vmatprep.subr.mxu0 0.0
    %2373 = vmatpush1.msra.mxu0 0.0
    %2374 = vmatprep.subr.mxu0 0.0
    %2375 = vmatpush1.msra.mxu0 0.0
    %2376 = vmatprep.subr.mxu0 0.0
    %2377 = vmatpush1.msra.mxu0 0.0
    %2378 = vmatprep.subr.mxu0 0.0
    %2379 = vmatpush1.msra.mxu0 0.0
    %2380 = vmatprep.subr.mxu0 0.0
    %2381 = vmatpush1.msra.mxu0 0.0
    %2382 = vmatprep.subr.mxu0 0.0
    %2383 = vmatpush1.msra.mxu0 0.0
    %2384 = vmatprep.subr.mxu0 0.0
    %2385 = vmatpush1.msra.mxu0 0.0
    %2386 = vmatprep.subr.mxu0 0.0
    %2387 = vmatpush1.msra.mxu0 0.0
    %2388 = vmatprep.subr.mxu0 0.0
    %2389 = vmatpush1.msra.mxu0 0.0
    %2390 = vmatprep.subr.mxu0 0.0
    %2391 = vmatpush1.msra.mxu0 0.0
    %2392 = vmatprep.subr.mxu0 0.0
    %2393 = vmatpush1.msra.mxu0 0.0
    %2394 = vmatprep.subr.mxu0 0.0
    %2395 = vmatpush1.msra.mxu0 0.0
    %2396 = vmatprep.subr.mxu0 0.0
    %2397 = vmatpush1.msra.mxu0 0.0
    %2398 = vmatprep.subr.mxu0 0.0
    %2399 = vmatpush1.msra.mxu0 0.0
    %2400 = vmatprep.subr.mxu0 0.0
    %2401 = vmatpush1.msra.mxu0 0.0
    %2402 = vmatprep.subr.mxu0 0.0
    %2403 = vmatpush1.msra.mxu0 0.0
    %2404 = vmatprep.mubr.f32.mxu0 0.0
    %2405 = vmatmul.mubr.f32.gmra.mrb[0].mxu0 %v2338
    %v2406 = vpop.f32.mrb[0].mxu0
    %v2407 = vadd.f32 0.0, %v2406
    %v2408 = vpop.f32.mrb[0].mxu0
    %2409 = vdwg.mxu0
    %v2410 = vadd.f32 %v2332, %v2407
    %v2411 = vxor.u32 %v2410, 2147483648
    %v2412 = vmul.f32 %v2411, 1.442695
    %v2413 = vpow.pop %v2412
    %v2414 = vadd.f32 %v2413, 1.0
    %v2415 = vrcp.pop %v2414
    %v2416 = vmul.f32 1.0, %v2415
    %v2417 = vmul.f32 %v2416, 2.0
    %v2418 = vsub.f32 %v2417, 1.0
    %v2419 = vmul.f32 %v2416, %v1602
    %2421 = vrot.lane.b32.xlu0 %v2418, 64
    %v2422 = vpop.permute.xlu0 %2421
    %v2424 = vmul.f32 %v2416, %v2422
    %2426 = vrot.lane.b32.xlu0 %v2424, 32
    %v2427 = vpop.permute.xlu0 %2426
    %v2429 = vadd.f32 %v2419, %v2427
    %v2430 = vtanh.pop %v2429
    %2432 = vrot.lane.b32.xlu0 %v2430, 64
    %v2433 = vpop.permute.xlu0 %2432
    %v2435 = vmul.f32 %v2416, %v2433
    %v2436 = vld [vmem:[%s10] sm:$0xff]
    %v2437 = vld [vmem:[%s10 + $0x8] sm:$0xff]
    %v2438 = vld [vmem:[%s10 + $0x10] sm:$0xff]
    %v2439 = vld [vmem:[%s10 + $0x18] sm:$0xff]
    %v2440 = vld [vmem:[%s11] sm:$0x1]
    %v2442 = vlaneseq
    %v2443 = vshrl.u32 %v2442, 7
    %v2444 = vsub.s32 0, %v2443
    %v2445 = vrot.slane %v2440, %v2444
    %2448 = vrot.lane.b32.xlu0 %v2435, 32
    %v2449 = vpop.permute.xlu0 %2448
    %v2450 = vsel %vm70, %v2449, 0
    %2452 = vmatprep.subr.mxu0 0.0
    %2453 = vmatpush1.msra.mxu0 %v2436
    %2454 = vmatprep.subr.mxu0 0.0
    %2455 = vmatpush1.msra.mxu0 %v2437
    %2456 = vmatprep.subr.mxu0 0.0
    %2457 = vmatpush1.msra.mxu0 %v2438
    %2458 = vmatprep.subr.mxu0 0.0
    %2459 = vmatpush1.msra.mxu0 %v2439
    %2460 = vmatprep.subr.mxu0 0.0
    %2461 = vmatpush1.msra.mxu0 0.0
    %2462 = vmatprep.subr.mxu0 0.0
    %2463 = vmatpush1.msra.mxu0 0.0
    %2464 = vmatprep.subr.mxu0 0.0
    %2465 = vmatpush1.msra.mxu0 0.0
    %2466 = vmatprep.subr.mxu0 0.0
    %2467 = vmatpush1.msra.mxu0 0.0
    %2468 = vmatprep.subr.mxu0 0.0
    %2469 = vmatpush1.msra.mxu0 0.0
    %2470 = vmatprep.subr.mxu0 0.0
    %2471 = vmatpush1.msra.mxu0 0.0
    %2472 = vmatprep.subr.mxu0 0.0
    %2473 = vmatpush1.msra.mxu0 0.0
    %2474 = vmatprep.subr.mxu0 0.0
    %2475 = vmatpush1.msra.mxu0 0.0
    %2476 = vmatprep.subr.mxu0 0.0
    %2477 = vmatpush1.msra.mxu0 0.0
    %2478 = vmatprep.subr.mxu0 0.0
    %2479 = vmatpush1.msra.mxu0 0.0
    %2480 = vmatprep.subr.mxu0 0.0
    %2481 = vmatpush1.msra.mxu0 0.0
    %2482 = vmatprep.subr.mxu0 0.0
    %2483 = vmatpush1.msra.mxu0 0.0
    %2484 = vmatprep.subr.mxu0 0.0
    %2485 = vmatpush1.msra.mxu0 0.0
    %2486 = vmatprep.subr.mxu0 0.0
    %2487 = vmatpush1.msra.mxu0 0.0
    %2488 = vmatprep.subr.mxu0 0.0
    %2489 = vmatpush1.msra.mxu0 0.0
    %2490 = vmatprep.subr.mxu0 0.0
    %2491 = vmatpush1.msra.mxu0 0.0
    %2492 = vmatprep.subr.mxu0 0.0
    %2493 = vmatpush1.msra.mxu0 0.0
    %2494 = vmatprep.subr.mxu0 0.0
    %2495 = vmatpush1.msra.mxu0 0.0
    %2496 = vmatprep.subr.mxu0 0.0
    %2497 = vmatpush1.msra.mxu0 0.0
    %2498 = vmatprep.subr.mxu0 0.0
    %2499 = vmatpush1.msra.mxu0 0.0
    %2500 = vmatprep.subr.mxu0 0.0
    %2501 = vmatpush1.msra.mxu0 0.0
    %2502 = vmatprep.subr.mxu0 0.0
    %2503 = vmatpush1.msra.mxu0 0.0
    %2504 = vmatprep.subr.mxu0 0.0
    %2505 = vmatpush1.msra.mxu0 0.0
    %2506 = vmatprep.subr.mxu0 0.0
    %2507 = vmatpush1.msra.mxu0 0.0
    %2508 = vmatprep.subr.mxu0 0.0
    %2509 = vmatpush1.msra.mxu0 0.0
    %2510 = vmatprep.subr.mxu0 0.0
    %2511 = vmatpush1.msra.mxu0 0.0
    %2512 = vmatprep.subr.mxu0 0.0
    %2513 = vmatpush1.msra.mxu0 0.0
    %2514 = vmatprep.subr.mxu0 0.0
    %2515 = vmatpush1.msra.mxu0 0.0
    %2516 = vmatprep.mubr.f32.mxu0 0.0
    %2517 = vmatmul.mubr.f32.gmra.mrb[0].mxu0 %v2450
    %v2518 = vpop.f32.mrb[0].mxu0
    %v2519 = vadd.f32 %v2445, %v2518
    %v2520 = vpop.f32.mrb[0].mxu0
    %2521 = vdwg.mxu0
    %s2522 = scalar_lea.vmem [#allocation2], 16
    %2523 = vst [vmem:[%s2522] sm:$0xff] %v2519
    %s2524 = scalar_lea.vmem [#allocation4], 16
    %2525 = vst.msk [vmem:[%s2524] sm:$0xff] %vm502, %v2166
    %s2527 = scalar_lea.vmem [#allocation6], 16
    %2528 = vst.msk [vmem:[%s2527] sm:$0xff] %vm70, %v2449
    %2530 = vrot.lane.b32.xlu0 %v2429, 96
    %v2531 = vpop.permute.xlu0 %2530
    %s2533 = scalar_lea.vmem [#allocation7], 16
    %2534 = vst.msk [vmem:[%s2533] sm:$0xff] %vm70, %v2531
    %v2535 = vld [vmem:[%s5] sm:$0xff]
    %v2536 = vld [vmem:[%s5 + $0x8] sm:$0xff]
    %v2537 = vld [vmem:[%s5 + $0x10] sm:$0xff]
    %v2538 = vld [vmem:[%s5 + $0x18] sm:$0xff]
    %v2539 = vld [vmem:[%s5 + $0x20] sm:$0xff]
    %v2540 = vld [vmem:[%s5 + $0x28] sm:$0xff]
    %v2541 = vld [vmem:[%s5 + $0x30] sm:$0xff]
    %v2542 = vld [vmem:[%s5 + $0x38] sm:$0xff]
    %v2543 = vld [vmem:[%s5 + $0x40] sm:$0xff]
    %v2544 = vld [vmem:[%s5 + $0x48] sm:$0xff]
    %v2545 = vld [vmem:[%s5 + $0x50] sm:$0xff]
    %v2546 = vld [vmem:[%s5 + $0x58] sm:$0xff]
    %v2547 = vld [vmem:[%s5 + $0x60] sm:$0xff]
    %v2548 = vld [vmem:[%s5 + $0x68] sm:$0xff]
    %v2549 = vld [vmem:[%s5 + $0x70] sm:$0xff]
    %v2550 = vld [vmem:[%s5 + $0x78] sm:$0xff]
    %v2551 = vld [vmem:[%s5 + $0x80] sm:$0xff]
    %v2552 = vld [vmem:[%s5 + $0x88] sm:$0xff]
    %v2553 = vld [vmem:[%s5 + $0x90] sm:$0xff]
    %v2554 = vld [vmem:[%s5 + $0x98] sm:$0xff]
    %2555 = vmatprep.subr.mxu0 %v2536
    %2556 = vmatpush1.msra.mxu0 %v2535
    %2557 = vmatprep.subr.mxu0 %v2541
    %2558 = vmatpush1.msra.mxu0 %v2540
    %2559 = vmatprep.subr.mxu0 %v2546
    %2560 = vmatpush1.msra.mxu0 %v2545
    %2561 = vmatprep.subr.mxu0 %v2551
    %2562 = vmatpush1.msra.mxu0 %v2550
    %2563 = vmatprep.subr.mxu0 0.0
    %2564 = vmatpush1.msra.mxu0 0.0
    %2565 = vmatprep.subr.mxu0 0.0
    %2566 = vmatpush1.msra.mxu0 0.0
    %2567 = vmatprep.subr.mxu0 0.0
    %2568 = vmatpush1.msra.mxu0 0.0
    %2569 = vmatprep.subr.mxu0 0.0
    %2570 = vmatpush1.msra.mxu0 0.0
    %2571 = vmatprep.subr.mxu0 0.0
    %2572 = vmatpush1.msra.mxu0 0.0
    %2573 = vmatprep.subr.mxu0 0.0
    %2574 = vmatpush1.msra.mxu0 0.0
    %2575 = vmatprep.subr.mxu0 0.0
    %2576 = vmatpush1.msra.mxu0 0.0
    %2577 = vmatprep.subr.mxu0 0.0
    %2578 = vmatpush1.msra.mxu0 0.0
    %2579 = vmatprep.subr.mxu0 0.0
    %2580 = vmatpush1.msra.mxu0 0.0
    %2581 = vmatprep.subr.mxu0 0.0
    %2582 = vmatpush1.msra.mxu0 0.0
    %2583 = vmatprep.subr.mxu0 0.0
    %2584 = vmatpush1.msra.mxu0 0.0
    %2585 = vmatprep.subr.mxu0 0.0
    %2586 = vmatpush1.msra.mxu0 0.0
    %2587 = vmatprep.subr.mxu0 0.0
    %2588 = vmatpush1.msra.mxu0 0.0
    %2589 = vmatprep.subr.mxu0 0.0
    %2590 = vmatpush1.msra.mxu0 0.0
    %2591 = vmatprep.subr.mxu0 0.0
    %2592 = vmatpush1.msra.mxu0 0.0
    %2593 = vmatprep.subr.mxu0 0.0
    %2594 = vmatpush1.msra.mxu0 0.0
    %2595 = vmatprep.subr.mxu0 0.0
    %2596 = vmatpush1.msra.mxu0 0.0
    %2597 = vmatprep.subr.mxu0 0.0
    %2598 = vmatpush1.msra.mxu0 0.0
    %2599 = vmatprep.subr.mxu0 0.0
    %2600 = vmatpush1.msra.mxu0 0.0
    %2601 = vmatprep.subr.mxu0 0.0
    %2602 = vmatpush1.msra.mxu0 0.0
    %2603 = vmatprep.subr.mxu0 0.0
    %2604 = vmatpush1.msra.mxu0 0.0
    %2605 = vmatprep.subr.mxu0 0.0
    %2606 = vmatpush1.msra.mxu0 0.0
    %2607 = vmatprep.subr.mxu0 0.0
    %2608 = vmatpush1.msra.mxu0 0.0
    %2609 = vmatprep.subr.mxu0 0.0
    %2610 = vmatpush1.msra.mxu0 0.0
    %2611 = vmatprep.subr.mxu0 0.0
    %2612 = vmatpush1.msra.mxu0 0.0
    %2613 = vmatprep.subr.mxu0 0.0
    %2614 = vmatpush1.msra.mxu0 0.0
    %2615 = vmatprep.subr.mxu0 0.0
    %2616 = vmatpush1.msra.mxu0 0.0
    %2617 = vmatprep.subr.mxu0 0.0
    %2618 = vmatpush1.msra.mxu0 0.0
    %2619 = vmatprep.mubr.f32.mxu0 0.0
    %2620 = vmatmul.mubr.f32.gmra.mrb[0].mxu0 %v2450
    %v2621 = vpop.f32.mrb[0].mxu0
    %v2622 = vadd.f32 0.0, %v2621
    %v2623 = vpop.f32.mrb[0].mxu0
    %v2624 = vadd.f32 0.0, %v2623
    %2625 = vdwg.mxu0
    %2626 = vmatprep.subr.mxu0 %v2538
    %2627 = vmatpush1.msra.mxu0 %v2537
    %2628 = vmatprep.subr.mxu0 %v2543
    %2629 = vmatpush1.msra.mxu0 %v2542
    %2630 = vmatprep.subr.mxu0 %v2548
    %2631 = vmatpush1.msra.mxu0 %v2547
    %2632 = vmatprep.subr.mxu0 %v2553
    %2633 = vmatpush1.msra.mxu0 %v2552
    %2634 = vmatprep.subr.mxu0 0.0
    %2635 = vmatpush1.msra.mxu0 0.0
    %2636 = vmatprep.subr.mxu0 0.0
    %2637 = vmatpush1.msra.mxu0 0.0
    %2638 = vmatprep.subr.mxu0 0.0
    %2639 = vmatpush1.msra.mxu0 0.0
    %2640 = vmatprep.subr.mxu0 0.0
    %2641 = vmatpush1.msra.mxu0 0.0
    %2642 = vmatprep.subr.mxu0 0.0
    %2643 = vmatpush1.msra.mxu0 0.0
    %2644 = vmatprep.subr.mxu0 0.0
    %2645 = vmatpush1.msra.mxu0 0.0
    %2646 = vmatprep.subr.mxu0 0.0
    %2647 = vmatpush1.msra.mxu0 0.0
    %2648 = vmatprep.subr.mxu0 0.0
    %2649 = vmatpush1.msra.mxu0 0.0
    %2650 = vmatprep.subr.mxu0 0.0
    %2651 = vmatpush1.msra.mxu0 0.0
    %2652 = vmatprep.subr.mxu0 0.0
    %2653 = vmatpush1.msra.mxu0 0.0
    %2654 = vmatprep.subr.mxu0 0.0
    %2655 = vmatpush1.msra.mxu0 0.0
    %2656 = vmatprep.subr.mxu0 0.0
    %2657 = vmatpush1.msra.mxu0 0.0
    %2658 = vmatprep.subr.mxu0 0.0
    %2659 = vmatpush1.msra.mxu0 0.0
    %2660 = vmatprep.subr.mxu0 0.0
    %2661 = vmatpush1.msra.mxu0 0.0
    %2662 = vmatprep.subr.mxu0 0.0
    %2663 = vmatpush1.msra.mxu0 0.0
    %2664 = vmatprep.subr.mxu0 0.0
    %2665 = vmatpush1.msra.mxu0 0.0
    %2666 = vmatprep.subr.mxu0 0.0
    %2667 = vmatpush1.msra.mxu0 0.0
    %2668 = vmatprep.subr.mxu0 0.0
    %2669 = vmatpush1.msra.mxu0 0.0
    %2670 = vmatprep.subr.mxu0 0.0
    %2671 = vmatpush1.msra.mxu0 0.0
    %2672 = vmatprep.subr.mxu0 0.0
    %2673 = vmatpush1.msra.mxu0 0.0
    %2674 = vmatprep.subr.mxu0 0.0
    %2675 = vmatpush1.msra.mxu0 0.0
    %2676 = vmatprep.subr.mxu0 0.0
    %2677 = vmatpush1.msra.mxu0 0.0
    %2678 = vmatprep.subr.mxu0 0.0
    %2679 = vmatpush1.msra.mxu0 0.0
    %2680 = vmatprep.subr.mxu0 0.0
    %2681 = vmatpush1.msra.mxu0 0.0
    %2682 = vmatprep.subr.mxu0 0.0
    %2683 = vmatpush1.msra.mxu0 0.0
    %2684 = vmatprep.subr.mxu0 0.0
    %2685 = vmatpush1.msra.mxu0 0.0
    %2686 = vmatprep.subr.mxu0 0.0
    %2687 = vmatpush1.msra.mxu0 0.0
    %2688 = vmatprep.subr.mxu0 0.0
    %2689 = vmatpush1.msra.mxu0 0.0
    %2690 = vmatprep.mubr.f32.mxu0 0.0
    %2691 = vmatmul.mubr.f32.gmra.mrb[0].mxu0 %v2450
    %v2692 = vpop.f32.mrb[0].mxu0
    %v2693 = vadd.f32 0.0, %v2692
    %v2694 = vpop.f32.mrb[0].mxu0
    %v2695 = vadd.f32 0.0, %v2694
    %2696 = vdwg.mxu0
    %2697 = vmatprep.subr.mxu0 0.0
    %2698 = vmatpush1.msra.mxu0 %v2539
    %2699 = vmatprep.subr.mxu0 0.0
    %2700 = vmatpush1.msra.mxu0 %v2544
    %2701 = vmatprep.subr.mxu0 0.0
    %2702 = vmatpush1.msra.mxu0 %v2549
    %2703 = vmatprep.subr.mxu0 0.0
    %2704 = vmatpush1.msra.mxu0 %v2554
    %2705 = vmatprep.subr.mxu0 0.0
    %2706 = vmatpush1.msra.mxu0 0.0
    %2707 = vmatprep.subr.mxu0 0.0
    %2708 = vmatpush1.msra.mxu0 0.0
    %2709 = vmatprep.subr.mxu0 0.0
    %2710 = vmatpush1.msra.mxu0 0.0
    %2711 = vmatprep.subr.mxu0 0.0
    %2712 = vmatpush1.msra.mxu0 0.0
    %2713 = vmatprep.subr.mxu0 0.0
    %2714 = vmatpush1.msra.mxu0 0.0
    %2715 = vmatprep.subr.mxu0 0.0
    %2716 = vmatpush1.msra.mxu0 0.0
    %2717 = vmatprep.subr.mxu0 0.0
    %2718 = vmatpush1.msra.mxu0 0.0
    %2719 = vmatprep.subr.mxu0 0.0
    %2720 = vmatpush1.msra.mxu0 0.0
    %2721 = vmatprep.subr.mxu0 0.0
    %2722 = vmatpush1.msra.mxu0 0.0
    %2723 = vmatprep.subr.mxu0 0.0
    %2724 = vmatpush1.msra.mxu0 0.0
    %2725 = vmatprep.subr.mxu0 0.0
    %2726 = vmatpush1.msra.mxu0 0.0
    %2727 = vmatprep.subr.mxu0 0.0
    %2728 = vmatpush1.msra.mxu0 0.0
    %2729 = vmatprep.subr.mxu0 0.0
    %2730 = vmatpush1.msra.mxu0 0.0
    %2731 = vmatprep.subr.mxu0 0.0
    %2732 = vmatpush1.msra.mxu0 0.0
    %2733 = vmatprep.subr.mxu0 0.0
    %2734 = vmatpush1.msra.mxu0 0.0
    %2735 = vmatprep.subr.mxu0 0.0
    %2736 = vmatpush1.msra.mxu0 0.0
    %2737 = vmatprep.subr.mxu0 0.0
    %2738 = vmatpush1.msra.mxu0 0.0
    %2739 = vmatprep.subr.mxu0 0.0
    %2740 = vmatpush1.msra.mxu0 0.0
    %2741 = vmatprep.subr.mxu0 0.0
    %2742 = vmatpush1.msra.mxu0 0.0
    %2743 = vmatprep.subr.mxu0 0.0
    %2744 = vmatpush1.msra.mxu0 0.0
    %2745 = vmatprep.subr.mxu0 0.0
    %2746 = vmatpush1.msra.mxu0 0.0
    %2747 = vmatprep.subr.mxu0 0.0
    %2748 = vmatpush1.msra.mxu0 0.0
    %2749 = vmatprep.subr.mxu0 0.0
    %2750 = vmatpush1.msra.mxu0 0.0
    %2751 = vmatprep.subr.mxu0 0.0
    %2752 = vmatpush1.msra.mxu0 0.0
    %2753 = vmatprep.subr.mxu0 0.0
    %2754 = vmatpush1.msra.mxu0 0.0
    %2755 = vmatprep.subr.mxu0 0.0
    %2756 = vmatpush1.msra.mxu0 0.0
    %2757 = vmatprep.subr.mxu0 0.0
    %2758 = vmatpush1.msra.mxu0 0.0
    %2759 = vmatprep.subr.mxu0 0.0
    %2760 = vmatpush1.msra.mxu0 0.0
    %2761 = vmatprep.mubr.f32.mxu0 0.0
    %2762 = vmatmul.mubr.f32.gmra.mrb[0].mxu0 %v2450
    %v2763 = vpop.f32.mrb[0].mxu0
    %v2764 = vadd.f32 0.0, %v2763
    %v2765 = vpop.f32.mrb[0].mxu0
    %2766 = vdwg.mxu0
    %v2767 = vld [vmem:[%s0] sm:$0xff]
    %v2768 = vld [vmem:[%s0 + $0x8] sm:$0xff]
    %v2769 = vld [vmem:[%s0 + $0x10] sm:$0xff]
    %v2770 = vld [vmem:[%s0 + $0x18] sm:$0xff]
    %v2771 = vadd.f32 %v2767, %v2622
    %v2772 = vadd.f32 %v2768, %v2624
    %v2773 = vadd.f32 %v2769, %v2693
    %v2774 = vadd.f32 %v2770, %v2695
    %v2775 = vtanh.pop %v2771
    %v2776 = vtanh.pop %v2772
    %v2777 = vtanh.pop %v2773
    %v2778 = vtanh.pop %v2774
    %v2779 = vld [vmem:[%s6] sm:$0xff]
    %v2780 = vld [vmem:[%s6 + $0x8] sm:$0xff]
    %v2781 = vld [vmem:[%s6 + $0x10] sm:$0xff]
    %v2782 = vld [vmem:[%s6 + $0x18] sm:$0xff]
    %v2783 = vld [vmem:[%s6 + $0x20] sm:$0xff]
    %v2784 = vld [vmem:[%s6 + $0x28] sm:$0xff]
    %v2785 = vld [vmem:[%s6 + $0x30] sm:$0xff]
    %v2786 = vld [vmem:[%s6 + $0x38] sm:$0xff]
    %v2787 = vld [vmem:[%s6 + $0x40] sm:$0xff]
    %v2788 = vld [vmem:[%s6 + $0x48] sm:$0xff]
    %v2789 = vld [vmem:[%s6 + $0x50] sm:$0xff]
    %v2790 = vld [vmem:[%s6 + $0x58] sm:$0xff]
    %v2791 = vld [vmem:[%s6 + $0x60] sm:$0xff]
    %v2792 = vld [vmem:[%s6 + $0x68] sm:$0xff]
    %v2793 = vld [vmem:[%s6 + $0x70] sm:$0xff]
    %v2794 = vld [vmem:[%s6 + $0x78] sm:$0xff]
    %v2795 = vld [vmem:[%s6 + $0x80] sm:$0xff]
    %v2796 = vld [vmem:[%s6 + $0x88] sm:$0xff]
    %v2797 = vld [vmem:[%s6 + $0x90] sm:$0xff]
    %v2798 = vld [vmem:[%s6 + $0x98] sm:$0xff]
    %v2799 = vld [vmem:[%s6 + $0xa0] sm:$0xff]
    %v2800 = vld [vmem:[%s6 + $0xa8] sm:$0xff]
    %v2801 = vld [vmem:[%s6 + $0xb0] sm:$0xff]
    %v2802 = vld [vmem:[%s6 + $0xb8] sm:$0xff]
    %v2803 = vld [vmem:[%s6 + $0xc0] sm:$0xff]
    %v2804 = vld [vmem:[%s6 + $0xc8] sm:$0xff]
    %v2805 = vld [vmem:[%s6 + $0xd0] sm:$0xff]
    %v2806 = vld [vmem:[%s6 + $0xd8] sm:$0xff]
    %v2807 = vld [vmem:[%s6 + $0xe0] sm:$0xff]
    %v2808 = vld [vmem:[%s6 + $0xe8] sm:$0xff]
    %v2809 = vld [vmem:[%s6 + $0xf0] sm:$0xff]
    %v2810 = vld [vmem:[%s6 + $0xf8] sm:$0xff]
    %v2811 = vld [vmem:[%s6 + $0x100] sm:$0xff]
    %v2812 = vld [vmem:[%s6 + $0x108] sm:$0xff]
    %v2813 = vld [vmem:[%s6 + $0x110] sm:$0xff]
    %v2814 = vld [vmem:[%s6 + $0x118] sm:$0xff]
    %v2815 = vld [vmem:[%s6 + $0x120] sm:$0xff]
    %v2816 = vld [vmem:[%s6 + $0x128] sm:$0xff]
    %v2817 = vld [vmem:[%s6 + $0x130] sm:$0xff]
    %v2818 = vld [vmem:[%s6 + $0x138] sm:$0xff]
    %v2819 = vld [vmem:[%s6 + $0x140] sm:$0xff]
    %v2820 = vld [vmem:[%s6 + $0x148] sm:$0xff]
    %v2821 = vld [vmem:[%s6 + $0x150] sm:$0xff]
    %v2822 = vld [vmem:[%s6 + $0x158] sm:$0xff]
    %v2823 = vld [vmem:[%s6 + $0x160] sm:$0xff]
    %v2824 = vld [vmem:[%s6 + $0x168] sm:$0xff]
    %v2825 = vld [vmem:[%s6 + $0x170] sm:$0xff]
    %v2826 = vld [vmem:[%s6 + $0x178] sm:$0xff]
    %v2827 = vld [vmem:[%s6 + $0x180] sm:$0xff]
    %v2828 = vld [vmem:[%s6 + $0x188] sm:$0xff]
    %v2829 = vld [vmem:[%s6 + $0x190] sm:$0xff]
    %v2830 = vld [vmem:[%s6 + $0x198] sm:$0xff]
    %v2831 = vld [vmem:[%s6 + $0x1a0] sm:$0xff]
    %v2832 = vld [vmem:[%s6 + $0x1a8] sm:$0xff]
    %v2833 = vld [vmem:[%s6 + $0x1b0] sm:$0xff]
    %v2834 = vld [vmem:[%s6 + $0x1b8] sm:$0xff]
    %v2835 = vld [vmem:[%s6 + $0x1c0] sm:$0xff]
    %v2836 = vld [vmem:[%s6 + $0x1c8] sm:$0xff]
    %v2837 = vld [vmem:[%s6 + $0x1d0] sm:$0xff]
    %v2838 = vld [vmem:[%s6 + $0x1d8] sm:$0xff]
    %v2839 = vld [vmem:[%s6 + $0x1e0] sm:$0xff]
    %v2840 = vld [vmem:[%s6 + $0x1e8] sm:$0xff]
    %v2841 = vld [vmem:[%s6 + $0x1f0] sm:$0xff]
    %v2842 = vld [vmem:[%s6 + $0x1f8] sm:$0xff]
    %2843 = vmatprep.subr.mxu0 0.0
    %2844 = vmatpush1.msra.mxu0 %v2779
    %2845 = vmatprep.subr.mxu0 0.0
    %2846 = vmatpush1.msra.mxu0 %v2780
    %2847 = vmatprep.subr.mxu0 0.0
    %2848 = vmatpush1.msra.mxu0 %v2781
    %2849 = vmatprep.subr.mxu0 0.0
    %2850 = vmatpush1.msra.mxu0 %v2782
    %2851 = vmatprep.subr.mxu0 0.0
    %2852 = vmatpush1.msra.mxu0 %v2783
    %2853 = vmatprep.subr.mxu0 0.0
    %2854 = vmatpush1.msra.mxu0 %v2784
    %2855 = vmatprep.subr.mxu0 0.0
    %2856 = vmatpush1.msra.mxu0 %v2785
    %2857 = vmatprep.subr.mxu0 0.0
    %2858 = vmatpush1.msra.mxu0 %v2786
    %2859 = vmatprep.subr.mxu0 0.0
    %2860 = vmatpush1.msra.mxu0 %v2787
    %2861 = vmatprep.subr.mxu0 0.0
    %2862 = vmatpush1.msra.mxu0 %v2788
    %2863 = vmatprep.subr.mxu0 0.0
    %2864 = vmatpush1.msra.mxu0 %v2789
    %2865 = vmatprep.subr.mxu0 0.0
    %2866 = vmatpush1.msra.mxu0 %v2790
    %2867 = vmatprep.subr.mxu0 0.0
    %2868 = vmatpush1.msra.mxu0 %v2791
    %2869 = vmatprep.subr.mxu0 0.0
    %2870 = vmatpush1.msra.mxu0 %v2792
    %2871 = vmatprep.subr.mxu0 0.0
    %2872 = vmatpush1.msra.mxu0 %v2793
    %2873 = vmatprep.subr.mxu0 0.0
    %2874 = vmatpush1.msra.mxu0 %v2794
    %2875 = vmatprep.subr.mxu0 0.0
    %2876 = vmatpush1.msra.mxu0 %v2795
    %2877 = vmatprep.subr.mxu0 0.0
    %2878 = vmatpush1.msra.mxu0 %v2796
    %2879 = vmatprep.subr.mxu0 0.0
    %2880 = vmatpush1.msra.mxu0 %v2797
    %2881 = vmatprep.subr.mxu0 0.0
    %2882 = vmatpush1.msra.mxu0 %v2798
    %2883 = vmatprep.subr.mxu0 0.0
    %2884 = vmatpush1.msra.mxu0 %v2799
    %2885 = vmatprep.subr.mxu0 0.0
    %2886 = vmatpush1.msra.mxu0 %v2800
    %2887 = vmatprep.subr.mxu0 0.0
    %2888 = vmatpush1.msra.mxu0 %v2801
    %2889 = vmatprep.subr.mxu0 0.0
    %2890 = vmatpush1.msra.mxu0 %v2802
    %2891 = vmatprep.subr.mxu0 0.0
    %2892 = vmatpush1.msra.mxu0 %v2803
    %2893 = vmatprep.subr.mxu0 0.0
    %2894 = vmatpush1.msra.mxu0 %v2804
    %2895 = vmatprep.subr.mxu0 0.0
    %2896 = vmatpush1.msra.mxu0 %v2805
    %2897 = vmatprep.subr.mxu0 0.0
    %2898 = vmatpush1.msra.mxu0 %v2806
    %2899 = vmatprep.subr.mxu0 0.0
    %2900 = vmatpush1.msra.mxu0 %v2807
    %2901 = vmatprep.subr.mxu0 0.0
    %2902 = vmatpush1.msra.mxu0 %v2808
    %2903 = vmatprep.subr.mxu0 0.0
    %2904 = vmatpush1.msra.mxu0 %v2809
    %2905 = vmatprep.subr.mxu0 0.0
    %2906 = vmatpush1.msra.mxu0 %v2810
    %2907 = vmatprep.mubr.f32.mxu0 %v2776
    %2908 = vmatmul.mubr.f32.gmra.mrb[0].mxu0 %v2775
    %v2909 = vpop.f32.mrb[0].mxu0
    %v2910 = vadd.f32 0.0, %v2909
    %v2911 = vpop.f32.mrb[0].mxu0
    %2912 = vdwg.mxu0
    %2913 = vmatprep.subr.mxu0 0.0
    %2914 = vmatpush1.msra.mxu0 %v2811
    %2915 = vmatprep.subr.mxu0 0.0
    %2916 = vmatpush1.msra.mxu0 %v2812
    %2917 = vmatprep.subr.mxu0 0.0
    %2918 = vmatpush1.msra.mxu0 %v2813
    %2919 = vmatprep.subr.mxu0 0.0
    %2920 = vmatpush1.msra.mxu0 %v2814
    %2921 = vmatprep.subr.mxu0 0.0
    %2922 = vmatpush1.msra.mxu0 %v2815
    %2923 = vmatprep.subr.mxu0 0.0
    %2924 = vmatpush1.msra.mxu0 %v2816
    %2925 = vmatprep.subr.mxu0 0.0
    %2926 = vmatpush1.msra.mxu0 %v2817
    %2927 = vmatprep.subr.mxu0 0.0
    %2928 = vmatpush1.msra.mxu0 %v2818
    %2929 = vmatprep.subr.mxu0 0.0
    %2930 = vmatpush1.msra.mxu0 %v2819
    %2931 = vmatprep.subr.mxu0 0.0
    %2932 = vmatpush1.msra.mxu0 %v2820
    %2933 = vmatprep.subr.mxu0 0.0
    %2934 = vmatpush1.msra.mxu0 %v2821
    %2935 = vmatprep.subr.mxu0 0.0
    %2936 = vmatpush1.msra.mxu0 %v2822
    %2937 = vmatprep.subr.mxu0 0.0
    %2938 = vmatpush1.msra.mxu0 %v2823
    %2939 = vmatprep.subr.mxu0 0.0
    %2940 = vmatpush1.msra.mxu0 %v2824
    %2941 = vmatprep.subr.mxu0 0.0
    %2942 = vmatpush1.msra.mxu0 %v2825
    %2943 = vmatprep.subr.mxu0 0.0
    %2944 = vmatpush1.msra.mxu0 %v2826
    %2945 = vmatprep.subr.mxu0 0.0
    %2946 = vmatpush1.msra.mxu0 %v2827
    %2947 = vmatprep.subr.mxu0 0.0
    %2948 = vmatpush1.msra.mxu0 %v2828
    %2949 = vmatprep.subr.mxu0 0.0
    %2950 = vmatpush1.msra.mxu0 %v2829
    %2951 = vmatprep.subr.mxu0 0.0
    %2952 = vmatpush1.msra.mxu0 %v2830
    %2953 = vmatprep.subr.mxu0 0.0
    %2954 = vmatpush1.msra.mxu0 %v2831
    %2955 = vmatprep.subr.mxu0 0.0
    %2956 = vmatpush1.msra.mxu0 %v2832
    %2957 = vmatprep.subr.mxu0 0.0
    %2958 = vmatpush1.msra.mxu0 %v2833
    %2959 = vmatprep.subr.mxu0 0.0
    %2960 = vmatpush1.msra.mxu0 %v2834
    %2961 = vmatprep.subr.mxu0 0.0
    %2962 = vmatpush1.msra.mxu0 %v2835
    %2963 = vmatprep.subr.mxu0 0.0
    %2964 = vmatpush1.msra.mxu0 %v2836
    %2965 = vmatprep.subr.mxu0 0.0
    %2966 = vmatpush1.msra.mxu0 %v2837
    %2967 = vmatprep.subr.mxu0 0.0
    %2968 = vmatpush1.msra.mxu0 %v2838
    %2969 = vmatprep.subr.mxu0 0.0
    %2970 = vmatpush1.msra.mxu0 %v2839
    %2971 = vmatprep.subr.mxu0 0.0
    %2972 = vmatpush1.msra.mxu0 %v2840
    %2973 = vmatprep.subr.mxu0 0.0
    %2974 = vmatpush1.msra.mxu0 %v2841
    %2975 = vmatprep.subr.mxu0 0.0
    %2976 = vmatpush1.msra.mxu0 %v2842
    %2977 = vmatprep.mubr.f32.mxu0 %v2778
    %2978 = vmatmul.mubr.f32.gmra.mrb[0].mxu0 %v2777
    %v2979 = vpop.f32.mrb[0].mxu0
    %v2980 = vadd.f32 %v2910, %v2979
    %v2981 = vpop.f32.mrb[0].mxu0
    %2982 = vdwg.mxu0
    %v2983 = vsel %vm502, %v2980, -inf
    %2984 = vmax.xlane.f32.xlu0 %v2983
    %v2985 = vpop.xlane.xlu0 %2984
    %v2986 = vsub.f32 %v2980, %v2985
    %v2987 = vmul.f32 %v2986, 1.442695
    %v2988 = vpow.pop %v2987
    %v2989 = vsel %vm502, %v2988, 0.0
    %2990 = vadd.xlane.f32.xlu0 %v2989
    %v2991 = vpop.xlane.xlu0 %2990
    %v2992 = vrcp.pop %v2991
    %v2993 = vmul.f32 %v2988, %v2992
    %v2994 = vld [vmem:[%s7] sm:$0xff]
    %v2995 = vld [vmem:[%s7 + $0x8] sm:$0xff]
    %v2997 = vsel %vm502, %v2993, 0
    %2999 = vmatprep.subr.mxu0 0.0
    %3000 = vmatpush1.msra.mxu0 %v2994
    %3001 = vmatprep.subr.mxu0 0.0
    %3002 = vmatpush1.msra.mxu0 %v2995
    %3003 = vmatprep.subr.mxu0 0.0
    %3004 = vmatpush1.msra.mxu0 0.0
    %3005 = vmatprep.subr.mxu0 0.0
    %3006 = vmatpush1.msra.mxu0 0.0
    %3007 = vmatprep.subr.mxu0 0.0
    %3008 = vmatpush1.msra.mxu0 0.0
    %3009 = vmatprep.subr.mxu0 0.0
    %3010 = vmatpush1.msra.mxu0 0.0
    %3011 = vmatprep.subr.mxu0 0.0
    %3012 = vmatpush1.msra.mxu0 0.0
    %3013 = vmatprep.subr.mxu0 0.0
    %3014 = vmatpush1.msra.mxu0 0.0
    %3015 = vmatprep.subr.mxu0 0.0
    %3016 = vmatpush1.msra.mxu0 0.0
    %3017 = vmatprep.subr.mxu0 0.0
    %3018 = vmatpush1.msra.mxu0 0.0
    %3019 = vmatprep.subr.mxu0 0.0
    %3020 = vmatpush1.msra.mxu0 0.0
    %3021 = vmatprep.subr.mxu0 0.0
    %3022 = vmatpush1.msra.mxu0 0.0
    %3023 = vmatprep.subr.mxu0 0.0
    %3024 = vmatpush1.msra.mxu0 0.0
    %3025 = vmatprep.subr.mxu0 0.0
    %3026 = vmatpush1.msra.mxu0 0.0
    %3027 = vmatprep.subr.mxu0 0.0
    %3028 = vmatpush1.msra.mxu0 0.0
    %3029 = vmatprep.subr.mxu0 0.0
    %3030 = vmatpush1.msra.mxu0 0.0
    %3031 = vmatprep.subr.mxu0 0.0
    %3032 = vmatpush1.msra.mxu0 0.0
    %3033 = vmatprep.subr.mxu0 0.0
    %3034 = vmatpush1.msra.mxu0 0.0
    %3035 = vmatprep.subr.mxu0 0.0
    %3036 = vmatpush1.msra.mxu0 0.0
    %3037 = vmatprep.subr.mxu0 0.0
    %3038 = vmatpush1.msra.mxu0 0.0
    %3039 = vmatprep.subr.mxu0 0.0
    %3040 = vmatpush1.msra.mxu0 0.0
    %3041 = vmatprep.subr.mxu0 0.0
    %3042 = vmatpush1.msra.mxu0 0.0
    %3043 = vmatprep.subr.mxu0 0.0
    %3044 = vmatpush1.msra.mxu0 0.0
    %3045 = vmatprep.subr.mxu0 0.0
    %3046 = vmatpush1.msra.mxu0 0.0
    %3047 = vmatprep.subr.mxu0 0.0
    %3048 = vmatpush1.msra.mxu0 0.0
    %3049 = vmatprep.subr.mxu0 0.0
    %3050 = vmatpush1.msra.mxu0 0.0
    %3051 = vmatprep.subr.mxu0 0.0
    %3052 = vmatpush1.msra.mxu0 0.0
    %3053 = vmatprep.subr.mxu0 0.0
    %3054 = vmatpush1.msra.mxu0 0.0
    %3055 = vmatprep.subr.mxu0 0.0
    %3056 = vmatpush1.msra.mxu0 0.0
    %3057 = vmatprep.subr.mxu0 0.0
    %3058 = vmatpush1.msra.mxu0 0.0
    %3059 = vmatprep.subr.mxu0 0.0
    %3060 = vmatpush1.msra.mxu0 0.0
    %3061 = vmatprep.subr.mxu0 0.0
    %3062 = vmatpush1.msra.mxu0 0.0
    %3063 = vmatprep.mubr.f32.mxu0 0.0
    %3064 = vmatmul.mubr.f32.gmra.mrb[0].mxu0 %v2997
    %v3065 = vpop.f32.mrb[0].mxu0
    %v3066 = vadd.f32 0.0, %v3065
    %v3067 = vpop.f32.mrb[0].mxu0
    %3068 = vdwg.mxu0
    %v3069 = vld [vmem:[%s8] sm:$0xff]
    %v3070 = vmul.f32 %v3066, %v3069
    %v3071 = vld [vmem:[%s1] sm:$0xff]
    %v3072 = vld [vmem:[%s1 + $0x8] sm:$0xff]
    %v3073 = vld [vmem:[%s1 + $0x10] sm:$0xff]
    %v3074 = vld [vmem:[%s1 + $0x18] sm:$0xff]
    %v3075 = vld [vmem:[%s1 + $0x20] sm:$0xff]
    %v3076 = vld [vmem:[%s1 + $0x28] sm:$0xff]
    %v3077 = vld [vmem:[%s1 + $0x30] sm:$0xff]
    %v3078 = vld [vmem:[%s1 + $0x38] sm:$0xff]
    %v3079 = vld [vmem:[%s1 + $0x40] sm:$0xff]
    %v3080 = vld [vmem:[%s1 + $0x48] sm:$0xff]
    %v3081 = vld [vmem:[%s1 + $0x50] sm:$0xff]
    %v3082 = vld [vmem:[%s1 + $0x58] sm:$0xff]
    %v3083 = vld [vmem:[%s1 + $0x60] sm:$0xff]
    %v3084 = vld [vmem:[%s1 + $0x68] sm:$0xff]
    %v3085 = vld [vmem:[%s1 + $0x70] sm:$0xff]
    %v3086 = vld [vmem:[%s1 + $0x78] sm:$0xff]
    %3087 = vmatprep.subr.mxu0 0.0
    %3088 = vmatpush1.msra.mxu0 %v3071
    %3089 = vmatprep.subr.mxu0 0.0
    %3090 = vmatpush1.msra.mxu0 %v3072
    %3091 = vmatprep.subr.mxu0 0.0
    %3092 = vmatpush1.msra.mxu0 %v3073
    %3093 = vmatprep.subr.mxu0 0.0
    %3094 = vmatpush1.msra.mxu0 %v3074
    %3095 = vmatprep.subr.mxu0 0.0
    %3096 = vmatpush1.msra.mxu0 %v3075
    %3097 = vmatprep.subr.mxu0 0.0
    %3098 = vmatpush1.msra.mxu0 %v3076
    %3099 = vmatprep.subr.mxu0 0.0
    %3100 = vmatpush1.msra.mxu0 %v3077
    %3101 = vmatprep.subr.mxu0 0.0
    %3102 = vmatpush1.msra.mxu0 %v3078
    %3103 = vmatprep.subr.mxu0 0.0
    %3104 = vmatpush1.msra.mxu0 %v3079
    %3105 = vmatprep.subr.mxu0 0.0
    %3106 = vmatpush1.msra.mxu0 %v3080
    %3107 = vmatprep.subr.mxu0 0.0
    %3108 = vmatpush1.msra.mxu0 %v3081
    %3109 = vmatprep.subr.mxu0 0.0
    %3110 = vmatpush1.msra.mxu0 %v3082
    %3111 = vmatprep.subr.mxu0 0.0
    %3112 = vmatpush1.msra.mxu0 %v3083
    %3113 = vmatprep.subr.mxu0 0.0
    %3114 = vmatpush1.msra.mxu0 %v3084
    %3115 = vmatprep.subr.mxu0 0.0
    %3116 = vmatpush1.msra.mxu0 %v3085
    %3117 = vmatprep.subr.mxu0 0.0
    %3118 = vmatpush1.msra.mxu0 %v3086
    %3119 = vmatprep.subr.mxu0 0.0
    %3120 = vmatpush1.msra.mxu0 0.0
    %3121 = vmatprep.subr.mxu0 0.0
    %3122 = vmatpush1.msra.mxu0 0.0
    %3123 = vmatprep.subr.mxu0 0.0
    %3124 = vmatpush1.msra.mxu0 0.0
    %3125 = vmatprep.subr.mxu0 0.0
    %3126 = vmatpush1.msra.mxu0 0.0
    %3127 = vmatprep.subr.mxu0 0.0
    %3128 = vmatpush1.msra.mxu0 0.0
    %3129 = vmatprep.subr.mxu0 0.0
    %3130 = vmatpush1.msra.mxu0 0.0
    %3131 = vmatprep.subr.mxu0 0.0
    %3132 = vmatpush1.msra.mxu0 0.0
    %3133 = vmatprep.subr.mxu0 0.0
    %3134 = vmatpush1.msra.mxu0 0.0
    %3135 = vmatprep.subr.mxu0 0.0
    %3136 = vmatpush1.msra.mxu0 0.0
    %3137 = vmatprep.subr.mxu0 0.0
    %3138 = vmatpush1.msra.mxu0 0.0
    %3139 = vmatprep.subr.mxu0 0.0
    %3140 = vmatpush1.msra.mxu0 0.0
    %3141 = vmatprep.subr.mxu0 0.0
    %3142 = vmatpush1.msra.mxu0 0.0
    %3143 = vmatprep.subr.mxu0 0.0
    %3144 = vmatpush1.msra.mxu0 0.0
    %3145 = vmatprep.subr.mxu0 0.0
    %3146 = vmatpush1.msra.mxu0 0.0
    %3147 = vmatprep.subr.mxu0 0.0
    %3148 = vmatpush1.msra.mxu0 0.0
    %3149 = vmatprep.subr.mxu0 0.0
    %3150 = vmatpush1.msra.mxu0 0.0
    %3151 = vmatprep.mubr.f32.mxu0 0.0
    %3152 = vmatmul.mubr.f32.gmra.mrb[0].mxu0 %v3070
    %v3153 = vpop.f32.mrb[0].mxu0
    %v3154 = vadd.f32 0.0, %v3153
    %v3155 = vpop.f32.mrb[0].mxu0
    %3156 = vdwg.mxu0
    %s3157 = scalar_lea.vmem %s2, 24
    %v3158 = vld [vmem:[%s3157] sm:$0xff]
    %v3159 = vadd.f32 %v3158, %v2764
    %v3160 = vld [vmem:[%s9] sm:$0xff]
    %v3161 = vld [vmem:[%s9 + $0x8] sm:$0xff]
    %v3162 = vld [vmem:[%s9 + $0x10] sm:$0xff]
    %v3163 = vld [vmem:[%s9 + $0x18] sm:$0xff]
    %v3165 = vsel %vm70, %v3154, 0
    %3167 = vmatprep.subr.mxu0 0.0
    %3168 = vmatpush1.msra.mxu0 %v3160
    %3169 = vmatprep.subr.mxu0 0.0
    %3170 = vmatpush1.msra.mxu0 %v3161
    %3171 = vmatprep.subr.mxu0 0.0
    %3172 = vmatpush1.msra.mxu0 %v3162
    %3173 = vmatprep.subr.mxu0 0.0
    %3174 = vmatpush1.msra.mxu0 %v3163
    %3175 = vmatprep.subr.mxu0 0.0
    %3176 = vmatpush1.msra.mxu0 0.0
    %3177 = vmatprep.subr.mxu0 0.0
    %3178 = vmatpush1.msra.mxu0 0.0
    %3179 = vmatprep.subr.mxu0 0.0
    %3180 = vmatpush1.msra.mxu0 0.0
    %3181 = vmatprep.subr.mxu0 0.0
    %3182 = vmatpush1.msra.mxu0 0.0
    %3183 = vmatprep.subr.mxu0 0.0
    %3184 = vmatpush1.msra.mxu0 0.0
    %3185 = vmatprep.subr.mxu0 0.0
    %3186 = vmatpush1.msra.mxu0 0.0
    %3187 = vmatprep.subr.mxu0 0.0
    %3188 = vmatpush1.msra.mxu0 0.0
    %3189 = vmatprep.subr.mxu0 0.0
    %3190 = vmatpush1.msra.mxu0 0.0
    %3191 = vmatprep.subr.mxu0 0.0
    %3192 = vmatpush1.msra.mxu0 0.0
    %3193 = vmatprep.subr.mxu0 0.0
    %3194 = vmatpush1.msra.mxu0 0.0
    %3195 = vmatprep.subr.mxu0 0.0
    %3196 = vmatpush1.msra.mxu0 0.0
    %3197 = vmatprep.subr.mxu0 0.0
    %3198 = vmatpush1.msra.mxu0 0.0
    %3199 = vmatprep.subr.mxu0 0.0
    %3200 = vmatpush1.msra.mxu0 0.0
    %3201 = vmatprep.subr.mxu0 0.0
    %3202 = vmatpush1.msra.mxu0 0.0
    %3203 = vmatprep.subr.mxu0 0.0
    %3204 = vmatpush1.msra.mxu0 0.0
    %3205 = vmatprep.subr.mxu0 0.0
    %3206 = vmatpush1.msra.mxu0 0.0
    %3207 = vmatprep.subr.mxu0 0.0
    %3208 = vmatpush1.msra.mxu0 0.0
    %3209 = vmatprep.subr.mxu0 0.0
    %3210 = vmatpush1.msra.mxu0 0.0
    %3211 = vmatprep.subr.mxu0 0.0
    %3212 = vmatpush1.msra.mxu0 0.0
    %3213 = vmatprep.subr.mxu0 0.0
    %3214 = vmatpush1.msra.mxu0 0.0
    %3215 = vmatprep.subr.mxu0 0.0
    %3216 = vmatpush1.msra.mxu0 0.0
    %3217 = vmatprep.subr.mxu0 0.0
    %3218 = vmatpush1.msra.mxu0 0.0
    %3219 = vmatprep.subr.mxu0 0.0
    %3220 = vmatpush1.msra.mxu0 0.0
    %3221 = vmatprep.subr.mxu0 0.0
    %3222 = vmatpush1.msra.mxu0 0.0
    %3223 = vmatprep.subr.mxu0 0.0
    %3224 = vmatpush1.msra.mxu0 0.0
    %3225 = vmatprep.subr.mxu0 0.0
    %3226 = vmatpush1.msra.mxu0 0.0
    %3227 = vmatprep.subr.mxu0 0.0
    %3228 = vmatpush1.msra.mxu0 0.0
    %3229 = vmatprep.subr.mxu0 0.0
    %3230 = vmatpush1.msra.mxu0 0.0
    %3231 = vmatprep.mubr.f32.mxu0 0.0
    %3232 = vmatmul.mubr.f32.gmra.mrb[0].mxu0 %v3165
    %v3233 = vpop.f32.mrb[0].mxu0
    %v3234 = vadd.f32 0.0, %v3233
    %v3235 = vpop.f32.mrb[0].mxu0
    %3236 = vdwg.mxu0
    %v3237 = vadd.f32 %v3159, %v3234
    %v3238 = vxor.u32 %v3237, 2147483648
    %v3239 = vmul.f32 %v3238, 1.442695
    %v3240 = vpow.pop %v3239
    %v3241 = vadd.f32 %v3240, 1.0
    %v3242 = vrcp.pop %v3241
    %v3243 = vmul.f32 1.0, %v3242
    %v3244 = vmul.f32 %v3243, 2.0
    %v3245 = vsub.f32 %v3244, 1.0
    %v3246 = vmul.f32 %v3243, %v2429
    %3248 = vrot.lane.b32.xlu0 %v3245, 64
    %v3249 = vpop.permute.xlu0 %3248
    %v3251 = vmul.f32 %v3243, %v3249
    %3253 = vrot.lane.b32.xlu0 %v3251, 32
    %v3254 = vpop.permute.xlu0 %3253
    %v3256 = vadd.f32 %v3246, %v3254
    %v3257 = vtanh.pop %v3256
    %3259 = vrot.lane.b32.xlu0 %v3257, 64
    %v3260 = vpop.permute.xlu0 %3259
    %v3262 = vmul.f32 %v3243, %v3260
    %v3263 = vld [vmem:[%s10] sm:$0xff]
    %v3264 = vld [vmem:[%s10 + $0x8] sm:$0xff]
    %v3265 = vld [vmem:[%s10 + $0x10] sm:$0xff]
    %v3266 = vld [vmem:[%s10 + $0x18] sm:$0xff]
    %v3267 = vld [vmem:[%s11] sm:$0x1]
    %v3269 = vlaneseq
    %v3270 = vshrl.u32 %v3269, 7
    %v3271 = vsub.s32 0, %v3270
    %v3272 = vrot.slane %v3267, %v3271
    %3275 = vrot.lane.b32.xlu0 %v3262, 32
    %v3276 = vpop.permute.xlu0 %3275
    %v3277 = vsel %vm70, %v3276, 0
    %3279 = vmatprep.subr.mxu0 0.0
    %3280 = vmatpush1.msra.mxu0 %v3263
    %3281 = vmatprep.subr.mxu0 0.0
    %3282 = vmatpush1.msra.mxu0 %v3264
    %3283 = vmatprep.subr.mxu0 0.0
    %3284 = vmatpush1.msra.mxu0 %v3265
    %3285 = vmatprep.subr.mxu0 0.0
    %3286 = vmatpush1.msra.mxu0 %v3266
    %3287 = vmatprep.subr.mxu0 0.0
    %3288 = vmatpush1.msra.mxu0 0.0
    %3289 = vmatprep.subr.mxu0 0.0
    %3290 = vmatpush1.msra.mxu0 0.0
    %3291 = vmatprep.subr.mxu0 0.0
    %3292 = vmatpush1.msra.mxu0 0.0
    %3293 = vmatprep.subr.mxu0 0.0
    %3294 = vmatpush1.msra.mxu0 0.0
    %3295 = vmatprep.subr.mxu0 0.0
    %3296 = vmatpush1.msra.mxu0 0.0
    %3297 = vmatprep.subr.mxu0 0.0
    %3298 = vmatpush1.msra.mxu0 0.0
    %3299 = vmatprep.subr.mxu0 0.0
    %3300 = vmatpush1.msra.mxu0 0.0
    %3301 = vmatprep.subr.mxu0 0.0
    %3302 = vmatpush1.msra.mxu0 0.0
    %3303 = vmatprep.subr.mxu0 0.0
    %3304 = vmatpush1.msra.mxu0 0.0
    %3305 = vmatprep.subr.mxu0 0.0
    %3306 = vmatpush1.msra.mxu0 0.0
    %3307 = vmatprep.subr.mxu0 0.0
    %3308 = vmatpush1.msra.mxu0 0.0
    %3309 = vmatprep.subr.mxu0 0.0
    %3310 = vmatpush1.msra.mxu0 0.0
    %3311 = vmatprep.subr.mxu0 0.0
    %3312 = vmatpush1.msra.mxu0 0.0
    %3313 = vmatprep.subr.mxu0 0.0
    %3314 = vmatpush1.msra.mxu0 0.0
    %3315 = vmatprep.subr.mxu0 0.0
    %3316 = vmatpush1.msra.mxu0 0.0
    %3317 = vmatprep.subr.mxu0 0.0
    %3318 = vmatpush1.msra.mxu0 0.0
    %3319 = vmatprep.subr.mxu0 0.0
    %3320 = vmatpush1.msra.mxu0 0.0
    %3321 = vmatprep.subr.mxu0 0.0
    %3322 = vmatpush1.msra.mxu0 0.0
    %3323 = vmatprep.subr.mxu0 0.0
    %3324 = vmatpush1.msra.mxu0 0.0
    %3325 = vmatprep.subr.mxu0 0.0
    %3326 = vmatpush1.msra.mxu0 0.0
    %3327 = vmatprep.subr.mxu0 0.0
    %3328 = vmatpush1.msra.mxu0 0.0
    %3329 = vmatprep.subr.mxu0 0.0
    %3330 = vmatpush1.msra.mxu0 0.0
    %3331 = vmatprep.subr.mxu0 0.0
    %3332 = vmatpush1.msra.mxu0 0.0
    %3333 = vmatprep.subr.mxu0 0.0
    %3334 = vmatpush1.msra.mxu0 0.0
    %3335 = vmatprep.subr.mxu0 0.0
    %3336 = vmatpush1.msra.mxu0 0.0
    %3337 = vmatprep.subr.mxu0 0.0
    %3338 = vmatpush1.msra.mxu0 0.0
    %3339 = vmatprep.subr.mxu0 0.0
    %3340 = vmatpush1.msra.mxu0 0.0
    %3341 = vmatprep.subr.mxu0 0.0
    %3342 = vmatpush1.msra.mxu0 0.0
    %3343 = vmatprep.mubr.f32.mxu0 0.0
    %3344 = vmatmul.mubr.f32.gmra.mrb[0].mxu0 %v3277
    %v3345 = vpop.f32.mrb[0].mxu0
    %v3346 = vadd.f32 %v3272, %v3345
    %v3347 = vpop.f32.mrb[0].mxu0
    %3348 = vdwg.mxu0
    %s3349 = scalar_lea.vmem [#allocation2], 24
    %3350 = vst [vmem:[%s3349] sm:$0xff] %v3346
    %s3351 = scalar_lea.vmem [#allocation4], 24
    %3352 = vst.msk [vmem:[%s3351] sm:$0xff] %vm502, %v2993
    %s3354 = scalar_lea.vmem [#allocation6], 24
    %3355 = vst.msk [vmem:[%s3354] sm:$0xff] %vm70, %v3276
    %3357 = vrot.lane.b32.xlu0 %v3256, 96
    %v3358 = vpop.permute.xlu0 %3357
    %s3360 = scalar_lea.vmem [#allocation7], 24
    %3361 = vst.msk [vmem:[%s3360] sm:$0xff] %vm70, %v3358
    %v3362 = vld [vmem:[%s5] sm:$0xff]
    %v3363 = vld [vmem:[%s5 + $0x8] sm:$0xff]
    %v3364 = vld [vmem:[%s5 + $0x10] sm:$0xff]
    %v3365 = vld [vmem:[%s5 + $0x18] sm:$0xff]
    %v3366 = vld [vmem:[%s5 + $0x20] sm:$0xff]
    %v3367 = vld [vmem:[%s5 + $0x28] sm:$0xff]
    %v3368 = vld [vmem:[%s5 + $0x30] sm:$0xff]
    %v3369 = vld [vmem:[%s5 + $0x38] sm:$0xff]
    %v3370 = vld [vmem:[%s5 + $0x40] sm:$0xff]
    %v3371 = vld [vmem:[%s5 + $0x48] sm:$0xff]
    %v3372 = vld [vmem:[%s5 + $0x50] sm:$0xff]
    %v3373 = vld [vmem:[%s5 + $0x58] sm:$0xff]
    %v3374 = vld [vmem:[%s5 + $0x60] sm:$0xff]
    %v3375 = vld [vmem:[%s5 + $0x68] sm:$0xff]
    %v3376 = vld [vmem:[%s5 + $0x70] sm:$0xff]
    %v3377 = vld [vmem:[%s5 + $0x78] sm:$0xff]
    %v3378 = vld [vmem:[%s5 + $0x80] sm:$0xff]
    %v3379 = vld [vmem:[%s5 + $0x88] sm:$0xff]
    %v3380 = vld [vmem:[%s5 + $0x90] sm:$0xff]
    %v3381 = vld [vmem:[%s5 + $0x98] sm:$0xff]
    %3382 = vmatprep.subr.mxu0 %v3363
    %3383 = vmatpush1.msra.mxu0 %v3362
    %3384 = vmatprep.subr.mxu0 %v3368
    %3385 = vmatpush1.msra.mxu0 %v3367
    %3386 = vmatprep.subr.mxu0 %v3373
    %3387 = vmatpush1.msra.mxu0 %v3372
    %3388 = vmatprep.subr.mxu0 %v3378
    %3389 = vmatpush1.msra.mxu0 %v3377
    %3390 = vmatprep.subr.mxu0 0.0
    %3391 = vmatpush1.msra.mxu0 0.0
    %3392 = vmatprep.subr.mxu0 0.0
    %3393 = vmatpush1.msra.mxu0 0.0
    %3394 = vmatprep.subr.mxu0 0.0
    %3395 = vmatpush1.msra.mxu0 0.0
    %3396 = vmatprep.subr.mxu0 0.0
    %3397 = vmatpush1.msra.mxu0 0.0
    %3398 = vmatprep.subr.mxu0 0.0
    %3399 = vmatpush1.msra.mxu0 0.0
    %3400 = vmatprep.subr.mxu0 0.0
    %3401 = vmatpush1.msra.mxu0 0.0
    %3402 = vmatprep.subr.mxu0 0.0
    %3403 = vmatpush1.msra.mxu0 0.0
    %3404 = vmatprep.subr.mxu0 0.0
    %3405 = vmatpush1.msra.mxu0 0.0
    %3406 = vmatprep.subr.mxu0 0.0
    %3407 = vmatpush1.msra.mxu0 0.0
    %3408 = vmatprep.subr.mxu0 0.0
    %3409 = vmatpush1.msra.mxu0 0.0
    %3410 = vmatprep.subr.mxu0 0.0
    %3411 = vmatpush1.msra.mxu0 0.0
    %3412 = vmatprep.subr.mxu0 0.0
    %3413 = vmatpush1.msra.mxu0 0.0
    %3414 = vmatprep.subr.mxu0 0.0
    %3415 = vmatpush1.msra.mxu0 0.0
    %3416 = vmatprep.subr.mxu0 0.0
    %3417 = vmatpush1.msra.mxu0 0.0
    %3418 = vmatprep.subr.mxu0 0.0
    %3419 = vmatpush1.msra.mxu0 0.0
    %3420 = vmatprep.subr.mxu0 0.0
    %3421 = vmatpush1.msra.mxu0 0.0
    %3422 = vmatprep.subr.mxu0 0.0
    %3423 = vmatpush1.msra.mxu0 0.0
    %3424 = vmatprep.subr.mxu0 0.0
    %3425 = vmatpush1.msra.mxu0 0.0
    %3426 = vmatprep.subr.mxu0 0.0
    %3427 = vmatpush1.msra.mxu0 0.0
    %3428 = vmatprep.subr.mxu0 0.0
    %3429 = vmatpush1.msra.mxu0 0.0
    %3430 = vmatprep.subr.mxu0 0.0
    %3431 = vmatpush1.msra.mxu0 0.0
    %3432 = vmatprep.subr.mxu0 0.0
    %3433 = vmatpush1.msra.mxu0 0.0
    %3434 = vmatprep.subr.mxu0 0.0
    %3435 = vmatpush1.msra.mxu0 0.0
    %3436 = vmatprep.subr.mxu0 0.0
    %3437 = vmatpush1.msra.mxu0 0.0
    %3438 = vmatprep.subr.mxu0 0.0
    %3439 = vmatpush1.msra.mxu0 0.0
    %3440 = vmatprep.subr.mxu0 0.0
    %3441 = vmatpush1.msra.mxu0 0.0
    %3442 = vmatprep.subr.mxu0 0.0
    %3443 = vmatpush1.msra.mxu0 0.0
    %3444 = vmatprep.subr.mxu0 0.0
    %3445 = vmatpush1.msra.mxu0 0.0
    %3446 = vmatprep.mubr.f32.mxu0 0.0
    %3447 = vmatmul.mubr.f32.gmra.mrb[0].mxu0 %v3277
    %v3448 = vpop.f32.mrb[0].mxu0
    %v3449 = vadd.f32 0.0, %v3448
    %v3450 = vpop.f32.mrb[0].mxu0
    %v3451 = vadd.f32 0.0, %v3450
    %3452 = vdwg.mxu0
    %3453 = vmatprep.subr.mxu0 %v3365
    %3454 = vmatpush1.msra.mxu0 %v3364
    %3455 = vmatprep.subr.mxu0 %v3370
    %3456 = vmatpush1.msra.mxu0 %v3369
    %3457 = vmatprep.subr.mxu0 %v3375
    %3458 = vmatpush1.msra.mxu0 %v3374
    %3459 = vmatprep.subr.mxu0 %v3380
    %3460 = vmatpush1.msra.mxu0 %v3379
    %3461 = vmatprep.subr.mxu0 0.0
    %3462 = vmatpush1.msra.mxu0 0.0
    %3463 = vmatprep.subr.mxu0 0.0
    %3464 = vmatpush1.msra.mxu0 0.0
    %3465 = vmatprep.subr.mxu0 0.0
    %3466 = vmatpush1.msra.mxu0 0.0
    %3467 = vmatprep.subr.mxu0 0.0
    %3468 = vmatpush1.msra.mxu0 0.0
    %3469 = vmatprep.subr.mxu0 0.0
    %3470 = vmatpush1.msra.mxu0 0.0
    %3471 = vmatprep.subr.mxu0 0.0
    %3472 = vmatpush1.msra.mxu0 0.0
    %3473 = vmatprep.subr.mxu0 0.0
    %3474 = vmatpush1.msra.mxu0 0.0
    %3475 = vmatprep.subr.mxu0 0.0
    %3476 = vmatpush1.msra.mxu0 0.0
    %3477 = vmatprep.subr.mxu0 0.0
    %3478 = vmatpush1.msra.mxu0 0.0
    %3479 = vmatprep.subr.mxu0 0.0
    %3480 = vmatpush1.msra.mxu0 0.0
    %3481 = vmatprep.subr.mxu0 0.0
    %3482 = vmatpush1.msra.mxu0 0.0
    %3483 = vmatprep.subr.mxu0 0.0
    %3484 = vmatpush1.msra.mxu0 0.0
    %3485 = vmatprep.subr.mxu0 0.0
    %3486 = vmatpush1.msra.mxu0 0.0
    %3487 = vmatprep.subr.mxu0 0.0
    %3488 = vmatpush1.msra.mxu0 0.0
    %3489 = vmatprep.subr.mxu0 0.0
    %3490 = vmatpush1.msra.mxu0 0.0
    %3491 = vmatprep.subr.mxu0 0.0
    %3492 = vmatpush1.msra.mxu0 0.0
    %3493 = vmatprep.subr.mxu0 0.0
    %3494 = vmatpush1.msra.mxu0 0.0
    %3495 = vmatprep.subr.mxu0 0.0
    %3496 = vmatpush1.msra.mxu0 0.0
    %3497 = vmatprep.subr.mxu0 0.0
    %3498 = vmatpush1.msra.mxu0 0.0
    %3499 = vmatprep.subr.mxu0 0.0
    %3500 = vmatpush1.msra.mxu0 0.0
    %3501 = vmatprep.subr.mxu0 0.0
    %3502 = vmatpush1.msra.mxu0 0.0
    %3503 = vmatprep.subr.mxu0 0.0
    %3504 = vmatpush1.msra.mxu0 0.0
    %3505 = vmatprep.subr.mxu0 0.0
    %3506 = vmatpush1.msra.mxu0 0.0
    %3507 = vmatprep.subr.mxu0 0.0
    %3508 = vmatpush1.msra.mxu0 0.0
    %3509 = vmatprep.subr.mxu0 0.0
    %3510 = vmatpush1.msra.mxu0 0.0
    %3511 = vmatprep.subr.mxu0 0.0
    %3512 = vmatpush1.msra.mxu0 0.0
    %3513 = vmatprep.subr.mxu0 0.0
    %3514 = vmatpush1.msra.mxu0 0.0
    %3515 = vmatprep.subr.mxu0 0.0
    %3516 = vmatpush1.msra.mxu0 0.0
    %3517 = vmatprep.mubr.f32.mxu0 0.0
    %3518 = vmatmul.mubr.f32.gmra.mrb[0].mxu0 %v3277
    %v3519 = vpop.f32.mrb[0].mxu0
    %v3520 = vadd.f32 0.0, %v3519
    %v3521 = vpop.f32.mrb[0].mxu0
    %v3522 = vadd.f32 0.0, %v3521
    %3523 = vdwg.mxu0
    %3524 = vmatprep.subr.mxu0 0.0
    %3525 = vmatpush1.msra.mxu0 %v3366
    %3526 = vmatprep.subr.mxu0 0.0
    %3527 = vmatpush1.msra.mxu0 %v3371
    %3528 = vmatprep.subr.mxu0 0.0
    %3529 = vmatpush1.msra.mxu0 %v3376
    %3530 = vmatprep.subr.mxu0 0.0
    %3531 = vmatpush1.msra.mxu0 %v3381
    %3532 = vmatprep.subr.mxu0 0.0
    %3533 = vmatpush1.msra.mxu0 0.0
    %3534 = vmatprep.subr.mxu0 0.0
    %3535 = vmatpush1.msra.mxu0 0.0
    %3536 = vmatprep.subr.mxu0 0.0
    %3537 = vmatpush1.msra.mxu0 0.0
    %3538 = vmatprep.subr.mxu0 0.0
    %3539 = vmatpush1.msra.mxu0 0.0
    %3540 = vmatprep.subr.mxu0 0.0
    %3541 = vmatpush1.msra.mxu0 0.0
    %3542 = vmatprep.subr.mxu0 0.0
    %3543 = vmatpush1.msra.mxu0 0.0
    %3544 = vmatprep.subr.mxu0 0.0
    %3545 = vmatpush1.msra.mxu0 0.0
    %3546 = vmatprep.subr.mxu0 0.0
    %3547 = vmatpush1.msra.mxu0 0.0
    %3548 = vmatprep.subr.mxu0 0.0
    %3549 = vmatpush1.msra.mxu0 0.0
    %3550 = vmatprep.subr.mxu0 0.0
    %3551 = vmatpush1.msra.mxu0 0.0
    %3552 = vmatprep.subr.mxu0 0.0
    %3553 = vmatpush1.msra.mxu0 0.0
    %3554 = vmatprep.subr.mxu0 0.0
    %3555 = vmatpush1.msra.mxu0 0.0
    %3556 = vmatprep.subr.mxu0 0.0
    %3557 = vmatpush1.msra.mxu0 0.0
    %3558 = vmatprep.subr.mxu0 0.0
    %3559 = vmatpush1.msra.mxu0 0.0
    %3560 = vmatprep.subr.mxu0 0.0
    %3561 = vmatpush1.msra.mxu0 0.0
    %3562 = vmatprep.subr.mxu0 0.0
    %3563 = vmatpush1.msra.mxu0 0.0
    %3564 = vmatprep.subr.mxu0 0.0
    %3565 = vmatpush1.msra.mxu0 0.0
    %3566 = vmatprep.subr.mxu0 0.0
    %3567 = vmatpush1.msra.mxu0 0.0
    %3568 = vmatprep.subr.mxu0 0.0
    %3569 = vmatpush1.msra.mxu0 0.0
    %3570 = vmatprep.subr.mxu0 0.0
    %3571 = vmatpush1.msra.mxu0 0.0
    %3572 = vmatprep.subr.mxu0 0.0
    %3573 = vmatpush1.msra.mxu0 0.0
    %3574 = vmatprep.subr.mxu0 0.0
    %3575 = vmatpush1.msra.mxu0 0.0
    %3576 = vmatprep.subr.mxu0 0.0
    %3577 = vmatpush1.msra.mxu0 0.0
    %3578 = vmatprep.subr.mxu0 0.0
    %3579 = vmatpush1.msra.mxu0 0.0
    %3580 = vmatprep.subr.mxu0 0.0
    %3581 = vmatpush1.msra.mxu0 0.0
    %3582 = vmatprep.subr.mxu0 0.0
    %3583 = vmatpush1.msra.mxu0 0.0
    %3584 = vmatprep.subr.mxu0 0.0
    %3585 = vmatpush1.msra.mxu0 0.0
    %3586 = vmatprep.subr.mxu0 0.0
    %3587 = vmatpush1.msra.mxu0 0.0
    %3588 = vmatprep.mubr.f32.mxu0 0.0
    %3589 = vmatmul.mubr.f32.gmra.mrb[0].mxu0 %v3277
    %v3590 = vpop.f32.mrb[0].mxu0
    %v3591 = vadd.f32 0.0, %v3590
    %v3592 = vpop.f32.mrb[0].mxu0
    %3593 = vdwg.mxu0
    %v3594 = vld [vmem:[%s0] sm:$0xff]
    %v3595 = vld [vmem:[%s0 + $0x8] sm:$0xff]
    %v3596 = vld [vmem:[%s0 + $0x10] sm:$0xff]
    %v3597 = vld [vmem:[%s0 + $0x18] sm:$0xff]
    %v3598 = vadd.f32 %v3594, %v3449
    %v3599 = vadd.f32 %v3595, %v3451
    %v3600 = vadd.f32 %v3596, %v3520
    %v3601 = vadd.f32 %v3597, %v3522
    %v3602 = vtanh.pop %v3598
    %v3603 = vtanh.pop %v3599
    %v3604 = vtanh.pop %v3600
    %v3605 = vtanh.pop %v3601
    %v3606 = vld [vmem:[%s6] sm:$0xff]
    %v3607 = vld [vmem:[%s6 + $0x8] sm:$0xff]
    %v3608 = vld [vmem:[%s6 + $0x10] sm:$0xff]
    %v3609 = vld [vmem:[%s6 + $0x18] sm:$0xff]
    %v3610 = vld [vmem:[%s6 + $0x20] sm:$0xff]
    %v3611 = vld [vmem:[%s6 + $0x28] sm:$0xff]
    %v3612 = vld [vmem:[%s6 + $0x30] sm:$0xff]
    %v3613 = vld [vmem:[%s6 + $0x38] sm:$0xff]
    %v3614 = vld [vmem:[%s6 + $0x40] sm:$0xff]
    %v3615 = vld [vmem:[%s6 + $0x48] sm:$0xff]
    %v3616 = vld [vmem:[%s6 + $0x50] sm:$0xff]
    %v3617 = vld [vmem:[%s6 + $0x58] sm:$0xff]
    %v3618 = vld [vmem:[%s6 + $0x60] sm:$0xff]
    %v3619 = vld [vmem:[%s6 + $0x68] sm:$0xff]
    %v3620 = vld [vmem:[%s6 + $0x70] sm:$0xff]
    %v3621 = vld [vmem:[%s6 + $0x78] sm:$0xff]
    %v3622 = vld [vmem:[%s6 + $0x80] sm:$0xff]
    %v3623 = vld [vmem:[%s6 + $0x88] sm:$0xff]
    %v3624 = vld [vmem:[%s6 + $0x90] sm:$0xff]
    %v3625 = vld [vmem:[%s6 + $0x98] sm:$0xff]
    %v3626 = vld [vmem:[%s6 + $0xa0] sm:$0xff]
    %v3627 = vld [vmem:[%s6 + $0xa8] sm:$0xff]
    %v3628 = vld [vmem:[%s6 + $0xb0] sm:$0xff]
    %v3629 = vld [vmem:[%s6 + $0xb8] sm:$0xff]
    %v3630 = vld [vmem:[%s6 + $0xc0] sm:$0xff]
    %v3631 = vld [vmem:[%s6 + $0xc8] sm:$0xff]
    %v3632 = vld [vmem:[%s6 + $0xd0] sm:$0xff]
    %v3633 = vld [vmem:[%s6 + $0xd8] sm:$0xff]
    %v3634 = vld [vmem:[%s6 + $0xe0] sm:$0xff]
    %v3635 = vld [vmem:[%s6 + $0xe8] sm:$0xff]
    %v3636 = vld [vmem:[%s6 + $0xf0] sm:$0xff]
    %v3637 = vld [vmem:[%s6 + $0xf8] sm:$0xff]
    %v3638 = vld [vmem:[%s6 + $0x100] sm:$0xff]
    %v3639 = vld [vmem:[%s6 + $0x108] sm:$0xff]
    %v3640 = vld [vmem:[%s6 + $0x110] sm:$0xff]
    %v3641 = vld [vmem:[%s6 + $0x118] sm:$0xff]
    %v3642 = vld [vmem:[%s6 + $0x120] sm:$0xff]
    %v3643 = vld [vmem:[%s6 + $0x128] sm:$0xff]
    %v3644 = vld [vmem:[%s6 + $0x130] sm:$0xff]
    %v3645 = vld [vmem:[%s6 + $0x138] sm:$0xff]
    %v3646 = vld [vmem:[%s6 + $0x140] sm:$0xff]
    %v3647 = vld [vmem:[%s6 + $0x148] sm:$0xff]
    %v3648 = vld [vmem:[%s6 + $0x150] sm:$0xff]
    %v3649 = vld [vmem:[%s6 + $0x158] sm:$0xff]
    %v3650 = vld [vmem:[%s6 + $0x160] sm:$0xff]
    %v3651 = vld [vmem:[%s6 + $0x168] sm:$0xff]
    %v3652 = vld [vmem:[%s6 + $0x170] sm:$0xff]
    %v3653 = vld [vmem:[%s6 + $0x178] sm:$0xff]
    %v3654 = vld [vmem:[%s6 + $0x180] sm:$0xff]
    %v3655 = vld [vmem:[%s6 + $0x188] sm:$0xff]
    %v3656 = vld [vmem:[%s6 + $0x190] sm:$0xff]
    %v3657 = vld [vmem:[%s6 + $0x198] sm:$0xff]
    %v3658 = vld [vmem:[%s6 + $0x1a0] sm:$0xff]
    %v3659 = vld [vmem:[%s6 + $0x1a8] sm:$0xff]
    %v3660 = vld [vmem:[%s6 + $0x1b0] sm:$0xff]
    %v3661 = vld [vmem:[%s6 + $0x1b8] sm:$0xff]
    %v3662 = vld [vmem:[%s6 + $0x1c0] sm:$0xff]
    %v3663 = vld [vmem:[%s6 + $0x1c8] sm:$0xff]
    %v3664 = vld [vmem:[%s6 + $0x1d0] sm:$0xff]
    %v3665 = vld [vmem:[%s6 + $0x1d8] sm:$0xff]
    %v3666 = vld [vmem:[%s6 + $0x1e0] sm:$0xff]
    %v3667 = vld [vmem:[%s6 + $0x1e8] sm:$0xff]
    %v3668 = vld [vmem:[%s6 + $0x1f0] sm:$0xff]
    %v3669 = vld [vmem:[%s6 + $0x1f8] sm:$0xff]
    %3670 = vmatprep.subr.mxu0 0.0
    %3671 = vmatpush1.msra.mxu0 %v3606
    %3672 = vmatprep.subr.mxu0 0.0
    %3673 = vmatpush1.msra.mxu0 %v3607
    %3674 = vmatprep.subr.mxu0 0.0
    %3675 = vmatpush1.msra.mxu0 %v3608
    %3676 = vmatprep.subr.mxu0 0.0
    %3677 = vmatpush1.msra.mxu0 %v3609
    %3678 = vmatprep.subr.mxu0 0.0
    %3679 = vmatpush1.msra.mxu0 %v3610
    %3680 = vmatprep.subr.mxu0 0.0
    %3681 = vmatpush1.msra.mxu0 %v3611
    %3682 = vmatprep.subr.mxu0 0.0
    %3683 = vmatpush1.msra.mxu0 %v3612
    %3684 = vmatprep.subr.mxu0 0.0
    %3685 = vmatpush1.msra.mxu0 %v3613
    %3686 = vmatprep.subr.mxu0 0.0
    %3687 = vmatpush1.msra.mxu0 %v3614
    %3688 = vmatprep.subr.mxu0 0.0
    %3689 = vmatpush1.msra.mxu0 %v3615
    %3690 = vmatprep.subr.mxu0 0.0
    %3691 = vmatpush1.msra.mxu0 %v3616
    %3692 = vmatprep.subr.mxu0 0.0
    %3693 = vmatpush1.msra.mxu0 %v3617
    %3694 = vmatprep.subr.mxu0 0.0
    %3695 = vmatpush1.msra.mxu0 %v3618
    %3696 = vmatprep.subr.mxu0 0.0
    %3697 = vmatpush1.msra.mxu0 %v3619
    %3698 = vmatprep.subr.mxu0 0.0
    %3699 = vmatpush1.msra.mxu0 %v3620
    %3700 = vmatprep.subr.mxu0 0.0
    %3701 = vmatpush1.msra.mxu0 %v3621
    %3702 = vmatprep.subr.mxu0 0.0
    %3703 = vmatpush1.msra.mxu0 %v3622
    %3704 = vmatprep.subr.mxu0 0.0
    %3705 = vmatpush1.msra.mxu0 %v3623
    %3706 = vmatprep.subr.mxu0 0.0
    %3707 = vmatpush1.msra.mxu0 %v3624
    %3708 = vmatprep.subr.mxu0 0.0
    %3709 = vmatpush1.msra.mxu0 %v3625
    %3710 = vmatprep.subr.mxu0 0.0
    %3711 = vmatpush1.msra.mxu0 %v3626
    %3712 = vmatprep.subr.mxu0 0.0
    %3713 = vmatpush1.msra.mxu0 %v3627
    %3714 = vmatprep.subr.mxu0 0.0
    %3715 = vmatpush1.msra.mxu0 %v3628
    %3716 = vmatprep.subr.mxu0 0.0
    %3717 = vmatpush1.msra.mxu0 %v3629
    %3718 = vmatprep.subr.mxu0 0.0
    %3719 = vmatpush1.msra.mxu0 %v3630
    %3720 = vmatprep.subr.mxu0 0.0
    %3721 = vmatpush1.msra.mxu0 %v3631
    %3722 = vmatprep.subr.mxu0 0.0
    %3723 = vmatpush1.msra.mxu0 %v3632
    %3724 = vmatprep.subr.mxu0 0.0
    %3725 = vmatpush1.msra.mxu0 %v3633
    %3726 = vmatprep.subr.mxu0 0.0
    %3727 = vmatpush1.msra.mxu0 %v3634
    %3728 = vmatprep.subr.mxu0 0.0
    %3729 = vmatpush1.msra.mxu0 %v3635
    %3730 = vmatprep.subr.mxu0 0.0
    %3731 = vmatpush1.msra.mxu0 %v3636
    %3732 = vmatprep.subr.mxu0 0.0
    %3733 = vmatpush1.msra.mxu0 %v3637
    %3734 = vmatprep.mubr.f32.mxu0 %v3603
    %3735 = vmatmul.mubr.f32.gmra.mrb[0].mxu0 %v3602
    %v3736 = vpop.f32.mrb[0].mxu0
    %v3737 = vadd.f32 0.0, %v3736
    %v3738 = vpop.f32.mrb[0].mxu0
    %3739 = vdwg.mxu0
    %3740 = vmatprep.subr.mxu0 0.0
    %3741 = vmatpush1.msra.mxu0 %v3638
    %3742 = vmatprep.subr.mxu0 0.0
    %3743 = vmatpush1.msra.mxu0 %v3639
    %3744 = vmatprep.subr.mxu0 0.0
    %3745 = vmatpush1.msra.mxu0 %v3640
    %3746 = vmatprep.subr.mxu0 0.0
    %3747 = vmatpush1.msra.mxu0 %v3641
    %3748 = vmatprep.subr.mxu0 0.0
    %3749 = vmatpush1.msra.mxu0 %v3642
    %3750 = vmatprep.subr.mxu0 0.0
    %3751 = vmatpush1.msra.mxu0 %v3643
    %3752 = vmatprep.subr.mxu0 0.0
    %3753 = vmatpush1.msra.mxu0 %v3644
    %3754 = vmatprep.subr.mxu0 0.0
    %3755 = vmatpush1.msra.mxu0 %v3645
    %3756 = vmatprep.subr.mxu0 0.0
    %3757 = vmatpush1.msra.mxu0 %v3646
    %3758 = vmatprep.subr.mxu0 0.0
    %3759 = vmatpush1.msra.mxu0 %v3647
    %3760 = vmatprep.subr.mxu0 0.0
    %3761 = vmatpush1.msra.mxu0 %v3648
    %3762 = vmatprep.subr.mxu0 0.0
    %3763 = vmatpush1.msra.mxu0 %v3649
    %3764 = vmatprep.subr.mxu0 0.0
    %3765 = vmatpush1.msra.mxu0 %v3650
    %3766 = vmatprep.subr.mxu0 0.0
    %3767 = vmatpush1.msra.mxu0 %v3651
    %3768 = vmatprep.subr.mxu0 0.0
    %3769 = vmatpush1.msra.mxu0 %v3652
    %3770 = vmatprep.subr.mxu0 0.0
    %3771 = vmatpush1.msra.mxu0 %v3653
    %3772 = vmatprep.subr.mxu0 0.0
    %3773 = vmatpush1.msra.mxu0 %v3654
    %3774 = vmatprep.subr.mxu0 0.0
    %3775 = vmatpush1.msra.mxu0 %v3655
    %3776 = vmatprep.subr.mxu0 0.0
    %3777 = vmatpush1.msra.mxu0 %v3656
    %3778 = vmatprep.subr.mxu0 0.0
    %3779 = vmatpush1.msra.mxu0 %v3657
    %3780 = vmatprep.subr.mxu0 0.0
    %3781 = vmatpush1.msra.mxu0 %v3658
    %3782 = vmatprep.subr.mxu0 0.0
    %3783 = vmatpush1.msra.mxu0 %v3659
    %3784 = vmatprep.subr.mxu0 0.0
    %3785 = vmatpush1.msra.mxu0 %v3660
    %3786 = vmatprep.subr.mxu0 0.0
    %3787 = vmatpush1.msra.mxu0 %v3661
    %3788 = vmatprep.subr.mxu0 0.0
    %3789 = vmatpush1.msra.mxu0 %v3662
    %3790 = vmatprep.subr.mxu0 0.0
    %3791 = vmatpush1.msra.mxu0 %v3663
    %3792 = vmatprep.subr.mxu0 0.0
    %3793 = vmatpush1.msra.mxu0 %v3664
    %3794 = vmatprep.subr.mxu0 0.0
    %3795 = vmatpush1.msra.mxu0 %v3665
    %3796 = vmatprep.subr.mxu0 0.0
    %3797 = vmatpush1.msra.mxu0 %v3666
    %3798 = vmatprep.subr.mxu0 0.0
    %3799 = vmatpush1.msra.mxu0 %v3667
    %3800 = vmatprep.subr.mxu0 0.0
    %3801 = vmatpush1.msra.mxu0 %v3668
    %3802 = vmatprep.subr.mxu0 0.0
    %3803 = vmatpush1.msra.mxu0 %v3669
    %3804 = vmatprep.mubr.f32.mxu0 %v3605
    %3805 = vmatmul.mubr.f32.gmra.mrb[0].mxu0 %v3604
    %v3806 = vpop.f32.mrb[0].mxu0
    %v3807 = vadd.f32 %v3737, %v3806
    %v3808 = vpop.f32.mrb[0].mxu0
    %3809 = vdwg.mxu0
    %v3810 = vsel %vm502, %v3807, -inf
    %3811 = vmax.xlane.f32.xlu0 %v3810
    %v3812 = vpop.xlane.xlu0 %3811
    %v3813 = vsub.f32 %v3807, %v3812
    %v3814 = vmul.f32 %v3813, 1.442695
    %v3815 = vpow.pop %v3814
    %v3816 = vsel %vm502, %v3815, 0.0
    %3817 = vadd.xlane.f32.xlu0 %v3816
    %v3818 = vpop.xlane.xlu0 %3817
    %v3819 = vrcp.pop %v3818
    %v3820 = vmul.f32 %v3815, %v3819
    %v3821 = vld [vmem:[%s7] sm:$0xff]
    %v3822 = vld [vmem:[%s7 + $0x8] sm:$0xff]
    %v3824 = vsel %vm502, %v3820, 0
    %3826 = vmatprep.subr.mxu0 0.0
    %3827 = vmatpush1.msra.mxu0 %v3821
    %3828 = vmatprep.subr.mxu0 0.0
    %3829 = vmatpush1.msra.mxu0 %v3822
    %3830 = vmatprep.subr.mxu0 0.0
    %3831 = vmatpush1.msra.mxu0 0.0
    %3832 = vmatprep.subr.mxu0 0.0
    %3833 = vmatpush1.msra.mxu0 0.0
    %3834 = vmatprep.subr.mxu0 0.0
    %3835 = vmatpush1.msra.mxu0 0.0
    %3836 = vmatprep.subr.mxu0 0.0
    %3837 = vmatpush1.msra.mxu0 0.0
    %3838 = vmatprep.subr.mxu0 0.0
    %3839 = vmatpush1.msra.mxu0 0.0
    %3840 = vmatprep.subr.mxu0 0.0
    %3841 = vmatpush1.msra.mxu0 0.0
    %3842 = vmatprep.subr.mxu0 0.0
    %3843 = vmatpush1.msra.mxu0 0.0
    %3844 = vmatprep.subr.mxu0 0.0
    %3845 = vmatpush1.msra.mxu0 0.0
    %3846 = vmatprep.subr.mxu0 0.0
    %3847 = vmatpush1.msra.mxu0 0.0
    %3848 = vmatprep.subr.mxu0 0.0
    %3849 = vmatpush1.msra.mxu0 0.0
    %3850 = vmatprep.subr.mxu0 0.0
    %3851 = vmatpush1.msra.mxu0 0.0
    %3852 = vmatprep.subr.mxu0 0.0
    %3853 = vmatpush1.msra.mxu0 0.0
    %3854 = vmatprep.subr.mxu0 0.0
    %3855 = vmatpush1.msra.mxu0 0.0
    %3856 = vmatprep.subr.mxu0 0.0
    %3857 = vmatpush1.msra.mxu0 0.0
    %3858 = vmatprep.subr.mxu0 0.0
    %3859 = vmatpush1.msra.mxu0 0.0
    %3860 = vmatprep.subr.mxu0 0.0
    %3861 = vmatpush1.msra.mxu0 0.0
    %3862 = vmatprep.subr.mxu0 0.0
    %3863 = vmatpush1.msra.mxu0 0.0
    %3864 = vmatprep.subr.mxu0 0.0
    %3865 = vmatpush1.msra.mxu0 0.0
    %3866 = vmatprep.subr.mxu0 0.0
    %3867 = vmatpush1.msra.mxu0 0.0
    %3868 = vmatprep.subr.mxu0 0.0
    %3869 = vmatpush1.msra.mxu0 0.0
    %3870 = vmatprep.subr.mxu0 0.0
    %3871 = vmatpush1.msra.mxu0 0.0
    %3872 = vmatprep.subr.mxu0 0.0
    %3873 = vmatpush1.msra.mxu0 0.0
    %3874 = vmatprep.subr.mxu0 0.0
    %3875 = vmatpush1.msra.mxu0 0.0
    %3876 = vmatprep.subr.mxu0 0.0
    %3877 = vmatpush1.msra.mxu0 0.0
    %3878 = vmatprep.subr.mxu0 0.0
    %3879 = vmatpush1.msra.mxu0 0.0
    %3880 = vmatprep.subr.mxu0 0.0
    %3881 = vmatpush1.msra.mxu0 0.0
    %3882 = vmatprep.subr.mxu0 0.0
    %3883 = vmatpush1.msra.mxu0 0.0
    %3884 = vmatprep.subr.mxu0 0.0
    %3885 = vmatpush1.msra.mxu0 0.0
    %3886 = vmatprep.subr.mxu0 0.0
    %3887 = vmatpush1.msra.mxu0 0.0
    %3888 = vmatprep.subr.mxu0 0.0
    %3889 = vmatpush1.msra.mxu0 0.0
    %3890 = vmatprep.mubr.f32.mxu0 0.0
    %3891 = vmatmul.mubr.f32.gmra.mrb[0].mxu0 %v3824
    %v3892 = vpop.f32.mrb[0].mxu0
    %v3893 = vadd.f32 0.0, %v3892
    %v3894 = vpop.f32.mrb[0].mxu0
    %3895 = vdwg.mxu0
    %v3896 = vld [vmem:[%s8] sm:$0xff]
    %v3897 = vmul.f32 %v3893, %v3896
    %v3898 = vld [vmem:[%s1] sm:$0xff]
    %v3899 = vld [vmem:[%s1 + $0x8] sm:$0xff]
    %v3900 = vld [vmem:[%s1 + $0x10] sm:$0xff]
    %v3901 = vld [vmem:[%s1 + $0x18] sm:$0xff]
    %v3902 = vld [vmem:[%s1 + $0x20] sm:$0xff]
    %v3903 = vld [vmem:[%s1 + $0x28] sm:$0xff]
    %v3904 = vld [vmem:[%s1 + $0x30] sm:$0xff]
    %v3905 = vld [vmem:[%s1 + $0x38] sm:$0xff]
    %v3906 = vld [vmem:[%s1 + $0x40] sm:$0xff]
    %v3907 = vld [vmem:[%s1 + $0x48] sm:$0xff]
    %v3908 = vld [vmem:[%s1 + $0x50] sm:$0xff]
    %v3909 = vld [vmem:[%s1 + $0x58] sm:$0xff]
    %v3910 = vld [vmem:[%s1 + $0x60] sm:$0xff]
    %v3911 = vld [vmem:[%s1 + $0x68] sm:$0xff]
    %v3912 = vld [vmem:[%s1 + $0x70] sm:$0xff]
    %v3913 = vld [vmem:[%s1 + $0x78] sm:$0xff]
    %3914 = vmatprep.subr.mxu0 0.0
    %3915 = vmatpush1.msra.mxu0 %v3898
    %3916 = vmatprep.subr.mxu0 0.0
    %3917 = vmatpush1.msra.mxu0 %v3899
    %3918 = vmatprep.subr.mxu0 0.0
    %3919 = vmatpush1.msra.mxu0 %v3900
    %3920 = vmatprep.subr.mxu0 0.0
    %3921 = vmatpush1.msra.mxu0 %v3901
    %3922 = vmatprep.subr.mxu0 0.0
    %3923 = vmatpush1.msra.mxu0 %v3902
    %3924 = vmatprep.subr.mxu0 0.0
    %3925 = vmatpush1.msra.mxu0 %v3903
    %3926 = vmatprep.subr.mxu0 0.0
    %3927 = vmatpush1.msra.mxu0 %v3904
    %3928 = vmatprep.subr.mxu0 0.0
    %3929 = vmatpush1.msra.mxu0 %v3905
    %3930 = vmatprep.subr.mxu0 0.0
    %3931 = vmatpush1.msra.mxu0 %v3906
    %3932 = vmatprep.subr.mxu0 0.0
    %3933 = vmatpush1.msra.mxu0 %v3907
    %3934 = vmatprep.subr.mxu0 0.0
    %3935 = vmatpush1.msra.mxu0 %v3908
    %3936 = vmatprep.subr.mxu0 0.0
    %3937 = vmatpush1.msra.mxu0 %v3909
    %3938 = vmatprep.subr.mxu0 0.0
    %3939 = vmatpush1.msra.mxu0 %v3910
    %3940 = vmatprep.subr.mxu0 0.0
    %3941 = vmatpush1.msra.mxu0 %v3911
    %3942 = vmatprep.subr.mxu0 0.0
    %3943 = vmatpush1.msra.mxu0 %v3912
    %3944 = vmatprep.subr.mxu0 0.0
    %3945 = vmatpush1.msra.mxu0 %v3913
    %3946 = vmatprep.subr.mxu0 0.0
    %3947 = vmatpush1.msra.mxu0 0.0
    %3948 = vmatprep.subr.mxu0 0.0
    %3949 = vmatpush1.msra.mxu0 0.0
    %3950 = vmatprep.subr.mxu0 0.0
    %3951 = vmatpush1.msra.mxu0 0.0
    %3952 = vmatprep.subr.mxu0 0.0
    %3953 = vmatpush1.msra.mxu0 0.0
    %3954 = vmatprep.subr.mxu0 0.0
    %3955 = vmatpush1.msra.mxu0 0.0
    %3956 = vmatprep.subr.mxu0 0.0
    %3957 = vmatpush1.msra.mxu0 0.0
    %3958 = vmatprep.subr.mxu0 0.0
    %3959 = vmatpush1.msra.mxu0 0.0
    %3960 = vmatprep.subr.mxu0 0.0
    %3961 = vmatpush1.msra.mxu0 0.0
    %3962 = vmatprep.subr.mxu0 0.0
    %3963 = vmatpush1.msra.mxu0 0.0
    %3964 = vmatprep.subr.mxu0 0.0
    %3965 = vmatpush1.msra.mxu0 0.0
    %3966 = vmatprep.subr.mxu0 0.0
    %3967 = vmatpush1.msra.mxu0 0.0
    %3968 = vmatprep.subr.mxu0 0.0
    %3969 = vmatpush1.msra.mxu0 0.0
    %3970 = vmatprep.subr.mxu0 0.0
    %3971 = vmatpush1.msra.mxu0 0.0
    %3972 = vmatprep.subr.mxu0 0.0
    %3973 = vmatpush1.msra.mxu0 0.0
    %3974 = vmatprep.subr.mxu0 0.0
    %3975 = vmatpush1.msra.mxu0 0.0
    %3976 = vmatprep.subr.mxu0 0.0
    %3977 = vmatpush1.msra.mxu0 0.0
    %3978 = vmatprep.mubr.f32.mxu0 0.0
    %3979 = vmatmul.mubr.f32.gmra.mrb[0].mxu0 %v3897
    %v3980 = vpop.f32.mrb[0].mxu0
    %v3981 = vadd.f32 0.0, %v3980
    %v3982 = vpop.f32.mrb[0].mxu0
    %3983 = vdwg.mxu0
    %s3984 = scalar_lea.vmem %s2, 32
    %v3985 = vld [vmem:[%s3984] sm:$0xff]
    %v3986 = vadd.f32 %v3985, %v3591
    %v3987 = vld [vmem:[%s9] sm:$0xff]
    %v3988 = vld [vmem:[%s9 + $0x8] sm:$0xff]
    %v3989 = vld [vmem:[%s9 + $0x10] sm:$0xff]
    %v3990 = vld [vmem:[%s9 + $0x18] sm:$0xff]
    %v3992 = vsel %vm70, %v3981, 0
    %3994 = vmatprep.subr.mxu0 0.0
    %3995 = vmatpush1.msra.mxu0 %v3987
    %3996 = vmatprep.subr.mxu0 0.0
    %3997 = vmatpush1.msra.mxu0 %v3988
    %3998 = vmatprep.subr.mxu0 0.0
    %3999 = vmatpush1.msra.mxu0 %v3989
    %4000 = vmatprep.subr.mxu0 0.0
    %4001 = vmatpush1.msra.mxu0 %v3990
    %4002 = vmatprep.subr.mxu0 0.0
    %4003 = vmatpush1.msra.mxu0 0.0
    %4004 = vmatprep.subr.mxu0 0.0
    %4005 = vmatpush1.msra.mxu0 0.0
    %4006 = vmatprep.subr.mxu0 0.0
    %4007 = vmatpush1.msra.mxu0 0.0
    %4008 = vmatprep.subr.mxu0 0.0
    %4009 = vmatpush1.msra.mxu0 0.0
    %4010 = vmatprep.subr.mxu0 0.0
    %4011 = vmatpush1.msra.mxu0 0.0
    %4012 = vmatprep.subr.mxu0 0.0
    %4013 = vmatpush1.msra.mxu0 0.0
    %4014 = vmatprep.subr.mxu0 0.0
    %4015 = vmatpush1.msra.mxu0 0.0
    %4016 = vmatprep.subr.mxu0 0.0
    %4017 = vmatpush1.msra.mxu0 0.0
    %4018 = vmatprep.subr.mxu0 0.0
    %4019 = vmatpush1.msra.mxu0 0.0
    %4020 = vmatprep.subr.mxu0 0.0
    %4021 = vmatpush1.msra.mxu0 0.0
    %4022 = vmatprep.subr.mxu0 0.0
    %4023 = vmatpush1.msra.mxu0 0.0
    %4024 = vmatprep.subr.mxu0 0.0
    %4025 = vmatpush1.msra.mxu0 0.0
    %4026 = vmatprep.subr.mxu0 0.0
    %4027 = vmatpush1.msra.mxu0 0.0
    %4028 = vmatprep.subr.mxu0 0.0
    %4029 = vmatpush1.msra.mxu0 0.0
    %4030 = vmatprep.subr.mxu0 0.0
    %4031 = vmatpush1.msra.mxu0 0.0
    %4032 = vmatprep.subr.mxu0 0.0
    %4033 = vmatpush1.msra.mxu0 0.0
    %4034 = vmatprep.subr.mxu0 0.0
    %4035 = vmatpush1.msra.mxu0 0.0
    %4036 = vmatprep.subr.mxu0 0.0
    %4037 = vmatpush1.msra.mxu0 0.0
    %4038 = vmatprep.subr.mxu0 0.0
    %4039 = vmatpush1.msra.mxu0 0.0
    %4040 = vmatprep.subr.mxu0 0.0
    %4041 = vmatpush1.msra.mxu0 0.0
    %4042 = vmatprep.subr.mxu0 0.0
    %4043 = vmatpush1.msra.mxu0 0.0
    %4044 = vmatprep.subr.mxu0 0.0
    %4045 = vmatpush1.msra.mxu0 0.0
    %4046 = vmatprep.subr.mxu0 0.0
    %4047 = vmatpush1.msra.mxu0 0.0
    %4048 = vmatprep.subr.mxu0 0.0
    %4049 = vmatpush1.msra.mxu0 0.0
    %4050 = vmatprep.subr.mxu0 0.0
    %4051 = vmatpush1.msra.mxu0 0.0
    %4052 = vmatprep.subr.mxu0 0.0
    %4053 = vmatpush1.msra.mxu0 0.0
    %4054 = vmatprep.subr.mxu0 0.0
    %4055 = vmatpush1.msra.mxu0 0.0
    %4056 = vmatprep.subr.mxu0 0.0
    %4057 = vmatpush1.msra.mxu0 0.0
    %4058 = vmatprep.mubr.f32.mxu0 0.0
    %4059 = vmatmul.mubr.f32.gmra.mrb[0].mxu0 %v3992
    %v4060 = vpop.f32.mrb[0].mxu0
    %v4061 = vadd.f32 0.0, %v4060
    %v4062 = vpop.f32.mrb[0].mxu0
    %4063 = vdwg.mxu0
    %v4064 = vadd.f32 %v3986, %v4061
    %v4065 = vxor.u32 %v4064, 2147483648
    %v4066 = vmul.f32 %v4065, 1.442695
    %v4067 = vpow.pop %v4066
    %v4068 = vadd.f32 %v4067, 1.0
    %v4069 = vrcp.pop %v4068
    %v4070 = vmul.f32 1.0, %v4069
    %v4071 = vmul.f32 %v4070, 2.0
    %v4072 = vsub.f32 %v4071, 1.0
    %v4073 = vmul.f32 %v4070, %v3256
    %4075 = vrot.lane.b32.xlu0 %v4072, 64
    %v4076 = vpop.permute.xlu0 %4075
    %v4078 = vmul.f32 %v4070, %v4076
    %4080 = vrot.lane.b32.xlu0 %v4078, 32
    %v4081 = vpop.permute.xlu0 %4080
    %v4083 = vadd.f32 %v4073, %v4081
    %v4084 = vtanh.pop %v4083
    %4086 = vrot.lane.b32.xlu0 %v4084, 64
    %v4087 = vpop.permute.xlu0 %4086
    %v4089 = vmul.f32 %v4070, %v4087
    %v4090 = vld [vmem:[%s10] sm:$0xff]
    %v4091 = vld [vmem:[%s10 + $0x8] sm:$0xff]
    %v4092 = vld [vmem:[%s10 + $0x10] sm:$0xff]
    %v4093 = vld [vmem:[%s10 + $0x18] sm:$0xff]
    %v4094 = vld [vmem:[%s11] sm:$0x1]
    %v4096 = vlaneseq
    %v4097 = vshrl.u32 %v4096, 7
    %v4098 = vsub.s32 0, %v4097
    %v4099 = vrot.slane %v4094, %v4098
    %4102 = vrot.lane.b32.xlu0 %v4089, 32
    %v4103 = vpop.permute.xlu0 %4102
    %v4104 = vsel %vm70, %v4103, 0
    %4106 = vmatprep.subr.mxu0 0.0
    %4107 = vmatpush1.msra.mxu0 %v4090
    %4108 = vmatprep.subr.mxu0 0.0
    %4109 = vmatpush1.msra.mxu0 %v4091
    %4110 = vmatprep.subr.mxu0 0.0
    %4111 = vmatpush1.msra.mxu0 %v4092
    %4112 = vmatprep.subr.mxu0 0.0
    %4113 = vmatpush1.msra.mxu0 %v4093
    %4114 = vmatprep.subr.mxu0 0.0
    %4115 = vmatpush1.msra.mxu0 0.0
    %4116 = vmatprep.subr.mxu0 0.0
    %4117 = vmatpush1.msra.mxu0 0.0
    %4118 = vmatprep.subr.mxu0 0.0
    %4119 = vmatpush1.msra.mxu0 0.0
    %4120 = vmatprep.subr.mxu0 0.0
    %4121 = vmatpush1.msra.mxu0 0.0
    %4122 = vmatprep.subr.mxu0 0.0
    %4123 = vmatpush1.msra.mxu0 0.0
    %4124 = vmatprep.subr.mxu0 0.0
    %4125 = vmatpush1.msra.mxu0 0.0
    %4126 = vmatprep.subr.mxu0 0.0
    %4127 = vmatpush1.msra.mxu0 0.0
    %4128 = vmatprep.subr.mxu0 0.0
    %4129 = vmatpush1.msra.mxu0 0.0
    %4130 = vmatprep.subr.mxu0 0.0
    %4131 = vmatpush1.msra.mxu0 0.0
    %4132 = vmatprep.subr.mxu0 0.0
    %4133 = vmatpush1.msra.mxu0 0.0
    %4134 = vmatprep.subr.mxu0 0.0
    %4135 = vmatpush1.msra.mxu0 0.0
    %4136 = vmatprep.subr.mxu0 0.0
    %4137 = vmatpush1.msra.mxu0 0.0
    %4138 = vmatprep.subr.mxu0 0.0
    %4139 = vmatpush1.msra.mxu0 0.0
    %4140 = vmatprep.subr.mxu0 0.0
    %4141 = vmatpush1.msra.mxu0 0.0
    %4142 = vmatprep.subr.mxu0 0.0
    %4143 = vmatpush1.msra.mxu0 0.0
    %4144 = vmatprep.subr.mxu0 0.0
    %4145 = vmatpush1.msra.mxu0 0.0
    %4146 = vmatprep.subr.mxu0 0.0
    %4147 = vmatpush1.msra.mxu0 0.0
    %4148 = vmatprep.subr.mxu0 0.0
    %4149 = vmatpush1.msra.mxu0 0.0
    %4150 = vmatprep.subr.mxu0 0.0
    %4151 = vmatpush1.msra.mxu0 0.0
    %4152 = vmatprep.subr.mxu0 0.0
    %4153 = vmatpush1.msra.mxu0 0.0
    %4154 = vmatprep.subr.mxu0 0.0
    %4155 = vmatpush1.msra.mxu0 0.0
    %4156 = vmatprep.subr.mxu0 0.0
    %4157 = vmatpush1.msra.mxu0 0.0
    %4158 = vmatprep.subr.mxu0 0.0
    %4159 = vmatpush1.msra.mxu0 0.0
    %4160 = vmatprep.subr.mxu0 0.0
    %4161 = vmatpush1.msra.mxu0 0.0
    %4162 = vmatprep.subr.mxu0 0.0
    %4163 = vmatpush1.msra.mxu0 0.0
    %4164 = vmatprep.subr.mxu0 0.0
    %4165 = vmatpush1.msra.mxu0 0.0
    %4166 = vmatprep.subr.mxu0 0.0
    %4167 = vmatpush1.msra.mxu0 0.0
    %4168 = vmatprep.subr.mxu0 0.0
    %4169 = vmatpush1.msra.mxu0 0.0
    %4170 = vmatprep.mubr.f32.mxu0 0.0
    %4171 = vmatmul.mubr.f32.gmra.mrb[0].mxu0 %v4104
    %v4172 = vpop.f32.mrb[0].mxu0
    %v4173 = vadd.f32 %v4099, %v4172
    %v4174 = vpop.f32.mrb[0].mxu0
    %4175 = vdwg.mxu0
    %s4176 = scalar_lea.vmem [#allocation2], 32
    %4177 = vst [vmem:[%s4176] sm:$0xff] %v4173
    %s4178 = scalar_lea.vmem [#allocation4], 32
    %4179 = vst.msk [vmem:[%s4178] sm:$0xff] %vm502, %v3820
    %s4181 = scalar_lea.vmem [#allocation6], 32
    %4182 = vst.msk [vmem:[%s4181] sm:$0xff] %vm70, %v4103
    %4184 = vrot.lane.b32.xlu0 %v4083, 96
    %v4185 = vpop.permute.xlu0 %4184
    %s4187 = scalar_lea.vmem [#allocation7], 32
    %4188 = vst.msk [vmem:[%s4187] sm:$0xff] %vm70, %v4185
    %v4189 = vld [vmem:[%s5] sm:$0xff]
    %v4190 = vld [vmem:[%s5 + $0x8] sm:$0xff]
    %v4191 = vld [vmem:[%s5 + $0x10] sm:$0xff]
    %v4192 = vld [vmem:[%s5 + $0x18] sm:$0xff]
    %v4193 = vld [vmem:[%s5 + $0x20] sm:$0xff]
    %v4194 = vld [vmem:[%s5 + $0x28] sm:$0xff]
    %v4195 = vld [vmem:[%s5 + $0x30] sm:$0xff]
    %v4196 = vld [vmem:[%s5 + $0x38] sm:$0xff]
    %v4197 = vld [vmem:[%s5 + $0x40] sm:$0xff]
    %v4198 = vld [vmem:[%s5 + $0x48] sm:$0xff]
    %v4199 = vld [vmem:[%s5 + $0x50] sm:$0xff]
    %v4200 = vld [vmem:[%s5 + $0x58] sm:$0xff]
    %v4201 = vld [vmem:[%s5 + $0x60] sm:$0xff]
    %v4202 = vld [vmem:[%s5 + $0x68] sm:$0xff]
    %v4203 = vld [vmem:[%s5 + $0x70] sm:$0xff]
    %v4204 = vld [vmem:[%s5 + $0x78] sm:$0xff]
    %v4205 = vld [vmem:[%s5 + $0x80] sm:$0xff]
    %v4206 = vld [vmem:[%s5 + $0x88] sm:$0xff]
    %v4207 = vld [vmem:[%s5 + $0x90] sm:$0xff]
    %v4208 = vld [vmem:[%s5 + $0x98] sm:$0xff]
    %4209 = vmatprep.subr.mxu0 %v4190
    %4210 = vmatpush1.msra.mxu0 %v4189
    %4211 = vmatprep.subr.mxu0 %v4195
    %4212 = vmatpush1.msra.mxu0 %v4194
    %4213 = vmatprep.subr.mxu0 %v4200
    %4214 = vmatpush1.msra.mxu0 %v4199
    %4215 = vmatprep.subr.mxu0 %v4205
    %4216 = vmatpush1.msra.mxu0 %v4204
    %4217 = vmatprep.subr.mxu0 0.0
    %4218 = vmatpush1.msra.mxu0 0.0
    %4219 = vmatprep.subr.mxu0 0.0
    %4220 = vmatpush1.msra.mxu0 0.0
    %4221 = vmatprep.subr.mxu0 0.0
    %4222 = vmatpush1.msra.mxu0 0.0
    %4223 = vmatprep.subr.mxu0 0.0
    %4224 = vmatpush1.msra.mxu0 0.0
    %4225 = vmatprep.subr.mxu0 0.0
    %4226 = vmatpush1.msra.mxu0 0.0
    %4227 = vmatprep.subr.mxu0 0.0
    %4228 = vmatpush1.msra.mxu0 0.0
    %4229 = vmatprep.subr.mxu0 0.0
    %4230 = vmatpush1.msra.mxu0 0.0
    %4231 = vmatprep.subr.mxu0 0.0
    %4232 = vmatpush1.msra.mxu0 0.0
    %4233 = vmatprep.subr.mxu0 0.0
    %4234 = vmatpush1.msra.mxu0 0.0
    %4235 = vmatprep.subr.mxu0 0.0
    %4236 = vmatpush1.msra.mxu0 0.0
    %4237 = vmatprep.subr.mxu0 0.0
    %4238 = vmatpush1.msra.mxu0 0.0
    %4239 = vmatprep.subr.mxu0 0.0
    %4240 = vmatpush1.msra.mxu0 0.0
    %4241 = vmatprep.subr.mxu0 0.0
    %4242 = vmatpush1.msra.mxu0 0.0
    %4243 = vmatprep.subr.mxu0 0.0
    %4244 = vmatpush1.msra.mxu0 0.0
    %4245 = vmatprep.subr.mxu0 0.0
    %4246 = vmatpush1.msra.mxu0 0.0
    %4247 = vmatprep.subr.mxu0 0.0
    %4248 = vmatpush1.msra.mxu0 0.0
    %4249 = vmatprep.subr.mxu0 0.0
    %4250 = vmatpush1.msra.mxu0 0.0
    %4251 = vmatprep.subr.mxu0 0.0
    %4252 = vmatpush1.msra.mxu0 0.0
    %4253 = vmatprep.subr.mxu0 0.0
    %4254 = vmatpush1.msra.mxu0 0.0
    %4255 = vmatprep.subr.mxu0 0.0
    %4256 = vmatpush1.msra.mxu0 0.0
    %4257 = vmatprep.subr.mxu0 0.0
    %4258 = vmatpush1.msra.mxu0 0.0
    %4259 = vmatprep.subr.mxu0 0.0
    %4260 = vmatpush1.msra.mxu0 0.0
    %4261 = vmatprep.subr.mxu0 0.0
    %4262 = vmatpush1.msra.mxu0 0.0
    %4263 = vmatprep.subr.mxu0 0.0
    %4264 = vmatpush1.msra.mxu0 0.0
    %4265 = vmatprep.subr.mxu0 0.0
    %4266 = vmatpush1.msra.mxu0 0.0
    %4267 = vmatprep.subr.mxu0 0.0
    %4268 = vmatpush1.msra.mxu0 0.0
    %4269 = vmatprep.subr.mxu0 0.0
    %4270 = vmatpush1.msra.mxu0 0.0
    %4271 = vmatprep.subr.mxu0 0.0
    %4272 = vmatpush1.msra.mxu0 0.0
    %4273 = vmatprep.mubr.f32.mxu0 0.0
    %4274 = vmatmul.mubr.f32.gmra.mrb[0].mxu0 %v4104
    %v4275 = vpop.f32.mrb[0].mxu0
    %v4276 = vadd.f32 0.0, %v4275
    %v4277 = vpop.f32.mrb[0].mxu0
    %v4278 = vadd.f32 0.0, %v4277
    %4279 = vdwg.mxu0
    %4280 = vmatprep.subr.mxu0 %v4192
    %4281 = vmatpush1.msra.mxu0 %v4191
    %4282 = vmatprep.subr.mxu0 %v4197
    %4283 = vmatpush1.msra.mxu0 %v4196
    %4284 = vmatprep.subr.mxu0 %v4202
    %4285 = vmatpush1.msra.mxu0 %v4201
    %4286 = vmatprep.subr.mxu0 %v4207
    %4287 = vmatpush1.msra.mxu0 %v4206
    %4288 = vmatprep.subr.mxu0 0.0
    %4289 = vmatpush1.msra.mxu0 0.0
    %4290 = vmatprep.subr.mxu0 0.0
    %4291 = vmatpush1.msra.mxu0 0.0
    %4292 = vmatprep.subr.mxu0 0.0
    %4293 = vmatpush1.msra.mxu0 0.0
    %4294 = vmatprep.subr.mxu0 0.0
    %4295 = vmatpush1.msra.mxu0 0.0
    %4296 = vmatprep.subr.mxu0 0.0
    %4297 = vmatpush1.msra.mxu0 0.0
    %4298 = vmatprep.subr.mxu0 0.0
    %4299 = vmatpush1.msra.mxu0 0.0
    %4300 = vmatprep.subr.mxu0 0.0
    %4301 = vmatpush1.msra.mxu0 0.0
    %4302 = vmatprep.subr.mxu0 0.0
    %4303 = vmatpush1.msra.mxu0 0.0
    %4304 = vmatprep.subr.mxu0 0.0
    %4305 = vmatpush1.msra.mxu0 0.0
    %4306 = vmatprep.subr.mxu0 0.0
    %4307 = vmatpush1.msra.mxu0 0.0
    %4308 = vmatprep.subr.mxu0 0.0
    %4309 = vmatpush1.msra.mxu0 0.0
    %4310 = vmatprep.subr.mxu0 0.0
    %4311 = vmatpush1.msra.mxu0 0.0
    %4312 = vmatprep.subr.mxu0 0.0
    %4313 = vmatpush1.msra.mxu0 0.0
    %4314 = vmatprep.subr.mxu0 0.0
    %4315 = vmatpush1.msra.mxu0 0.0
    %4316 = vmatprep.subr.mxu0 0.0
    %4317 = vmatpush1.msra.mxu0 0.0
    %4318 = vmatprep.subr.mxu0 0.0
    %4319 = vmatpush1.msra.mxu0 0.0
    %4320 = vmatprep.subr.mxu0 0.0
    %4321 = vmatpush1.msra.mxu0 0.0
    %4322 = vmatprep.subr.mxu0 0.0
    %4323 = vmatpush1.msra.mxu0 0.0
    %4324 = vmatprep.subr.mxu0 0.0
    %4325 = vmatpush1.msra.mxu0 0.0
    %4326 = vmatprep.subr.mxu0 0.0
    %4327 = vmatpush1.msra.mxu0 0.0
    %4328 = vmatprep.subr.mxu0 0.0
    %4329 = vmatpush1.msra.mxu0 0.0
    %4330 = vmatprep.subr.mxu0 0.0
    %4331 = vmatpush1.msra.mxu0 0.0
    %4332 = vmatprep.subr.mxu0 0.0
    %4333 = vmatpush1.msra.mxu0 0.0
    %4334 = vmatprep.subr.mxu0 0.0
    %4335 = vmatpush1.msra.mxu0 0.0
    %4336 = vmatprep.subr.mxu0 0.0
    %4337 = vmatpush1.msra.mxu0 0.0
    %4338 = vmatprep.subr.mxu0 0.0
    %4339 = vmatpush1.msra.mxu0 0.0
    %4340 = vmatprep.subr.mxu0 0.0
    %4341 = vmatpush1.msra.mxu0 0.0
    %4342 = vmatprep.subr.mxu0 0.0
    %4343 = vmatpush1.msra.mxu0 0.0
    %4344 = vmatprep.mubr.f32.mxu0 0.0
    %4345 = vmatmul.mubr.f32.gmra.mrb[0].mxu0 %v4104
    %v4346 = vpop.f32.mrb[0].mxu0
    %v4347 = vadd.f32 0.0, %v4346
    %v4348 = vpop.f32.mrb[0].mxu0
    %v4349 = vadd.f32 0.0, %v4348
    %4350 = vdwg.mxu0
    %4351 = vmatprep.subr.mxu0 0.0
    %4352 = vmatpush1.msra.mxu0 %v4193
    %4353 = vmatprep.subr.mxu0 0.0
    %4354 = vmatpush1.msra.mxu0 %v4198
    %4355 = vmatprep.subr.mxu0 0.0
    %4356 = vmatpush1.msra.mxu0 %v4203
    %4357 = vmatprep.subr.mxu0 0.0
    %4358 = vmatpush1.msra.mxu0 %v4208
    %4359 = vmatprep.subr.mxu0 0.0
    %4360 = vmatpush1.msra.mxu0 0.0
    %4361 = vmatprep.subr.mxu0 0.0
    %4362 = vmatpush1.msra.mxu0 0.0
    %4363 = vmatprep.subr.mxu0 0.0
    %4364 = vmatpush1.msra.mxu0 0.0
    %4365 = vmatprep.subr.mxu0 0.0
    %4366 = vmatpush1.msra.mxu0 0.0
    %4367 = vmatprep.subr.mxu0 0.0
    %4368 = vmatpush1.msra.mxu0 0.0
    %4369 = vmatprep.subr.mxu0 0.0
    %4370 = vmatpush1.msra.mxu0 0.0
    %4371 = vmatprep.subr.mxu0 0.0
    %4372 = vmatpush1.msra.mxu0 0.0
    %4373 = vmatprep.subr.mxu0 0.0
    %4374 = vmatpush1.msra.mxu0 0.0
    %4375 = vmatprep.subr.mxu0 0.0
    %4376 = vmatpush1.msra.mxu0 0.0
    %4377 = vmatprep.subr.mxu0 0.0
    %4378 = vmatpush1.msra.mxu0 0.0
    %4379 = vmatprep.subr.mxu0 0.0
    %4380 = vmatpush1.msra.mxu0 0.0
    %4381 = vmatprep.subr.mxu0 0.0
    %4382 = vmatpush1.msra.mxu0 0.0
    %4383 = vmatprep.subr.mxu0 0.0
    %4384 = vmatpush1.msra.mxu0 0.0
    %4385 = vmatprep.subr.mxu0 0.0
    %4386 = vmatpush1.msra.mxu0 0.0
    %4387 = vmatprep.subr.mxu0 0.0
    %4388 = vmatpush1.msra.mxu0 0.0
    %4389 = vmatprep.subr.mxu0 0.0
    %4390 = vmatpush1.msra.mxu0 0.0
    %4391 = vmatprep.subr.mxu0 0.0
    %4392 = vmatpush1.msra.mxu0 0.0
    %4393 = vmatprep.subr.mxu0 0.0
    %4394 = vmatpush1.msra.mxu0 0.0
    %4395 = vmatprep.subr.mxu0 0.0
    %4396 = vmatpush1.msra.mxu0 0.0
    %4397 = vmatprep.subr.mxu0 0.0
    %4398 = vmatpush1.msra.mxu0 0.0
    %4399 = vmatprep.subr.mxu0 0.0
    %4400 = vmatpush1.msra.mxu0 0.0
    %4401 = vmatprep.subr.mxu0 0.0
    %4402 = vmatpush1.msra.mxu0 0.0
    %4403 = vmatprep.subr.mxu0 0.0
    %4404 = vmatpush1.msra.mxu0 0.0
    %4405 = vmatprep.subr.mxu0 0.0
    %4406 = vmatpush1.msra.mxu0 0.0
    %4407 = vmatprep.subr.mxu0 0.0
    %4408 = vmatpush1.msra.mxu0 0.0
    %4409 = vmatprep.subr.mxu0 0.0
    %4410 = vmatpush1.msra.mxu0 0.0
    %4411 = vmatprep.subr.mxu0 0.0
    %4412 = vmatpush1.msra.mxu0 0.0
    %4413 = vmatprep.subr.mxu0 0.0
    %4414 = vmatpush1.msra.mxu0 0.0
    %4415 = vmatprep.mubr.f32.mxu0 0.0
    %4416 = vmatmul.mubr.f32.gmra.mrb[0].mxu0 %v4104
    %v4417 = vpop.f32.mrb[0].mxu0
    %v4418 = vadd.f32 0.0, %v4417
    %v4419 = vpop.f32.mrb[0].mxu0
    %4420 = vdwg.mxu0
    %v4421 = vld [vmem:[%s0] sm:$0xff]
    %v4422 = vld [vmem:[%s0 + $0x8] sm:$0xff]
    %v4423 = vld [vmem:[%s0 + $0x10] sm:$0xff]
    %v4424 = vld [vmem:[%s0 + $0x18] sm:$0xff]
    %v4425 = vadd.f32 %v4421, %v4276
    %v4426 = vadd.f32 %v4422, %v4278
    %v4427 = vadd.f32 %v4423, %v4347
    %v4428 = vadd.f32 %v4424, %v4349
    %v4429 = vtanh.pop %v4425
    %v4430 = vtanh.pop %v4426
    %v4431 = vtanh.pop %v4427
    %v4432 = vtanh.pop %v4428
    %v4433 = vld [vmem:[%s6] sm:$0xff]
    %v4434 = vld [vmem:[%s6 + $0x8] sm:$0xff]
    %v4435 = vld [vmem:[%s6 + $0x10] sm:$0xff]
    %v4436 = vld [vmem:[%s6 + $0x18] sm:$0xff]
    %v4437 = vld [vmem:[%s6 + $0x20] sm:$0xff]
    %v4438 = vld [vmem:[%s6 + $0x28] sm:$0xff]
    %v4439 = vld [vmem:[%s6 + $0x30] sm:$0xff]
    %v4440 = vld [vmem:[%s6 + $0x38] sm:$0xff]
    %v4441 = vld [vmem:[%s6 + $0x40] sm:$0xff]
    %v4442 = vld [vmem:[%s6 + $0x48] sm:$0xff]
    %v4443 = vld [vmem:[%s6 + $0x50] sm:$0xff]
    %v4444 = vld [vmem:[%s6 + $0x58] sm:$0xff]
    %v4445 = vld [vmem:[%s6 + $0x60] sm:$0xff]
    %v4446 = vld [vmem:[%s6 + $0x68] sm:$0xff]
    %v4447 = vld [vmem:[%s6 + $0x70] sm:$0xff]
    %v4448 = vld [vmem:[%s6 + $0x78] sm:$0xff]
    %v4449 = vld [vmem:[%s6 + $0x80] sm:$0xff]
    %v4450 = vld [vmem:[%s6 + $0x88] sm:$0xff]
    %v4451 = vld [vmem:[%s6 + $0x90] sm:$0xff]
    %v4452 = vld [vmem:[%s6 + $0x98] sm:$0xff]
    %v4453 = vld [vmem:[%s6 + $0xa0] sm:$0xff]
    %v4454 = vld [vmem:[%s6 + $0xa8] sm:$0xff]
    %v4455 = vld [vmem:[%s6 + $0xb0] sm:$0xff]
    %v4456 = vld [vmem:[%s6 + $0xb8] sm:$0xff]
    %v4457 = vld [vmem:[%s6 + $0xc0] sm:$0xff]
    %v4458 = vld [vmem:[%s6 + $0xc8] sm:$0xff]
    %v4459 = vld [vmem:[%s6 + $0xd0] sm:$0xff]
    %v4460 = vld [vmem:[%s6 + $0xd8] sm:$0xff]
    %v4461 = vld [vmem:[%s6 + $0xe0] sm:$0xff]
    %v4462 = vld [vmem:[%s6 + $0xe8] sm:$0xff]
    %v4463 = vld [vmem:[%s6 + $0xf0] sm:$0xff]
    %v4464 = vld [vmem:[%s6 + $0xf8] sm:$0xff]
    %v4465 = vld [vmem:[%s6 + $0x100] sm:$0xff]
    %v4466 = vld [vmem:[%s6 + $0x108] sm:$0xff]
    %v4467 = vld [vmem:[%s6 + $0x110] sm:$0xff]
    %v4468 = vld [vmem:[%s6 + $0x118] sm:$0xff]
    %v4469 = vld [vmem:[%s6 + $0x120] sm:$0xff]
    %v4470 = vld [vmem:[%s6 + $0x128] sm:$0xff]
    %v4471 = vld [vmem:[%s6 + $0x130] sm:$0xff]
    %v4472 = vld [vmem:[%s6 + $0x138] sm:$0xff]
    %v4473 = vld [vmem:[%s6 + $0x140] sm:$0xff]
    %v4474 = vld [vmem:[%s6 + $0x148] sm:$0xff]
    %v4475 = vld [vmem:[%s6 + $0x150] sm:$0xff]
    %v4476 = vld [vmem:[%s6 + $0x158] sm:$0xff]
    %v4477 = vld [vmem:[%s6 + $0x160] sm:$0xff]
    %v4478 = vld [vmem:[%s6 + $0x168] sm:$0xff]
    %v4479 = vld [vmem:[%s6 + $0x170] sm:$0xff]
    %v4480 = vld [vmem:[%s6 + $0x178] sm:$0xff]
    %v4481 = vld [vmem:[%s6 + $0x180] sm:$0xff]
    %v4482 = vld [vmem:[%s6 + $0x188] sm:$0xff]
    %v4483 = vld [vmem:[%s6 + $0x190] sm:$0xff]
    %v4484 = vld [vmem:[%s6 + $0x198] sm:$0xff]
    %v4485 = vld [vmem:[%s6 + $0x1a0] sm:$0xff]
    %v4486 = vld [vmem:[%s6 + $0x1a8] sm:$0xff]
    %v4487 = vld [vmem:[%s6 + $0x1b0] sm:$0xff]
    %v4488 = vld [vmem:[%s6 + $0x1b8] sm:$0xff]
    %v4489 = vld [vmem:[%s6 + $0x1c0] sm:$0xff]
    %v4490 = vld [vmem:[%s6 + $0x1c8] sm:$0xff]
    %v4491 = vld [vmem:[%s6 + $0x1d0] sm:$0xff]
    %v4492 = vld [vmem:[%s6 + $0x1d8] sm:$0xff]
    %v4493 = vld [vmem:[%s6 + $0x1e0] sm:$0xff]
    %v4494 = vld [vmem:[%s6 + $0x1e8] sm:$0xff]
    %v4495 = vld [vmem:[%s6 + $0x1f0] sm:$0xff]
    %v4496 = vld [vmem:[%s6 + $0x1f8] sm:$0xff]
    %4497 = vmatprep.subr.mxu0 0.0
    %4498 = vmatpush1.msra.mxu0 %v4433
    %4499 = vmatprep.subr.mxu0 0.0
    %4500 = vmatpush1.msra.mxu0 %v4434
    %4501 = vmatprep.subr.mxu0 0.0
    %4502 = vmatpush1.msra.mxu0 %v4435
    %4503 = vmatprep.subr.mxu0 0.0
    %4504 = vmatpush1.msra.mxu0 %v4436
    %4505 = vmatprep.subr.mxu0 0.0
    %4506 = vmatpush1.msra.mxu0 %v4437
    %4507 = vmatprep.subr.mxu0 0.0
    %4508 = vmatpush1.msra.mxu0 %v4438
    %4509 = vmatprep.subr.mxu0 0.0
    %4510 = vmatpush1.msra.mxu0 %v4439
    %4511 = vmatprep.subr.mxu0 0.0
    %4512 = vmatpush1.msra.mxu0 %v4440
    %4513 = vmatprep.subr.mxu0 0.0
    %4514 = vmatpush1.msra.mxu0 %v4441
    %4515 = vmatprep.subr.mxu0 0.0
    %4516 = vmatpush1.msra.mxu0 %v4442
    %4517 = vmatprep.subr.mxu0 0.0
    %4518 = vmatpush1.msra.mxu0 %v4443
    %4519 = vmatprep.subr.mxu0 0.0
    %4520 = vmatpush1.msra.mxu0 %v4444
    %4521 = vmatprep.subr.mxu0 0.0
    %4522 = vmatpush1.msra.mxu0 %v4445
    %4523 = vmatprep.subr.mxu0 0.0
    %4524 = vmatpush1.msra.mxu0 %v4446
    %4525 = vmatprep.subr.mxu0 0.0
    %4526 = vmatpush1.msra.mxu0 %v4447
    %4527 = vmatprep.subr.mxu0 0.0
    %4528 = vmatpush1.msra.mxu0 %v4448
    %4529 = vmatprep.subr.mxu0 0.0
    %4530 = vmatpush1.msra.mxu0 %v4449
    %4531 = vmatprep.subr.mxu0 0.0
    %4532 = vmatpush1.msra.mxu0 %v4450
    %4533 = vmatprep.subr.mxu0 0.0
    %4534 = vmatpush1.msra.mxu0 %v4451
    %4535 = vmatprep.subr.mxu0 0.0
    %4536 = vmatpush1.msra.mxu0 %v4452
    %4537 = vmatprep.subr.mxu0 0.0
    %4538 = vmatpush1.msra.mxu0 %v4453
    %4539 = vmatprep.subr.mxu0 0.0
    %4540 = vmatpush1.msra.mxu0 %v4454
    %4541 = vmatprep.subr.mxu0 0.0
    %4542 = vmatpush1.msra.mxu0 %v4455
    %4543 = vmatprep.subr.mxu0 0.0
    %4544 = vmatpush1.msra.mxu0 %v4456
    %4545 = vmatprep.subr.mxu0 0.0
    %4546 = vmatpush1.msra.mxu0 %v4457
    %4547 = vmatprep.subr.mxu0 0.0
    %4548 = vmatpush1.msra.mxu0 %v4458
    %4549 = vmatprep.subr.mxu0 0.0
    %4550 = vmatpush1.msra.mxu0 %v4459
    %4551 = vmatprep.subr.mxu0 0.0
    %4552 = vmatpush1.msra.mxu0 %v4460
    %4553 = vmatprep.subr.mxu0 0.0
    %4554 = vmatpush1.msra.mxu0 %v4461
    %4555 = vmatprep.subr.mxu0 0.0
    %4556 = vmatpush1.msra.mxu0 %v4462
    %4557 = vmatprep.subr.mxu0 0.0
    %4558 = vmatpush1.msra.mxu0 %v4463
    %4559 = vmatprep.subr.mxu0 0.0
    %4560 = vmatpush1.msra.mxu0 %v4464
    %4561 = vmatprep.mubr.f32.mxu0 %v4430
    %4562 = vmatmul.mubr.f32.gmra.mrb[0].mxu0 %v4429
    %v4563 = vpop.f32.mrb[0].mxu0
    %v4564 = vadd.f32 0.0, %v4563
    %v4565 = vpop.f32.mrb[0].mxu0
    %4566 = vdwg.mxu0
    %4567 = vmatprep.subr.mxu0 0.0
    %4568 = vmatpush1.msra.mxu0 %v4465
    %4569 = vmatprep.subr.mxu0 0.0
    %4570 = vmatpush1.msra.mxu0 %v4466
    %4571 = vmatprep.subr.mxu0 0.0
    %4572 = vmatpush1.msra.mxu0 %v4467
    %4573 = vmatprep.subr.mxu0 0.0
    %4574 = vmatpush1.msra.mxu0 %v4468
    %4575 = vmatprep.subr.mxu0 0.0
    %4576 = vmatpush1.msra.mxu0 %v4469
    %4577 = vmatprep.subr.mxu0 0.0
    %4578 = vmatpush1.msra.mxu0 %v4470
    %4579 = vmatprep.subr.mxu0 0.0
    %4580 = vmatpush1.msra.mxu0 %v4471
    %4581 = vmatprep.subr.mxu0 0.0
    %4582 = vmatpush1.msra.mxu0 %v4472
    %4583 = vmatprep.subr.mxu0 0.0
    %4584 = vmatpush1.msra.mxu0 %v4473
    %4585 = vmatprep.subr.mxu0 0.0
    %4586 = vmatpush1.msra.mxu0 %v4474
    %4587 = vmatprep.subr.mxu0 0.0
    %4588 = vmatpush1.msra.mxu0 %v4475
    %4589 = vmatprep.subr.mxu0 0.0
    %4590 = vmatpush1.msra.mxu0 %v4476
    %4591 = vmatprep.subr.mxu0 0.0
    %4592 = vmatpush1.msra.mxu0 %v4477
    %4593 = vmatprep.subr.mxu0 0.0
    %4594 = vmatpush1.msra.mxu0 %v4478
    %4595 = vmatprep.subr.mxu0 0.0
    %4596 = vmatpush1.msra.mxu0 %v4479
    %4597 = vmatprep.subr.mxu0 0.0
    %4598 = vmatpush1.msra.mxu0 %v4480
    %4599 = vmatprep.subr.mxu0 0.0
    %4600 = vmatpush1.msra.mxu0 %v4481
    %4601 = vmatprep.subr.mxu0 0.0
    %4602 = vmatpush1.msra.mxu0 %v4482
    %4603 = vmatprep.subr.mxu0 0.0
    %4604 = vmatpush1.msra.mxu0 %v4483
    %4605 = vmatprep.subr.mxu0 0.0
    %4606 = vmatpush1.msra.mxu0 %v4484
    %4607 = vmatprep.subr.mxu0 0.0
    %4608 = vmatpush1.msra.mxu0 %v4485
    %4609 = vmatprep.subr.mxu0 0.0
    %4610 = vmatpush1.msra.mxu0 %v4486
    %4611 = vmatprep.subr.mxu0 0.0
    %4612 = vmatpush1.msra.mxu0 %v4487
    %4613 = vmatprep.subr.mxu0 0.0
    %4614 = vmatpush1.msra.mxu0 %v4488
    %4615 = vmatprep.subr.mxu0 0.0
    %4616 = vmatpush1.msra.mxu0 %v4489
    %4617 = vmatprep.subr.mxu0 0.0
    %4618 = vmatpush1.msra.mxu0 %v4490
    %4619 = vmatprep.subr.mxu0 0.0
    %4620 = vmatpush1.msra.mxu0 %v4491
    %4621 = vmatprep.subr.mxu0 0.0
    %4622 = vmatpush1.msra.mxu0 %v4492
    %4623 = vmatprep.subr.mxu0 0.0
    %4624 = vmatpush1.msra.mxu0 %v4493
    %4625 = vmatprep.subr.mxu0 0.0
    %4626 = vmatpush1.msra.mxu0 %v4494
    %4627 = vmatprep.subr.mxu0 0.0
    %4628 = vmatpush1.msra.mxu0 %v4495
    %4629 = vmatprep.subr.mxu0 0.0
    %4630 = vmatpush1.msra.mxu0 %v4496
    %4631 = vmatprep.mubr.f32.mxu0 %v4432
    %4632 = vmatmul.mubr.f32.gmra.mrb[0].mxu0 %v4431
    %v4633 = vpop.f32.mrb[0].mxu0
    %v4634 = vadd.f32 %v4564, %v4633
    %v4635 = vpop.f32.mrb[0].mxu0
    %4636 = vdwg.mxu0
    %v4637 = vsel %vm502, %v4634, -inf
    %4638 = vmax.xlane.f32.xlu0 %v4637
    %v4639 = vpop.xlane.xlu0 %4638
    %v4640 = vsub.f32 %v4634, %v4639
    %v4641 = vmul.f32 %v4640, 1.442695
    %v4642 = vpow.pop %v4641
    %v4643 = vsel %vm502, %v4642, 0.0
    %4644 = vadd.xlane.f32.xlu0 %v4643
    %v4645 = vpop.xlane.xlu0 %4644
    %v4646 = vrcp.pop %v4645
    %v4647 = vmul.f32 %v4642, %v4646
    %v4648 = vld [vmem:[%s7] sm:$0xff]
    %v4649 = vld [vmem:[%s7 + $0x8] sm:$0xff]
    %v4651 = vsel %vm502, %v4647, 0
    %4653 = vmatprep.subr.mxu0 0.0
    %4654 = vmatpush1.msra.mxu0 %v4648
    %4655 = vmatprep.subr.mxu0 0.0
    %4656 = vmatpush1.msra.mxu0 %v4649
    %4657 = vmatprep.subr.mxu0 0.0
    %4658 = vmatpush1.msra.mxu0 0.0
    %4659 = vmatprep.subr.mxu0 0.0
    %4660 = vmatpush1.msra.mxu0 0.0
    %4661 = vmatprep.subr.mxu0 0.0
    %4662 = vmatpush1.msra.mxu0 0.0
    %4663 = vmatprep.subr.mxu0 0.0
    %4664 = vmatpush1.msra.mxu0 0.0
    %4665 = vmatprep.subr.mxu0 0.0
    %4666 = vmatpush1.msra.mxu0 0.0
    %4667 = vmatprep.subr.mxu0 0.0
    %4668 = vmatpush1.msra.mxu0 0.0
    %4669 = vmatprep.subr.mxu0 0.0
    %4670 = vmatpush1.msra.mxu0 0.0
    %4671 = vmatprep.subr.mxu0 0.0
    %4672 = vmatpush1.msra.mxu0 0.0
    %4673 = vmatprep.subr.mxu0 0.0
    %4674 = vmatpush1.msra.mxu0 0.0
    %4675 = vmatprep.subr.mxu0 0.0
    %4676 = vmatpush1.msra.mxu0 0.0
    %4677 = vmatprep.subr.mxu0 0.0
    %4678 = vmatpush1.msra.mxu0 0.0
    %4679 = vmatprep.subr.mxu0 0.0
    %4680 = vmatpush1.msra.mxu0 0.0
    %4681 = vmatprep.subr.mxu0 0.0
    %4682 = vmatpush1.msra.mxu0 0.0
    %4683 = vmatprep.subr.mxu0 0.0
    %4684 = vmatpush1.msra.mxu0 0.0
    %4685 = vmatprep.subr.mxu0 0.0
    %4686 = vmatpush1.msra.mxu0 0.0
    %4687 = vmatprep.subr.mxu0 0.0
    %4688 = vmatpush1.msra.mxu0 0.0
    %4689 = vmatprep.subr.mxu0 0.0
    %4690 = vmatpush1.msra.mxu0 0.0
    %4691 = vmatprep.subr.mxu0 0.0
    %4692 = vmatpush1.msra.mxu0 0.0
    %4693 = vmatprep.subr.mxu0 0.0
    %4694 = vmatpush1.msra.mxu0 0.0
    %4695 = vmatprep.subr.mxu0 0.0
    %4696 = vmatpush1.msra.mxu0 0.0
    %4697 = vmatprep.subr.mxu0 0.0
    %4698 = vmatpush1.msra.mxu0 0.0
    %4699 = vmatprep.subr.mxu0 0.0
    %4700 = vmatpush1.msra.mxu0 0.0
    %4701 = vmatprep.subr.mxu0 0.0
    %4702 = vmatpush1.msra.mxu0 0.0
    %4703 = vmatprep.subr.mxu0 0.0
    %4704 = vmatpush1.msra.mxu0 0.0
    %4705 = vmatprep.subr.mxu0 0.0
    %4706 = vmatpush1.msra.mxu0 0.0
    %4707 = vmatprep.subr.mxu0 0.0
    %4708 = vmatpush1.msra.mxu0 0.0
    %4709 = vmatprep.subr.mxu0 0.0
    %4710 = vmatpush1.msra.mxu0 0.0
    %4711 = vmatprep.subr.mxu0 0.0
    %4712 = vmatpush1.msra.mxu0 0.0
    %4713 = vmatprep.subr.mxu0 0.0
    %4714 = vmatpush1.msra.mxu0 0.0
    %4715 = vmatprep.subr.mxu0 0.0
    %4716 = vmatpush1.msra.mxu0 0.0
    %4717 = vmatprep.mubr.f32.mxu0 0.0
    %4718 = vmatmul.mubr.f32.gmra.mrb[0].mxu0 %v4651
    %v4719 = vpop.f32.mrb[0].mxu0
    %v4720 = vadd.f32 0.0, %v4719
    %v4721 = vpop.f32.mrb[0].mxu0
    %4722 = vdwg.mxu0
    %v4723 = vld [vmem:[%s8] sm:$0xff]
    %v4724 = vmul.f32 %v4720, %v4723
    %v4725 = vld [vmem:[%s1] sm:$0xff]
    %v4726 = vld [vmem:[%s1 + $0x8] sm:$0xff]
    %v4727 = vld [vmem:[%s1 + $0x10] sm:$0xff]
    %v4728 = vld [vmem:[%s1 + $0x18] sm:$0xff]
    %v4729 = vld [vmem:[%s1 + $0x20] sm:$0xff]
    %v4730 = vld [vmem:[%s1 + $0x28] sm:$0xff]
    %v4731 = vld [vmem:[%s1 + $0x30] sm:$0xff]
    %v4732 = vld [vmem:[%s1 + $0x38] sm:$0xff]
    %v4733 = vld [vmem:[%s1 + $0x40] sm:$0xff]
    %v4734 = vld [vmem:[%s1 + $0x48] sm:$0xff]
    %v4735 = vld [vmem:[%s1 + $0x50] sm:$0xff]
    %v4736 = vld [vmem:[%s1 + $0x58] sm:$0xff]
    %v4737 = vld [vmem:[%s1 + $0x60] sm:$0xff]
    %v4738 = vld [vmem:[%s1 + $0x68] sm:$0xff]
    %v4739 = vld [vmem:[%s1 + $0x70] sm:$0xff]
    %v4740 = vld [vmem:[%s1 + $0x78] sm:$0xff]
    %4741 = vmatprep.subr.mxu0 0.0
    %4742 = vmatpush1.msra.mxu0 %v4725
    %4743 = vmatprep.subr.mxu0 0.0
    %4744 = vmatpush1.msra.mxu0 %v4726
    %4745 = vmatprep.subr.mxu0 0.0
    %4746 = vmatpush1.msra.mxu0 %v4727
    %4747 = vmatprep.subr.mxu0 0.0
    %4748 = vmatpush1.msra.mxu0 %v4728
    %4749 = vmatprep.subr.mxu0 0.0
    %4750 = vmatpush1.msra.mxu0 %v4729
    %4751 = vmatprep.subr.mxu0 0.0
    %4752 = vmatpush1.msra.mxu0 %v4730
    %4753 = vmatprep.subr.mxu0 0.0
    %4754 = vmatpush1.msra.mxu0 %v4731
    %4755 = vmatprep.subr.mxu0 0.0
    %4756 = vmatpush1.msra.mxu0 %v4732
    %4757 = vmatprep.subr.mxu0 0.0
    %4758 = vmatpush1.msra.mxu0 %v4733
    %4759 = vmatprep.subr.mxu0 0.0
    %4760 = vmatpush1.msra.mxu0 %v4734
    %4761 = vmatprep.subr.mxu0 0.0
    %4762 = vmatpush1.msra.mxu0 %v4735
    %4763 = vmatprep.subr.mxu0 0.0
    %4764 = vmatpush1.msra.mxu0 %v4736
    %4765 = vmatprep.subr.mxu0 0.0
    %4766 = vmatpush1.msra.mxu0 %v4737
    %4767 = vmatprep.subr.mxu0 0.0
    %4768 = vmatpush1.msra.mxu0 %v4738
    %4769 = vmatprep.subr.mxu0 0.0
    %4770 = vmatpush1.msra.mxu0 %v4739
    %4771 = vmatprep.subr.mxu0 0.0
    %4772 = vmatpush1.msra.mxu0 %v4740
    %4773 = vmatprep.subr.mxu0 0.0
    %4774 = vmatpush1.msra.mxu0 0.0
    %4775 = vmatprep.subr.mxu0 0.0
    %4776 = vmatpush1.msra.mxu0 0.0
    %4777 = vmatprep.subr.mxu0 0.0
    %4778 = vmatpush1.msra.mxu0 0.0
    %4779 = vmatprep.subr.mxu0 0.0
    %4780 = vmatpush1.msra.mxu0 0.0
    %4781 = vmatprep.subr.mxu0 0.0
    %4782 = vmatpush1.msra.mxu0 0.0
    %4783 = vmatprep.subr.mxu0 0.0
    %4784 = vmatpush1.msra.mxu0 0.0
    %4785 = vmatprep.subr.mxu0 0.0
    %4786 = vmatpush1.msra.mxu0 0.0
    %4787 = vmatprep.subr.mxu0 0.0
    %4788 = vmatpush1.msra.mxu0 0.0
    %4789 = vmatprep.subr.mxu0 0.0
    %4790 = vmatpush1.msra.mxu0 0.0
    %4791 = vmatprep.subr.mxu0 0.0
    %4792 = vmatpush1.msra.mxu0 0.0
    %4793 = vmatprep.subr.mxu0 0.0
    %4794 = vmatpush1.msra.mxu0 0.0
    %4795 = vmatprep.subr.mxu0 0.0
    %4796 = vmatpush1.msra.mxu0 0.0
    %4797 = vmatprep.subr.mxu0 0.0
    %4798 = vmatpush1.msra.mxu0 0.0
    %4799 = vmatprep.subr.mxu0 0.0
    %4800 = vmatpush1.msra.mxu0 0.0
    %4801 = vmatprep.subr.mxu0 0.0
    %4802 = vmatpush1.msra.mxu0 0.0
    %4803 = vmatprep.subr.mxu0 0.0
    %4804 = vmatpush1.msra.mxu0 0.0
    %4805 = vmatprep.mubr.f32.mxu0 0.0
    %4806 = vmatmul.mubr.f32.gmra.mrb[0].mxu0 %v4724
    %v4807 = vpop.f32.mrb[0].mxu0
    %v4808 = vadd.f32 0.0, %v4807
    %v4809 = vpop.f32.mrb[0].mxu0
    %4810 = vdwg.mxu0
    %s4811 = scalar_lea.vmem %s2, 40
    %v4812 = vld [vmem:[%s4811] sm:$0xff]
    %v4813 = vadd.f32 %v4812, %v4418
    %v4814 = vld [vmem:[%s9] sm:$0xff]
    %v4815 = vld [vmem:[%s9 + $0x8] sm:$0xff]
    %v4816 = vld [vmem:[%s9 + $0x10] sm:$0xff]
    %v4817 = vld [vmem:[%s9 + $0x18] sm:$0xff]
    %v4819 = vsel %vm70, %v4808, 0
    %4821 = vmatprep.subr.mxu0 0.0
    %4822 = vmatpush1.msra.mxu0 %v4814
    %4823 = vmatprep.subr.mxu0 0.0
    %4824 = vmatpush1.msra.mxu0 %v4815
    %4825 = vmatprep.subr.mxu0 0.0
    %4826 = vmatpush1.msra.mxu0 %v4816
    %4827 = vmatprep.subr.mxu0 0.0
    %4828 = vmatpush1.msra.mxu0 %v4817
    %4829 = vmatprep.subr.mxu0 0.0
    %4830 = vmatpush1.msra.mxu0 0.0
    %4831 = vmatprep.subr.mxu0 0.0
    %4832 = vmatpush1.msra.mxu0 0.0
    %4833 = vmatprep.subr.mxu0 0.0
    %4834 = vmatpush1.msra.mxu0 0.0
    %4835 = vmatprep.subr.mxu0 0.0
    %4836 = vmatpush1.msra.mxu0 0.0
    %4837 = vmatprep.subr.mxu0 0.0
    %4838 = vmatpush1.msra.mxu0 0.0
    %4839 = vmatprep.subr.mxu0 0.0
    %4840 = vmatpush1.msra.mxu0 0.0
    %4841 = vmatprep.subr.mxu0 0.0
    %4842 = vmatpush1.msra.mxu0 0.0
    %4843 = vmatprep.subr.mxu0 0.0
    %4844 = vmatpush1.msra.mxu0 0.0
    %4845 = vmatprep.subr.mxu0 0.0
    %4846 = vmatpush1.msra.mxu0 0.0
    %4847 = vmatprep.subr.mxu0 0.0
    %4848 = vmatpush1.msra.mxu0 0.0
    %4849 = vmatprep.subr.mxu0 0.0
    %4850 = vmatpush1.msra.mxu0 0.0
    %4851 = vmatprep.subr.mxu0 0.0
    %4852 = vmatpush1.msra.mxu0 0.0
    %4853 = vmatprep.subr.mxu0 0.0
    %4854 = vmatpush1.msra.mxu0 0.0
    %4855 = vmatprep.subr.mxu0 0.0
    %4856 = vmatpush1.msra.mxu0 0.0
    %4857 = vmatprep.subr.mxu0 0.0
    %4858 = vmatpush1.msra.mxu0 0.0
    %4859 = vmatprep.subr.mxu0 0.0
    %4860 = vmatpush1.msra.mxu0 0.0
    %4861 = vmatprep.subr.mxu0 0.0
    %4862 = vmatpush1.msra.mxu0 0.0
    %4863 = vmatprep.subr.mxu0 0.0
    %4864 = vmatpush1.msra.mxu0 0.0
    %4865 = vmatprep.subr.mxu0 0.0
    %4866 = vmatpush1.msra.mxu0 0.0
    %4867 = vmatprep.subr.mxu0 0.0
    %4868 = vmatpush1.msra.mxu0 0.0
    %4869 = vmatprep.subr.mxu0 0.0
    %4870 = vmatpush1.msra.mxu0 0.0
    %4871 = vmatprep.subr.mxu0 0.0
    %4872 = vmatpush1.msra.mxu0 0.0
    %4873 = vmatprep.subr.mxu0 0.0
    %4874 = vmatpush1.msra.mxu0 0.0
    %4875 = vmatprep.subr.mxu0 0.0
    %4876 = vmatpush1.msra.mxu0 0.0
    %4877 = vmatprep.subr.mxu0 0.0
    %4878 = vmatpush1.msra.mxu0 0.0
    %4879 = vmatprep.subr.mxu0 0.0
    %4880 = vmatpush1.msra.mxu0 0.0
    %4881 = vmatprep.subr.mxu0 0.0
    %4882 = vmatpush1.msra.mxu0 0.0
    %4883 = vmatprep.subr.mxu0 0.0
    %4884 = vmatpush1.msra.mxu0 0.0
    %4885 = vmatprep.mubr.f32.mxu0 0.0
    %4886 = vmatmul.mubr.f32.gmra.mrb[0].mxu0 %v4819
    %v4887 = vpop.f32.mrb[0].mxu0
    %v4888 = vadd.f32 0.0, %v4887
    %v4889 = vpop.f32.mrb[0].mxu0
    %4890 = vdwg.mxu0
    %v4891 = vadd.f32 %v4813, %v4888
    %v4892 = vxor.u32 %v4891, 2147483648
    %v4893 = vmul.f32 %v4892, 1.442695
    %v4894 = vpow.pop %v4893
    %v4895 = vadd.f32 %v4894, 1.0
    %v4896 = vrcp.pop %v4895
    %v4897 = vmul.f32 1.0, %v4896
    %v4898 = vmul.f32 %v4897, 2.0
    %v4899 = vsub.f32 %v4898, 1.0
    %v4900 = vmul.f32 %v4897, %v4083
    %4902 = vrot.lane.b32.xlu0 %v4899, 64
    %v4903 = vpop.permute.xlu0 %4902
    %v4905 = vmul.f32 %v4897, %v4903
    %4907 = vrot.lane.b32.xlu0 %v4905, 32
    %v4908 = vpop.permute.xlu0 %4907
    %v4910 = vadd.f32 %v4900, %v4908
    %v4911 = vtanh.pop %v4910
    %4913 = vrot.lane.b32.xlu0 %v4911, 64
    %v4914 = vpop.permute.xlu0 %4913
    %v4916 = vmul.f32 %v4897, %v4914
    %v4917 = vld [vmem:[%s10] sm:$0xff]
    %v4918 = vld [vmem:[%s10 + $0x8] sm:$0xff]
    %v4919 = vld [vmem:[%s10 + $0x10] sm:$0xff]
    %v4920 = vld [vmem:[%s10 + $0x18] sm:$0xff]
    %v4921 = vld [vmem:[%s11] sm:$0x1]
    %v4923 = vlaneseq
    %v4924 = vshrl.u32 %v4923, 7
    %v4925 = vsub.s32 0, %v4924
    %v4926 = vrot.slane %v4921, %v4925
    %4929 = vrot.lane.b32.xlu0 %v4916, 32
    %v4930 = vpop.permute.xlu0 %4929
    %v4931 = vsel %vm70, %v4930, 0
    %4933 = vmatprep.subr.mxu0 0.0
    %4934 = vmatpush1.msra.mxu0 %v4917
    %4935 = vmatprep.subr.mxu0 0.0
    %4936 = vmatpush1.msra.mxu0 %v4918
    %4937 = vmatprep.subr.mxu0 0.0
    %4938 = vmatpush1.msra.mxu0 %v4919
    %4939 = vmatprep.subr.mxu0 0.0
    %4940 = vmatpush1.msra.mxu0 %v4920
    %4941 = vmatprep.subr.mxu0 0.0
    %4942 = vmatpush1.msra.mxu0 0.0
    %4943 = vmatprep.subr.mxu0 0.0
    %4944 = vmatpush1.msra.mxu0 0.0
    %4945 = vmatprep.subr.mxu0 0.0
    %4946 = vmatpush1.msra.mxu0 0.0
    %4947 = vmatprep.subr.mxu0 0.0
    %4948 = vmatpush1.msra.mxu0 0.0
    %4949 = vmatprep.subr.mxu0 0.0
    %4950 = vmatpush1.msra.mxu0 0.0
    %4951 = vmatprep.subr.mxu0 0.0
    %4952 = vmatpush1.msra.mxu0 0.0
    %4953 = vmatprep.subr.mxu0 0.0
    %4954 = vmatpush1.msra.mxu0 0.0
    %4955 = vmatprep.subr.mxu0 0.0
    %4956 = vmatpush1.msra.mxu0 0.0
    %4957 = vmatprep.subr.mxu0 0.0
    %4958 = vmatpush1.msra.mxu0 0.0
    %4959 = vmatprep.subr.mxu0 0.0
    %4960 = vmatpush1.msra.mxu0 0.0
    %4961 = vmatprep.subr.mxu0 0.0
    %4962 = vmatpush1.msra.mxu0 0.0
    %4963 = vmatprep.subr.mxu0 0.0
    %4964 = vmatpush1.msra.mxu0 0.0
    %4965 = vmatprep.subr.mxu0 0.0
    %4966 = vmatpush1.msra.mxu0 0.0
    %4967 = vmatprep.subr.mxu0 0.0
    %4968 = vmatpush1.msra.mxu0 0.0
    %4969 = vmatprep.subr.mxu0 0.0
    %4970 = vmatpush1.msra.mxu0 0.0
    %4971 = vmatprep.subr.mxu0 0.0
    %4972 = vmatpush1.msra.mxu0 0.0
    %4973 = vmatprep.subr.mxu0 0.0
    %4974 = vmatpush1.msra.mxu0 0.0
    %4975 = vmatprep.subr.mxu0 0.0
    %4976 = vmatpush1.msra.mxu0 0.0
    %4977 = vmatprep.subr.mxu0 0.0
    %4978 = vmatpush1.msra.mxu0 0.0
    %4979 = vmatprep.subr.mxu0 0.0
    %4980 = vmatpush1.msra.mxu0 0.0
    %4981 = vmatprep.subr.mxu0 0.0
    %4982 = vmatpush1.msra.mxu0 0.0
    %4983 = vmatprep.subr.mxu0 0.0
    %4984 = vmatpush1.msra.mxu0 0.0
    %4985 = vmatprep.subr.mxu0 0.0
    %4986 = vmatpush1.msra.mxu0 0.0
    %4987 = vmatprep.subr.mxu0 0.0
    %4988 = vmatpush1.msra.mxu0 0.0
    %4989 = vmatprep.subr.mxu0 0.0
    %4990 = vmatpush1.msra.mxu0 0.0
    %4991 = vmatprep.subr.mxu0 0.0
    %4992 = vmatpush1.msra.mxu0 0.0
    %4993 = vmatprep.subr.mxu0 0.0
    %4994 = vmatpush1.msra.mxu0 0.0
    %4995 = vmatprep.subr.mxu0 0.0
    %4996 = vmatpush1.msra.mxu0 0.0
    %4997 = vmatprep.mubr.f32.mxu0 0.0
    %4998 = vmatmul.mubr.f32.gmra.mrb[0].mxu0 %v4931
    %v4999 = vpop.f32.mrb[0].mxu0
    %v5000 = vadd.f32 %v4926, %v4999
    %v5001 = vpop.f32.mrb[0].mxu0
    %5002 = vdwg.mxu0
    %s5003 = scalar_lea.vmem [#allocation2], 40
    %5004 = vst [vmem:[%s5003] sm:$0xff] %v5000
    %s5005 = scalar_lea.vmem [#allocation4], 40
    %5006 = vst.msk [vmem:[%s5005] sm:$0xff] %vm502, %v4647
    %s5008 = scalar_lea.vmem [#allocation6], 40
    %5009 = vst.msk [vmem:[%s5008] sm:$0xff] %vm70, %v4930
    %5011 = vrot.lane.b32.xlu0 %v4910, 96
    %v5012 = vpop.permute.xlu0 %5011
    %s5014 = scalar_lea.vmem [#allocation7], 40
    %5015 = vst.msk [vmem:[%s5014] sm:$0xff] %vm70, %v5012
    %v5016 = vld [vmem:[%s5] sm:$0xff]
    %v5017 = vld [vmem:[%s5 + $0x8] sm:$0xff]
    %v5018 = vld [vmem:[%s5 + $0x10] sm:$0xff]
    %v5019 = vld [vmem:[%s5 + $0x18] sm:$0xff]
    %v5020 = vld [vmem:[%s5 + $0x20] sm:$0xff]
    %v5021 = vld [vmem:[%s5 + $0x28] sm:$0xff]
    %v5022 = vld [vmem:[%s5 + $0x30] sm:$0xff]
    %v5023 = vld [vmem:[%s5 + $0x38] sm:$0xff]
    %v5024 = vld [vmem:[%s5 + $0x40] sm:$0xff]
    %v5025 = vld [vmem:[%s5 + $0x48] sm:$0xff]
    %v5026 = vld [vmem:[%s5 + $0x50] sm:$0xff]
    %v5027 = vld [vmem:[%s5 + $0x58] sm:$0xff]
    %v5028 = vld [vmem:[%s5 + $0x60] sm:$0xff]
    %v5029 = vld [vmem:[%s5 + $0x68] sm:$0xff]
    %v5030 = vld [vmem:[%s5 + $0x70] sm:$0xff]
    %v5031 = vld [vmem:[%s5 + $0x78] sm:$0xff]
    %v5032 = vld [vmem:[%s5 + $0x80] sm:$0xff]
    %v5033 = vld [vmem:[%s5 + $0x88] sm:$0xff]
    %v5034 = vld [vmem:[%s5 + $0x90] sm:$0xff]
    %v5035 = vld [vmem:[%s5 + $0x98] sm:$0xff]
    %5036 = vmatprep.subr.mxu0 %v5017
    %5037 = vmatpush1.msra.mxu0 %v5016
    %5038 = vmatprep.subr.mxu0 %v5022
    %5039 = vmatpush1.msra.mxu0 %v5021
    %5040 = vmatprep.subr.mxu0 %v5027
    %5041 = vmatpush1.msra.mxu0 %v5026
    %5042 = vmatprep.subr.mxu0 %v5032
    %5043 = vmatpush1.msra.mxu0 %v5031
    %5044 = vmatprep.subr.mxu0 0.0
    %5045 = vmatpush1.msra.mxu0 0.0
    %5046 = vmatprep.subr.mxu0 0.0
    %5047 = vmatpush1.msra.mxu0 0.0
    %5048 = vmatprep.subr.mxu0 0.0
    %5049 = vmatpush1.msra.mxu0 0.0
    %5050 = vmatprep.subr.mxu0 0.0
    %5051 = vmatpush1.msra.mxu0 0.0
    %5052 = vmatprep.subr.mxu0 0.0
    %5053 = vmatpush1.msra.mxu0 0.0
    %5054 = vmatprep.subr.mxu0 0.0
    %5055 = vmatpush1.msra.mxu0 0.0
    %5056 = vmatprep.subr.mxu0 0.0
    %5057 = vmatpush1.msra.mxu0 0.0
    %5058 = vmatprep.subr.mxu0 0.0
    %5059 = vmatpush1.msra.mxu0 0.0
    %5060 = vmatprep.subr.mxu0 0.0
    %5061 = vmatpush1.msra.mxu0 0.0
    %5062 = vmatprep.subr.mxu0 0.0
    %5063 = vmatpush1.msra.mxu0 0.0
    %5064 = vmatprep.subr.mxu0 0.0
    %5065 = vmatpush1.msra.mxu0 0.0
    %5066 = vmatprep.subr.mxu0 0.0
    %5067 = vmatpush1.msra.mxu0 0.0
    %5068 = vmatprep.subr.mxu0 0.0
    %5069 = vmatpush1.msra.mxu0 0.0
    %5070 = vmatprep.subr.mxu0 0.0
    %5071 = vmatpush1.msra.mxu0 0.0
    %5072 = vmatprep.subr.mxu0 0.0
    %5073 = vmatpush1.msra.mxu0 0.0
    %5074 = vmatprep.subr.mxu0 0.0
    %5075 = vmatpush1.msra.mxu0 0.0
    %5076 = vmatprep.subr.mxu0 0.0
    %5077 = vmatpush1.msra.mxu0 0.0
    %5078 = vmatprep.subr.mxu0 0.0
    %5079 = vmatpush1.msra.mxu0 0.0
    %5080 = vmatprep.subr.mxu0 0.0
    %5081 = vmatpush1.msra.mxu0 0.0
    %5082 = vmatprep.subr.mxu0 0.0
    %5083 = vmatpush1.msra.mxu0 0.0
    %5084 = vmatprep.subr.mxu0 0.0
    %5085 = vmatpush1.msra.mxu0 0.0
    %5086 = vmatprep.subr.mxu0 0.0
    %5087 = vmatpush1.msra.mxu0 0.0
    %5088 = vmatprep.subr.mxu0 0.0
    %5089 = vmatpush1.msra.mxu0 0.0
    %5090 = vmatprep.subr.mxu0 0.0
    %5091 = vmatpush1.msra.mxu0 0.0
    %5092 = vmatprep.subr.mxu0 0.0
    %5093 = vmatpush1.msra.mxu0 0.0
    %5094 = vmatprep.subr.mxu0 0.0
    %5095 = vmatpush1.msra.mxu0 0.0
    %5096 = vmatprep.subr.mxu0 0.0
    %5097 = vmatpush1.msra.mxu0 0.0
    %5098 = vmatprep.subr.mxu0 0.0
    %5099 = vmatpush1.msra.mxu0 0.0
    %5100 = vmatprep.mubr.f32.mxu0 0.0
    %5101 = vmatmul.mubr.f32.gmra.mrb[0].mxu0 %v4931
    %v5102 = vpop.f32.mrb[0].mxu0
    %v5103 = vadd.f32 0.0, %v5102
    %v5104 = vpop.f32.mrb[0].mxu0
    %v5105 = vadd.f32 0.0, %v5104
    %5106 = vdwg.mxu0
    %5107 = vmatprep.subr.mxu0 %v5019
    %5108 = vmatpush1.msra.mxu0 %v5018
    %5109 = vmatprep.subr.mxu0 %v5024
    %5110 = vmatpush1.msra.mxu0 %v5023
    %5111 = vmatprep.subr.mxu0 %v5029
    %5112 = vmatpush1.msra.mxu0 %v5028
    %5113 = vmatprep.subr.mxu0 %v5034
    %5114 = vmatpush1.msra.mxu0 %v5033
    %5115 = vmatprep.subr.mxu0 0.0
    %5116 = vmatpush1.msra.mxu0 0.0
    %5117 = vmatprep.subr.mxu0 0.0
    %5118 = vmatpush1.msra.mxu0 0.0
    %5119 = vmatprep.subr.mxu0 0.0
    %5120 = vmatpush1.msra.mxu0 0.0
    %5121 = vmatprep.subr.mxu0 0.0
    %5122 = vmatpush1.msra.mxu0 0.0
    %5123 = vmatprep.subr.mxu0 0.0
    %5124 = vmatpush1.msra.mxu0 0.0
    %5125 = vmatprep.subr.mxu0 0.0
    %5126 = vmatpush1.msra.mxu0 0.0
    %5127 = vmatprep.subr.mxu0 0.0
    %5128 = vmatpush1.msra.mxu0 0.0
    %5129 = vmatprep.subr.mxu0 0.0
    %5130 = vmatpush1.msra.mxu0 0.0
    %5131 = vmatprep.subr.mxu0 0.0
    %5132 = vmatpush1.msra.mxu0 0.0
    %5133 = vmatprep.subr.mxu0 0.0
    %5134 = vmatpush1.msra.mxu0 0.0
    %5135 = vmatprep.subr.mxu0 0.0
    %5136 = vmatpush1.msra.mxu0 0.0
    %5137 = vmatprep.subr.mxu0 0.0
    %5138 = vmatpush1.msra.mxu0 0.0
    %5139 = vmatprep.subr.mxu0 0.0
    %5140 = vmatpush1.msra.mxu0 0.0
    %5141 = vmatprep.subr.mxu0 0.0
    %5142 = vmatpush1.msra.mxu0 0.0
    %5143 = vmatprep.subr.mxu0 0.0
    %5144 = vmatpush1.msra.mxu0 0.0
    %5145 = vmatprep.subr.mxu0 0.0
    %5146 = vmatpush1.msra.mxu0 0.0
    %5147 = vmatprep.subr.mxu0 0.0
    %5148 = vmatpush1.msra.mxu0 0.0
    %5149 = vmatprep.subr.mxu0 0.0
    %5150 = vmatpush1.msra.mxu0 0.0
    %5151 = vmatprep.subr.mxu0 0.0
    %5152 = vmatpush1.msra.mxu0 0.0
    %5153 = vmatprep.subr.mxu0 0.0
    %5154 = vmatpush1.msra.mxu0 0.0
    %5155 = vmatprep.subr.mxu0 0.0
    %5156 = vmatpush1.msra.mxu0 0.0
    %5157 = vmatprep.subr.mxu0 0.0
    %5158 = vmatpush1.msra.mxu0 0.0
    %5159 = vmatprep.subr.mxu0 0.0
    %5160 = vmatpush1.msra.mxu0 0.0
    %5161 = vmatprep.subr.mxu0 0.0
    %5162 = vmatpush1.msra.mxu0 0.0
    %5163 = vmatprep.subr.mxu0 0.0
    %5164 = vmatpush1.msra.mxu0 0.0
    %5165 = vmatprep.subr.mxu0 0.0
    %5166 = vmatpush1.msra.mxu0 0.0
    %5167 = vmatprep.subr.mxu0 0.0
    %5168 = vmatpush1.msra.mxu0 0.0
    %5169 = vmatprep.subr.mxu0 0.0
    %5170 = vmatpush1.msra.mxu0 0.0
    %5171 = vmatprep.mubr.f32.mxu0 0.0
    %5172 = vmatmul.mubr.f32.gmra.mrb[0].mxu0 %v4931
    %v5173 = vpop.f32.mrb[0].mxu0
    %v5174 = vadd.f32 0.0, %v5173
    %v5175 = vpop.f32.mrb[0].mxu0
    %v5176 = vadd.f32 0.0, %v5175
    %5177 = vdwg.mxu0
    %5178 = vmatprep.subr.mxu0 0.0
    %5179 = vmatpush1.msra.mxu0 %v5020
    %5180 = vmatprep.subr.mxu0 0.0
    %5181 = vmatpush1.msra.mxu0 %v5025
    %5182 = vmatprep.subr.mxu0 0.0
    %5183 = vmatpush1.msra.mxu0 %v5030
    %5184 = vmatprep.subr.mxu0 0.0
    %5185 = vmatpush1.msra.mxu0 %v5035
    %5186 = vmatprep.subr.mxu0 0.0
    %5187 = vmatpush1.msra.mxu0 0.0
    %5188 = vmatprep.subr.mxu0 0.0
    %5189 = vmatpush1.msra.mxu0 0.0
    %5190 = vmatprep.subr.mxu0 0.0
    %5191 = vmatpush1.msra.mxu0 0.0
    %5192 = vmatprep.subr.mxu0 0.0
    %5193 = vmatpush1.msra.mxu0 0.0
    %5194 = vmatprep.subr.mxu0 0.0
    %5195 = vmatpush1.msra.mxu0 0.0
    %5196 = vmatprep.subr.mxu0 0.0
    %5197 = vmatpush1.msra.mxu0 0.0
    %5198 = vmatprep.subr.mxu0 0.0
    %5199 = vmatpush1.msra.mxu0 0.0
    %5200 = vmatprep.subr.mxu0 0.0
    %5201 = vmatpush1.msra.mxu0 0.0
    %5202 = vmatprep.subr.mxu0 0.0
    %5203 = vmatpush1.msra.mxu0 0.0
    %5204 = vmatprep.subr.mxu0 0.0
    %5205 = vmatpush1.msra.mxu0 0.0
    %5206 = vmatprep.subr.mxu0 0.0
    %5207 = vmatpush1.msra.mxu0 0.0
    %5208 = vmatprep.subr.mxu0 0.0
    %5209 = vmatpush1.msra.mxu0 0.0
    %5210 = vmatprep.subr.mxu0 0.0
    %5211 = vmatpush1.msra.mxu0 0.0
    %5212 = vmatprep.subr.mxu0 0.0
    %5213 = vmatpush1.msra.mxu0 0.0
    %5214 = vmatprep.subr.mxu0 0.0
    %5215 = vmatpush1.msra.mxu0 0.0
    %5216 = vmatprep.subr.mxu0 0.0
    %5217 = vmatpush1.msra.mxu0 0.0
    %5218 = vmatprep.subr.mxu0 0.0
    %5219 = vmatpush1.msra.mxu0 0.0
    %5220 = vmatprep.subr.mxu0 0.0
    %5221 = vmatpush1.msra.mxu0 0.0
    %5222 = vmatprep.subr.mxu0 0.0
    %5223 = vmatpush1.msra.mxu0 0.0
    %5224 = vmatprep.subr.mxu0 0.0
    %5225 = vmatpush1.msra.mxu0 0.0
    %5226 = vmatprep.subr.mxu0 0.0
    %5227 = vmatpush1.msra.mxu0 0.0
    %5228 = vmatprep.subr.mxu0 0.0
    %5229 = vmatpush1.msra.mxu0 0.0
    %5230 = vmatprep.subr.mxu0 0.0
    %5231 = vmatpush1.msra.mxu0 0.0
    %5232 = vmatprep.subr.mxu0 0.0
    %5233 = vmatpush1.msra.mxu0 0.0
    %5234 = vmatprep.subr.mxu0 0.0
    %5235 = vmatpush1.msra.mxu0 0.0
    %5236 = vmatprep.subr.mxu0 0.0
    %5237 = vmatpush1.msra.mxu0 0.0
    %5238 = vmatprep.subr.mxu0 0.0
    %5239 = vmatpush1.msra.mxu0 0.0
    %5240 = vmatprep.subr.mxu0 0.0
    %5241 = vmatpush1.msra.mxu0 0.0
    %5242 = vmatprep.mubr.f32.mxu0 0.0
    %5243 = vmatmul.mubr.f32.gmra.mrb[0].mxu0 %v4931
    %v5244 = vpop.f32.mrb[0].mxu0
    %v5245 = vadd.f32 0.0, %v5244
    %v5246 = vpop.f32.mrb[0].mxu0
    %5247 = vdwg.mxu0
    %v5248 = vld [vmem:[%s0] sm:$0xff]
    %v5249 = vld [vmem:[%s0 + $0x8] sm:$0xff]
    %v5250 = vld [vmem:[%s0 + $0x10] sm:$0xff]
    %v5251 = vld [vmem:[%s0 + $0x18] sm:$0xff]
    %v5252 = vadd.f32 %v5248, %v5103
    %v5253 = vadd.f32 %v5249, %v5105
    %v5254 = vadd.f32 %v5250, %v5174
    %v5255 = vadd.f32 %v5251, %v5176
    %v5256 = vtanh.pop %v5252
    %v5257 = vtanh.pop %v5253
    %v5258 = vtanh.pop %v5254
    %v5259 = vtanh.pop %v5255
    %v5260 = vld [vmem:[%s6] sm:$0xff]
    %v5261 = vld [vmem:[%s6 + $0x8] sm:$0xff]
    %v5262 = vld [vmem:[%s6 + $0x10] sm:$0xff]
    %v5263 = vld [vmem:[%s6 + $0x18] sm:$0xff]
    %v5264 = vld [vmem:[%s6 + $0x20] sm:$0xff]
    %v5265 = vld [vmem:[%s6 + $0x28] sm:$0xff]
    %v5266 = vld [vmem:[%s6 + $0x30] sm:$0xff]
    %v5267 = vld [vmem:[%s6 + $0x38] sm:$0xff]
    %v5268 = vld [vmem:[%s6 + $0x40] sm:$0xff]
    %v5269 = vld [vmem:[%s6 + $0x48] sm:$0xff]
    %v5270 = vld [vmem:[%s6 + $0x50] sm:$0xff]
    %v5271 = vld [vmem:[%s6 + $0x58] sm:$0xff]
    %v5272 = vld [vmem:[%s6 + $0x60] sm:$0xff]
    %v5273 = vld [vmem:[%s6 + $0x68] sm:$0xff]
    %v5274 = vld [vmem:[%s6 + $0x70] sm:$0xff]
    %v5275 = vld [vmem:[%s6 + $0x78] sm:$0xff]
    %v5276 = vld [vmem:[%s6 + $0x80] sm:$0xff]
    %v5277 = vld [vmem:[%s6 + $0x88] sm:$0xff]
    %v5278 = vld [vmem:[%s6 + $0x90] sm:$0xff]
    %v5279 = vld [vmem:[%s6 + $0x98] sm:$0xff]
    %v5280 = vld [vmem:[%s6 + $0xa0] sm:$0xff]
    %v5281 = vld [vmem:[%s6 + $0xa8] sm:$0xff]
    %v5282 = vld [vmem:[%s6 + $0xb0] sm:$0xff]
    %v5283 = vld [vmem:[%s6 + $0xb8] sm:$0xff]
    %v5284 = vld [vmem:[%s6 + $0xc0] sm:$0xff]
    %v5285 = vld [vmem:[%s6 + $0xc8] sm:$0xff]
    %v5286 = vld [vmem:[%s6 + $0xd0] sm:$0xff]
    %v5287 = vld [vmem:[%s6 + $0xd8] sm:$0xff]
    %v5288 = vld [vmem:[%s6 + $0xe0] sm:$0xff]
    %v5289 = vld [vmem:[%s6 + $0xe8] sm:$0xff]
    %v5290 = vld [vmem:[%s6 + $0xf0] sm:$0xff]
    %v5291 = vld [vmem:[%s6 + $0xf8] sm:$0xff]
    %v5292 = vld [vmem:[%s6 + $0x100] sm:$0xff]
    %v5293 = vld [vmem:[%s6 + $0x108] sm:$0xff]
    %v5294 = vld [vmem:[%s6 + $0x110] sm:$0xff]
    %v5295 = vld [vmem:[%s6 + $0x118] sm:$0xff]
    %v5296 = vld [vmem:[%s6 + $0x120] sm:$0xff]
    %v5297 = vld [vmem:[%s6 + $0x128] sm:$0xff]
    %v5298 = vld [vmem:[%s6 + $0x130] sm:$0xff]
    %v5299 = vld [vmem:[%s6 + $0x138] sm:$0xff]
    %v5300 = vld [vmem:[%s6 + $0x140] sm:$0xff]
    %v5301 = vld [vmem:[%s6 + $0x148] sm:$0xff]
    %v5302 = vld [vmem:[%s6 + $0x150] sm:$0xff]
    %v5303 = vld [vmem:[%s6 + $0x158] sm:$0xff]
    %v5304 = vld [vmem:[%s6 + $0x160] sm:$0xff]
    %v5305 = vld [vmem:[%s6 + $0x168] sm:$0xff]
    %v5306 = vld [vmem:[%s6 + $0x170] sm:$0xff]
    %v5307 = vld [vmem:[%s6 + $0x178] sm:$0xff]
    %v5308 = vld [vmem:[%s6 + $0x180] sm:$0xff]
    %v5309 = vld [vmem:[%s6 + $0x188] sm:$0xff]
    %v5310 = vld [vmem:[%s6 + $0x190] sm:$0xff]
    %v5311 = vld [vmem:[%s6 + $0x198] sm:$0xff]
    %v5312 = vld [vmem:[%s6 + $0x1a0] sm:$0xff]
    %v5313 = vld [vmem:[%s6 + $0x1a8] sm:$0xff]
    %v5314 = vld [vmem:[%s6 + $0x1b0] sm:$0xff]
    %v5315 = vld [vmem:[%s6 + $0x1b8] sm:$0xff]
    %v5316 = vld [vmem:[%s6 + $0x1c0] sm:$0xff]
    %v5317 = vld [vmem:[%s6 + $0x1c8] sm:$0xff]
    %v5318 = vld [vmem:[%s6 + $0x1d0] sm:$0xff]
    %v5319 = vld [vmem:[%s6 + $0x1d8] sm:$0xff]
    %v5320 = vld [vmem:[%s6 + $0x1e0] sm:$0xff]
    %v5321 = vld [vmem:[%s6 + $0x1e8] sm:$0xff]
    %v5322 = vld [vmem:[%s6 + $0x1f0] sm:$0xff]
    %v5323 = vld [vmem:[%s6 + $0x1f8] sm:$0xff]
    %5324 = vmatprep.subr.mxu0 0.0
    %5325 = vmatpush1.msra.mxu0 %v5260
    %5326 = vmatprep.subr.mxu0 0.0
    %5327 = vmatpush1.msra.mxu0 %v5261
    %5328 = vmatprep.subr.mxu0 0.0
    %5329 = vmatpush1.msra.mxu0 %v5262
    %5330 = vmatprep.subr.mxu0 0.0
    %5331 = vmatpush1.msra.mxu0 %v5263
    %5332 = vmatprep.subr.mxu0 0.0
    %5333 = vmatpush1.msra.mxu0 %v5264
    %5334 = vmatprep.subr.mxu0 0.0
    %5335 = vmatpush1.msra.mxu0 %v5265
    %5336 = vmatprep.subr.mxu0 0.0
    %5337 = vmatpush1.msra.mxu0 %v5266
    %5338 = vmatprep.subr.mxu0 0.0
    %5339 = vmatpush1.msra.mxu0 %v5267
    %5340 = vmatprep.subr.mxu0 0.0
    %5341 = vmatpush1.msra.mxu0 %v5268
    %5342 = vmatprep.subr.mxu0 0.0
    %5343 = vmatpush1.msra.mxu0 %v5269
    %5344 = vmatprep.subr.mxu0 0.0
    %5345 = vmatpush1.msra.mxu0 %v5270
    %5346 = vmatprep.subr.mxu0 0.0
    %5347 = vmatpush1.msra.mxu0 %v5271
    %5348 = vmatprep.subr.mxu0 0.0
    %5349 = vmatpush1.msra.mxu0 %v5272
    %5350 = vmatprep.subr.mxu0 0.0
    %5351 = vmatpush1.msra.mxu0 %v5273
    %5352 = vmatprep.subr.mxu0 0.0
    %5353 = vmatpush1.msra.mxu0 %v5274
    %5354 = vmatprep.subr.mxu0 0.0
    %5355 = vmatpush1.msra.mxu0 %v5275
    %5356 = vmatprep.subr.mxu0 0.0
    %5357 = vmatpush1.msra.mxu0 %v5276
    %5358 = vmatprep.subr.mxu0 0.0
    %5359 = vmatpush1.msra.mxu0 %v5277
    %5360 = vmatprep.subr.mxu0 0.0
    %5361 = vmatpush1.msra.mxu0 %v5278
    %5362 = vmatprep.subr.mxu0 0.0
    %5363 = vmatpush1.msra.mxu0 %v5279
    %5364 = vmatprep.subr.mxu0 0.0
    %5365 = vmatpush1.msra.mxu0 %v5280
    %5366 = vmatprep.subr.mxu0 0.0
    %5367 = vmatpush1.msra.mxu0 %v5281
    %5368 = vmatprep.subr.mxu0 0.0
    %5369 = vmatpush1.msra.mxu0 %v5282
    %5370 = vmatprep.subr.mxu0 0.0
    %5371 = vmatpush1.msra.mxu0 %v5283
    %5372 = vmatprep.subr.mxu0 0.0
    %5373 = vmatpush1.msra.mxu0 %v5284
    %5374 = vmatprep.subr.mxu0 0.0
    %5375 = vmatpush1.msra.mxu0 %v5285
    %5376 = vmatprep.subr.mxu0 0.0
    %5377 = vmatpush1.msra.mxu0 %v5286
    %5378 = vmatprep.subr.mxu0 0.0
    %5379 = vmatpush1.msra.mxu0 %v5287
    %5380 = vmatprep.subr.mxu0 0.0
    %5381 = vmatpush1.msra.mxu0 %v5288
    %5382 = vmatprep.subr.mxu0 0.0
    %5383 = vmatpush1.msra.mxu0 %v5289
    %5384 = vmatprep.subr.mxu0 0.0
    %5385 = vmatpush1.msra.mxu0 %v5290
    %5386 = vmatprep.subr.mxu0 0.0
    %5387 = vmatpush1.msra.mxu0 %v5291
    %5388 = vmatprep.mubr.f32.mxu0 %v5257
    %5389 = vmatmul.mubr.f32.gmra.mrb[0].mxu0 %v5256
    %v5390 = vpop.f32.mrb[0].mxu0
    %v5391 = vadd.f32 0.0, %v5390
    %v5392 = vpop.f32.mrb[0].mxu0
    %5393 = vdwg.mxu0
    %5394 = vmatprep.subr.mxu0 0.0
    %5395 = vmatpush1.msra.mxu0 %v5292
    %5396 = vmatprep.subr.mxu0 0.0
    %5397 = vmatpush1.msra.mxu0 %v5293
    %5398 = vmatprep.subr.mxu0 0.0
    %5399 = vmatpush1.msra.mxu0 %v5294
    %5400 = vmatprep.subr.mxu0 0.0
    %5401 = vmatpush1.msra.mxu0 %v5295
    %5402 = vmatprep.subr.mxu0 0.0
    %5403 = vmatpush1.msra.mxu0 %v5296
    %5404 = vmatprep.subr.mxu0 0.0
    %5405 = vmatpush1.msra.mxu0 %v5297
    %5406 = vmatprep.subr.mxu0 0.0
    %5407 = vmatpush1.msra.mxu0 %v5298
    %5408 = vmatprep.subr.mxu0 0.0
    %5409 = vmatpush1.msra.mxu0 %v5299
    %5410 = vmatprep.subr.mxu0 0.0
    %5411 = vmatpush1.msra.mxu0 %v5300
    %5412 = vmatprep.subr.mxu0 0.0
    %5413 = vmatpush1.msra.mxu0 %v5301
    %5414 = vmatprep.subr.mxu0 0.0
    %5415 = vmatpush1.msra.mxu0 %v5302
    %5416 = vmatprep.subr.mxu0 0.0
    %5417 = vmatpush1.msra.mxu0 %v5303
    %5418 = vmatprep.subr.mxu0 0.0
    %5419 = vmatpush1.msra.mxu0 %v5304
    %5420 = vmatprep.subr.mxu0 0.0
    %5421 = vmatpush1.msra.mxu0 %v5305
    %5422 = vmatprep.subr.mxu0 0.0
    %5423 = vmatpush1.msra.mxu0 %v5306
    %5424 = vmatprep.subr.mxu0 0.0
    %5425 = vmatpush1.msra.mxu0 %v5307
    %5426 = vmatprep.subr.mxu0 0.0
    %5427 = vmatpush1.msra.mxu0 %v5308
    %5428 = vmatprep.subr.mxu0 0.0
    %5429 = vmatpush1.msra.mxu0 %v5309
    %5430 = vmatprep.subr.mxu0 0.0
    %5431 = vmatpush1.msra.mxu0 %v5310
    %5432 = vmatprep.subr.mxu0 0.0
    %5433 = vmatpush1.msra.mxu0 %v5311
    %5434 = vmatprep.subr.mxu0 0.0
    %5435 = vmatpush1.msra.mxu0 %v5312
    %5436 = vmatprep.subr.mxu0 0.0
    %5437 = vmatpush1.msra.mxu0 %v5313
    %5438 = vmatprep.subr.mxu0 0.0
    %5439 = vmatpush1.msra.mxu0 %v5314
    %5440 = vmatprep.subr.mxu0 0.0
    %5441 = vmatpush1.msra.mxu0 %v5315
    %5442 = vmatprep.subr.mxu0 0.0
    %5443 = vmatpush1.msra.mxu0 %v5316
    %5444 = vmatprep.subr.mxu0 0.0
    %5445 = vmatpush1.msra.mxu0 %v5317
    %5446 = vmatprep.subr.mxu0 0.0
    %5447 = vmatpush1.msra.mxu0 %v5318
    %5448 = vmatprep.subr.mxu0 0.0
    %5449 = vmatpush1.msra.mxu0 %v5319
    %5450 = vmatprep.subr.mxu0 0.0
    %5451 = vmatpush1.msra.mxu0 %v5320
    %5452 = vmatprep.subr.mxu0 0.0
    %5453 = vmatpush1.msra.mxu0 %v5321
    %5454 = vmatprep.subr.mxu0 0.0
    %5455 = vmatpush1.msra.mxu0 %v5322
    %5456 = vmatprep.subr.mxu0 0.0
    %5457 = vmatpush1.msra.mxu0 %v5323
    %5458 = vmatprep.mubr.f32.mxu0 %v5259
    %5459 = vmatmul.mubr.f32.gmra.mrb[0].mxu0 %v5258
    %v5460 = vpop.f32.mrb[0].mxu0
    %v5461 = vadd.f32 %v5391, %v5460
    %v5462 = vpop.f32.mrb[0].mxu0
    %5463 = vdwg.mxu0
    %v5464 = vsel %vm502, %v5461, -inf
    %5465 = vmax.xlane.f32.xlu0 %v5464
    %v5466 = vpop.xlane.xlu0 %5465
    %v5467 = vsub.f32 %v5461, %v5466
    %v5468 = vmul.f32 %v5467, 1.442695
    %v5469 = vpow.pop %v5468
    %v5470 = vsel %vm502, %v5469, 0.0
    %5471 = vadd.xlane.f32.xlu0 %v5470
    %v5472 = vpop.xlane.xlu0 %5471
    %v5473 = vrcp.pop %v5472
    %v5474 = vmul.f32 %v5469, %v5473
    %v5475 = vld [vmem:[%s7] sm:$0xff]
    %v5476 = vld [vmem:[%s7 + $0x8] sm:$0xff]
    %v5478 = vsel %vm502, %v5474, 0
    %5480 = vmatprep.subr.mxu0 0.0
    %5481 = vmatpush1.msra.mxu0 %v5475
    %5482 = vmatprep.subr.mxu0 0.0
    %5483 = vmatpush1.msra.mxu0 %v5476
    %5484 = vmatprep.subr.mxu0 0.0
    %5485 = vmatpush1.msra.mxu0 0.0
    %5486 = vmatprep.subr.mxu0 0.0
    %5487 = vmatpush1.msra.mxu0 0.0
    %5488 = vmatprep.subr.mxu0 0.0
    %5489 = vmatpush1.msra.mxu0 0.0
    %5490 = vmatprep.subr.mxu0 0.0
    %5491 = vmatpush1.msra.mxu0 0.0
    %5492 = vmatprep.subr.mxu0 0.0
    %5493 = vmatpush1.msra.mxu0 0.0
    %5494 = vmatprep.subr.mxu0 0.0
    %5495 = vmatpush1.msra.mxu0 0.0
    %5496 = vmatprep.subr.mxu0 0.0
    %5497 = vmatpush1.msra.mxu0 0.0
    %5498 = vmatprep.subr.mxu0 0.0
    %5499 = vmatpush1.msra.mxu0 0.0
    %5500 = vmatprep.subr.mxu0 0.0
    %5501 = vmatpush1.msra.mxu0 0.0
    %5502 = vmatprep.subr.mxu0 0.0
    %5503 = vmatpush1.msra.mxu0 0.0
    %5504 = vmatprep.subr.mxu0 0.0
    %5505 = vmatpush1.msra.mxu0 0.0
    %5506 = vmatprep.subr.mxu0 0.0
    %5507 = vmatpush1.msra.mxu0 0.0
    %5508 = vmatprep.subr.mxu0 0.0
    %5509 = vmatpush1.msra.mxu0 0.0
    %5510 = vmatprep.subr.mxu0 0.0
    %5511 = vmatpush1.msra.mxu0 0.0
    %5512 = vmatprep.subr.mxu0 0.0
    %5513 = vmatpush1.msra.mxu0 0.0
    %5514 = vmatprep.subr.mxu0 0.0
    %5515 = vmatpush1.msra.mxu0 0.0
    %5516 = vmatprep.subr.mxu0 0.0
    %5517 = vmatpush1.msra.mxu0 0.0
    %5518 = vmatprep.subr.mxu0 0.0
    %5519 = vmatpush1.msra.mxu0 0.0
    %5520 = vmatprep.subr.mxu0 0.0
    %5521 = vmatpush1.msra.mxu0 0.0
    %5522 = vmatprep.subr.mxu0 0.0
    %5523 = vmatpush1.msra.mxu0 0.0
    %5524 = vmatprep.subr.mxu0 0.0
    %5525 = vmatpush1.msra.mxu0 0.0
    %5526 = vmatprep.subr.mxu0 0.0
    %5527 = vmatpush1.msra.mxu0 0.0
    %5528 = vmatprep.subr.mxu0 0.0
    %5529 = vmatpush1.msra.mxu0 0.0
    %5530 = vmatprep.subr.mxu0 0.0
    %5531 = vmatpush1.msra.mxu0 0.0
    %5532 = vmatprep.subr.mxu0 0.0
    %5533 = vmatpush1.msra.mxu0 0.0
    %5534 = vmatprep.subr.mxu0 0.0
    %5535 = vmatpush1.msra.mxu0 0.0
    %5536 = vmatprep.subr.mxu0 0.0
    %5537 = vmatpush1.msra.mxu0 0.0
    %5538 = vmatprep.subr.mxu0 0.0
    %5539 = vmatpush1.msra.mxu0 0.0
    %5540 = vmatprep.subr.mxu0 0.0
    %5541 = vmatpush1.msra.mxu0 0.0
    %5542 = vmatprep.subr.mxu0 0.0
    %5543 = vmatpush1.msra.mxu0 0.0
    %5544 = vmatprep.mubr.f32.mxu0 0.0
    %5545 = vmatmul.mubr.f32.gmra.mrb[0].mxu0 %v5478
    %v5546 = vpop.f32.mrb[0].mxu0
    %v5547 = vadd.f32 0.0, %v5546
    %v5548 = vpop.f32.mrb[0].mxu0
    %5549 = vdwg.mxu0
    %v5550 = vld [vmem:[%s8] sm:$0xff]
    %v5551 = vmul.f32 %v5547, %v5550
    %v5552 = vld [vmem:[%s1] sm:$0xff]
    %v5553 = vld [vmem:[%s1 + $0x8] sm:$0xff]
    %v5554 = vld [vmem:[%s1 + $0x10] sm:$0xff]
    %v5555 = vld [vmem:[%s1 + $0x18] sm:$0xff]
    %v5556 = vld [vmem:[%s1 + $0x20] sm:$0xff]
    %v5557 = vld [vmem:[%s1 + $0x28] sm:$0xff]
    %v5558 = vld [vmem:[%s1 + $0x30] sm:$0xff]
    %v5559 = vld [vmem:[%s1 + $0x38] sm:$0xff]
    %v5560 = vld [vmem:[%s1 + $0x40] sm:$0xff]
    %v5561 = vld [vmem:[%s1 + $0x48] sm:$0xff]
    %v5562 = vld [vmem:[%s1 + $0x50] sm:$0xff]
    %v5563 = vld [vmem:[%s1 + $0x58] sm:$0xff]
    %v5564 = vld [vmem:[%s1 + $0x60] sm:$0xff]
    %v5565 = vld [vmem:[%s1 + $0x68] sm:$0xff]
    %v5566 = vld [vmem:[%s1 + $0x70] sm:$0xff]
    %v5567 = vld [vmem:[%s1 + $0x78] sm:$0xff]
    %5568 = vmatprep.subr.mxu0 0.0
    %5569 = vmatpush1.msra.mxu0 %v5552
    %5570 = vmatprep.subr.mxu0 0.0
    %5571 = vmatpush1.msra.mxu0 %v5553
    %5572 = vmatprep.subr.mxu0 0.0
    %5573 = vmatpush1.msra.mxu0 %v5554
    %5574 = vmatprep.subr.mxu0 0.0
    %5575 = vmatpush1.msra.mxu0 %v5555
    %5576 = vmatprep.subr.mxu0 0.0
    %5577 = vmatpush1.msra.mxu0 %v5556
    %5578 = vmatprep.subr.mxu0 0.0
    %5579 = vmatpush1.msra.mxu0 %v5557
    %5580 = vmatprep.subr.mxu0 0.0
    %5581 = vmatpush1.msra.mxu0 %v5558
    %5582 = vmatprep.subr.mxu0 0.0
    %5583 = vmatpush1.msra.mxu0 %v5559
    %5584 = vmatprep.subr.mxu0 0.0
    %5585 = vmatpush1.msra.mxu0 %v5560
    %5586 = vmatprep.subr.mxu0 0.0
    %5587 = vmatpush1.msra.mxu0 %v5561
    %5588 = vmatprep.subr.mxu0 0.0
    %5589 = vmatpush1.msra.mxu0 %v5562
    %5590 = vmatprep.subr.mxu0 0.0
    %5591 = vmatpush1.msra.mxu0 %v5563
    %5592 = vmatprep.subr.mxu0 0.0
    %5593 = vmatpush1.msra.mxu0 %v5564
    %5594 = vmatprep.subr.mxu0 0.0
    %5595 = vmatpush1.msra.mxu0 %v5565
    %5596 = vmatprep.subr.mxu0 0.0
    %5597 = vmatpush1.msra.mxu0 %v5566
    %5598 = vmatprep.subr.mxu0 0.0
    %5599 = vmatpush1.msra.mxu0 %v5567
    %5600 = vmatprep.subr.mxu0 0.0
    %5601 = vmatpush1.msra.mxu0 0.0
    %5602 = vmatprep.subr.mxu0 0.0
    %5603 = vmatpush1.msra.mxu0 0.0
    %5604 = vmatprep.subr.mxu0 0.0
    %5605 = vmatpush1.msra.mxu0 0.0
    %5606 = vmatprep.subr.mxu0 0.0
    %5607 = vmatpush1.msra.mxu0 0.0
    %5608 = vmatprep.subr.mxu0 0.0
    %5609 = vmatpush1.msra.mxu0 0.0
    %5610 = vmatprep.subr.mxu0 0.0
    %5611 = vmatpush1.msra.mxu0 0.0
    %5612 = vmatprep.subr.mxu0 0.0
    %5613 = vmatpush1.msra.mxu0 0.0
    %5614 = vmatprep.subr.mxu0 0.0
    %5615 = vmatpush1.msra.mxu0 0.0
    %5616 = vmatprep.subr.mxu0 0.0
    %5617 = vmatpush1.msra.mxu0 0.0
    %5618 = vmatprep.subr.mxu0 0.0
    %5619 = vmatpush1.msra.mxu0 0.0
    %5620 = vmatprep.subr.mxu0 0.0
    %5621 = vmatpush1.msra.mxu0 0.0
    %5622 = vmatprep.subr.mxu0 0.0
    %5623 = vmatpush1.msra.mxu0 0.0
    %5624 = vmatprep.subr.mxu0 0.0
    %5625 = vmatpush1.msra.mxu0 0.0
    %5626 = vmatprep.subr.mxu0 0.0
    %5627 = vmatpush1.msra.mxu0 0.0
    %5628 = vmatprep.subr.mxu0 0.0
    %5629 = vmatpush1.msra.mxu0 0.0
    %5630 = vmatprep.subr.mxu0 0.0
    %5631 = vmatpush1.msra.mxu0 0.0
    %5632 = vmatprep.mubr.f32.mxu0 0.0
    %5633 = vmatmul.mubr.f32.gmra.mrb[0].mxu0 %v5551
    %v5634 = vpop.f32.mrb[0].mxu0
    %v5635 = vadd.f32 0.0, %v5634
    %v5636 = vpop.f32.mrb[0].mxu0
    %5637 = vdwg.mxu0
    %s5638 = scalar_lea.vmem %s2, 48
    %v5639 = vld [vmem:[%s5638] sm:$0xff]
    %v5640 = vadd.f32 %v5639, %v5245
    %v5641 = vld [vmem:[%s9] sm:$0xff]
    %v5642 = vld [vmem:[%s9 + $0x8] sm:$0xff]
    %v5643 = vld [vmem:[%s9 + $0x10] sm:$0xff]
    %v5644 = vld [vmem:[%s9 + $0x18] sm:$0xff]
    %v5646 = vsel %vm70, %v5635, 0
    %5648 = vmatprep.subr.mxu0 0.0
    %5649 = vmatpush1.msra.mxu0 %v5641
    %5650 = vmatprep.subr.mxu0 0.0
    %5651 = vmatpush1.msra.mxu0 %v5642
    %5652 = vmatprep.subr.mxu0 0.0
    %5653 = vmatpush1.msra.mxu0 %v5643
    %5654 = vmatprep.subr.mxu0 0.0
    %5655 = vmatpush1.msra.mxu0 %v5644
    %5656 = vmatprep.subr.mxu0 0.0
    %5657 = vmatpush1.msra.mxu0 0.0
    %5658 = vmatprep.subr.mxu0 0.0
    %5659 = vmatpush1.msra.mxu0 0.0
    %5660 = vmatprep.subr.mxu0 0.0
    %5661 = vmatpush1.msra.mxu0 0.0
    %5662 = vmatprep.subr.mxu0 0.0
    %5663 = vmatpush1.msra.mxu0 0.0
    %5664 = vmatprep.subr.mxu0 0.0
    %5665 = vmatpush1.msra.mxu0 0.0
    %5666 = vmatprep.subr.mxu0 0.0
    %5667 = vmatpush1.msra.mxu0 0.0
    %5668 = vmatprep.subr.mxu0 0.0
    %5669 = vmatpush1.msra.mxu0 0.0
    %5670 = vmatprep.subr.mxu0 0.0
    %5671 = vmatpush1.msra.mxu0 0.0
    %5672 = vmatprep.subr.mxu0 0.0
    %5673 = vmatpush1.msra.mxu0 0.0
    %5674 = vmatprep.subr.mxu0 0.0
    %5675 = vmatpush1.msra.mxu0 0.0
    %5676 = vmatprep.subr.mxu0 0.0
    %5677 = vmatpush1.msra.mxu0 0.0
    %5678 = vmatprep.subr.mxu0 0.0
    %5679 = vmatpush1.msra.mxu0 0.0
    %5680 = vmatprep.subr.mxu0 0.0
    %5681 = vmatpush1.msra.mxu0 0.0
    %5682 = vmatprep.subr.mxu0 0.0
    %5683 = vmatpush1.msra.mxu0 0.0
    %5684 = vmatprep.subr.mxu0 0.0
    %5685 = vmatpush1.msra.mxu0 0.0
    %5686 = vmatprep.subr.mxu0 0.0
    %5687 = vmatpush1.msra.mxu0 0.0
    %5688 = vmatprep.subr.mxu0 0.0
    %5689 = vmatpush1.msra.mxu0 0.0
    %5690 = vmatprep.subr.mxu0 0.0
    %5691 = vmatpush1.msra.mxu0 0.0
    %5692 = vmatprep.subr.mxu0 0.0
    %5693 = vmatpush1.msra.mxu0 0.0
    %5694 = vmatprep.subr.mxu0 0.0
    %5695 = vmatpush1.msra.mxu0 0.0
    %5696 = vmatprep.subr.mxu0 0.0
    %5697 = vmatpush1.msra.mxu0 0.0
    %5698 = vmatprep.subr.mxu0 0.0
    %5699 = vmatpush1.msra.mxu0 0.0
    %5700 = vmatprep.subr.mxu0 0.0
    %5701 = vmatpush1.msra.mxu0 0.0
    %5702 = vmatprep.subr.mxu0 0.0
    %5703 = vmatpush1.msra.mxu0 0.0
    %5704 = vmatprep.subr.mxu0 0.0
    %5705 = vmatpush1.msra.mxu0 0.0
    %5706 = vmatprep.subr.mxu0 0.0
    %5707 = vmatpush1.msra.mxu0 0.0
    %5708 = vmatprep.subr.mxu0 0.0
    %5709 = vmatpush1.msra.mxu0 0.0
    %5710 = vmatprep.subr.mxu0 0.0
    %5711 = vmatpush1.msra.mxu0 0.0
    %5712 = vmatprep.mubr.f32.mxu0 0.0
    %5713 = vmatmul.mubr.f32.gmra.mrb[0].mxu0 %v5646
    %v5714 = vpop.f32.mrb[0].mxu0
    %v5715 = vadd.f32 0.0, %v5714
    %v5716 = vpop.f32.mrb[0].mxu0
    %5717 = vdwg.mxu0
    %v5718 = vadd.f32 %v5640, %v5715
    %v5719 = vxor.u32 %v5718, 2147483648
    %v5720 = vmul.f32 %v5719, 1.442695
    %v5721 = vpow.pop %v5720
    %v5722 = vadd.f32 %v5721, 1.0
    %v5723 = vrcp.pop %v5722
    %v5724 = vmul.f32 1.0, %v5723
    %v5725 = vmul.f32 %v5724, 2.0
    %v5726 = vsub.f32 %v5725, 1.0
    %v5727 = vmul.f32 %v5724, %v4910
    %5729 = vrot.lane.b32.xlu0 %v5726, 64
    %v5730 = vpop.permute.xlu0 %5729
    %v5732 = vmul.f32 %v5724, %v5730
    %5734 = vrot.lane.b32.xlu0 %v5732, 32
    %v5735 = vpop.permute.xlu0 %5734
    %v5737 = vadd.f32 %v5727, %v5735
    %v5738 = vtanh.pop %v5737
    %5740 = vrot.lane.b32.xlu0 %v5738, 64
    %v5741 = vpop.permute.xlu0 %5740
    %v5743 = vmul.f32 %v5724, %v5741
    %v5744 = vld [vmem:[%s10] sm:$0xff]
    %v5745 = vld [vmem:[%s10 + $0x8] sm:$0xff]
    %v5746 = vld [vmem:[%s10 + $0x10] sm:$0xff]
    %v5747 = vld [vmem:[%s10 + $0x18] sm:$0xff]
    %v5748 = vld [vmem:[%s11] sm:$0x1]
    %v5750 = vlaneseq
    %v5751 = vshrl.u32 %v5750, 7
    %v5752 = vsub.s32 0, %v5751
    %v5753 = vrot.slane %v5748, %v5752
    %5756 = vrot.lane.b32.xlu0 %v5743, 32
    %v5757 = vpop.permute.xlu0 %5756
    %v5758 = vsel %vm70, %v5757, 0
    %5760 = vmatprep.subr.mxu0 0.0
    %5761 = vmatpush1.msra.mxu0 %v5744
    %5762 = vmatprep.subr.mxu0 0.0
    %5763 = vmatpush1.msra.mxu0 %v5745
    %5764 = vmatprep.subr.mxu0 0.0
    %5765 = vmatpush1.msra.mxu0 %v5746
    %5766 = vmatprep.subr.mxu0 0.0
    %5767 = vmatpush1.msra.mxu0 %v5747
    %5768 = vmatprep.subr.mxu0 0.0
    %5769 = vmatpush1.msra.mxu0 0.0
    %5770 = vmatprep.subr.mxu0 0.0
    %5771 = vmatpush1.msra.mxu0 0.0
    %5772 = vmatprep.subr.mxu0 0.0
    %5773 = vmatpush1.msra.mxu0 0.0
    %5774 = vmatprep.subr.mxu0 0.0
    %5775 = vmatpush1.msra.mxu0 0.0
    %5776 = vmatprep.subr.mxu0 0.0
    %5777 = vmatpush1.msra.mxu0 0.0
    %5778 = vmatprep.subr.mxu0 0.0
    %5779 = vmatpush1.msra.mxu0 0.0
    %5780 = vmatprep.subr.mxu0 0.0
    %5781 = vmatpush1.msra.mxu0 0.0
    %5782 = vmatprep.subr.mxu0 0.0
    %5783 = vmatpush1.msra.mxu0 0.0
    %5784 = vmatprep.subr.mxu0 0.0
    %5785 = vmatpush1.msra.mxu0 0.0
    %5786 = vmatprep.subr.mxu0 0.0
    %5787 = vmatpush1.msra.mxu0 0.0
    %5788 = vmatprep.subr.mxu0 0.0
    %5789 = vmatpush1.msra.mxu0 0.0
    %5790 = vmatprep.subr.mxu0 0.0
    %5791 = vmatpush1.msra.mxu0 0.0
    %5792 = vmatprep.subr.mxu0 0.0
    %5793 = vmatpush1.msra.mxu0 0.0
    %5794 = vmatprep.subr.mxu0 0.0
    %5795 = vmatpush1.msra.mxu0 0.0
    %5796 = vmatprep.subr.mxu0 0.0
    %5797 = vmatpush1.msra.mxu0 0.0
    %5798 = vmatprep.subr.mxu0 0.0
    %5799 = vmatpush1.msra.mxu0 0.0
    %5800 = vmatprep.subr.mxu0 0.0
    %5801 = vmatpush1.msra.mxu0 0.0
    %5802 = vmatprep.subr.mxu0 0.0
    %5803 = vmatpush1.msra.mxu0 0.0
    %5804 = vmatprep.subr.mxu0 0.0
    %5805 = vmatpush1.msra.mxu0 0.0
    %5806 = vmatprep.subr.mxu0 0.0
    %5807 = vmatpush1.msra.mxu0 0.0
    %5808 = vmatprep.subr.mxu0 0.0
    %5809 = vmatpush1.msra.mxu0 0.0
    %5810 = vmatprep.subr.mxu0 0.0
    %5811 = vmatpush1.msra.mxu0 0.0
    %5812 = vmatprep.subr.mxu0 0.0
    %5813 = vmatpush1.msra.mxu0 0.0
    %5814 = vmatprep.subr.mxu0 0.0
    %5815 = vmatpush1.msra.mxu0 0.0
    %5816 = vmatprep.subr.mxu0 0.0
    %5817 = vmatpush1.msra.mxu0 0.0
    %5818 = vmatprep.subr.mxu0 0.0
    %5819 = vmatpush1.msra.mxu0 0.0
    %5820 = vmatprep.subr.mxu0 0.0
    %5821 = vmatpush1.msra.mxu0 0.0
    %5822 = vmatprep.subr.mxu0 0.0
    %5823 = vmatpush1.msra.mxu0 0.0
    %5824 = vmatprep.mubr.f32.mxu0 0.0
    %5825 = vmatmul.mubr.f32.gmra.mrb[0].mxu0 %v5758
    %v5826 = vpop.f32.mrb[0].mxu0
    %v5827 = vadd.f32 %v5753, %v5826
    %v5828 = vpop.f32.mrb[0].mxu0
    %5829 = vdwg.mxu0
    %s5830 = scalar_lea.vmem [#allocation2], 48
    %5831 = vst [vmem:[%s5830] sm:$0xff] %v5827
    %s5832 = scalar_lea.vmem [#allocation4], 48
    %5833 = vst.msk [vmem:[%s5832] sm:$0xff] %vm502, %v5474
    %s5835 = scalar_lea.vmem [#allocation6], 48
    %5836 = vst.msk [vmem:[%s5835] sm:$0xff] %vm70, %v5757
    %5838 = vrot.lane.b32.xlu0 %v5737, 96
    %v5839 = vpop.permute.xlu0 %5838
    %s5841 = scalar_lea.vmem [#allocation7], 48
    %5842 = vst.msk [vmem:[%s5841] sm:$0xff] %vm70, %v5839
    %v5843 = vld [vmem:[%s5] sm:$0xff]
    %v5844 = vld [vmem:[%s5 + $0x8] sm:$0xff]
    %v5845 = vld [vmem:[%s5 + $0x10] sm:$0xff]
    %v5846 = vld [vmem:[%s5 + $0x18] sm:$0xff]
    %v5847 = vld [vmem:[%s5 + $0x20] sm:$0xff]
    %v5848 = vld [vmem:[%s5 + $0x28] sm:$0xff]
    %v5849 = vld [vmem:[%s5 + $0x30] sm:$0xff]
    %v5850 = vld [vmem:[%s5 + $0x38] sm:$0xff]
    %v5851 = vld [vmem:[%s5 + $0x40] sm:$0xff]
    %v5852 = vld [vmem:[%s5 + $0x48] sm:$0xff]
    %v5853 = vld [vmem:[%s5 + $0x50] sm:$0xff]
    %v5854 = vld [vmem:[%s5 + $0x58] sm:$0xff]
    %v5855 = vld [vmem:[%s5 + $0x60] sm:$0xff]
    %v5856 = vld [vmem:[%s5 + $0x68] sm:$0xff]
    %v5857 = vld [vmem:[%s5 + $0x70] sm:$0xff]
    %v5858 = vld [vmem:[%s5 + $0x78] sm:$0xff]
    %v5859 = vld [vmem:[%s5 + $0x80] sm:$0xff]
    %v5860 = vld [vmem:[%s5 + $0x88] sm:$0xff]
    %v5861 = vld [vmem:[%s5 + $0x90] sm:$0xff]
    %v5862 = vld [vmem:[%s5 + $0x98] sm:$0xff]
    %5863 = vmatprep.subr.mxu0 %v5844
    %5864 = vmatpush1.msra.mxu0 %v5843
    %5865 = vmatprep.subr.mxu0 %v5849
    %5866 = vmatpush1.msra.mxu0 %v5848
    %5867 = vmatprep.subr.mxu0 %v5854
    %5868 = vmatpush1.msra.mxu0 %v5853
    %5869 = vmatprep.subr.mxu0 %v5859
    %5870 = vmatpush1.msra.mxu0 %v5858
    %5871 = vmatprep.subr.mxu0 0.0
    %5872 = vmatpush1.msra.mxu0 0.0
    %5873 = vmatprep.subr.mxu0 0.0
    %5874 = vmatpush1.msra.mxu0 0.0
    %5875 = vmatprep.subr.mxu0 0.0
    %5876 = vmatpush1.msra.mxu0 0.0
    %5877 = vmatprep.subr.mxu0 0.0
    %5878 = vmatpush1.msra.mxu0 0.0
    %5879 = vmatprep.subr.mxu0 0.0
    %5880 = vmatpush1.msra.mxu0 0.0
    %5881 = vmatprep.subr.mxu0 0.0
    %5882 = vmatpush1.msra.mxu0 0.0
    %5883 = vmatprep.subr.mxu0 0.0
    %5884 = vmatpush1.msra.mxu0 0.0
    %5885 = vmatprep.subr.mxu0 0.0
    %5886 = vmatpush1.msra.mxu0 0.0
    %5887 = vmatprep.subr.mxu0 0.0
    %5888 = vmatpush1.msra.mxu0 0.0
    %5889 = vmatprep.subr.mxu0 0.0
    %5890 = vmatpush1.msra.mxu0 0.0
    %5891 = vmatprep.subr.mxu0 0.0
    %5892 = vmatpush1.msra.mxu0 0.0
    %5893 = vmatprep.subr.mxu0 0.0
    %5894 = vmatpush1.msra.mxu0 0.0
    %5895 = vmatprep.subr.mxu0 0.0
    %5896 = vmatpush1.msra.mxu0 0.0
    %5897 = vmatprep.subr.mxu0 0.0
    %5898 = vmatpush1.msra.mxu0 0.0
    %5899 = vmatprep.subr.mxu0 0.0
    %5900 = vmatpush1.msra.mxu0 0.0
    %5901 = vmatprep.subr.mxu0 0.0
    %5902 = vmatpush1.msra.mxu0 0.0
    %5903 = vmatprep.subr.mxu0 0.0
    %5904 = vmatpush1.msra.mxu0 0.0
    %5905 = vmatprep.subr.mxu0 0.0
    %5906 = vmatpush1.msra.mxu0 0.0
    %5907 = vmatprep.subr.mxu0 0.0
    %5908 = vmatpush1.msra.mxu0 0.0
    %5909 = vmatprep.subr.mxu0 0.0
    %5910 = vmatpush1.msra.mxu0 0.0
    %5911 = vmatprep.subr.mxu0 0.0
    %5912 = vmatpush1.msra.mxu0 0.0
    %5913 = vmatprep.subr.mxu0 0.0
    %5914 = vmatpush1.msra.mxu0 0.0
    %5915 = vmatprep.subr.mxu0 0.0
    %5916 = vmatpush1.msra.mxu0 0.0
    %5917 = vmatprep.subr.mxu0 0.0
    %5918 = vmatpush1.msra.mxu0 0.0
    %5919 = vmatprep.subr.mxu0 0.0
    %5920 = vmatpush1.msra.mxu0 0.0
    %5921 = vmatprep.subr.mxu0 0.0
    %5922 = vmatpush1.msra.mxu0 0.0
    %5923 = vmatprep.subr.mxu0 0.0
    %5924 = vmatpush1.msra.mxu0 0.0
    %5925 = vmatprep.subr.mxu0 0.0
    %5926 = vmatpush1.msra.mxu0 0.0
    %5927 = vmatprep.mubr.f32.mxu0 0.0
    %5928 = vmatmul.mubr.f32.gmra.mrb[0].mxu0 %v5758
    %v5929 = vpop.f32.mrb[0].mxu0
    %v5930 = vadd.f32 0.0, %v5929
    %v5931 = vpop.f32.mrb[0].mxu0
    %v5932 = vadd.f32 0.0, %v5931
    %5933 = vdwg.mxu0
    %5934 = vmatprep.subr.mxu0 %v5846
    %5935 = vmatpush1.msra.mxu0 %v5845
    %5936 = vmatprep.subr.mxu0 %v5851
    %5937 = vmatpush1.msra.mxu0 %v5850
    %5938 = vmatprep.subr.mxu0 %v5856
    %5939 = vmatpush1.msra.mxu0 %v5855
    %5940 = vmatprep.subr.mxu0 %v5861
    %5941 = vmatpush1.msra.mxu0 %v5860
    %5942 = vmatprep.subr.mxu0 0.0
    %5943 = vmatpush1.msra.mxu0 0.0
    %5944 = vmatprep.subr.mxu0 0.0
    %5945 = vmatpush1.msra.mxu0 0.0
    %5946 = vmatprep.subr.mxu0 0.0
    %5947 = vmatpush1.msra.mxu0 0.0
    %5948 = vmatprep.subr.mxu0 0.0
    %5949 = vmatpush1.msra.mxu0 0.0
    %5950 = vmatprep.subr.mxu0 0.0
    %5951 = vmatpush1.msra.mxu0 0.0
    %5952 = vmatprep.subr.mxu0 0.0
    %5953 = vmatpush1.msra.mxu0 0.0
    %5954 = vmatprep.subr.mxu0 0.0
    %5955 = vmatpush1.msra.mxu0 0.0
    %5956 = vmatprep.subr.mxu0 0.0
    %5957 = vmatpush1.msra.mxu0 0.0
    %5958 = vmatprep.subr.mxu0 0.0
    %5959 = vmatpush1.msra.mxu0 0.0
    %5960 = vmatprep.subr.mxu0 0.0
    %5961 = vmatpush1.msra.mxu0 0.0
    %5962 = vmatprep.subr.mxu0 0.0
    %5963 = vmatpush1.msra.mxu0 0.0
    %5964 = vmatprep.subr.mxu0 0.0
    %5965 = vmatpush1.msra.mxu0 0.0
    %5966 = vmatprep.subr.mxu0 0.0
    %5967 = vmatpush1.msra.mxu0 0.0
    %5968 = vmatprep.subr.mxu0 0.0
    %5969 = vmatpush1.msra.mxu0 0.0
    %5970 = vmatprep.subr.mxu0 0.0
    %5971 = vmatpush1.msra.mxu0 0.0
    %5972 = vmatprep.subr.mxu0 0.0
    %5973 = vmatpush1.msra.mxu0 0.0
    %5974 = vmatprep.subr.mxu0 0.0
    %5975 = vmatpush1.msra.mxu0 0.0
    %5976 = vmatprep.subr.mxu0 0.0
    %5977 = vmatpush1.msra.mxu0 0.0
    %5978 = vmatprep.subr.mxu0 0.0
    %5979 = vmatpush1.msra.mxu0 0.0
    %5980 = vmatprep.subr.mxu0 0.0
    %5981 = vmatpush1.msra.mxu0 0.0
    %5982 = vmatprep.subr.mxu0 0.0
    %5983 = vmatpush1.msra.mxu0 0.0
    %5984 = vmatprep.subr.mxu0 0.0
    %5985 = vmatpush1.msra.mxu0 0.0
    %5986 = vmatprep.subr.mxu0 0.0
    %5987 = vmatpush1.msra.mxu0 0.0
    %5988 = vmatprep.subr.mxu0 0.0
    %5989 = vmatpush1.msra.mxu0 0.0
    %5990 = vmatprep.subr.mxu0 0.0
    %5991 = vmatpush1.msra.mxu0 0.0
    %5992 = vmatprep.subr.mxu0 0.0
    %5993 = vmatpush1.msra.mxu0 0.0
    %5994 = vmatprep.subr.mxu0 0.0
    %5995 = vmatpush1.msra.mxu0 0.0
    %5996 = vmatprep.subr.mxu0 0.0
    %5997 = vmatpush1.msra.mxu0 0.0
    %5998 = vmatprep.mubr.f32.mxu0 0.0
    %5999 = vmatmul.mubr.f32.gmra.mrb[0].mxu0 %v5758
    %v6000 = vpop.f32.mrb[0].mxu0
    %v6001 = vadd.f32 0.0, %v6000
    %v6002 = vpop.f32.mrb[0].mxu0
    %v6003 = vadd.f32 0.0, %v6002
    %6004 = vdwg.mxu0
    %6005 = vmatprep.subr.mxu0 0.0
    %6006 = vmatpush1.msra.mxu0 %v5847
    %6007 = vmatprep.subr.mxu0 0.0
    %6008 = vmatpush1.msra.mxu0 %v5852
    %6009 = vmatprep.subr.mxu0 0.0
    %6010 = vmatpush1.msra.mxu0 %v5857
    %6011 = vmatprep.subr.mxu0 0.0
    %6012 = vmatpush1.msra.mxu0 %v5862
    %6013 = vmatprep.subr.mxu0 0.0
    %6014 = vmatpush1.msra.mxu0 0.0
    %6015 = vmatprep.subr.mxu0 0.0
    %6016 = vmatpush1.msra.mxu0 0.0
    %6017 = vmatprep.subr.mxu0 0.0
    %6018 = vmatpush1.msra.mxu0 0.0
    %6019 = vmatprep.subr.mxu0 0.0
    %6020 = vmatpush1.msra.mxu0 0.0
    %6021 = vmatprep.subr.mxu0 0.0
    %6022 = vmatpush1.msra.mxu0 0.0
    %6023 = vmatprep.subr.mxu0 0.0
    %6024 = vmatpush1.msra.mxu0 0.0
    %6025 = vmatprep.subr.mxu0 0.0
    %6026 = vmatpush1.msra.mxu0 0.0
    %6027 = vmatprep.subr.mxu0 0.0
    %6028 = vmatpush1.msra.mxu0 0.0
    %6029 = vmatprep.subr.mxu0 0.0
    %6030 = vmatpush1.msra.mxu0 0.0
    %6031 = vmatprep.subr.mxu0 0.0
    %6032 = vmatpush1.msra.mxu0 0.0
    %6033 = vmatprep.subr.mxu0 0.0
    %6034 = vmatpush1.msra.mxu0 0.0
    %6035 = vmatprep.subr.mxu0 0.0
    %6036 = vmatpush1.msra.mxu0 0.0
    %6037 = vmatprep.subr.mxu0 0.0
    %6038 = vmatpush1.msra.mxu0 0.0
    %6039 = vmatprep.subr.mxu0 0.0
    %6040 = vmatpush1.msra.mxu0 0.0
    %6041 = vmatprep.subr.mxu0 0.0
    %6042 = vmatpush1.msra.mxu0 0.0
    %6043 = vmatprep.subr.mxu0 0.0
    %6044 = vmatpush1.msra.mxu0 0.0
    %6045 = vmatprep.subr.mxu0 0.0
    %6046 = vmatpush1.msra.mxu0 0.0
    %6047 = vmatprep.subr.mxu0 0.0
    %6048 = vmatpush1.msra.mxu0 0.0
    %6049 = vmatprep.subr.mxu0 0.0
    %6050 = vmatpush1.msra.mxu0 0.0
    %6051 = vmatprep.subr.mxu0 0.0
    %6052 = vmatpush1.msra.mxu0 0.0
    %6053 = vmatprep.subr.mxu0 0.0
    %6054 = vmatpush1.msra.mxu0 0.0
    %6055 = vmatprep.subr.mxu0 0.0
    %6056 = vmatpush1.msra.mxu0 0.0
    %6057 = vmatprep.subr.mxu0 0.0
    %6058 = vmatpush1.msra.mxu0 0.0
    %6059 = vmatprep.subr.mxu0 0.0
    %6060 = vmatpush1.msra.mxu0 0.0
    %6061 = vmatprep.subr.mxu0 0.0
    %6062 = vmatpush1.msra.mxu0 0.0
    %6063 = vmatprep.subr.mxu0 0.0
    %6064 = vmatpush1.msra.mxu0 0.0
    %6065 = vmatprep.subr.mxu0 0.0
    %6066 = vmatpush1.msra.mxu0 0.0
    %6067 = vmatprep.subr.mxu0 0.0
    %6068 = vmatpush1.msra.mxu0 0.0
    %6069 = vmatprep.mubr.f32.mxu0 0.0
    %6070 = vmatmul.mubr.f32.gmra.mrb[0].mxu0 %v5758
    %v6071 = vpop.f32.mrb[0].mxu0
    %v6072 = vadd.f32 0.0, %v6071
    %v6073 = vpop.f32.mrb[0].mxu0
    %6074 = vdwg.mxu0
    %v6075 = vld [vmem:[%s0] sm:$0xff]
    %v6076 = vld [vmem:[%s0 + $0x8] sm:$0xff]
    %v6077 = vld [vmem:[%s0 + $0x10] sm:$0xff]
    %v6078 = vld [vmem:[%s0 + $0x18] sm:$0xff]
    %v6079 = vadd.f32 %v6075, %v5930
    %v6080 = vadd.f32 %v6076, %v5932
    %v6081 = vadd.f32 %v6077, %v6001
    %v6082 = vadd.f32 %v6078, %v6003
    %v6083 = vtanh.pop %v6079
    %v6084 = vtanh.pop %v6080
    %v6085 = vtanh.pop %v6081
    %v6086 = vtanh.pop %v6082
    %v6087 = vld [vmem:[%s6] sm:$0xff]
    %v6088 = vld [vmem:[%s6 + $0x8] sm:$0xff]
    %v6089 = vld [vmem:[%s6 + $0x10] sm:$0xff]
    %v6090 = vld [vmem:[%s6 + $0x18] sm:$0xff]
    %v6091 = vld [vmem:[%s6 + $0x20] sm:$0xff]
    %v6092 = vld [vmem:[%s6 + $0x28] sm:$0xff]
    %v6093 = vld [vmem:[%s6 + $0x30] sm:$0xff]
    %v6094 = vld [vmem:[%s6 + $0x38] sm:$0xff]
    %v6095 = vld [vmem:[%s6 + $0x40] sm:$0xff]
    %v6096 = vld [vmem:[%s6 + $0x48] sm:$0xff]
    %v6097 = vld [vmem:[%s6 + $0x50] sm:$0xff]
    %v6098 = vld [vmem:[%s6 + $0x58] sm:$0xff]
    %v6099 = vld [vmem:[%s6 + $0x60] sm:$0xff]
    %v6100 = vld [vmem:[%s6 + $0x68] sm:$0xff]
    %v6101 = vld [vmem:[%s6 + $0x70] sm:$0xff]
    %v6102 = vld [vmem:[%s6 + $0x78] sm:$0xff]
    %v6103 = vld [vmem:[%s6 + $0x80] sm:$0xff]
    %v6104 = vld [vmem:[%s6 + $0x88] sm:$0xff]
    %v6105 = vld [vmem:[%s6 + $0x90] sm:$0xff]
    %v6106 = vld [vmem:[%s6 + $0x98] sm:$0xff]
    %v6107 = vld [vmem:[%s6 + $0xa0] sm:$0xff]
    %v6108 = vld [vmem:[%s6 + $0xa8] sm:$0xff]
    %v6109 = vld [vmem:[%s6 + $0xb0] sm:$0xff]
    %v6110 = vld [vmem:[%s6 + $0xb8] sm:$0xff]
    %v6111 = vld [vmem:[%s6 + $0xc0] sm:$0xff]
    %v6112 = vld [vmem:[%s6 + $0xc8] sm:$0xff]
    %v6113 = vld [vmem:[%s6 + $0xd0] sm:$0xff]
    %v6114 = vld [vmem:[%s6 + $0xd8] sm:$0xff]
    %v6115 = vld [vmem:[%s6 + $0xe0] sm:$0xff]
    %v6116 = vld [vmem:[%s6 + $0xe8] sm:$0xff]
    %v6117 = vld [vmem:[%s6 + $0xf0] sm:$0xff]
    %v6118 = vld [vmem:[%s6 + $0xf8] sm:$0xff]
    %v6119 = vld [vmem:[%s6 + $0x100] sm:$0xff]
    %v6120 = vld [vmem:[%s6 + $0x108] sm:$0xff]
    %v6121 = vld [vmem:[%s6 + $0x110] sm:$0xff]
    %v6122 = vld [vmem:[%s6 + $0x118] sm:$0xff]
    %v6123 = vld [vmem:[%s6 + $0x120] sm:$0xff]
    %v6124 = vld [vmem:[%s6 + $0x128] sm:$0xff]
    %v6125 = vld [vmem:[%s6 + $0x130] sm:$0xff]
    %v6126 = vld [vmem:[%s6 + $0x138] sm:$0xff]
    %v6127 = vld [vmem:[%s6 + $0x140] sm:$0xff]
    %v6128 = vld [vmem:[%s6 + $0x148] sm:$0xff]
    %v6129 = vld [vmem:[%s6 + $0x150] sm:$0xff]
    %v6130 = vld [vmem:[%s6 + $0x158] sm:$0xff]
    %v6131 = vld [vmem:[%s6 + $0x160] sm:$0xff]
    %v6132 = vld [vmem:[%s6 + $0x168] sm:$0xff]
    %v6133 = vld [vmem:[%s6 + $0x170] sm:$0xff]
    %v6134 = vld [vmem:[%s6 + $0x178] sm:$0xff]
    %v6135 = vld [vmem:[%s6 + $0x180] sm:$0xff]
    %v6136 = vld [vmem:[%s6 + $0x188] sm:$0xff]
    %v6137 = vld [vmem:[%s6 + $0x190] sm:$0xff]
    %v6138 = vld [vmem:[%s6 + $0x198] sm:$0xff]
    %v6139 = vld [vmem:[%s6 + $0x1a0] sm:$0xff]
    %v6140 = vld [vmem:[%s6 + $0x1a8] sm:$0xff]
    %v6141 = vld [vmem:[%s6 + $0x1b0] sm:$0xff]
    %v6142 = vld [vmem:[%s6 + $0x1b8] sm:$0xff]
    %v6143 = vld [vmem:[%s6 + $0x1c0] sm:$0xff]
    %v6144 = vld [vmem:[%s6 + $0x1c8] sm:$0xff]
    %v6145 = vld [vmem:[%s6 + $0x1d0] sm:$0xff]
    %v6146 = vld [vmem:[%s6 + $0x1d8] sm:$0xff]
    %v6147 = vld [vmem:[%s6 + $0x1e0] sm:$0xff]
    %v6148 = vld [vmem:[%s6 + $0x1e8] sm:$0xff]
    %v6149 = vld [vmem:[%s6 + $0x1f0] sm:$0xff]
    %v6150 = vld [vmem:[%s6 + $0x1f8] sm:$0xff]
    %6151 = vmatprep.subr.mxu0 0.0
    %6152 = vmatpush1.msra.mxu0 %v6087
    %6153 = vmatprep.subr.mxu0 0.0
    %6154 = vmatpush1.msra.mxu0 %v6088
    %6155 = vmatprep.subr.mxu0 0.0
    %6156 = vmatpush1.msra.mxu0 %v6089
    %6157 = vmatprep.subr.mxu0 0.0
    %6158 = vmatpush1.msra.mxu0 %v6090
    %6159 = vmatprep.subr.mxu0 0.0
    %6160 = vmatpush1.msra.mxu0 %v6091
    %6161 = vmatprep.subr.mxu0 0.0
    %6162 = vmatpush1.msra.mxu0 %v6092
    %6163 = vmatprep.subr.mxu0 0.0
    %6164 = vmatpush1.msra.mxu0 %v6093
    %6165 = vmatprep.subr.mxu0 0.0
    %6166 = vmatpush1.msra.mxu0 %v6094
    %6167 = vmatprep.subr.mxu0 0.0
    %6168 = vmatpush1.msra.mxu0 %v6095
    %6169 = vmatprep.subr.mxu0 0.0
    %6170 = vmatpush1.msra.mxu0 %v6096
    %6171 = vmatprep.subr.mxu0 0.0
    %6172 = vmatpush1.msra.mxu0 %v6097
    %6173 = vmatprep.subr.mxu0 0.0
    %6174 = vmatpush1.msra.mxu0 %v6098
    %6175 = vmatprep.subr.mxu0 0.0
    %6176 = vmatpush1.msra.mxu0 %v6099
    %6177 = vmatprep.subr.mxu0 0.0
    %6178 = vmatpush1.msra.mxu0 %v6100
    %6179 = vmatprep.subr.mxu0 0.0
    %6180 = vmatpush1.msra.mxu0 %v6101
    %6181 = vmatprep.subr.mxu0 0.0
    %6182 = vmatpush1.msra.mxu0 %v6102
    %6183 = vmatprep.subr.mxu0 0.0
    %6184 = vmatpush1.msra.mxu0 %v6103
    %6185 = vmatprep.subr.mxu0 0.0
    %6186 = vmatpush1.msra.mxu0 %v6104
    %6187 = vmatprep.subr.mxu0 0.0
    %6188 = vmatpush1.msra.mxu0 %v6105
    %6189 = vmatprep.subr.mxu0 0.0
    %6190 = vmatpush1.msra.mxu0 %v6106
    %6191 = vmatprep.subr.mxu0 0.0
    %6192 = vmatpush1.msra.mxu0 %v6107
    %6193 = vmatprep.subr.mxu0 0.0
    %6194 = vmatpush1.msra.mxu0 %v6108
    %6195 = vmatprep.subr.mxu0 0.0
    %6196 = vmatpush1.msra.mxu0 %v6109
    %6197 = vmatprep.subr.mxu0 0.0
    %6198 = vmatpush1.msra.mxu0 %v6110
    %6199 = vmatprep.subr.mxu0 0.0
    %6200 = vmatpush1.msra.mxu0 %v6111
    %6201 = vmatprep.subr.mxu0 0.0
    %6202 = vmatpush1.msra.mxu0 %v6112
    %6203 = vmatprep.subr.mxu0 0.0
    %6204 = vmatpush1.msra.mxu0 %v6113
    %6205 = vmatprep.subr.mxu0 0.0
    %6206 = vmatpush1.msra.mxu0 %v6114
    %6207 = vmatprep.subr.mxu0 0.0
    %6208 = vmatpush1.msra.mxu0 %v6115
    %6209 = vmatprep.subr.mxu0 0.0
    %6210 = vmatpush1.msra.mxu0 %v6116
    %6211 = vmatprep.subr.mxu0 0.0
    %6212 = vmatpush1.msra.mxu0 %v6117
    %6213 = vmatprep.subr.mxu0 0.0
    %6214 = vmatpush1.msra.mxu0 %v6118
    %6215 = vmatprep.mubr.f32.mxu0 %v6084
    %6216 = vmatmul.mubr.f32.gmra.mrb[0].mxu0 %v6083
    %v6217 = vpop.f32.mrb[0].mxu0
    %v6218 = vadd.f32 0.0, %v6217
    %v6219 = vpop.f32.mrb[0].mxu0
    %6220 = vdwg.mxu0
    %6221 = vmatprep.subr.mxu0 0.0
    %6222 = vmatpush1.msra.mxu0 %v6119
    %6223 = vmatprep.subr.mxu0 0.0
    %6224 = vmatpush1.msra.mxu0 %v6120
    %6225 = vmatprep.subr.mxu0 0.0
    %6226 = vmatpush1.msra.mxu0 %v6121
    %6227 = vmatprep.subr.mxu0 0.0
    %6228 = vmatpush1.msra.mxu0 %v6122
    %6229 = vmatprep.subr.mxu0 0.0
    %6230 = vmatpush1.msra.mxu0 %v6123
    %6231 = vmatprep.subr.mxu0 0.0
    %6232 = vmatpush1.msra.mxu0 %v6124
    %6233 = vmatprep.subr.mxu0 0.0
    %6234 = vmatpush1.msra.mxu0 %v6125
    %6235 = vmatprep.subr.mxu0 0.0
    %6236 = vmatpush1.msra.mxu0 %v6126
    %6237 = vmatprep.subr.mxu0 0.0
    %6238 = vmatpush1.msra.mxu0 %v6127
    %6239 = vmatprep.subr.mxu0 0.0
    %6240 = vmatpush1.msra.mxu0 %v6128
    %6241 = vmatprep.subr.mxu0 0.0
    %6242 = vmatpush1.msra.mxu0 %v6129
    %6243 = vmatprep.subr.mxu0 0.0
    %6244 = vmatpush1.msra.mxu0 %v6130
    %6245 = vmatprep.subr.mxu0 0.0
    %6246 = vmatpush1.msra.mxu0 %v6131
    %6247 = vmatprep.subr.mxu0 0.0
    %6248 = vmatpush1.msra.mxu0 %v6132
    %6249 = vmatprep.subr.mxu0 0.0
    %6250 = vmatpush1.msra.mxu0 %v6133
    %6251 = vmatprep.subr.mxu0 0.0
    %6252 = vmatpush1.msra.mxu0 %v6134
    %6253 = vmatprep.subr.mxu0 0.0
    %6254 = vmatpush1.msra.mxu0 %v6135
    %6255 = vmatprep.subr.mxu0 0.0
    %6256 = vmatpush1.msra.mxu0 %v6136
    %6257 = vmatprep.subr.mxu0 0.0
    %6258 = vmatpush1.msra.mxu0 %v6137
    %6259 = vmatprep.subr.mxu0 0.0
    %6260 = vmatpush1.msra.mxu0 %v6138
    %6261 = vmatprep.subr.mxu0 0.0
    %6262 = vmatpush1.msra.mxu0 %v6139
    %6263 = vmatprep.subr.mxu0 0.0
    %6264 = vmatpush1.msra.mxu0 %v6140
    %6265 = vmatprep.subr.mxu0 0.0
    %6266 = vmatpush1.msra.mxu0 %v6141
    %6267 = vmatprep.subr.mxu0 0.0
    %6268 = vmatpush1.msra.mxu0 %v6142
    %6269 = vmatprep.subr.mxu0 0.0
    %6270 = vmatpush1.msra.mxu0 %v6143
    %6271 = vmatprep.subr.mxu0 0.0
    %6272 = vmatpush1.msra.mxu0 %v6144
    %6273 = vmatprep.subr.mxu0 0.0
    %6274 = vmatpush1.msra.mxu0 %v6145
    %6275 = vmatprep.subr.mxu0 0.0
    %6276 = vmatpush1.msra.mxu0 %v6146
    %6277 = vmatprep.subr.mxu0 0.0
    %6278 = vmatpush1.msra.mxu0 %v6147
    %6279 = vmatprep.subr.mxu0 0.0
    %6280 = vmatpush1.msra.mxu0 %v6148
    %6281 = vmatprep.subr.mxu0 0.0
    %6282 = vmatpush1.msra.mxu0 %v6149
    %6283 = vmatprep.subr.mxu0 0.0
    %6284 = vmatpush1.msra.mxu0 %v6150
    %6285 = vmatprep.mubr.f32.mxu0 %v6086
    %6286 = vmatmul.mubr.f32.gmra.mrb[0].mxu0 %v6085
    %v6287 = vpop.f32.mrb[0].mxu0
    %v6288 = vadd.f32 %v6218, %v6287
    %v6289 = vpop.f32.mrb[0].mxu0
    %6290 = vdwg.mxu0
    %v6291 = vsel %vm502, %v6288, -inf
    %6292 = vmax.xlane.f32.xlu0 %v6291
    %v6293 = vpop.xlane.xlu0 %6292
    %v6294 = vsub.f32 %v6288, %v6293
    %v6295 = vmul.f32 %v6294, 1.442695
    %v6296 = vpow.pop %v6295
    %v6297 = vsel %vm502, %v6296, 0.0
    %6298 = vadd.xlane.f32.xlu0 %v6297
    %v6299 = vpop.xlane.xlu0 %6298
    %v6300 = vrcp.pop %v6299
    %v6301 = vmul.f32 %v6296, %v6300
    %v6302 = vld [vmem:[%s7] sm:$0xff]
    %v6303 = vld [vmem:[%s7 + $0x8] sm:$0xff]
    %v6305 = vsel %vm502, %v6301, 0
    %6307 = vmatprep.subr.mxu0 0.0
    %6308 = vmatpush1.msra.mxu0 %v6302
    %6309 = vmatprep.subr.mxu0 0.0
    %6310 = vmatpush1.msra.mxu0 %v6303
    %6311 = vmatprep.subr.mxu0 0.0
    %6312 = vmatpush1.msra.mxu0 0.0
    %6313 = vmatprep.subr.mxu0 0.0
    %6314 = vmatpush1.msra.mxu0 0.0
    %6315 = vmatprep.subr.mxu0 0.0
    %6316 = vmatpush1.msra.mxu0 0.0
    %6317 = vmatprep.subr.mxu0 0.0
    %6318 = vmatpush1.msra.mxu0 0.0
    %6319 = vmatprep.subr.mxu0 0.0
    %6320 = vmatpush1.msra.mxu0 0.0
    %6321 = vmatprep.subr.mxu0 0.0
    %6322 = vmatpush1.msra.mxu0 0.0
    %6323 = vmatprep.subr.mxu0 0.0
    %6324 = vmatpush1.msra.mxu0 0.0
    %6325 = vmatprep.subr.mxu0 0.0
    %6326 = vmatpush1.msra.mxu0 0.0
    %6327 = vmatprep.subr.mxu0 0.0
    %6328 = vmatpush1.msra.mxu0 0.0
    %6329 = vmatprep.subr.mxu0 0.0
    %6330 = vmatpush1.msra.mxu0 0.0
    %6331 = vmatprep.subr.mxu0 0.0
    %6332 = vmatpush1.msra.mxu0 0.0
    %6333 = vmatprep.subr.mxu0 0.0
    %6334 = vmatpush1.msra.mxu0 0.0
    %6335 = vmatprep.subr.mxu0 0.0
    %6336 = vmatpush1.msra.mxu0 0.0
    %6337 = vmatprep.subr.mxu0 0.0
    %6338 = vmatpush1.msra.mxu0 0.0
    %6339 = vmatprep.subr.mxu0 0.0
    %6340 = vmatpush1.msra.mxu0 0.0
    %6341 = vmatprep.subr.mxu0 0.0
    %6342 = vmatpush1.msra.mxu0 0.0
    %6343 = vmatprep.subr.mxu0 0.0
    %6344 = vmatpush1.msra.mxu0 0.0
    %6345 = vmatprep.subr.mxu0 0.0
    %6346 = vmatpush1.msra.mxu0 0.0
    %6347 = vmatprep.subr.mxu0 0.0
    %6348 = vmatpush1.msra.mxu0 0.0
    %6349 = vmatprep.subr.mxu0 0.0
    %6350 = vmatpush1.msra.mxu0 0.0
    %6351 = vmatprep.subr.mxu0 0.0
    %6352 = vmatpush1.msra.mxu0 0.0
    %6353 = vmatprep.subr.mxu0 0.0
    %6354 = vmatpush1.msra.mxu0 0.0
    %6355 = vmatprep.subr.mxu0 0.0
    %6356 = vmatpush1.msra.mxu0 0.0
    %6357 = vmatprep.subr.mxu0 0.0
    %6358 = vmatpush1.msra.mxu0 0.0
    %6359 = vmatprep.subr.mxu0 0.0
    %6360 = vmatpush1.msra.mxu0 0.0
    %6361 = vmatprep.subr.mxu0 0.0
    %6362 = vmatpush1.msra.mxu0 0.0
    %6363 = vmatprep.subr.mxu0 0.0
    %6364 = vmatpush1.msra.mxu0 0.0
    %6365 = vmatprep.subr.mxu0 0.0
    %6366 = vmatpush1.msra.mxu0 0.0
    %6367 = vmatprep.subr.mxu0 0.0
    %6368 = vmatpush1.msra.mxu0 0.0
    %6369 = vmatprep.subr.mxu0 0.0
    %6370 = vmatpush1.msra.mxu0 0.0
    %6371 = vmatprep.mubr.f32.mxu0 0.0
    %6372 = vmatmul.mubr.f32.gmra.mrb[0].mxu0 %v6305
    %v6373 = vpop.f32.mrb[0].mxu0
    %v6374 = vadd.f32 0.0, %v6373
    %v6375 = vpop.f32.mrb[0].mxu0
    %6376 = vdwg.mxu0
    %v6377 = vld [vmem:[%s8] sm:$0xff]
    %v6378 = vmul.f32 %v6374, %v6377
    %v6379 = vld [vmem:[%s1] sm:$0xff]
    %v6380 = vld [vmem:[%s1 + $0x8] sm:$0xff]
    %v6381 = vld [vmem:[%s1 + $0x10] sm:$0xff]
    %v6382 = vld [vmem:[%s1 + $0x18] sm:$0xff]
    %v6383 = vld [vmem:[%s1 + $0x20] sm:$0xff]
    %v6384 = vld [vmem:[%s1 + $0x28] sm:$0xff]
    %v6385 = vld [vmem:[%s1 + $0x30] sm:$0xff]
    %v6386 = vld [vmem:[%s1 + $0x38] sm:$0xff]
    %v6387 = vld [vmem:[%s1 + $0x40] sm:$0xff]
    %v6388 = vld [vmem:[%s1 + $0x48] sm:$0xff]
    %v6389 = vld [vmem:[%s1 + $0x50] sm:$0xff]
    %v6390 = vld [vmem:[%s1 + $0x58] sm:$0xff]
    %v6391 = vld [vmem:[%s1 + $0x60] sm:$0xff]
    %v6392 = vld [vmem:[%s1 + $0x68] sm:$0xff]
    %v6393 = vld [vmem:[%s1 + $0x70] sm:$0xff]
    %v6394 = vld [vmem:[%s1 + $0x78] sm:$0xff]
    %6395 = vmatprep.subr.mxu0 0.0
    %6396 = vmatpush1.msra.mxu0 %v6379
    %6397 = vmatprep.subr.mxu0 0.0
    %6398 = vmatpush1.msra.mxu0 %v6380
    %6399 = vmatprep.subr.mxu0 0.0
    %6400 = vmatpush1.msra.mxu0 %v6381
    %6401 = vmatprep.subr.mxu0 0.0
    %6402 = vmatpush1.msra.mxu0 %v6382
    %6403 = vmatprep.subr.mxu0 0.0
    %6404 = vmatpush1.msra.mxu0 %v6383
    %6405 = vmatprep.subr.mxu0 0.0
    %6406 = vmatpush1.msra.mxu0 %v6384
    %6407 = vmatprep.subr.mxu0 0.0
    %6408 = vmatpush1.msra.mxu0 %v6385
    %6409 = vmatprep.subr.mxu0 0.0
    %6410 = vmatpush1.msra.mxu0 %v6386
    %6411 = vmatprep.subr.mxu0 0.0
    %6412 = vmatpush1.msra.mxu0 %v6387
    %6413 = vmatprep.subr.mxu0 0.0
    %6414 = vmatpush1.msra.mxu0 %v6388
    %6415 = vmatprep.subr.mxu0 0.0
    %6416 = vmatpush1.msra.mxu0 %v6389
    %6417 = vmatprep.subr.mxu0 0.0
    %6418 = vmatpush1.msra.mxu0 %v6390
    %6419 = vmatprep.subr.mxu0 0.0
    %6420 = vmatpush1.msra.mxu0 %v6391
    %6421 = vmatprep.subr.mxu0 0.0
    %6422 = vmatpush1.msra.mxu0 %v6392
    %6423 = vmatprep.subr.mxu0 0.0
    %6424 = vmatpush1.msra.mxu0 %v6393
    %6425 = vmatprep.subr.mxu0 0.0
    %6426 = vmatpush1.msra.mxu0 %v6394
    %6427 = vmatprep.subr.mxu0 0.0
    %6428 = vmatpush1.msra.mxu0 0.0
    %6429 = vmatprep.subr.mxu0 0.0
    %6430 = vmatpush1.msra.mxu0 0.0
    %6431 = vmatprep.subr.mxu0 0.0
    %6432 = vmatpush1.msra.mxu0 0.0
    %6433 = vmatprep.subr.mxu0 0.0
    %6434 = vmatpush1.msra.mxu0 0.0
    %6435 = vmatprep.subr.mxu0 0.0
    %6436 = vmatpush1.msra.mxu0 0.0
    %6437 = vmatprep.subr.mxu0 0.0
    %6438 = vmatpush1.msra.mxu0 0.0
    %6439 = vmatprep.subr.mxu0 0.0
    %6440 = vmatpush1.msra.mxu0 0.0
    %6441 = vmatprep.subr.mxu0 0.0
    %6442 = vmatpush1.msra.mxu0 0.0
    %6443 = vmatprep.subr.mxu0 0.0
    %6444 = vmatpush1.msra.mxu0 0.0
    %6445 = vmatprep.subr.mxu0 0.0
    %6446 = vmatpush1.msra.mxu0 0.0
    %6447 = vmatprep.subr.mxu0 0.0
    %6448 = vmatpush1.msra.mxu0 0.0
    %6449 = vmatprep.subr.mxu0 0.0
    %6450 = vmatpush1.msra.mxu0 0.0
    %6451 = vmatprep.subr.mxu0 0.0
    %6452 = vmatpush1.msra.mxu0 0.0
    %6453 = vmatprep.subr.mxu0 0.0
    %6454 = vmatpush1.msra.mxu0 0.0
    %6455 = vmatprep.subr.mxu0 0.0
    %6456 = vmatpush1.msra.mxu0 0.0
    %6457 = vmatprep.subr.mxu0 0.0
    %6458 = vmatpush1.msra.mxu0 0.0
    %6459 = vmatprep.mubr.f32.mxu0 0.0
    %6460 = vmatmul.mubr.f32.gmra.mrb[0].mxu0 %v6378
    %v6461 = vpop.f32.mrb[0].mxu0
    %v6462 = vadd.f32 0.0, %v6461
    %v6463 = vpop.f32.mrb[0].mxu0
    %6464 = vdwg.mxu0
    %s6465 = scalar_lea.vmem %s2, 56
    %v6466 = vld [vmem:[%s6465] sm:$0xff]
    %v6467 = vadd.f32 %v6466, %v6072
    %v6468 = vld [vmem:[%s9] sm:$0xff]
    %v6469 = vld [vmem:[%s9 + $0x8] sm:$0xff]
    %v6470 = vld [vmem:[%s9 + $0x10] sm:$0xff]
    %v6471 = vld [vmem:[%s9 + $0x18] sm:$0xff]
    %v6473 = vsel %vm70, %v6462, 0
    %6475 = vmatprep.subr.mxu0 0.0
    %6476 = vmatpush1.msra.mxu0 %v6468
    %6477 = vmatprep.subr.mxu0 0.0
    %6478 = vmatpush1.msra.mxu0 %v6469
    %6479 = vmatprep.subr.mxu0 0.0
    %6480 = vmatpush1.msra.mxu0 %v6470
    %6481 = vmatprep.subr.mxu0 0.0
    %6482 = vmatpush1.msra.mxu0 %v6471
    %6483 = vmatprep.subr.mxu0 0.0
    %6484 = vmatpush1.msra.mxu0 0.0
    %6485 = vmatprep.subr.mxu0 0.0
    %6486 = vmatpush1.msra.mxu0 0.0
    %6487 = vmatprep.subr.mxu0 0.0
    %6488 = vmatpush1.msra.mxu0 0.0
    %6489 = vmatprep.subr.mxu0 0.0
    %6490 = vmatpush1.msra.mxu0 0.0
    %6491 = vmatprep.subr.mxu0 0.0
    %6492 = vmatpush1.msra.mxu0 0.0
    %6493 = vmatprep.subr.mxu0 0.0
    %6494 = vmatpush1.msra.mxu0 0.0
    %6495 = vmatprep.subr.mxu0 0.0
    %6496 = vmatpush1.msra.mxu0 0.0
    %6497 = vmatprep.subr.mxu0 0.0
    %6498 = vmatpush1.msra.mxu0 0.0
    %6499 = vmatprep.subr.mxu0 0.0
    %6500 = vmatpush1.msra.mxu0 0.0
    %6501 = vmatprep.subr.mxu0 0.0
    %6502 = vmatpush1.msra.mxu0 0.0
    %6503 = vmatprep.subr.mxu0 0.0
    %6504 = vmatpush1.msra.mxu0 0.0
    %6505 = vmatprep.subr.mxu0 0.0
    %6506 = vmatpush1.msra.mxu0 0.0
    %6507 = vmatprep.subr.mxu0 0.0
    %6508 = vmatpush1.msra.mxu0 0.0
    %6509 = vmatprep.subr.mxu0 0.0
    %6510 = vmatpush1.msra.mxu0 0.0
    %6511 = vmatprep.subr.mxu0 0.0
    %6512 = vmatpush1.msra.mxu0 0.0
    %6513 = vmatprep.subr.mxu0 0.0
    %6514 = vmatpush1.msra.mxu0 0.0
    %6515 = vmatprep.subr.mxu0 0.0
    %6516 = vmatpush1.msra.mxu0 0.0
    %6517 = vmatprep.subr.mxu0 0.0
    %6518 = vmatpush1.msra.mxu0 0.0
    %6519 = vmatprep.subr.mxu0 0.0
    %6520 = vmatpush1.msra.mxu0 0.0
    %6521 = vmatprep.subr.mxu0 0.0
    %6522 = vmatpush1.msra.mxu0 0.0
    %6523 = vmatprep.subr.mxu0 0.0
    %6524 = vmatpush1.msra.mxu0 0.0
    %6525 = vmatprep.subr.mxu0 0.0
    %6526 = vmatpush1.msra.mxu0 0.0
    %6527 = vmatprep.subr.mxu0 0.0
    %6528 = vmatpush1.msra.mxu0 0.0
    %6529 = vmatprep.subr.mxu0 0.0
    %6530 = vmatpush1.msra.mxu0 0.0
    %6531 = vmatprep.subr.mxu0 0.0
    %6532 = vmatpush1.msra.mxu0 0.0
    %6533 = vmatprep.subr.mxu0 0.0
    %6534 = vmatpush1.msra.mxu0 0.0
    %6535 = vmatprep.subr.mxu0 0.0
    %6536 = vmatpush1.msra.mxu0 0.0
    %6537 = vmatprep.subr.mxu0 0.0
    %6538 = vmatpush1.msra.mxu0 0.0
    %6539 = vmatprep.mubr.f32.mxu0 0.0
    %6540 = vmatmul.mubr.f32.gmra.mrb[0].mxu0 %v6473
    %v6541 = vpop.f32.mrb[0].mxu0
    %v6542 = vadd.f32 0.0, %v6541
    %v6543 = vpop.f32.mrb[0].mxu0
    %6544 = vdwg.mxu0
    %v6545 = vadd.f32 %v6467, %v6542
    %v6546 = vxor.u32 %v6545, 2147483648
    %v6547 = vmul.f32 %v6546, 1.442695
    %v6548 = vpow.pop %v6547
    %v6549 = vadd.f32 %v6548, 1.0
    %v6550 = vrcp.pop %v6549
    %v6551 = vmul.f32 1.0, %v6550
    %v6552 = vmul.f32 %v6551, 2.0
    %v6553 = vsub.f32 %v6552, 1.0
    %v6554 = vmul.f32 %v6551, %v5737
    %6556 = vrot.lane.b32.xlu0 %v6553, 64
    %v6557 = vpop.permute.xlu0 %6556
    %v6559 = vmul.f32 %v6551, %v6557
    %6561 = vrot.lane.b32.xlu0 %v6559, 32
    %v6562 = vpop.permute.xlu0 %6561
    %v6564 = vadd.f32 %v6554, %v6562
    %v6565 = vtanh.pop %v6564
    %6567 = vrot.lane.b32.xlu0 %v6565, 64
    %v6568 = vpop.permute.xlu0 %6567
    %v6570 = vmul.f32 %v6551, %v6568
    %v6571 = vld [vmem:[%s10] sm:$0xff]
    %v6572 = vld [vmem:[%s10 + $0x8] sm:$0xff]
    %v6573 = vld [vmem:[%s10 + $0x10] sm:$0xff]
    %v6574 = vld [vmem:[%s10 + $0x18] sm:$0xff]
    %v6575 = vld [vmem:[%s11] sm:$0x1]
    %v6577 = vlaneseq
    %v6578 = vshrl.u32 %v6577, 7
    %v6579 = vsub.s32 0, %v6578
    %v6580 = vrot.slane %v6575, %v6579
    %6583 = vrot.lane.b32.xlu0 %v6570, 32
    %v6584 = vpop.permute.xlu0 %6583
    %v6585 = vsel %vm70, %v6584, 0
    %6587 = vmatprep.subr.mxu0 0.0
    %6588 = vmatpush1.msra.mxu0 %v6571
    %6589 = vmatprep.subr.mxu0 0.0
    %6590 = vmatpush1.msra.mxu0 %v6572
    %6591 = vmatprep.subr.mxu0 0.0
    %6592 = vmatpush1.msra.mxu0 %v6573
    %6593 = vmatprep.subr.mxu0 0.0
    %6594 = vmatpush1.msra.mxu0 %v6574
    %6595 = vmatprep.subr.mxu0 0.0
    %6596 = vmatpush1.msra.mxu0 0.0
    %6597 = vmatprep.subr.mxu0 0.0
    %6598 = vmatpush1.msra.mxu0 0.0
    %6599 = vmatprep.subr.mxu0 0.0
    %6600 = vmatpush1.msra.mxu0 0.0
    %6601 = vmatprep.subr.mxu0 0.0
    %6602 = vmatpush1.msra.mxu0 0.0
    %6603 = vmatprep.subr.mxu0 0.0
    %6604 = vmatpush1.msra.mxu0 0.0
    %6605 = vmatprep.subr.mxu0 0.0
    %6606 = vmatpush1.msra.mxu0 0.0
    %6607 = vmatprep.subr.mxu0 0.0
    %6608 = vmatpush1.msra.mxu0 0.0
    %6609 = vmatprep.subr.mxu0 0.0
    %6610 = vmatpush1.msra.mxu0 0.0
    %6611 = vmatprep.subr.mxu0 0.0
    %6612 = vmatpush1.msra.mxu0 0.0
    %6613 = vmatprep.subr.mxu0 0.0
    %6614 = vmatpush1.msra.mxu0 0.0
    %6615 = vmatprep.subr.mxu0 0.0
    %6616 = vmatpush1.msra.mxu0 0.0
    %6617 = vmatprep.subr.mxu0 0.0
    %6618 = vmatpush1.msra.mxu0 0.0
    %6619 = vmatprep.subr.mxu0 0.0
    %6620 = vmatpush1.msra.mxu0 0.0
    %6621 = vmatprep.subr.mxu0 0.0
    %6622 = vmatpush1.msra.mxu0 0.0
    %6623 = vmatprep.subr.mxu0 0.0
    %6624 = vmatpush1.msra.mxu0 0.0
    %6625 = vmatprep.subr.mxu0 0.0
    %6626 = vmatpush1.msra.mxu0 0.0
    %6627 = vmatprep.subr.mxu0 0.0
    %6628 = vmatpush1.msra.mxu0 0.0
    %6629 = vmatprep.subr.mxu0 0.0
    %6630 = vmatpush1.msra.mxu0 0.0
    %6631 = vmatprep.subr.mxu0 0.0
    %6632 = vmatpush1.msra.mxu0 0.0
    %6633 = vmatprep.subr.mxu0 0.0
    %6634 = vmatpush1.msra.mxu0 0.0
    %6635 = vmatprep.subr.mxu0 0.0
    %6636 = vmatpush1.msra.mxu0 0.0
    %6637 = vmatprep.subr.mxu0 0.0
    %6638 = vmatpush1.msra.mxu0 0.0
    %6639 = vmatprep.subr.mxu0 0.0
    %6640 = vmatpush1.msra.mxu0 0.0
    %6641 = vmatprep.subr.mxu0 0.0
    %6642 = vmatpush1.msra.mxu0 0.0
    %6643 = vmatprep.subr.mxu0 0.0
    %6644 = vmatpush1.msra.mxu0 0.0
    %6645 = vmatprep.subr.mxu0 0.0
    %6646 = vmatpush1.msra.mxu0 0.0
    %6647 = vmatprep.subr.mxu0 0.0
    %6648 = vmatpush1.msra.mxu0 0.0
    %6649 = vmatprep.subr.mxu0 0.0
    %6650 = vmatpush1.msra.mxu0 0.0
    %6651 = vmatprep.mubr.f32.mxu0 0.0
    %6652 = vmatmul.mubr.f32.gmra.mrb[0].mxu0 %v6585
    %v6653 = vpop.f32.mrb[0].mxu0
    %v6654 = vadd.f32 %v6580, %v6653
    %v6655 = vpop.f32.mrb[0].mxu0
    %6656 = vdwg.mxu0
    %s6657 = scalar_lea.vmem [#allocation2], 56
    %6658 = vst [vmem:[%s6657] sm:$0xff] %v6654
    %s6659 = scalar_lea.vmem [#allocation4], 56
    %6660 = vst.msk [vmem:[%s6659] sm:$0xff] %vm502, %v6301
    %s6662 = scalar_lea.vmem [#allocation6], 56
    %6663 = vst.msk [vmem:[%s6662] sm:$0xff] %vm70, %v6584
    %6665 = vrot.lane.b32.xlu0 %v6564, 96
    %v6666 = vpop.permute.xlu0 %6665
    %s6668 = scalar_lea.vmem [#allocation7], 56
    %6669 = vst.msk [vmem:[%s6668] sm:$0xff] %vm70, %v6666
    // Predicated region
    $region50: #{tpu_custom_call.1} parent=1 // pred_check
      _
    $region51: #{tpu_custom_call.1} parent=1 // pred_check_branch
      %6671 = sbr.rel (0) target = $region53
    $region52: #{tpu_custom_call.1} parent=1 // pred_region
      %s6673 = ssub.s32 1024, 1024
      %6674 = vsyncadd [#allocation3], %s6673
      %s6675 = sshll.u32 [#allocation2], 4
      %s6676 = int_to_ptr.vmem [resolvable:$true] %s6675
      %6681 = dma.vmem_to_hbm [thread:$0]  %s6676, 1024, %s12, [#allocation3], 128, 128, 8
    $region53: #{tpu_custom_call.1} parent=1 // pred_fallthru
      _
    // Predicated region
    $region54: #{tpu_custom_call.1} parent=1 // pred_check
      _
    $region55: #{tpu_custom_call.1} parent=1 // pred_check_branch
      %6683 = sbr.rel (0) target = $region57
    $region56: #{tpu_custom_call.1} parent=1 // pred_region
      %s6685 = ssub.s32 1024, 1024
      %6686 = vsyncadd [#allocation5], %s6685
      %s6687 = sshll.u32 [#allocation4], 4
      %s6688 = int_to_ptr.vmem [resolvable:$true] %s6687
      %6693 = dma.vmem_to_hbm [thread:$0]  %s6688, 1024, %s13, [#allocation5], 128, 128, 8
    $region57: #{tpu_custom_call.1} parent=1 // pred_fallthru
      _
    // Predicated region
    $region58: #{tpu_custom_call.1} parent=1 // pred_check
      _
    $region59: #{tpu_custom_call.1} parent=1 // pred_check_branch
      %6695 = sbr.rel (0) target = $region61
    $region60: #{tpu_custom_call.1} parent=1 // pred_region
      %s6697 = ssub.s32 1024, 1024
      %6698 = vsyncadd [#allocation5], %s6697
      %s6699 = sshll.u32 [#allocation6], 4
      %s6700 = int_to_ptr.vmem [resolvable:$true] %s6699
      %6705 = dma.vmem_to_hbm [thread:$0]  %s6700, 1024, %s14, [#allocation5], 128, 128, 8
    $region61: #{tpu_custom_call.1} parent=1 // pred_fallthru
      _
    // Predicated region
    $region62: #{tpu_custom_call.1} parent=1 // pred_check
      _
    $region63: #{tpu_custom_call.1} parent=1 // pred_check_branch
      %6707 = sbr.rel (0) target = $region65
    $region64: #{tpu_custom_call.1} parent=1 // pred_region
      %s6709 = ssub.s32 1024, 1024
      %6710 = vsyncadd [#allocation8], %s6709
      %s6711 = sshll.u32 [#allocation7], 4
      %s6712 = int_to_ptr.vmem [resolvable:$true] %s6711
      %6717 = dma.vmem_to_hbm [thread:$0]  %s6712, 1024, %s15, [#allocation8], 128, 128, 8
    $region65: #{tpu_custom_call.1} parent=1 // pred_fallthru
      _
    // Predicated region
    $region66: #{tpu_custom_call.1} parent=1 // pred_check
      _
    $region67: #{tpu_custom_call.1} parent=1 // pred_check_branch
      %6719 = sbr.rel (0) target = $region69
    $region68: #{tpu_custom_call.1} parent=1 // pred_region
      %6720 = dma.done [#allocation3], 1024
    $region69: #{tpu_custom_call.1} parent=1 // pred_fallthru
      _
    // Predicated region
    $region70: #{tpu_custom_call.1} parent=1 // pred_check
      _
    $region71: #{tpu_custom_call.1} parent=1 // pred_check_branch
      %6722 = sbr.rel (0) target = $region73
    $region72: #{tpu_custom_call.1} parent=1 // pred_region
      %6723 = dma.done [#allocation5], 1024
    $region73: #{tpu_custom_call.1} parent=1 // pred_fallthru
      _
    // Predicated region
    $region74: #{tpu_custom_call.1} parent=1 // pred_check
      _
    $region75: #{tpu_custom_call.1} parent=1 // pred_check_branch
      %6725 = sbr.rel (0) target = $region77
    $region76: #{tpu_custom_call.1} parent=1 // pred_region
      %6726 = dma.done [#allocation5], 1024
    $region77: #{tpu_custom_call.1} parent=1 // pred_fallthru
      _
    // Predicated region
    $region78: #{tpu_custom_call.1} parent=1 // pred_check
      _
    $region79: #{tpu_custom_call.1} parent=1 // pred_check_branch
      %6728 = sbr.rel (0) target = $region81
    $region80: #{tpu_custom_call.1} parent=1 // pred_region
      %6729 = dma.done [#allocation8], 1024
    $region81: #{tpu_custom_call.1} parent=1 // pred_fallthru
      _
    %6730 = vsyncpa [#allocation3], 1
    %6731 = vsyncpa [#allocation5], 1
    %6732 = vsyncpa [#allocation8], 1

</llo_original>
